<compile_context>
chip_gen: v5e
topology: v5e:2x2
jax: 0.10.0
libtpu: 0.0.40
codegen_flags: <defaults>
</compile_context>

<pallas_src>
import jax
import jax.numpy as jnp
import numpy as np
from jax.experimental import pallas as pl
from jax.experimental.pallas import tpu as pltpu

# ---------------------------------------------------------------------------
# Model hyper-parameters (consistent with the module's __init__)
# ---------------------------------------------------------------------------
BOARD_X = 8
BOARD_Y = 8
CHANNELS = 32
ACTION_SIZE = BOARD_X * BOARD_Y + 1                  # 65
FC_IN = CHANNELS * (BOARD_X - 4) * (BOARD_Y - 4)     # 512
FC1_OUT = 1024
FC2_OUT = 512
HEAD_N = 128                                         # 65 policy + 1 value + pad
BN_EPS = 1e-5
BATCH_TILE = 256                                     # batch grid tile
IN_LANES = 16                                        # padded board row width
PAD_LANES = 10 * CHANNELS                            # conv2 padded slab width


# ---------------------------------------------------------------------------
# Fused Pallas kernel: whole forward pass for one batch tile
# ---------------------------------------------------------------------------
def othello_fused_kernel(x_ref,
                         c1w_ref, c1s_ref, c2w_ref, c2s_ref,
                         c3w_ref, c3s_ref, c4w_ref, c4s_ref,
                         f1w_ref, f1s_ref, f2w_ref, f2s_ref,
                         hw_ref, hb_ref,
                         out_ref, pad_ref):
    """x_ref: (TB,10,16) bf16 zero-padded board (cols 1..8 = board).
    c*w: (3,K,N) bf16 row-banded slab weights (BN scale folded);
    c*s/f*s: (1,N) f32 folded bias+BN shifts.
    out_ref: (TB,128) f32, cols 0..64 = log_pi, col 65 = tanh(v).
    pad_ref: (TB,10,320) bf16 scratch: conv2's zero-padded input slab, reused
    as the staging slab for conv3/conv4."""
    tb = x_ref.shape[0]

    def banded_conv(src_ref, w_ref_, s_ref_):
        # 3x3 conv (+ folded BN + ReLU) as 3 row-banded MXU matmuls in the
        # lane-dense (rows, board_col*ch) slab layout.  Output rows past the
        # valid height are garbage that no later read consumes.
        k = w_ref_.shape[1]
        n = w_ref_.shape[2]
        acc = None
        for dy in range(3):
            rows = src_ref[:, dy:dy + 8, 0:k].reshape(tb * 8, k)
            part = jnp.dot(rows, w_ref_[dy],
                           preferred_element_type=jnp.float32)
            acc = part if acc is None else acc + part
        y = jnp.maximum(acc + s_ref_[...], 0.0)
        return y.astype(jnp.bfloat16).reshape(tb, 8, n)

    # conv1 + bn1 + relu : (TB,10,16) board -> (TB,8,320) slab whose left and
    # right 32-lane border blocks are already zero (zero weight columns + zero
    # shift), i.e. conv2's W-direction zero-padding comes for free.
    a = banded_conv(x_ref, c1w_ref, c1s_ref)                     # (TB,8,320)

    # conv2's zero-padded input slab: interior rewritten every step; the two
    # H-direction pad rows are re-zeroed every step (scratch persists across
    # grid steps and the batch axis may be sharded across TensorCores, so no
    # first-step-only init).
    zero_row = jnp.zeros((tb, 1, PAD_LANES), jnp.bfloat16)
    pad_ref[:, 0:1, :] = zero_row
    pad_ref[:, 9:10, :] = zero_row
    pad_ref[:, 1:9, :] = a

    # conv2 + bn2 + relu : (TB,10,320) -> (TB,8,256)
    a = banded_conv(pad_ref, c2w_ref, c2s_ref)
    # conv3 + bn3 + relu ('valid'): rows 0..5 valid -> (TB,8,192)
    pad_ref[:, 0:8, 0:8 * CHANNELS] = a
    a = banded_conv(pad_ref, c3w_ref, c3s_ref)
    # conv4 + bn4 + relu ('valid'): rows 0..3 valid -> (TB,8,128)
    pad_ref[:, 0:8, 0:6 * CHANNELS] = a
    a = banded_conv(pad_ref, c4w_ref, c4s_ref)

    # fc1 + fc_bn1 + relu : 4 accumulated K=128 dots over the valid conv4 rows
    # (fc1 rows pre-permuted at init to PyTorch's NCHW flatten order, so no
    # flatten relayout / transpose is needed).
    # TODO(synk): dropout omitted (inference semantics, training=False).
    acc = None
    for ho in range(BOARD_X - 4):
        part = jnp.dot(a[:, ho, :], f1w_ref[ho],
                       preferred_element_type=jnp.float32)
        acc = part if acc is None else acc + part
    h = jnp.maximum(acc + f1s_ref[...], 0.0).astype(jnp.bfloat16)  # (TB,1024)

    # fc2 + fc_bn2 + relu
    h = jnp.maximum(
        jnp.dot(h, f2w_ref[...], preferred_element_type=jnp.float32)
        + f2s_ref[...], 0.0).astype(jnp.bfloat16)                  # (TB,512)

    # fc3 (policy) and fc4 (value) fused into one lane-dense (512,128) matmul.
    y = jnp.dot(h, hw_ref[...],
                preferred_element_type=jnp.float32) + hb_ref[...]  # (TB,128)

    # Masked log-softmax over the 65 policy columns; tanh on the value column.
    # Everything stays a full 128-lane slab -> unmasked, lane-dense stores.
    col = jax.lax.broadcasted_iota(jnp.int32, (tb, HEAD_N), 1)
    is_pi = col < ACTION_SIZE
    ym = jnp.where(is_pi, y, -1e30)
    m = jnp.max(ym, axis=1, keepdims=True)
    lse = jnp.log(jnp.sum(jnp.exp(ym - m), axis=1, keepdims=True)) + m
    out_ref[...] = jnp.where(
        is_pi, y - lse, jnp.where(col == ACTION_SIZE, jnp.tanh(y), 0.0))


# ---------------------------------------------------------------------------
# Wrapper: a single batch-tiled pallas_call
# ---------------------------------------------------------------------------
def _round_up(v, m):
    return (v + m - 1) // m * m


def _wspec(arr):
    if arr.ndim == 2:
        return pl.BlockSpec(arr.shape, lambda i: (0, 0))
    return pl.BlockSpec(arr.shape, lambda i: (0, 0, 0))


def othello_net_forward_impl(board, params):
    """board: (B, 8, 8) float  ->  (log_pi (B, 65), v (B, 1))."""
    b = board.shape[0]
    tb = min(BATCH_TILE, _round_up(b, 8))
    b_pad = _round_up(b, tb)

    # (B,8,8) -> (B_pad,10,16) bf16: +1 spatial zero-pad for conv1 (pad=1),
    # right-pad each row to 16 lanes, zero-pad the batch to a tile multiple.
    x = jnp.pad(board.astype(jnp.bfloat16),
                ((0, b_pad - b), (1, 1), (1, IN_LANES - BOARD_Y - 1)))

    weights = (params["c1w"], params["c1s"], params["c2w"], params["c2s"],
               params["c3w"], params["c3s"], params["c4w"], params["c4s"],
               params["f1w"], params["f1s"], params["f2w"], params["f2s"],
               params["hw"], params["hb"])

    out = pl.pallas_call(
        othello_fused_kernel,
        out_shape=jax.ShapeDtypeStruct((b_pad, HEAD_N), jnp.float32),
        grid=(b_pad // tb,),
        in_specs=[pl.BlockSpec((tb, 10, IN_LANES), lambda i: (i, 0, 0))]
                 + [_wspec(w) for w in weights],
        out_specs=pl.BlockSpec((tb, HEAD_N), lambda i: (i, 0)),
        scratch_shapes=[pltpu.VMEM((tb, 10, PAD_LANES), jnp.bfloat16)],
        compiler_params=pltpu.CompilerParams(
            # independent batch tiles -> shards across both TCs on v7x
            dimension_semantics=("parallel",),
            # headroom over v5e's 16 MiB scoped default; well under v7x's
            # 64 MiB physical VMEM at TB=256 (weights ~3 MiB resident).
            vmem_limit_bytes=32 * 1024 * 1024),
    )(x, *weights)

    return out[:b, :ACTION_SIZE], out[:b, ACTION_SIZE:ACTION_SIZE + 1]


othello_net_forward = jax.jit(othello_net_forward_impl)


# ---------------------------------------------------------------------------
# Parameter initialization (deterministic, synthetic) with BN / layout folding
# ---------------------------------------------------------------------------
def init_params(key):
    ks = iter(jax.random.split(key, 64))

    def nrm(shape, scale):
        return np.asarray(scale * jax.random.normal(next(ks), shape,
                                                    jnp.float32))

    def bn_fold(bias, n):
        # eval-mode BatchNorm folded with the preceding conv/linear bias.
        gamma = 1.0 + 0.1 * nrm((n,), 1.0)
        beta = nrm((n,), 0.1)
        mean = nrm((n,), 0.1)
        var = 1.0 + 0.1 * np.abs(nrm((n,), 1.0))
        scale = gamma / np.sqrt(var + BN_EPS)
        shift = beta + (bias - mean) * scale
        return scale.astype(np.float32), shift.astype(np.float32)

    c = CHANNELS

    def band_conv1(w, shift):
        # w: (3,3,1,C) HWIO, BN scale folded.  Output slab has 10 blocks of C
        # lanes; blocks 0 and 9 stay zero (they are conv2's left/right pad).
        wb = np.zeros((3, IN_LANES, 10 * c), np.float32)
        sb = np.zeros((1, 10 * c), np.float32)
        for dy in range(3):
            for wo in range(8):                       # conv1 output column
                j = wo + 1                            # output slab block
                for dx in range(3):
                    wb[dy, wo + dx, j * c:(j + 1) * c] = w[dy, dx, 0, :]
        for j in range(1, 9):
            sb[0, j * c:(j + 1) * c] = shift
        return wb, sb

    def band_conv(w, shift, in_blocks, out_blocks):
        # w: (3,3,C,C) HWIO, BN scale folded.  Row-banded slab weight: output
        # block wo reads input blocks wo..wo+2 (dx taps baked into the band).
        wb = np.zeros((3, in_blocks * c, out_blocks * c), np.float32)
        for dy in range(3):
            for wo in range(out_blocks):
                for dx in range(3):
                    wi = wo + dx
                    wb[dy, wi * c:(wi + 1) * c, wo * c:(wo + 1) * c] = w[dy, dx]
        sb = np.tile(shift, out_blocks)[None, :]
        return wb, sb

    p = {}

    # conv1 .. conv4 (+ folded BN)
    conv_defs = [("c1", 1, None), ("c2", c, (10, 8)),
                 ("c3", c, (8, 6)), ("c4", c, (6, 4))]
    for name, c_in, blocks in conv_defs:
        w = nrm((3, 3, c_in, c), 0.1)
        bias = nrm((c,), 0.02)
        scale, shift = bn_fold(bias, c)
        w = w * scale                                  # fold BN scale into w
        if blocks is None:
            wb, sb = band_conv1(w, shift)
        else:
            wb, sb = band_conv(w, shift, *blocks)
        p[name + "w"] = jnp.asarray(wb, jnp.bfloat16)
        p[name + "s"] = jnp.asarray(sb, jnp.float32)

    # fc1 (+ folded fc_bn1): rows conceptually in PyTorch's NCHW flatten order
    # (c,h,w); permute once to the kernel's (h,w,c) slab order and split by
    # conv4 row -> (4, 128, 1024).
    w = nrm((FC_IN, FC1_OUT), 0.05)
    bias = nrm((FC1_OUT,), 0.02)
    scale, shift = bn_fold(bias, FC1_OUT)
    w = w * scale[None, :]
    w = w.reshape(c, BOARD_X - 4, BOARD_Y - 4, FC1_OUT)
    w = np.transpose(w, (1, 2, 0, 3)).reshape(BOARD_X - 4,
                                              (BOARD_Y - 4) * c, FC1_OUT)
    p["f1w"] = jnp.asarray(w, jnp.bfloat16)
    p["f1s"] = jnp.asarray(shift[None, :], jnp.float32)

    # fc2 (+ folded fc_bn2)
    w = nrm((FC1_OUT, FC2_OUT), 0.05)
    bias = nrm((FC2_OUT,), 0.02)
    scale, shift = bn_fold(bias, FC2_OUT)
    p["f2w"] = jnp.asarray(w * scale[None, :], jnp.bfloat16)
    p["f2s"] = jnp.asarray(shift[None, :], jnp.float32)

    # heads: fc3 (policy, cols 0..64) ++ fc4 (value, col 65), zero-pad to 128.
    hw = np.zeros((FC2_OUT, HEAD_N), np.float32)
    hb = np.zeros((1, HEAD_N), np.float32)
    hw[:, :ACTION_SIZE] = nrm((FC2_OUT, ACTION_SIZE), 0.05)
    hw[:, ACTION_SIZE] = nrm((FC2_OUT,), 0.05)
    hb[0, :ACTION_SIZE] = nrm((ACTION_SIZE,), 0.02)
    hb[0, ACTION_SIZE] = float(nrm((1,), 0.02)[0])
    p["hw"] = jnp.asarray(hw, jnp.bfloat16)
    p["hb"] = jnp.asarray(hb, jnp.float32)
    return p


# ---------------------------------------------------------------------------
if __name__ == "__main__":
    key = jax.random.PRNGKey(0)
    k_params, k_board = jax.random.split(key)

    params = init_params(k_params)

    # Synthetic board states in {-1, 0, 1}, batch of 2 (8x8 Othello boards).
    board = jax.random.randint(k_board, (2, BOARD_X, BOARD_Y), -1, 2)
    board = board.astype(jnp.float32)

    log_pi, v = othello_net_forward(board, params)
    jax.block_until_ready((log_pi, v))

    assert log_pi.shape == (2, ACTION_SIZE)
    assert v.shape == (2, 1)
    # log_softmax sanity: probabilities sum to 1.
    assert bool(jnp.allclose(jnp.exp(log_pi).sum(axis=1), 1.0, atol=1e-3))
    # tanh range sanity.
    assert bool(jnp.all(jnp.abs(v) <= 1.0))

    print("KERNEL_OK")
</pallas_src>

<mosaic_0001>
module attributes {stable_mosaic.version = 11 : i64} {
  func.func @othello_fused_kernel(%arg0: i32, %arg1: memref<8x10x16xbf16, #tpu.memory_space<vmem>>, %arg2: memref<3x16x320xbf16, #tpu.memory_space<vmem>>, %arg3: memref<1x320xf32, #tpu.memory_space<vmem>>, %arg4: memref<3x320x256xbf16, #tpu.memory_space<vmem>>, %arg5: memref<1x256xf32, #tpu.memory_space<vmem>>, %arg6: memref<3x256x192xbf16, #tpu.memory_space<vmem>>, %arg7: memref<1x192xf32, #tpu.memory_space<vmem>>, %arg8: memref<3x192x128xbf16, #tpu.memory_space<vmem>>, %arg9: memref<1x128xf32, #tpu.memory_space<vmem>>, %arg10: memref<4x128x1024xbf16, #tpu.memory_space<vmem>>, %arg11: memref<1x1024xf32, #tpu.memory_space<vmem>>, %arg12: memref<1024x512xbf16, #tpu.memory_space<vmem>>, %arg13: memref<1x512xf32, #tpu.memory_space<vmem>>, %arg14: memref<512x128xbf16, #tpu.memory_space<vmem>>, %arg15: memref<1x128xf32, #tpu.memory_space<vmem>>, %arg16: memref<8x128xf32, #tpu.memory_space<vmem>>, %arg17: memref<8x10x320xbf16, #tpu.memory_space<vmem>>) attributes {dimension_semantics = [#tpu.dimension_semantics<parallel>], iteration_bounds = array<i64: 1>, scalar_prefetch = 0 : i64, scratch_operands = 1 : i64, tpu.core_type = #tpu.core_type<tc>, window_params = [{transform_indices = @transform_0, window_bounds = array<i64: 8, 10, 16>}, {pipeline_mode = #tpu.pipeline_mode<synchronous>, transform_indices = @transform_1, window_bounds = array<i64: 3, 16, 320>}, {pipeline_mode = #tpu.pipeline_mode<synchronous>, transform_indices = @transform_2, window_bounds = array<i64: 1, 320>}, {pipeline_mode = #tpu.pipeline_mode<synchronous>, transform_indices = @transform_3, window_bounds = array<i64: 3, 320, 256>}, {pipeline_mode = #tpu.pipeline_mode<synchronous>, transform_indices = @transform_4, window_bounds = array<i64: 1, 256>}, {pipeline_mode = #tpu.pipeline_mode<synchronous>, transform_indices = @transform_5, window_bounds = array<i64: 3, 256, 192>}, {pipeline_mode = #tpu.pipeline_mode<synchronous>, transform_indices = @transform_6, window_bounds = array<i64: 1, 192>}, {pipeline_mode = #tpu.pipeline_mode<synchronous>, transform_indices = @transform_7, window_bounds = array<i64: 3, 192, 128>}, {pipeline_mode = #tpu.pipeline_mode<synchronous>, transform_indices = @transform_8, window_bounds = array<i64: 1, 128>}, {pipeline_mode = #tpu.pipeline_mode<synchronous>, transform_indices = @transform_9, window_bounds = array<i64: 4, 128, 1024>}, {pipeline_mode = #tpu.pipeline_mode<synchronous>, transform_indices = @transform_10, window_bounds = array<i64: 1, 1024>}, {pipeline_mode = #tpu.pipeline_mode<synchronous>, transform_indices = @transform_11, window_bounds = array<i64: 1024, 512>}, {pipeline_mode = #tpu.pipeline_mode<synchronous>, transform_indices = @transform_12, window_bounds = array<i64: 1, 512>}, {pipeline_mode = #tpu.pipeline_mode<synchronous>, transform_indices = @transform_13, window_bounds = array<i64: 512, 128>}, {pipeline_mode = #tpu.pipeline_mode<synchronous>, transform_indices = @transform_14, window_bounds = array<i64: 1, 128>}, {transform_indices = @transform_15, window_bounds = array<i64: 8, 128>}]} {
    %c0 = arith.constant 0 : index
    %c0_0 = arith.constant 0 : index
    %c0_1 = arith.constant 0 : index
    %0 = vector.load %arg1[%c0, %c0_0, %c0_1] : memref<8x10x16xbf16, #tpu.memory_space<vmem>>, vector<8x8x16xbf16>
    %1 = vector.shape_cast %0 : vector<8x8x16xbf16> to vector<64x16xbf16>
    %c0_2 = arith.constant 0 : index
    %c0_3 = arith.constant 0 : index
    %c0_4 = arith.constant 0 : index
    %2 = vector.load %arg2[%c0_2, %c0_3, %c0_4] : memref<3x16x320xbf16, #tpu.memory_space<vmem>>, vector<1x16x320xbf16>
    %3 = vector.shape_cast %2 : vector<1x16x320xbf16> to vector<16x320xbf16>
    %cst = arith.constant dense<0.000000e+00> : vector<64x320xf32>
    %4 = tpu.matmul %1, %3, %cst {dimension_numbers = #tpu.dot_dimension_numbers<[1], [0], [0], [1], [0, 0, 1, 1], [], []>} : vector<64x16xbf16>, vector<16x320xbf16>, vector<64x320xf32> -> vector<64x320xf32>
    %c0_5 = arith.constant 0 : index
    %c1 = arith.constant 1 : index
    %c0_6 = arith.constant 0 : index
    %5 = vector.load %arg1[%c0_5, %c1, %c0_6] : memref<8x10x16xbf16, #tpu.memory_space<vmem>>, vector<8x8x16xbf16>
    %6 = vector.shape_cast %5 : vector<8x8x16xbf16> to vector<64x16xbf16>
    %c1_7 = arith.constant 1 : index
    %c0_8 = arith.constant 0 : index
    %c0_9 = arith.constant 0 : index
    %7 = vector.load %arg2[%c1_7, %c0_8, %c0_9] : memref<3x16x320xbf16, #tpu.memory_space<vmem>>, vector<1x16x320xbf16>
    %8 = vector.shape_cast %7 : vector<1x16x320xbf16> to vector<16x320xbf16>
    %cst_10 = arith.constant dense<0.000000e+00> : vector<64x320xf32>
    %9 = tpu.matmul %6, %8, %cst_10 {dimension_numbers = #tpu.dot_dimension_numbers<[1], [0], [0], [1], [0, 0, 1, 1], [], []>} : vector<64x16xbf16>, vector<16x320xbf16>, vector<64x320xf32> -> vector<64x320xf32>
    %10 = arith.addf %4, %9 : vector<64x320xf32>
    %c0_11 = arith.constant 0 : index
    %c2 = arith.constant 2 : index
    %c0_12 = arith.constant 0 : index
    %11 = vector.load %arg1[%c0_11, %c2, %c0_12] : memref<8x10x16xbf16, #tpu.memory_space<vmem>>, vector<8x8x16xbf16>
    %12 = vector.shape_cast %11 : vector<8x8x16xbf16> to vector<64x16xbf16>
    %c2_13 = arith.constant 2 : index
    %c0_14 = arith.constant 0 : index
    %c0_15 = arith.constant 0 : index
    %13 = vector.load %arg2[%c2_13, %c0_14, %c0_15] : memref<3x16x320xbf16, #tpu.memory_space<vmem>>, vector<1x16x320xbf16>
    %14 = vector.shape_cast %13 : vector<1x16x320xbf16> to vector<16x320xbf16>
    %cst_16 = arith.constant dense<0.000000e+00> : vector<64x320xf32>
    %15 = tpu.matmul %12, %14, %cst_16 {dimension_numbers = #tpu.dot_dimension_numbers<[1], [0], [0], [1], [0, 0, 1, 1], [], []>} : vector<64x16xbf16>, vector<16x320xbf16>, vector<64x320xf32> -> vector<64x320xf32>
    %16 = arith.addf %10, %15 : vector<64x320xf32>
    %c0_17 = arith.constant 0 : index
    %c0_18 = arith.constant 0 : index
    %17 = vector.load %arg3[%c0_17, %c0_18] : memref<1x320xf32, #tpu.memory_space<vmem>>, vector<1x320xf32>
    %18 = vector.broadcast %17 : vector<1x320xf32> to vector<64x320xf32>
    %19 = arith.addf %16, %18 : vector<64x320xf32>
    %cst_19 = arith.constant 0.000000e+00 : f32
    %20 = vector.broadcast %cst_19 : f32 to vector<64x320xf32>
    %21 = arith.maximumf %19, %20 : vector<64x320xf32>
    %22 = arith.truncf %21 : vector<64x320xf32> to vector<64x320xbf16>
    %23 = vector.shape_cast %22 : vector<64x320xbf16> to vector<8x8x320xbf16>
    %cst_20 = arith.constant 0.000000e+00 : bf16
    %24 = vector.broadcast %cst_20 : bf16 to vector<8x1x320xbf16>
    %c0_21 = arith.constant 0 : index
    %c0_22 = arith.constant 0 : index
    %c0_23 = arith.constant 0 : index
    %25 = vector.load %arg17[%c0_21, %c0_22, %c0_23] : memref<8x10x320xbf16, #tpu.memory_space<vmem>>, vector<8x1x320xbf16>
    tpu.vector_store %arg17[%c0_21, %c0_22, %c0_23], %24 {strides = array<i32>} : memref<8x10x320xbf16, #tpu.memory_space<vmem>>, vector<8x1x320xbf16>,
    %c0_24 = arith.constant 0 : index
    %c9 = arith.constant 9 : index
    %c0_25 = arith.constant 0 : index
    %26 = vector.load %arg17[%c0_24, %c9, %c0_25] : memref<8x10x320xbf16, #tpu.memory_space<vmem>>, vector<8x1x320xbf16>
    tpu.vector_store %arg17[%c0_24, %c9, %c0_25], %24 {strides = array<i32>} : memref<8x10x320xbf16, #tpu.memory_space<vmem>>, vector<8x1x320xbf16>,
    %c0_26 = arith.constant 0 : index
    %c1_27 = arith.constant 1 : index
    %c0_28 = arith.constant 0 : index
    %27 = vector.load %arg17[%c0_26, %c1_27, %c0_28] : memref<8x10x320xbf16, #tpu.memory_space<vmem>>, vector<8x8x320xbf16>
    tpu.vector_store %arg17[%c0_26, %c1_27, %c0_28], %23 {strides = array<i32>} : memref<8x10x320xbf16, #tpu.memory_space<vmem>>, vector<8x8x320xbf16>,
    %c0_29 = arith.constant 0 : index
    %c0_30 = arith.constant 0 : index
    %c0_31 = arith.constant 0 : index
    %28 = vector.load %arg17[%c0_29, %c0_30, %c0_31] : memref<8x10x320xbf16, #tpu.memory_space<vmem>>, vector<8x8x320xbf16>
    %29 = vector.shape_cast %28 : vector<8x8x320xbf16> to vector<64x320xbf16>
    %c0_32 = arith.constant 0 : index
    %c0_33 = arith.constant 0 : index
    %c0_34 = arith.constant 0 : index
    %30 = vector.load %arg4[%c0_32, %c0_33, %c0_34] : memref<3x320x256xbf16, #tpu.memory_space<vmem>>, vector<1x320x256xbf16>
    %31 = vector.shape_cast %30 : vector<1x320x256xbf16> to vector<320x256xbf16>
    %cst_35 = arith.constant dense<0.000000e+00> : vector<64x256xf32>
    %32 = tpu.matmul %29, %31, %cst_35 {dimension_numbers = #tpu.dot_dimension_numbers<[1], [0], [0], [1], [0, 0, 1, 1], [], []>} : vector<64x320xbf16>, vector<320x256xbf16>, vector<64x256xf32> -> vector<64x256xf32>
    %c0_36 = arith.constant 0 : index
    %c1_37 = arith.constant 1 : index
    %c0_38 = arith.constant 0 : index
    %33 = vector.load %arg17[%c0_36, %c1_37, %c0_38] : memref<8x10x320xbf16, #tpu.memory_space<vmem>>, vector<8x8x320xbf16>
    %34 = vector.shape_cast %33 : vector<8x8x320xbf16> to vector<64x320xbf16>
    %c1_39 = arith.constant 1 : index
    %c0_40 = arith.constant 0 : index
    %c0_41 = arith.constant 0 : index
    %35 = vector.load %arg4[%c1_39, %c0_40, %c0_41] : memref<3x320x256xbf16, #tpu.memory_space<vmem>>, vector<1x320x256xbf16>
    %36 = vector.shape_cast %35 : vector<1x320x256xbf16> to vector<320x256xbf16>
    %cst_42 = arith.constant dense<0.000000e+00> : vector<64x256xf32>
    %37 = tpu.matmul %34, %36, %cst_42 {dimension_numbers = #tpu.dot_dimension_numbers<[1], [0], [0], [1], [0, 0, 1, 1], [], []>} : vector<64x320xbf16>, vector<320x256xbf16>, vector<64x256xf32> -> vector<64x256xf32>
    %38 = arith.addf %32, %37 : vector<64x256xf32>
    %c0_43 = arith.constant 0 : index
    %c2_44 = arith.constant 2 : index
    %c0_45 = arith.constant 0 : index
    %39 = vector.load %arg17[%c0_43, %c2_44, %c0_45] : memref<8x10x320xbf16, #tpu.memory_space<vmem>>, vector<8x8x320xbf16>
    %40 = vector.shape_cast %39 : vector<8x8x320xbf16> to vector<64x320xbf16>
    %c2_46 = arith.constant 2 : index
    %c0_47 = arith.constant 0 : index
    %c0_48 = arith.constant 0 : index
    %41 = vector.load %arg4[%c2_46, %c0_47, %c0_48] : memref<3x320x256xbf16, #tpu.memory_space<vmem>>, vector<1x320x256xbf16>
    %42 = vector.shape_cast %41 : vector<1x320x256xbf16> to vector<320x256xbf16>
    %cst_49 = arith.constant dense<0.000000e+00> : vector<64x256xf32>
    %43 = tpu.matmul %40, %42, %cst_49 {dimension_numbers = #tpu.dot_dimension_numbers<[1], [0], [0], [1], [0, 0, 1, 1], [], []>} : vector<64x320xbf16>, vector<320x256xbf16>, vector<64x256xf32> -> vector<64x256xf32>
    %44 = arith.addf %38, %43 : vector<64x256xf32>
    %c0_50 = arith.constant 0 : index
    %c0_51 = arith.constant 0 : index
    %45 = vector.load %arg5[%c0_50, %c0_51] : memref<1x256xf32, #tpu.memory_space<vmem>>, vector<1x256xf32>
    %46 = vector.broadcast %45 : vector<1x256xf32> to vector<64x256xf32>
    %47 = arith.addf %44, %46 : vector<64x256xf32>
    %cst_52 = arith.constant 0.000000e+00 : f32
    %48 = vector.broadcast %cst_52 : f32 to vector<64x256xf32>
    %49 = arith.maximumf %47, %48 : vector<64x256xf32>
    %50 = arith.truncf %49 : vector<64x256xf32> to vector<64x256xbf16>
    %51 = vector.shape_cast %50 : vector<64x256xbf16> to vector<8x8x256xbf16>
    %c0_53 = arith.constant 0 : index
    %c0_54 = arith.constant 0 : index
    %c0_55 = arith.constant 0 : index
    %52 = vector.load %arg17[%c0_53, %c0_54, %c0_55] : memref<8x10x320xbf16, #tpu.memory_space<vmem>>, vector<8x8x256xbf16>
    tpu.vector_store %arg17[%c0_53, %c0_54, %c0_55], %51 {strides = array<i32>} : memref<8x10x320xbf16, #tpu.memory_space<vmem>>, vector<8x8x256xbf16>,
    %c0_56 = arith.constant 0 : index
    %c0_57 = arith.constant 0 : index
    %c0_58 = arith.constant 0 : index
    %53 = vector.load %arg17[%c0_56, %c0_57, %c0_58] : memref<8x10x320xbf16, #tpu.memory_space<vmem>>, vector<8x8x256xbf16>
    %54 = vector.shape_cast %53 : vector<8x8x256xbf16> to vector<64x256xbf16>
    %c0_59 = arith.constant 0 : index
    %c0_60 = arith.constant 0 : index
    %c0_61 = arith.constant 0 : index
    %55 = vector.load %arg6[%c0_59, %c0_60, %c0_61] : memref<3x256x192xbf16, #tpu.memory_space<vmem>>, vector<1x256x192xbf16>
    %56 = vector.shape_cast %55 : vector<1x256x192xbf16> to vector<256x192xbf16>
    %cst_62 = arith.constant dense<0.000000e+00> : vector<64x192xf32>
    %57 = tpu.matmul %54, %56, %cst_62 {dimension_numbers = #tpu.dot_dimension_numbers<[1], [0], [0], [1], [0, 0, 1, 1], [], []>} : vector<64x256xbf16>, vector<256x192xbf16>, vector<64x192xf32> -> vector<64x192xf32>
    %c0_63 = arith.constant 0 : index
    %c1_64 = arith.constant 1 : index
    %c0_65 = arith.constant 0 : index
    %58 = vector.load %arg17[%c0_63, %c1_64, %c0_65] : memref<8x10x320xbf16, #tpu.memory_space<vmem>>, vector<8x8x256xbf16>
    %59 = vector.shape_cast %58 : vector<8x8x256xbf16> to vector<64x256xbf16>
    %c1_66 = arith.constant 1 : index
    %c0_67 = arith.constant 0 : index
    %c0_68 = arith.constant 0 : index
    %60 = vector.load %arg6[%c1_66, %c0_67, %c0_68] : memref<3x256x192xbf16, #tpu.memory_space<vmem>>, vector<1x256x192xbf16>
    %61 = vector.shape_cast %60 : vector<1x256x192xbf16> to vector<256x192xbf16>
    %cst_69 = arith.constant dense<0.000000e+00> : vector<64x192xf32>
    %62 = tpu.matmul %59, %61, %cst_69 {dimension_numbers = #tpu.dot_dimension_numbers<[1], [0], [0], [1], [0, 0, 1, 1], [], []>} : vector<64x256xbf16>, vector<256x192xbf16>, vector<64x192xf32> -> vector<64x192xf32>
    %63 = arith.addf %57, %62 : vector<64x192xf32>
    %c0_70 = arith.constant 0 : index
    %c2_71 = arith.constant 2 : index
    %c0_72 = arith.constant 0 : index
    %64 = vector.load %arg17[%c0_70, %c2_71, %c0_72] : memref<8x10x320xbf16, #tpu.memory_space<vmem>>, vector<8x8x256xbf16>
    %65 = vector.shape_cast %64 : vector<8x8x256xbf16> to vector<64x256xbf16>
    %c2_73 = arith.constant 2 : index
    %c0_74 = arith.constant 0 : index
    %c0_75 = arith.constant 0 : index
    %66 = vector.load %arg6[%c2_73, %c0_74, %c0_75] : memref<3x256x192xbf16, #tpu.memory_space<vmem>>, vector<1x256x192xbf16>
    %67 = vector.shape_cast %66 : vector<1x256x192xbf16> to vector<256x192xbf16>
    %cst_76 = arith.constant dense<0.000000e+00> : vector<64x192xf32>
    %68 = tpu.matmul %65, %67, %cst_76 {dimension_numbers = #tpu.dot_dimension_numbers<[1], [0], [0], [1], [0, 0, 1, 1], [], []>} : vector<64x256xbf16>, vector<256x192xbf16>, vector<64x192xf32> -> vector<64x192xf32>
    %69 = arith.addf %63, %68 : vector<64x192xf32>
    %c0_77 = arith.constant 0 : index
    %c0_78 = arith.constant 0 : index
    %70 = vector.load %arg7[%c0_77, %c0_78] : memref<1x192xf32, #tpu.memory_space<vmem>>, vector<1x192xf32>
    %71 = vector.broadcast %70 : vector<1x192xf32> to vector<64x192xf32>
    %72 = arith.addf %69, %71 : vector<64x192xf32>
    %cst_79 = arith.constant 0.000000e+00 : f32
    %73 = vector.broadcast %cst_79 : f32 to vector<64x192xf32>
    %74 = arith.maximumf %72, %73 : vector<64x192xf32>
    %75 = arith.truncf %74 : vector<64x192xf32> to vector<64x192xbf16>
    %76 = vector.shape_cast %75 : vector<64x192xbf16> to vector<8x8x192xbf16>
    %c0_80 = arith.constant 0 : index
    %c0_81 = arith.constant 0 : index
    %c0_82 = arith.constant 0 : index
    %77 = vector.load %arg17[%c0_80, %c0_81, %c0_82] : memref<8x10x320xbf16, #tpu.memory_space<vmem>>, vector<8x8x192xbf16>
    tpu.vector_store %arg17[%c0_80, %c0_81, %c0_82], %76 {strides = array<i32>} : memref<8x10x320xbf16, #tpu.memory_space<vmem>>, vector<8x8x192xbf16>,
    %c0_83 = arith.constant 0 : index
    %c0_84 = arith.constant 0 : index
    %c0_85 = arith.constant 0 : index
    %78 = vector.load %arg17[%c0_83, %c0_84, %c0_85] : memref<8x10x320xbf16, #tpu.memory_space<vmem>>, vector<8x8x192xbf16>
    %79 = vector.shape_cast %78 : vector<8x8x192xbf16> to vector<64x192xbf16>
    %c0_86 = arith.constant 0 : index
    %c0_87 = arith.constant 0 : index
    %c0_88 = arith.constant 0 : index
    %80 = vector.load %arg8[%c0_86, %c0_87, %c0_88] : memref<3x192x128xbf16, #tpu.memory_space<vmem>>, vector<1x192x128xbf16>
    %81 = vector.shape_cast %80 : vector<1x192x128xbf16> to vector<192x128xbf16>
    %cst_89 = arith.constant dense<0.000000e+00> : vector<64x128xf32>
    %82 = tpu.matmul %79, %81, %cst_89 {dimension_numbers = #tpu.dot_dimension_numbers<[1], [0], [0], [1], [0, 0, 1, 1], [], []>} : vector<64x192xbf16>, vector<192x128xbf16>, vector<64x128xf32> -> vector<64x128xf32>
    %c0_90 = arith.constant 0 : index
    %c1_91 = arith.constant 1 : index
    %c0_92 = arith.constant 0 : index
    %83 = vector.load %arg17[%c0_90, %c1_91, %c0_92] : memref<8x10x320xbf16, #tpu.memory_space<vmem>>, vector<8x8x192xbf16>
    %84 = vector.shape_cast %83 : vector<8x8x192xbf16> to vector<64x192xbf16>
    %c1_93 = arith.constant 1 : index
    %c0_94 = arith.constant 0 : index
    %c0_95 = arith.constant 0 : index
    %85 = vector.load %arg8[%c1_93, %c0_94, %c0_95] : memref<3x192x128xbf16, #tpu.memory_space<vmem>>, vector<1x192x128xbf16>
    %86 = vector.shape_cast %85 : vector<1x192x128xbf16> to vector<192x128xbf16>
    %cst_96 = arith.constant dense<0.000000e+00> : vector<64x128xf32>
    %87 = tpu.matmul %84, %86, %cst_96 {dimension_numbers = #tpu.dot_dimension_numbers<[1], [0], [0], [1], [0, 0, 1, 1], [], []>} : vector<64x192xbf16>, vector<192x128xbf16>, vector<64x128xf32> -> vector<64x128xf32>
    %88 = arith.addf %82, %87 : vector<64x128xf32>
    %c0_97 = arith.constant 0 : index
    %c2_98 = arith.constant 2 : index
    %c0_99 = arith.constant 0 : index
    %89 = vector.load %arg17[%c0_97, %c2_98, %c0_99] : memref<8x10x320xbf16, #tpu.memory_space<vmem>>, vector<8x8x192xbf16>
    %90 = vector.shape_cast %89 : vector<8x8x192xbf16> to vector<64x192xbf16>
    %c2_100 = arith.constant 2 : index
    %c0_101 = arith.constant 0 : index
    %c0_102 = arith.constant 0 : index
    %91 = vector.load %arg8[%c2_100, %c0_101, %c0_102] : memref<3x192x128xbf16, #tpu.memory_space<vmem>>, vector<1x192x128xbf16>
    %92 = vector.shape_cast %91 : vector<1x192x128xbf16> to vector<192x128xbf16>
    %cst_103 = arith.constant dense<0.000000e+00> : vector<64x128xf32>
    %93 = tpu.matmul %90, %92, %cst_103 {dimension_numbers = #tpu.dot_dimension_numbers<[1], [0], [0], [1], [0, 0, 1, 1], [], []>} : vector<64x192xbf16>, vector<192x128xbf16>, vector<64x128xf32> -> vector<64x128xf32>
    %94 = arith.addf %88, %93 : vector<64x128xf32>
    %c0_104 = arith.constant 0 : index
    %c0_105 = arith.constant 0 : index
    %95 = vector.load %arg9[%c0_104, %c0_105] : memref<1x128xf32, #tpu.memory_space<vmem>>, vector<1x128xf32>
    %96 = vector.broadcast %95 : vector<1x128xf32> to vector<64x128xf32>
    %97 = arith.addf %94, %96 : vector<64x128xf32>
    %cst_106 = arith.constant 0.000000e+00 : f32
    %98 = vector.broadcast %cst_106 : f32 to vector<64x128xf32>
    %99 = arith.maximumf %97, %98 : vector<64x128xf32>
    %100 = arith.truncf %99 : vector<64x128xf32> to vector<64x128xbf16>
    %101 = vector.shape_cast %100 : vector<64x128xbf16> to vector<8x8x128xbf16>
    %102 = vector.extract_strided_slice %101 {offsets = [0, 0, 0], sizes = [8, 1, 128], strides = [1, 1, 1]} : vector<8x8x128xbf16> to vector<8x1x128xbf16>
    %103 = vector.shape_cast %102 : vector<8x1x128xbf16> to vector<8x128xbf16>
    %c0_107 = arith.constant 0 : index
    %c0_108 = arith.constant 0 : index
    %c0_109 = arith.constant 0 : index
    %104 = vector.load %arg10[%c0_107, %c0_108, %c0_109] : memref<4x128x1024xbf16, #tpu.memory_space<vmem>>, vector<1x128x1024xbf16>
    %105 = vector.shape_cast %104 : vector<1x128x1024xbf16> to vector<128x1024xbf16>
    %cst_110 = arith.constant dense<0.000000e+00> : vector<8x1024xf32>
    %106 = tpu.matmul %103, %105, %cst_110 {dimension_numbers = #tpu.dot_dimension_numbers<[1], [0], [0], [1], [0, 0, 1, 1], [], []>} : vector<8x128xbf16>, vector<128x1024xbf16>, vector<8x1024xf32> -> vector<8x1024xf32>
    %107 = vector.extract_strided_slice %101 {offsets = [0, 1, 0], sizes = [8, 1, 128], strides = [1, 1, 1]} : vector<8x8x128xbf16> to vector<8x1x128xbf16>
    %108 = vector.shape_cast %107 : vector<8x1x128xbf16> to vector<8x128xbf16>
    %c1_111 = arith.constant 1 : index
    %c0_112 = arith.constant 0 : index
    %c0_113 = arith.constant 0 : index
    %109 = vector.load %arg10[%c1_111, %c0_112, %c0_113] : memref<4x128x1024xbf16, #tpu.memory_space<vmem>>, vector<1x128x1024xbf16>
    %110 = vector.shape_cast %109 : vector<1x128x1024xbf16> to vector<128x1024xbf16>
    %cst_114 = arith.constant dense<0.000000e+00> : vector<8x1024xf32>
    %111 = tpu.matmul %108, %110, %cst_114 {dimension_numbers = #tpu.dot_dimension_numbers<[1], [0], [0], [1], [0, 0, 1, 1], [], []>} : vector<8x128xbf16>, vector<128x1024xbf16>, vector<8x1024xf32> -> vector<8x1024xf32>
    %112 = arith.addf %106, %111 : vector<8x1024xf32>
    %113 = vector.extract_strided_slice %101 {offsets = [0, 2, 0], sizes = [8, 1, 128], strides = [1, 1, 1]} : vector<8x8x128xbf16> to vector<8x1x128xbf16>
    %114 = vector.shape_cast %113 : vector<8x1x128xbf16> to vector<8x128xbf16>
    %c2_115 = arith.constant 2 : index
    %c0_116 = arith.constant 0 : index
    %c0_117 = arith.constant 0 : index
    %115 = vector.load %arg10[%c2_115, %c0_116, %c0_117] : memref<4x128x1024xbf16, #tpu.memory_space<vmem>>, vector<1x128x1024xbf16>
    %116 = vector.shape_cast %115 : vector<1x128x1024xbf16> to vector<128x1024xbf16>
    %cst_118 = arith.constant dense<0.000000e+00> : vector<8x1024xf32>
    %117 = tpu.matmul %114, %116, %cst_118 {dimension_numbers = #tpu.dot_dimension_numbers<[1], [0], [0], [1], [0, 0, 1, 1], [], []>} : vector<8x128xbf16>, vector<128x1024xbf16>, vector<8x1024xf32> -> vector<8x1024xf32>
    %118 = arith.addf %112, %117 : vector<8x1024xf32>
    %119 = vector.extract_strided_slice %101 {offsets = [0, 3, 0], sizes = [8, 1, 128], strides = [1, 1, 1]} : vector<8x8x128xbf16> to vector<8x1x128xbf16>
    %120 = vector.shape_cast %119 : vector<8x1x128xbf16> to vector<8x128xbf16>
    %c3 = arith.constant 3 : index
    %c0_119 = arith.constant 0 : index
    %c0_120 = arith.constant 0 : index
    %121 = vector.load %arg10[%c3, %c0_119, %c0_120] : memref<4x128x1024xbf16, #tpu.memory_space<vmem>>, vector<1x128x1024xbf16>
    %122 = vector.shape_cast %121 : vector<1x128x1024xbf16> to vector<128x1024xbf16>
    %cst_121 = arith.constant dense<0.000000e+00> : vector<8x1024xf32>
    %123 = tpu.matmul %120, %122, %cst_121 {dimension_numbers = #tpu.dot_dimension_numbers<[1], [0], [0], [1], [0, 0, 1, 1], [], []>} : vector<8x128xbf16>, vector<128x1024xbf16>, vector<8x1024xf32> -> vector<8x1024xf32>
    %124 = arith.addf %118, %123 : vector<8x1024xf32>
    %c0_122 = arith.constant 0 : index
    %c0_123 = arith.constant 0 : index
    %125 = vector.load %arg11[%c0_122, %c0_123] : memref<1x1024xf32, #tpu.memory_space<vmem>>, vector<1x1024xf32>
    %126 = vector.broadcast %125 : vector<1x1024xf32> to vector<8x1024xf32>
    %127 = arith.addf %124, %126 : vector<8x1024xf32>
    %cst_124 = arith.constant 0.000000e+00 : f32
    %128 = vector.broadcast %cst_124 : f32 to vector<8x1024xf32>
    %129 = arith.maximumf %127, %128 : vector<8x1024xf32>
    %130 = arith.truncf %129 : vector<8x1024xf32> to vector<8x1024xbf16>
    %c0_125 = arith.constant 0 : index
    %c0_126 = arith.constant 0 : index
    %131 = vector.load %arg12[%c0_125, %c0_126] : memref<1024x512xbf16, #tpu.memory_space<vmem>>, vector<1024x512xbf16>
    %cst_127 = arith.constant dense<0.000000e+00> : vector<8x512xf32>
    %132 = tpu.matmul %130, %131, %cst_127 {dimension_numbers = #tpu.dot_dimension_numbers<[1], [0], [0], [1], [0, 0, 1, 1], [], []>} : vector<8x1024xbf16>, vector<1024x512xbf16>, vector<8x512xf32> -> vector<8x512xf32>
    %c0_128 = arith.constant 0 : index
    %c0_129 = arith.constant 0 : index
    %133 = vector.load %arg13[%c0_128, %c0_129] : memref<1x512xf32, #tpu.memory_space<vmem>>, vector<1x512xf32>
    %134 = vector.broadcast %133 : vector<1x512xf32> to vector<8x512xf32>
    %135 = arith.addf %132, %134 : vector<8x512xf32>
    %cst_130 = arith.constant 0.000000e+00 : f32
    %136 = vector.broadcast %cst_130 : f32 to vector<8x512xf32>
    %137 = arith.maximumf %135, %136 : vector<8x512xf32>
    %138 = arith.truncf %137 : vector<8x512xf32> to vector<8x512xbf16>
    %c0_131 = arith.constant 0 : index
    %c0_132 = arith.constant 0 : index
    %139 = vector.load %arg14[%c0_131, %c0_132] : memref<512x128xbf16, #tpu.memory_space<vmem>>, vector<512x128xbf16>
    %cst_133 = arith.constant dense<0.000000e+00> : vector<8x128xf32>
    %140 = tpu.matmul %138, %139, %cst_133 {dimension_numbers = #tpu.dot_dimension_numbers<[1], [0], [0], [1], [0, 0, 1, 1], [], []>} : vector<8x512xbf16>, vector<512x128xbf16>, vector<8x128xf32> -> vector<8x128xf32>
    %c0_134 = arith.constant 0 : index
    %c0_135 = arith.constant 0 : index
    %141 = vector.load %arg15[%c0_134, %c0_135] : memref<1x128xf32, #tpu.memory_space<vmem>>, vector<1x128xf32>
    %142 = vector.broadcast %141 : vector<1x128xf32> to vector<8x128xf32>
    %143 = arith.addf %140, %142 : vector<8x128xf32>
    %144 = tpu.iota {dimensions = array<i32: 1>} : vector<8x128xi32>
    %c65_i32 = arith.constant 65 : i32
    %145 = vector.broadcast %c65_i32 : i32 to vector<8x128xi32>
    %146 = arith.cmpi slt, %144, %145 : vector<8x128xi32>
    %cst_136 = arith.constant -1.000000e+30 : f32
    %147 = vector.broadcast %cst_136 : f32 to vector<8x128xf32>
    %148 = arith.select %146, %143, %147 : vector<8x128xi1>, vector<8x128xf32>
    %cst_137 = arith.constant dense<0xFF800000> : vector<8xf32>
    %149 = vector.multi_reduction <maximumf>, %148, %cst_137 [1] : vector<8x128xf32> to vector<8xf32>
    %150 = vector.shape_cast %149 : vector<8xf32> to vector<8x1xf32>
    %151 = vector.broadcast %150 : vector<8x1xf32> to vector<8x128xf32>
    %152 = arith.subf %148, %151 : vector<8x128xf32>
    %153 = math.exp %152 : vector<8x128xf32>
    %cst_138 = arith.constant dense<0.000000e+00> : vector<8xf32>
    %154 = vector.multi_reduction <add>, %153, %cst_138 [1] : vector<8x128xf32> to vector<8xf32>
    %155 = vector.shape_cast %154 : vector<8xf32> to vector<8x1xf32>
    %156 = math.log %155 : vector<8x1xf32>
    %157 = arith.addf %156, %150 : vector<8x1xf32>
    %158 = vector.broadcast %157 : vector<8x1xf32> to vector<8x128xf32>
    %159 = arith.subf %143, %158 : vector<8x128xf32>
    %c65_i32_139 = arith.constant 65 : i32
    %160 = vector.broadcast %c65_i32_139 : i32 to vector<8x128xi32>
    %161 = arith.cmpi eq, %144, %160 : vector<8x128xi32>
    %162 = math.tanh %143 : vector<8x128xf32>
    %cst_140 = arith.constant 0.000000e+00 : f32
    %163 = vector.broadcast %cst_140 : f32 to vector<8x128xf32>
    %164 = arith.select %161, %162, %163 : vector<8x128xi1>, vector<8x128xf32>
    %165 = arith.select %146, %159, %164 : vector<8x128xi1>, vector<8x128xf32>
    %c0_141 = arith.constant 0 : index
    %c0_142 = arith.constant 0 : index
    %166 = vector.load %arg16[%c0_141, %c0_142] : memref<8x128xf32, #tpu.memory_space<vmem>>, vector<8x128xf32>
    tpu.vector_store %arg16[%c0_141, %c0_142], %165 {strides = array<i32>} : memref<8x128xf32, #tpu.memory_space<vmem>>, vector<8x128xf32>,
    return
  }
  func.func @transform_0(%arg0: i32) -> (i32, i32, i32) {
    %c0_i32 = arith.constant 0 : i32
    %c0_i32_0 = arith.constant 0 : i32
    %c0_i32_1 = arith.constant 0 : i32
    return %arg0, %c0_i32, %c0_i32_0 : i32, i32, i32
  }
  func.func @transform_1(%arg0: i32) -> (i32, i32, i32) {
    %c0_i32 = arith.constant 0 : i32
    %c0_i32_0 = arith.constant 0 : i32
    %c0_i32_1 = arith.constant 0 : i32
    %c0_i32_2 = arith.constant 0 : i32
    return %c0_i32, %c0_i32_0, %c0_i32_1 : i32, i32, i32
  }
  func.func @transform_2(%arg0: i32) -> (i32, i32) {
    %c0_i32 = arith.constant 0 : i32
    %c0_i32_0 = arith.constant 0 : i32
    %c0_i32_1 = arith.constant 0 : i32
    return %c0_i32, %c0_i32_0 : i32, i32
  }
  func.func @transform_3(%arg0: i32) -> (i32, i32, i32) {
    %c0_i32 = arith.constant 0 : i32
    %c0_i32_0 = arith.constant 0 : i32
    %c0_i32_1 = arith.constant 0 : i32
    %c0_i32_2 = arith.constant 0 : i32
    return %c0_i32, %c0_i32_0, %c0_i32_1 : i32, i32, i32
  }
  func.func @transform_4(%arg0: i32) -> (i32, i32) {
    %c0_i32 = arith.constant 0 : i32
    %c0_i32_0 = arith.constant 0 : i32
    %c0_i32_1 = arith.constant 0 : i32
    return %c0_i32, %c0_i32_0 : i32, i32
  }
  func.func @transform_5(%arg0: i32) -> (i32, i32, i32) {
    %c0_i32 = arith.constant 0 : i32
    %c0_i32_0 = arith.constant 0 : i32
    %c0_i32_1 = arith.constant 0 : i32
    %c0_i32_2 = arith.constant 0 : i32
    return %c0_i32, %c0_i32_0, %c0_i32_1 : i32, i32, i32
  }
  func.func @transform_6(%arg0: i32) -> (i32, i32) {
    %c0_i32 = arith.constant 0 : i32
    %c0_i32_0 = arith.constant 0 : i32
    %c0_i32_1 = arith.constant 0 : i32
    return %c0_i32, %c0_i32_0 : i32, i32
  }
  func.func @transform_7(%arg0: i32) -> (i32, i32, i32) {
    %c0_i32 = arith.constant 0 : i32
    %c0_i32_0 = arith.constant 0 : i32
    %c0_i32_1 = arith.constant 0 : i32
    %c0_i32_2 = arith.constant 0 : i32
    return %c0_i32, %c0_i32_0, %c0_i32_1 : i32, i32, i32
  }
  func.func @transform_8(%arg0: i32) -> (i32, i32) {
    %c0_i32 = arith.constant 0 : i32
    %c0_i32_0 = arith.constant 0 : i32
    %c0_i32_1 = arith.constant 0 : i32
    return %c0_i32, %c0_i32_0 : i32, i32
  }
  func.func @transform_9(%arg0: i32) -> (i32, i32, i32) {
    %c0_i32 = arith.constant 0 : i32
    %c0_i32_0 = arith.constant 0 : i32
    %c0_i32_1 = arith.constant 0 : i32
    %c0_i32_2 = arith.constant 0 : i32
    return %c0_i32, %c0_i32_0, %c0_i32_1 : i32, i32, i32
  }
  func.func @transform_10(%arg0: i32) -> (i32, i32) {
    %c0_i32 = arith.constant 0 : i32
    %c0_i32_0 = arith.constant 0 : i32
    %c0_i32_1 = arith.constant 0 : i32
    return %c0_i32, %c0_i32_0 : i32, i32
  }
  func.func @transform_11(%arg0: i32) -> (i32, i32) {
    %c0_i32 = arith.constant 0 : i32
    %c0_i32_0 = arith.constant 0 : i32
    %c0_i32_1 = arith.constant 0 : i32
    return %c0_i32, %c0_i32_0 : i32, i32
  }
  func.func @transform_12(%arg0: i32) -> (i32, i32) {
    %c0_i32 = arith.constant 0 : i32
    %c0_i32_0 = arith.constant 0 : i32
    %c0_i32_1 = arith.constant 0 : i32
    return %c0_i32, %c0_i32_0 : i32, i32
  }
  func.func @transform_13(%arg0: i32) -> (i32, i32) {
    %c0_i32 = arith.constant 0 : i32
    %c0_i32_0 = arith.constant 0 : i32
    %c0_i32_1 = arith.constant 0 : i32
    return %c0_i32, %c0_i32_0 : i32, i32
  }
  func.func @transform_14(%arg0: i32) -> (i32, i32) {
    %c0_i32 = arith.constant 0 : i32
    %c0_i32_0 = arith.constant 0 : i32
    %c0_i32_1 = arith.constant 0 : i32
    return %c0_i32, %c0_i32_0 : i32, i32
  }
  func.func @transform_15(%arg0: i32) -> (i32, i32) {
    %c0_i32 = arith.constant 0 : i32
    %c0_i32_0 = arith.constant 0 : i32
    return %arg0, %c0_i32 : i32, i32
  }
}

</mosaic_0001>

<llo_original>
// kernel: othello_net_forward_impl.1
$region0: #{othello_net_forward_impl.1}
  #allocation0 [shape = 'u32[]', space=smem, size = 0x4, offset = 0x4, fixed_abs, tag = 'smem constant byte address 0x4 - core index']
  #allocation1 [shape = 'u32[72,128]{1,0:T(1,128)}', space=vmem, size = 0x9000, scoped, tag = 'internal scratch']
  #allocation2 [shape = 'bf16[8,10,320]{2,1,0:T(8,128)(2,1)}', space=vmem, size = 0x18000, scoped, tag = 'scratch operand']
  %s0 = inlined_call_operand.vmem [shape: bf16[8,10,16], index: 0, kind: input, shape index: {}]
  %s1 = inlined_call_operand.vmem [shape: bf16[3,16,320], index: 1, kind: input, shape index: {}]
  %s2 = inlined_call_operand.vmem [shape: f32[1,320], index: 2, kind: input, shape index: {}]
  %s3 = inlined_call_operand.vmem [shape: bf16[3,320,256], index: 3, kind: input, shape index: {}]
  %s4 = inlined_call_operand.vmem [shape: f32[1,256], index: 4, kind: input, shape index: {}]
  %s5 = inlined_call_operand.vmem [shape: bf16[3,256,192], index: 5, kind: input, shape index: {}]
  %s6 = inlined_call_operand.vmem [shape: f32[1,192], index: 6, kind: input, shape index: {}]
  %s7 = inlined_call_operand.vmem [shape: bf16[3,192,128], index: 7, kind: input, shape index: {}]
  %s8 = inlined_call_operand.vmem [shape: f32[1,128], index: 8, kind: input, shape index: {}]
  %s9 = inlined_call_operand.hbm [shape: bf16[4,128,1024], index: 9, kind: input, shape index: {}]
  %s10 = inlined_call_operand.vmem [shape: f32[1,1024], index: 10, kind: input, shape index: {}]
  %s11 = inlined_call_operand.hbm [shape: bf16[1024,512], index: 11, kind: input, shape index: {}]
  %s12 = inlined_call_operand.vmem [shape: f32[1,512], index: 12, kind: input, shape index: {}]
  %s13 = inlined_call_operand.hbm [shape: bf16[512,128], index: 13, kind: input, shape index: {}]
  %s14 = inlined_call_operand.vmem [shape: f32[1,128], index: 14, kind: input, shape index: {}]
  %s15 = inlined_call_operand.vmem [shape: f32[8,128], index: 15, kind: output, shape index: {}]
  %s16 = sld [smem:[#allocation0]]
  $region82: #{othello_net_forward_impl.1} parent=0
    _
  %s18 = ssub.s32 1, %s16
  %s19 = scalar_select 0, %s18, %s16
  $region1: #{othello_net_forward_impl.1} parent=0
    #allocation3 [shape = 'u8[1048576]{0}', space=vmem, size = 0x100000, scoped, tag = 'input window, operand 9, single buffered']
    #allocation4 [shape = 's32[1]{0}', space=sflag, size = 0x4, scoped, tag = 'scoped memory for othello_net_forward_impl.1']
    #allocation5 [shape = 'u8[1048576]{0}', space=vmem, size = 0x100000, scoped, tag = 'input window, operand 11, single buffered']
    #allocation6 [shape = 's32[1]{0}', space=sflag, size = 0x4, scoped, tag = 'scoped memory for othello_net_forward_impl.1']
    #allocation7 [shape = 'u8[131072]{0}', space=vmem, size = 0x20000, scoped, tag = 'input window, operand 13, single buffered']
    %20 = vsyncpa [#allocation4], 0
    %21 = vsyncpa [#allocation6], 0
    // Predicated region
    $region2: #{othello_net_forward_impl.1} parent=1 // pred_check
      _
    $region3: #{othello_net_forward_impl.1} parent=1 // pred_check_branch
      %23 = sbr.rel (0) target = $region5
    $region4: #{othello_net_forward_impl.1} parent=1 // pred_region
      _
    $region5: #{othello_net_forward_impl.1} parent=1 // pred_fallthru
      _
    // Predicated region
    $region6: #{othello_net_forward_impl.1} parent=1 // pred_check
      _
    $region7: #{othello_net_forward_impl.1} parent=1 // pred_check_branch
      %25 = sbr.rel (0) target = $region9
    $region8: #{othello_net_forward_impl.1} parent=1 // pred_region
      _
    $region9: #{othello_net_forward_impl.1} parent=1 // pred_fallthru
      _
    // Predicated region
    $region10: #{othello_net_forward_impl.1} parent=1 // pred_check
      _
    $region11: #{othello_net_forward_impl.1} parent=1 // pred_check_branch
      %27 = sbr.rel (0) target = $region13
    $region12: #{othello_net_forward_impl.1} parent=1 // pred_region
      _
    $region13: #{othello_net_forward_impl.1} parent=1 // pred_fallthru
      _
    // Predicated region
    $region14: #{othello_net_forward_impl.1} parent=1 // pred_check
      _
    $region15: #{othello_net_forward_impl.1} parent=1 // pred_check_branch
      %29 = sbr.rel (0) target = $region17
    $region16: #{othello_net_forward_impl.1} parent=1 // pred_region
      _
    $region17: #{othello_net_forward_impl.1} parent=1 // pred_fallthru
      _
    // Predicated region
    $region18: #{othello_net_forward_impl.1} parent=1 // pred_check
      _
    $region19: #{othello_net_forward_impl.1} parent=1 // pred_check_branch
      %31 = sbr.rel (0) target = $region21
    $region20: #{othello_net_forward_impl.1} parent=1 // pred_region
      _
    $region21: #{othello_net_forward_impl.1} parent=1 // pred_fallthru
      _
    // Predicated region
    $region22: #{othello_net_forward_impl.1} parent=1 // pred_check
      _
    $region23: #{othello_net_forward_impl.1} parent=1 // pred_check_branch
      %33 = sbr.rel (0) target = $region25
    $region24: #{othello_net_forward_impl.1} parent=1 // pred_region
      _
    $region25: #{othello_net_forward_impl.1} parent=1 // pred_fallthru
      _
    // Predicated region
    $region26: #{othello_net_forward_impl.1} parent=1 // pred_check
      _
    $region27: #{othello_net_forward_impl.1} parent=1 // pred_check_branch
      %35 = sbr.rel (0) target = $region29
    $region28: #{othello_net_forward_impl.1} parent=1 // pred_region
      _
    $region29: #{othello_net_forward_impl.1} parent=1 // pred_fallthru
      _
    // Predicated region
    $region30: #{othello_net_forward_impl.1} parent=1 // pred_check
      _
    $region31: #{othello_net_forward_impl.1} parent=1 // pred_check_branch
      %37 = sbr.rel (0) target = $region33
    $region32: #{othello_net_forward_impl.1} parent=1 // pred_region
      _
    $region33: #{othello_net_forward_impl.1} parent=1 // pred_fallthru
      _
    // Predicated region
    $region34: #{othello_net_forward_impl.1} parent=1 // pred_check
      _
    $region35: #{othello_net_forward_impl.1} parent=1 // pred_check_branch
      %39 = sbr.rel (0) target = $region37
    $region36: #{othello_net_forward_impl.1} parent=1 // pred_region
      _
    $region37: #{othello_net_forward_impl.1} parent=1 // pred_fallthru
      _
    // Predicated region
    $region38: #{othello_net_forward_impl.1} parent=1 // pred_check
      _
    $region39: #{othello_net_forward_impl.1} parent=1 // pred_check_branch
      %41 = sbr.rel (0) target = $region41
    $region40: #{othello_net_forward_impl.1} parent=1 // pred_region
      %43 = vsyncadd [#allocation4], 0
      %s44 = sshll.u32 %s9, 4
      %s45 = int_to_ptr.hbm [resolvable:$true] %s44
      %s46 = sshll.u32 [#allocation3], 4
      %s47 = int_to_ptr.vmem [resolvable:$true] %s46
      %52 = dma.hbm_to_vmem [thread:$0]  %s45, 32768, %s47, [#allocation4], 512, 512, 32
    $region41: #{othello_net_forward_impl.1} parent=1 // pred_fallthru
      _
    // Predicated region
    $region42: #{othello_net_forward_impl.1} parent=1 // pred_check
      _
    $region43: #{othello_net_forward_impl.1} parent=1 // pred_check_branch
      %54 = sbr.rel (0) target = $region45
    $region44: #{othello_net_forward_impl.1} parent=1 // pred_region
      _
    $region45: #{othello_net_forward_impl.1} parent=1 // pred_fallthru
      _
    // Predicated region
    $region46: #{othello_net_forward_impl.1} parent=1 // pred_check
      _
    $region47: #{othello_net_forward_impl.1} parent=1 // pred_check_branch
      %56 = sbr.rel (0) target = $region49
    $region48: #{othello_net_forward_impl.1} parent=1 // pred_region
      %58 = vsyncadd [#allocation6], 0
      %s59 = sshll.u32 %s11, 4
      %s60 = int_to_ptr.hbm [resolvable:$true] %s59
      %s61 = sshll.u32 [#allocation5], 4
      %s62 = int_to_ptr.vmem [resolvable:$true] %s61
      %67 = dma.hbm_to_vmem [thread:$0]  %s60, 32768, %s62, [#allocation6], 256, 256, 16
    $region49: #{othello_net_forward_impl.1} parent=1 // pred_fallthru
      _
    // Predicated region
    $region50: #{othello_net_forward_impl.1} parent=1 // pred_check
      _
    $region51: #{othello_net_forward_impl.1} parent=1 // pred_check_branch
      %69 = sbr.rel (0) target = $region53
    $region52: #{othello_net_forward_impl.1} parent=1 // pred_region
      _
    $region53: #{othello_net_forward_impl.1} parent=1 // pred_fallthru
      _
    // Predicated region
    $region54: #{othello_net_forward_impl.1} parent=1 // pred_check
      _
    $region55: #{othello_net_forward_impl.1} parent=1 // pred_check_branch
      %71 = sbr.rel (0) target = $region57
    $region56: #{othello_net_forward_impl.1} parent=1 // pred_region
      %73 = vsyncadd [#allocation6], 0
      %s74 = sshll.u32 %s13, 4
      %s75 = int_to_ptr.hbm [resolvable:$true] %s74
      %s76 = sshll.u32 [#allocation7], 4
      %s77 = int_to_ptr.vmem [resolvable:$true] %s76
      %82 = dma.hbm_to_vmem [thread:$0]  %s75, 4096, %s77, [#allocation6], 64, 64, 4
    $region57: #{othello_net_forward_impl.1} parent=1 // pred_fallthru
      _
    // Predicated region
    $region58: #{othello_net_forward_impl.1} parent=1 // pred_check
      _
    $region59: #{othello_net_forward_impl.1} parent=1 // pred_check_branch
      %84 = sbr.rel (0) target = $region61
    $region60: #{othello_net_forward_impl.1} parent=1 // pred_region
      _
    $region61: #{othello_net_forward_impl.1} parent=1 // pred_fallthru
      _
    // Predicated region
    $region62: #{othello_net_forward_impl.1} parent=1 // pred_check
      _
    $region63: #{othello_net_forward_impl.1} parent=1 // pred_check_branch
      %86 = sbr.rel (0) target = $region65
    $region64: #{othello_net_forward_impl.1} parent=1 // pred_region
      %88 = dma.done [#allocation4], 32768
    $region65: #{othello_net_forward_impl.1} parent=1 // pred_fallthru
      _
    // Predicated region
    $region66: #{othello_net_forward_impl.1} parent=1 // pred_check
      _
    $region67: #{othello_net_forward_impl.1} parent=1 // pred_check_branch
      %90 = sbr.rel (0) target = $region69
    $region68: #{othello_net_forward_impl.1} parent=1 // pred_region
      %92 = dma.done [#allocation6], 32768
    $region69: #{othello_net_forward_impl.1} parent=1 // pred_fallthru
      _
    // Predicated region
    $region70: #{othello_net_forward_impl.1} parent=1 // pred_check
      _
    $region71: #{othello_net_forward_impl.1} parent=1 // pred_check_branch
      %94 = sbr.rel (0) target = $region73
    $region72: #{othello_net_forward_impl.1} parent=1 // pred_region
      %96 = dma.done [#allocation6], 4096
    $region73: #{othello_net_forward_impl.1} parent=1 // pred_fallthru
      _
    %v98 = vld [vmem:[%s0] sm:$0xf]
    %v99 = vld [vmem:[%s0 + $0x8] sm:$0xf]
    %v100 = vld [vmem:[%s0 + $0x10] sm:$0xf]
    %v101 = vld [vmem:[%s0 + $0x18] sm:$0xf]
    %v102 = vld [vmem:[%s0 + $0x20] sm:$0xf]
    %v103 = vld [vmem:[%s0 + $0x28] sm:$0xf]
    %v104 = vld [vmem:[%s0 + $0x30] sm:$0xf]
    %v105 = vld [vmem:[%s0 + $0x38] sm:$0xf]
    %v106 = vld [vmem:[%s1] sm:$0xff]
    %v107 = vld [vmem:[%s1 + $0x8] sm:$0xf]
    %v108 = vld [vmem:[%s1 + $0xc] sm:$0xff]
    %v109 = vld [vmem:[%s1 + $0x14] sm:$0xf]
    %v110 = vld [vmem:[%s0 + $0x4] sm:$0x1]
    %v111 = vld [vmem:[%s0 + $0xc] sm:$0x1]
    %v112 = vld [vmem:[%s0 + $0x14] sm:$0x1]
    %v113 = vld [vmem:[%s0 + $0x1c] sm:$0x1]
    %v114 = vld [vmem:[%s0 + $0x24] sm:$0x1]
    %v115 = vld [vmem:[%s0 + $0x2c] sm:$0x1]
    %v116 = vld [vmem:[%s0 + $0x34] sm:$0x1]
    %v117 = vld [vmem:[%s0 + $0x3c] sm:$0x1]
    %vm118 = vsmask.f32 3328
    %vm119 = vsmask.f32 7440
    %vm120 = vmor %vm118, %vm119
    %v122 = vshrl.u32 %v98, 16
    %v124 = vrot.slane %v122, 4
    %v125 = vshll.u32 %v98, 16
    %v127 = vrot.slane %v125, 5
    %v128 = vor.u32 %v124, %v127
    %v129 = vrot.slane %v128, 4
    %v131 = vshll.u32 %v110, 16
    %v133 = vrot.slane %v131, 5
    %v134 = vsel %vm120, %v129, %v133
    %v136 = vshrl.u32 %v99, 16
    %v138 = vrot.slane %v136, 4
    %v139 = vshll.u32 %v99, 16
    %v141 = vrot.slane %v139, 5
    %v142 = vor.u32 %v138, %v141
    %v143 = vrot.slane %v142, 4
    %v145 = vshll.u32 %v111, 16
    %v147 = vrot.slane %v145, 5
    %v148 = vsel %vm120, %v143, %v147
    %v150 = vshrl.u32 %v100, 16
    %v152 = vrot.slane %v150, 4
    %v153 = vshll.u32 %v100, 16
    %v155 = vrot.slane %v153, 5
    %v156 = vor.u32 %v152, %v155
    %v157 = vrot.slane %v156, 4
    %v159 = vshll.u32 %v112, 16
    %v161 = vrot.slane %v159, 5
    %v162 = vsel %vm120, %v157, %v161
    %v164 = vshrl.u32 %v101, 16
    %v166 = vrot.slane %v164, 4
    %v167 = vshll.u32 %v101, 16
    %v169 = vrot.slane %v167, 5
    %v170 = vor.u32 %v166, %v169
    %v171 = vrot.slane %v170, 4
    %v173 = vshll.u32 %v113, 16
    %v175 = vrot.slane %v173, 5
    %v176 = vsel %vm120, %v171, %v175
    %v178 = vshrl.u32 %v102, 16
    %v180 = vrot.slane %v178, 4
    %v181 = vshll.u32 %v102, 16
    %v183 = vrot.slane %v181, 5
    %v184 = vor.u32 %v180, %v183
    %v185 = vrot.slane %v184, 4
    %v187 = vshll.u32 %v114, 16
    %v189 = vrot.slane %v187, 5
    %v190 = vsel %vm120, %v185, %v189
    %v192 = vshrl.u32 %v103, 16
    %v194 = vrot.slane %v192, 4
    %v195 = vshll.u32 %v103, 16
    %v197 = vrot.slane %v195, 5
    %v198 = vor.u32 %v194, %v197
    %v199 = vrot.slane %v198, 4
    %v201 = vshll.u32 %v115, 16
    %v203 = vrot.slane %v201, 5
    %v204 = vsel %vm120, %v199, %v203
    %v206 = vshrl.u32 %v104, 16
    %v208 = vrot.slane %v206, 4
    %v209 = vshll.u32 %v104, 16
    %v211 = vrot.slane %v209, 5
    %v212 = vor.u32 %v208, %v211
    %v213 = vrot.slane %v212, 4
    %v215 = vshll.u32 %v116, 16
    %v217 = vrot.slane %v215, 5
    %v218 = vsel %vm120, %v213, %v217
    %v220 = vshrl.u32 %v105, 16
    %v222 = vrot.slane %v220, 4
    %v223 = vshll.u32 %v105, 16
    %v225 = vrot.slane %v223, 5
    %v226 = vor.u32 %v222, %v225
    %v227 = vrot.slane %v226, 4
    %v229 = vshll.u32 %v117, 16
    %v231 = vrot.slane %v229, 5
    %v232 = vsel %vm120, %v227, %v231
    %s233 = scalar_lea.vmem %s1, 24
    %v234 = vld [vmem:[%s233] sm:$0xff]
    %v235 = vld [vmem:[%s233 + $0x8] sm:$0xf]
    %v236 = vld [vmem:[%s233 + $0xc] sm:$0xff]
    %v237 = vld [vmem:[%s233 + $0x14] sm:$0xf]
    %v238 = vunpack.c.l.b16 %v134
    %v239 = vunpack.c.l.b16 %v148
    %v240 = vunpack.c.l.b16 %v162
    %v241 = vunpack.c.l.b16 %v176
    %v242 = vunpack.c.l.b16 %v190
    %v243 = vunpack.c.l.b16 %v204
    %v244 = vunpack.c.l.b16 %v218
    %v245 = vunpack.c.l.b16 %v232
    %v246 = vpack.c.b16 %v239, %v238
    %v247 = vpack.c.b16 %v241, %v240
    %v248 = vpack.c.b16 %v243, %v242
    %v249 = vpack.c.b16 %v245, %v244
    %v254 = vunpack.c.l.b16 %v234
    %v255 = vunpack.c.h.b16 %v234
    %v256 = vunpack.c.l.b16 %v235
    %v257 = vunpack.c.l.b16 %v236
    %v258 = vunpack.c.h.b16 %v236
    %v259 = vunpack.c.l.b16 %v237
    %v260 = vpack.c.b16 %v257, %v254
    %v261 = vpack.c.b16 %v258, %v255
    %v262 = vpack.c.b16 %v259, %v256
    %vm266 = vcmask 130048
    %v268 = vsel %vm266, %v246, 0
    %v271 = vsel %vm266, %v247, 0
    %v274 = vsel %vm266, %v248, 0
    %v277 = vsel %vm266, %v249, 0
    %279 = vmatpush.bf16.msra.mxu0 0
    %280 = vmatpush.bf16.msra.mxu0 0
    %281 = vmatpush.bf16.msra.mxu0 0
    %282 = vmatpush.bf16.msra.mxu0 0
    %283 = vmatpush.bf16.msra.mxu0 0
    %284 = vmatpush.bf16.msra.mxu0 0
    %285 = vmatpush.bf16.msra.mxu0 0
    %286 = vmatpush.bf16.msra.mxu0 %v260
    %287 = vmatmul.bf16.gmra.mxu0 %v268
    %v288 = vpop.f32.mrf.mxu0
    %v289 = vadd.f32 0.0, %v288
    %v290 = vpop.f32.mrf.mxu0
    %v291 = vadd.f32 0.0, %v290
    %292 = vmatmul.bf16.gmra.mxu0 %v271
    %v293 = vpop.f32.mrf.mxu0
    %v294 = vadd.f32 0.0, %v293
    %v295 = vpop.f32.mrf.mxu0
    %v296 = vadd.f32 0.0, %v295
    %297 = vmatmul.bf16.gmra.mxu0 %v274
    %v298 = vpop.f32.mrf.mxu0
    %v299 = vadd.f32 0.0, %v298
    %v300 = vpop.f32.mrf.mxu0
    %v301 = vadd.f32 0.0, %v300
    %302 = vmatmul.bf16.gmra.mxu0 %v277
    %v303 = vpop.f32.mrf.mxu0
    %v304 = vadd.f32 0.0, %v303
    %v305 = vpop.f32.mrf.mxu0
    %v306 = vadd.f32 0.0, %v305
    %307 = vdwg.mxu0
    %308 = vmatpush.bf16.msra.mxu0 0
    %309 = vmatpush.bf16.msra.mxu0 0
    %310 = vmatpush.bf16.msra.mxu0 0
    %311 = vmatpush.bf16.msra.mxu0 0
    %312 = vmatpush.bf16.msra.mxu0 0
    %313 = vmatpush.bf16.msra.mxu0 0
    %314 = vmatpush.bf16.msra.mxu0 0
    %315 = vmatpush.bf16.msra.mxu0 %v261
    %316 = vmatmul.bf16.gmra.mxu0 %v268
    %v317 = vpop.f32.mrf.mxu0
    %v318 = vadd.f32 0.0, %v317
    %v319 = vpop.f32.mrf.mxu0
    %v320 = vadd.f32 0.0, %v319
    %321 = vmatmul.bf16.gmra.mxu0 %v271
    %v322 = vpop.f32.mrf.mxu0
    %v323 = vadd.f32 0.0, %v322
    %v324 = vpop.f32.mrf.mxu0
    %v325 = vadd.f32 0.0, %v324
    %326 = vmatmul.bf16.gmra.mxu0 %v274
    %v327 = vpop.f32.mrf.mxu0
    %v328 = vadd.f32 0.0, %v327
    %v329 = vpop.f32.mrf.mxu0
    %v330 = vadd.f32 0.0, %v329
    %331 = vmatmul.bf16.gmra.mxu0 %v277
    %v332 = vpop.f32.mrf.mxu0
    %v333 = vadd.f32 0.0, %v332
    %v334 = vpop.f32.mrf.mxu0
    %v335 = vadd.f32 0.0, %v334
    %336 = vdwg.mxu0
    %337 = vmatpush.bf16.msra.mxu0 0
    %338 = vmatpush.bf16.msra.mxu0 0
    %339 = vmatpush.bf16.msra.mxu0 0
    %340 = vmatpush.bf16.msra.mxu0 0
    %341 = vmatpush.bf16.msra.mxu0 0
    %342 = vmatpush.bf16.msra.mxu0 0
    %343 = vmatpush.bf16.msra.mxu0 0
    %344 = vmatpush.bf16.msra.mxu0 %v262
    %345 = vmatmul.bf16.gmra.mxu0 %v268
    %v346 = vpop.f32.mrf.mxu0
    %v347 = vadd.f32 0.0, %v346
    %v348 = vpop.f32.mrf.mxu0
    %v349 = vadd.f32 0.0, %v348
    %350 = vmatmul.bf16.gmra.mxu0 %v271
    %v351 = vpop.f32.mrf.mxu0
    %v352 = vadd.f32 0.0, %v351
    %v353 = vpop.f32.mrf.mxu0
    %v354 = vadd.f32 0.0, %v353
    %355 = vmatmul.bf16.gmra.mxu0 %v274
    %v356 = vpop.f32.mrf.mxu0
    %v357 = vadd.f32 0.0, %v356
    %v358 = vpop.f32.mrf.mxu0
    %v359 = vadd.f32 0.0, %v358
    %360 = vmatmul.bf16.gmra.mxu0 %v277
    %v361 = vpop.f32.mrf.mxu0
    %v362 = vadd.f32 0.0, %v361
    %v363 = vpop.f32.mrf.mxu0
    %v364 = vadd.f32 0.0, %v363
    %365 = vdwg.mxu0
    %v374 = vunpack.c.l.b16 %v98
    %v375 = vunpack.c.l.b16 %v99
    %v376 = vunpack.c.l.b16 %v100
    %v377 = vunpack.c.l.b16 %v101
    %v378 = vunpack.c.l.b16 %v102
    %v379 = vunpack.c.l.b16 %v103
    %v380 = vunpack.c.l.b16 %v104
    %v381 = vunpack.c.l.b16 %v105
    %v382 = vpack.c.b16 %v375, %v374
    %v383 = vpack.c.b16 %v377, %v376
    %v384 = vpack.c.b16 %v379, %v378
    %v385 = vpack.c.b16 %v381, %v380
    %v390 = vunpack.c.l.b16 %v106
    %v391 = vunpack.c.h.b16 %v106
    %v392 = vunpack.c.l.b16 %v107
    %v393 = vunpack.c.l.b16 %v108
    %v394 = vunpack.c.h.b16 %v108
    %v395 = vunpack.c.l.b16 %v109
    %v396 = vpack.c.b16 %v393, %v390
    %v397 = vpack.c.b16 %v394, %v391
    %v398 = vpack.c.b16 %v395, %v392
    %v403 = vsel %vm266, %v382, 0
    %v406 = vsel %vm266, %v383, 0
    %v409 = vsel %vm266, %v384, 0
    %v412 = vsel %vm266, %v385, 0
    %414 = vmatpush.bf16.msra.mxu0 0
    %415 = vmatpush.bf16.msra.mxu0 0
    %416 = vmatpush.bf16.msra.mxu0 0
    %417 = vmatpush.bf16.msra.mxu0 0
    %418 = vmatpush.bf16.msra.mxu0 0
    %419 = vmatpush.bf16.msra.mxu0 0
    %420 = vmatpush.bf16.msra.mxu0 0
    %421 = vmatpush.bf16.msra.mxu0 %v396
    %422 = vmatmul.bf16.gmra.mxu0 %v403
    %v423 = vpop.f32.mrf.mxu0
    %v424 = vadd.f32 %v289, %v423
    %v425 = vpop.f32.mrf.mxu0
    %v426 = vadd.f32 %v291, %v425
    %427 = vmatmul.bf16.gmra.mxu0 %v406
    %v428 = vpop.f32.mrf.mxu0
    %v429 = vadd.f32 %v294, %v428
    %v430 = vpop.f32.mrf.mxu0
    %v431 = vadd.f32 %v296, %v430
    %432 = vmatmul.bf16.gmra.mxu0 %v409
    %v433 = vpop.f32.mrf.mxu0
    %v434 = vadd.f32 %v299, %v433
    %v435 = vpop.f32.mrf.mxu0
    %v436 = vadd.f32 %v301, %v435
    %437 = vmatmul.bf16.gmra.mxu0 %v412
    %v438 = vpop.f32.mrf.mxu0
    %v439 = vadd.f32 %v304, %v438
    %v440 = vpop.f32.mrf.mxu0
    %v441 = vadd.f32 %v306, %v440
    %442 = vdwg.mxu0
    %443 = vmatpush.bf16.msra.mxu0 0
    %444 = vmatpush.bf16.msra.mxu0 0
    %445 = vmatpush.bf16.msra.mxu0 0
    %446 = vmatpush.bf16.msra.mxu0 0
    %447 = vmatpush.bf16.msra.mxu0 0
    %448 = vmatpush.bf16.msra.mxu0 0
    %449 = vmatpush.bf16.msra.mxu0 0
    %450 = vmatpush.bf16.msra.mxu0 %v397
    %451 = vmatmul.bf16.gmra.mxu0 %v403
    %v452 = vpop.f32.mrf.mxu0
    %v453 = vadd.f32 %v318, %v452
    %v454 = vpop.f32.mrf.mxu0
    %v455 = vadd.f32 %v320, %v454
    %456 = vmatmul.bf16.gmra.mxu0 %v406
    %v457 = vpop.f32.mrf.mxu0
    %v458 = vadd.f32 %v323, %v457
    %v459 = vpop.f32.mrf.mxu0
    %v460 = vadd.f32 %v325, %v459
    %461 = vmatmul.bf16.gmra.mxu0 %v409
    %v462 = vpop.f32.mrf.mxu0
    %v463 = vadd.f32 %v328, %v462
    %v464 = vpop.f32.mrf.mxu0
    %v465 = vadd.f32 %v330, %v464
    %466 = vmatmul.bf16.gmra.mxu0 %v412
    %v467 = vpop.f32.mrf.mxu0
    %v468 = vadd.f32 %v333, %v467
    %v469 = vpop.f32.mrf.mxu0
    %v470 = vadd.f32 %v335, %v469
    %471 = vdwg.mxu0
    %472 = vmatpush.bf16.msra.mxu0 0
    %473 = vmatpush.bf16.msra.mxu0 0
    %474 = vmatpush.bf16.msra.mxu0 0
    %475 = vmatpush.bf16.msra.mxu0 0
    %476 = vmatpush.bf16.msra.mxu0 0
    %477 = vmatpush.bf16.msra.mxu0 0
    %478 = vmatpush.bf16.msra.mxu0 0
    %479 = vmatpush.bf16.msra.mxu0 %v398
    %480 = vmatmul.bf16.gmra.mxu0 %v403
    %v481 = vpop.f32.mrf.mxu0
    %v482 = vadd.f32 %v347, %v481
    %v483 = vpop.f32.mrf.mxu0
    %v484 = vadd.f32 %v349, %v483
    %485 = vmatmul.bf16.gmra.mxu0 %v406
    %v486 = vpop.f32.mrf.mxu0
    %v487 = vadd.f32 %v352, %v486
    %v488 = vpop.f32.mrf.mxu0
    %v489 = vadd.f32 %v354, %v488
    %490 = vmatmul.bf16.gmra.mxu0 %v409
    %v491 = vpop.f32.mrf.mxu0
    %v492 = vadd.f32 %v357, %v491
    %v493 = vpop.f32.mrf.mxu0
    %v494 = vadd.f32 %v359, %v493
    %495 = vmatmul.bf16.gmra.mxu0 %v412
    %v496 = vpop.f32.mrf.mxu0
    %v497 = vadd.f32 %v362, %v496
    %v498 = vpop.f32.mrf.mxu0
    %v499 = vadd.f32 %v364, %v498
    %500 = vdwg.mxu0
    %v501 = vld [vmem:[%s0] sm:$0xe]
    %v502 = vld [vmem:[%s0 + $0x8] sm:$0xe]
    %v503 = vld [vmem:[%s0 + $0x10] sm:$0xe]
    %v504 = vld [vmem:[%s0 + $0x18] sm:$0xe]
    %v505 = vld [vmem:[%s0 + $0x20] sm:$0xe]
    %v506 = vld [vmem:[%s0 + $0x28] sm:$0xe]
    %v507 = vld [vmem:[%s0 + $0x30] sm:$0xe]
    %v508 = vld [vmem:[%s0 + $0x38] sm:$0xe]
    %vm525 = vcmask 1042432
    %vm526 = vcmask 1046532
    %vm527 = vmor %vm525, %vm526
    %v528 = vrot.slane %v501, 5
    %v529 = vrot.slane %v528, 4
    %v530 = vrot.slane %v110, 5
    %v531 = vsel %vm527, %v529, %v530
    %v532 = vrot.slane %v502, 5
    %v533 = vrot.slane %v532, 4
    %v534 = vrot.slane %v111, 5
    %v535 = vsel %vm527, %v533, %v534
    %v536 = vrot.slane %v503, 5
    %v537 = vrot.slane %v536, 4
    %v538 = vrot.slane %v112, 5
    %v539 = vsel %vm527, %v537, %v538
    %v540 = vrot.slane %v504, 5
    %v541 = vrot.slane %v540, 4
    %v542 = vrot.slane %v113, 5
    %v543 = vsel %vm527, %v541, %v542
    %v544 = vrot.slane %v505, 5
    %v545 = vrot.slane %v544, 4
    %v546 = vrot.slane %v114, 5
    %v547 = vsel %vm527, %v545, %v546
    %v548 = vrot.slane %v506, 5
    %v549 = vrot.slane %v548, 4
    %v550 = vrot.slane %v115, 5
    %v551 = vsel %vm527, %v549, %v550
    %v552 = vrot.slane %v507, 5
    %v553 = vrot.slane %v552, 4
    %v554 = vrot.slane %v116, 5
    %v555 = vsel %vm527, %v553, %v554
    %v556 = vrot.slane %v508, 5
    %v557 = vrot.slane %v556, 4
    %v558 = vrot.slane %v117, 5
    %v559 = vsel %vm527, %v557, %v558
    %s560 = scalar_lea.vmem %s1, 48
    %v561 = vld [vmem:[%s560] sm:$0xff]
    %v562 = vld [vmem:[%s560 + $0x8] sm:$0xf]
    %v563 = vld [vmem:[%s560 + $0xc] sm:$0xff]
    %v564 = vld [vmem:[%s560 + $0x14] sm:$0xf]
    %v565 = vunpack.c.l.b16 %v531
    %v566 = vunpack.c.l.b16 %v535
    %v567 = vunpack.c.l.b16 %v539
    %v568 = vunpack.c.l.b16 %v543
    %v569 = vunpack.c.l.b16 %v547
    %v570 = vunpack.c.l.b16 %v551
    %v571 = vunpack.c.l.b16 %v555
    %v572 = vunpack.c.l.b16 %v559
    %v573 = vpack.c.b16 %v566, %v565
    %v574 = vpack.c.b16 %v568, %v567
    %v575 = vpack.c.b16 %v570, %v569
    %v576 = vpack.c.b16 %v572, %v571
    %v581 = vunpack.c.l.b16 %v561
    %v582 = vunpack.c.h.b16 %v561
    %v583 = vunpack.c.l.b16 %v562
    %v584 = vunpack.c.l.b16 %v563
    %v585 = vunpack.c.h.b16 %v563
    %v586 = vunpack.c.l.b16 %v564
    %v587 = vpack.c.b16 %v584, %v581
    %v588 = vpack.c.b16 %v585, %v582
    %v589 = vpack.c.b16 %v586, %v583
    %v594 = vsel %vm266, %v573, 0
    %v597 = vsel %vm266, %v574, 0
    %v600 = vsel %vm266, %v575, 0
    %v603 = vsel %vm266, %v576, 0
    %605 = vmatpush.bf16.msra.mxu0 0
    %606 = vmatpush.bf16.msra.mxu0 0
    %607 = vmatpush.bf16.msra.mxu0 0
    %608 = vmatpush.bf16.msra.mxu0 0
    %609 = vmatpush.bf16.msra.mxu0 0
    %610 = vmatpush.bf16.msra.mxu0 0
    %611 = vmatpush.bf16.msra.mxu0 0
    %612 = vmatpush.bf16.msra.mxu0 %v587
    %613 = vmatmul.bf16.gmra.mxu0 %v594
    %v614 = vpop.f32.mrf.mxu0
    %v615 = vadd.f32 0.0, %v614
    %v616 = vpop.f32.mrf.mxu0
    %v617 = vadd.f32 0.0, %v616
    %618 = vmatmul.bf16.gmra.mxu0 %v597
    %v619 = vpop.f32.mrf.mxu0
    %v620 = vadd.f32 0.0, %v619
    %v621 = vpop.f32.mrf.mxu0
    %v622 = vadd.f32 0.0, %v621
    %623 = vmatmul.bf16.gmra.mxu0 %v600
    %v624 = vpop.f32.mrf.mxu0
    %v625 = vadd.f32 0.0, %v624
    %v626 = vpop.f32.mrf.mxu0
    %v627 = vadd.f32 0.0, %v626
    %628 = vmatmul.bf16.gmra.mxu0 %v603
    %v629 = vpop.f32.mrf.mxu0
    %v630 = vadd.f32 0.0, %v629
    %v631 = vpop.f32.mrf.mxu0
    %v632 = vadd.f32 0.0, %v631
    %633 = vdwg.mxu0
    %634 = vmatpush.bf16.msra.mxu0 0
    %635 = vmatpush.bf16.msra.mxu0 0
    %636 = vmatpush.bf16.msra.mxu0 0
    %637 = vmatpush.bf16.msra.mxu0 0
    %638 = vmatpush.bf16.msra.mxu0 0
    %639 = vmatpush.bf16.msra.mxu0 0
    %640 = vmatpush.bf16.msra.mxu0 0
    %641 = vmatpush.bf16.msra.mxu0 %v588
    %642 = vmatmul.bf16.gmra.mxu0 %v594
    %v643 = vpop.f32.mrf.mxu0
    %v644 = vadd.f32 0.0, %v643
    %v645 = vpop.f32.mrf.mxu0
    %v646 = vadd.f32 0.0, %v645
    %647 = vmatmul.bf16.gmra.mxu0 %v597
    %v648 = vpop.f32.mrf.mxu0
    %v649 = vadd.f32 0.0, %v648
    %v650 = vpop.f32.mrf.mxu0
    %v651 = vadd.f32 0.0, %v650
    %652 = vmatmul.bf16.gmra.mxu0 %v600
    %v653 = vpop.f32.mrf.mxu0
    %v654 = vadd.f32 0.0, %v653
    %v655 = vpop.f32.mrf.mxu0
    %v656 = vadd.f32 0.0, %v655
    %657 = vmatmul.bf16.gmra.mxu0 %v603
    %v658 = vpop.f32.mrf.mxu0
    %v659 = vadd.f32 0.0, %v658
    %v660 = vpop.f32.mrf.mxu0
    %v661 = vadd.f32 0.0, %v660
    %662 = vdwg.mxu0
    %663 = vmatpush.bf16.msra.mxu0 0
    %664 = vmatpush.bf16.msra.mxu0 0
    %665 = vmatpush.bf16.msra.mxu0 0
    %666 = vmatpush.bf16.msra.mxu0 0
    %667 = vmatpush.bf16.msra.mxu0 0
    %668 = vmatpush.bf16.msra.mxu0 0
    %669 = vmatpush.bf16.msra.mxu0 0
    %670 = vmatpush.bf16.msra.mxu0 %v589
    %671 = vmatmul.bf16.gmra.mxu0 %v594
    %v672 = vpop.f32.mrf.mxu0
    %v673 = vadd.f32 0.0, %v672
    %v674 = vpop.f32.mrf.mxu0
    %v675 = vadd.f32 0.0, %v674
    %676 = vmatmul.bf16.gmra.mxu0 %v597
    %v677 = vpop.f32.mrf.mxu0
    %v678 = vadd.f32 0.0, %v677
    %v679 = vpop.f32.mrf.mxu0
    %v680 = vadd.f32 0.0, %v679
    %681 = vmatmul.bf16.gmra.mxu0 %v600
    %v682 = vpop.f32.mrf.mxu0
    %v683 = vadd.f32 0.0, %v682
    %v684 = vpop.f32.mrf.mxu0
    %v685 = vadd.f32 0.0, %v684
    %686 = vmatmul.bf16.gmra.mxu0 %v603
    %v687 = vpop.f32.mrf.mxu0
    %v688 = vadd.f32 0.0, %v687
    %v689 = vpop.f32.mrf.mxu0
    %v690 = vadd.f32 0.0, %v689
    %691 = vdwg.mxu0
    %v692 = vadd.f32 %v424, %v615
    %v693 = vadd.f32 %v453, %v644
    %v694 = vadd.f32 %v482, %v673
    %v695 = vadd.f32 %v426, %v617
    %v696 = vadd.f32 %v455, %v646
    %v697 = vadd.f32 %v484, %v675
    %v698 = vadd.f32 %v429, %v620
    %v699 = vadd.f32 %v458, %v649
    %v700 = vadd.f32 %v487, %v678
    %v701 = vadd.f32 %v431, %v622
    %v702 = vadd.f32 %v460, %v651
    %v703 = vadd.f32 %v489, %v680
    %v704 = vadd.f32 %v434, %v625
    %v705 = vadd.f32 %v463, %v654
    %v706 = vadd.f32 %v492, %v683
    %v707 = vadd.f32 %v436, %v627
    %v708 = vadd.f32 %v465, %v656
    %v709 = vadd.f32 %v494, %v685
    %v710 = vadd.f32 %v439, %v630
    %v711 = vadd.f32 %v468, %v659
    %v712 = vadd.f32 %v497, %v688
    %v713 = vadd.f32 %v441, %v632
    %v714 = vadd.f32 %v470, %v661
    %v715 = vadd.f32 %v499, %v690
    %v716 = vld [vmem:[%s2] sm:$0x7]
    %v718 = vperm.slane %v716, 0
    %v719 = vperm.slane %v716, 1
    %v720 = vperm.slane %v716, 2
    %v724 = vadd.f32 %v692, %v718
    %v725 = vadd.f32 %v693, %v719
    %v726 = vadd.f32 %v694, %v720
    %v727 = vadd.f32 %v695, %v718
    %v728 = vadd.f32 %v696, %v719
    %v729 = vadd.f32 %v697, %v720
    %v730 = vadd.f32 %v698, %v718
    %v731 = vadd.f32 %v699, %v719
    %v732 = vadd.f32 %v700, %v720
    %v733 = vadd.f32 %v701, %v718
    %v734 = vadd.f32 %v702, %v719
    %v735 = vadd.f32 %v703, %v720
    %v736 = vadd.f32 %v704, %v718
    %v737 = vadd.f32 %v705, %v719
    %v738 = vadd.f32 %v706, %v720
    %v739 = vadd.f32 %v707, %v718
    %v740 = vadd.f32 %v708, %v719
    %v741 = vadd.f32 %v709, %v720
    %v742 = vadd.f32 %v710, %v718
    %v743 = vadd.f32 %v711, %v719
    %v744 = vadd.f32 %v712, %v720
    %v745 = vadd.f32 %v713, %v718
    %v746 = vadd.f32 %v714, %v719
    %v747 = vadd.f32 %v715, %v720
    %v748 = vmax.f32 %v724, 0.0
    %v749 = vmax.f32 %v725, 0.0
    %v750 = vmax.f32 %v726, 0.0
    %v751 = vmax.f32 %v727, 0.0
    %v752 = vmax.f32 %v728, 0.0
    %v753 = vmax.f32 %v729, 0.0
    %v754 = vmax.f32 %v730, 0.0
    %v755 = vmax.f32 %v731, 0.0
    %v756 = vmax.f32 %v732, 0.0
    %v757 = vmax.f32 %v733, 0.0
    %v758 = vmax.f32 %v734, 0.0
    %v759 = vmax.f32 %v735, 0.0
    %v760 = vmax.f32 %v736, 0.0
    %v761 = vmax.f32 %v737, 0.0
    %v762 = vmax.f32 %v738, 0.0
    %v763 = vmax.f32 %v739, 0.0
    %v764 = vmax.f32 %v740, 0.0
    %v765 = vmax.f32 %v741, 0.0
    %v766 = vmax.f32 %v742, 0.0
    %v767 = vmax.f32 %v743, 0.0
    %v768 = vmax.f32 %v744, 0.0
    %v769 = vmax.f32 %v745, 0.0
    %v770 = vmax.f32 %v746, 0.0
    %v771 = vmax.f32 %v747, 0.0
    %v772 = vpack.c.bf16 %v749, %v748
    %v773 = vpack.c.bf16 %v750, %v750
    %v774 = vpack.c.bf16 %v752, %v751
    %v775 = vpack.c.bf16 %v753, %v753
    %v776 = vpack.c.bf16 %v755, %v754
    %v777 = vpack.c.bf16 %v756, %v756
    %v778 = vpack.c.bf16 %v758, %v757
    %v779 = vpack.c.bf16 %v759, %v759
    %v780 = vpack.c.bf16 %v761, %v760
    %v781 = vpack.c.bf16 %v762, %v762
    %v782 = vpack.c.bf16 %v764, %v763
    %v783 = vpack.c.bf16 %v765, %v765
    %v784 = vpack.c.bf16 %v767, %v766
    %v785 = vpack.c.bf16 %v768, %v768
    %v786 = vpack.c.bf16 %v770, %v769
    %v787 = vpack.c.bf16 %v771, %v771
    %vm788 = vcmask 1040384
    %vm789 = vsmask.f32 256
    %vm790 = vmand %vm788, %vm789
    %vm791 = vcmask 1044484
    %vm792 = vsmask.f32 4352
    %vm793 = vmand %vm791, %vm792
    %vm794 = vmor %vm793, %vm790
    %v795 = vld [vmem:[#allocation2] sm:$0x11]
    %v796 = vsel %vm794, 0, %v795
    %797 = vst [vmem:[#allocation2] sm:$0x11] %v796
    %vm798 = vcmask 516096
    %vm799 = vmand %vm798, %vm789
    %v800 = vld [vmem:[#allocation2 + $0x8] sm:$0x1]
    %v801 = vsel %vm799, 0, %v800
    %802 = vst [vmem:[#allocation2 + $0x8] sm:$0x1] %v801
    %v803 = vld [vmem:[#allocation2 + $0x18] sm:$0x11]
    %v804 = vsel %vm794, 0, %v803
    %805 = vst [vmem:[#allocation2 + $0x18] sm:$0x11] %v804
    %v806 = vld [vmem:[#allocation2 + $0x20] sm:$0x1]
    %v807 = vsel %vm799, 0, %v806
    %808 = vst [vmem:[#allocation2 + $0x20] sm:$0x1] %v807
    %v809 = vld [vmem:[#allocation2 + $0x30] sm:$0x11]
    %v810 = vsel %vm794, 0, %v809
    %811 = vst [vmem:[#allocation2 + $0x30] sm:$0x11] %v810
    %v812 = vld [vmem:[#allocation2 + $0x38] sm:$0x1]
    %v813 = vsel %vm799, 0, %v812
    %814 = vst [vmem:[#allocation2 + $0x38] sm:$0x1] %v813
    %v815 = vld [vmem:[#allocation2 + $0x48] sm:$0x11]
    %v816 = vsel %vm794, 0, %v815
    %817 = vst [vmem:[#allocation2 + $0x48] sm:$0x11] %v816
    %v818 = vld [vmem:[#allocation2 + $0x50] sm:$0x1]
    %v819 = vsel %vm799, 0, %v818
    %820 = vst [vmem:[#allocation2 + $0x50] sm:$0x1] %v819
    %v821 = vld [vmem:[#allocation2 + $0x60] sm:$0x11]
    %v822 = vsel %vm794, 0, %v821
    %823 = vst [vmem:[#allocation2 + $0x60] sm:$0x11] %v822
    %v824 = vld [vmem:[#allocation2 + $0x68] sm:$0x1]
    %v825 = vsel %vm799, 0, %v824
    %826 = vst [vmem:[#allocation2 + $0x68] sm:$0x1] %v825
    %v827 = vld [vmem:[#allocation2 + $0x78] sm:$0x11]
    %v828 = vsel %vm794, 0, %v827
    %829 = vst [vmem:[#allocation2 + $0x78] sm:$0x11] %v828
    %v830 = vld [vmem:[#allocation2 + $0x80] sm:$0x1]
    %v831 = vsel %vm799, 0, %v830
    %832 = vst [vmem:[#allocation2 + $0x80] sm:$0x1] %v831
    %v833 = vld [vmem:[#allocation2 + $0x90] sm:$0x11]
    %v834 = vsel %vm794, 0, %v833
    %835 = vst [vmem:[#allocation2 + $0x90] sm:$0x11] %v834
    %v836 = vld [vmem:[#allocation2 + $0x98] sm:$0x1]
    %v837 = vsel %vm799, 0, %v836
    %838 = vst [vmem:[#allocation2 + $0x98] sm:$0x1] %v837
    %v839 = vld [vmem:[#allocation2 + $0xa8] sm:$0x11]
    %v840 = vsel %vm794, 0, %v839
    %841 = vst [vmem:[#allocation2 + $0xa8] sm:$0x11] %v840
    %v842 = vld [vmem:[#allocation2 + $0xb0] sm:$0x1]
    %v843 = vsel %vm799, 0, %v842
    %844 = vst [vmem:[#allocation2 + $0xb0] sm:$0x1] %v843
    %vm845 = vsmask.f32 7938
    %vm846 = vmand %vm788, %vm845
    %vm847 = vsmask.f32 7954
    %vm848 = vmand %vm791, %vm847
    %vm849 = vmor %vm848, %vm846
    %v850 = vld [vmem:[#allocation2 + $0xc] sm:$0x11]
    %v851 = vsel %vm849, 0, %v850
    %852 = vst [vmem:[#allocation2 + $0xc] sm:$0x11] %v851
    %vm853 = vmand %vm798, %vm845
    %v854 = vld [vmem:[#allocation2 + $0x14] sm:$0x1]
    %v855 = vsel %vm853, 0, %v854
    %856 = vst [vmem:[#allocation2 + $0x14] sm:$0x1] %v855
    %v857 = vld [vmem:[#allocation2 + $0x24] sm:$0x11]
    %v858 = vsel %vm849, 0, %v857
    %859 = vst [vmem:[#allocation2 + $0x24] sm:$0x11] %v858
    %v860 = vld [vmem:[#allocation2 + $0x2c] sm:$0x1]
    %v861 = vsel %vm853, 0, %v860
    %862 = vst [vmem:[#allocation2 + $0x2c] sm:$0x1] %v861
    %v863 = vld [vmem:[#allocation2 + $0x3c] sm:$0x11]
    %v864 = vsel %vm849, 0, %v863
    %865 = vst [vmem:[#allocation2 + $0x3c] sm:$0x11] %v864
    %v866 = vld [vmem:[#allocation2 + $0x44] sm:$0x1]
    %v867 = vsel %vm853, 0, %v866
    %868 = vst [vmem:[#allocation2 + $0x44] sm:$0x1] %v867
    %v869 = vld [vmem:[#allocation2 + $0x54] sm:$0x11]
    %v870 = vsel %vm849, 0, %v869
    %871 = vst [vmem:[#allocation2 + $0x54] sm:$0x11] %v870
    %v872 = vld [vmem:[#allocation2 + $0x5c] sm:$0x1]
    %v873 = vsel %vm853, 0, %v872
    %874 = vst [vmem:[#allocation2 + $0x5c] sm:$0x1] %v873
    %v875 = vld [vmem:[#allocation2 + $0x6c] sm:$0x11]
    %v876 = vsel %vm849, 0, %v875
    %877 = vst [vmem:[#allocation2 + $0x6c] sm:$0x11] %v876
    %v878 = vld [vmem:[#allocation2 + $0x74] sm:$0x1]
    %v879 = vsel %vm853, 0, %v878
    %880 = vst [vmem:[#allocation2 + $0x74] sm:$0x1] %v879
    %v881 = vld [vmem:[#allocation2 + $0x84] sm:$0x11]
    %v882 = vsel %vm849, 0, %v881
    %883 = vst [vmem:[#allocation2 + $0x84] sm:$0x11] %v882
    %v884 = vld [vmem:[#allocation2 + $0x8c] sm:$0x1]
    %v885 = vsel %vm853, 0, %v884
    %886 = vst [vmem:[#allocation2 + $0x8c] sm:$0x1] %v885
    %v887 = vld [vmem:[#allocation2 + $0x9c] sm:$0x11]
    %v888 = vsel %vm849, 0, %v887
    %889 = vst [vmem:[#allocation2 + $0x9c] sm:$0x11] %v888
    %v890 = vld [vmem:[#allocation2 + $0xa4] sm:$0x1]
    %v891 = vsel %vm853, 0, %v890
    %892 = vst [vmem:[#allocation2 + $0xa4] sm:$0x1] %v891
    %v893 = vld [vmem:[#allocation2 + $0xb4] sm:$0x11]
    %v894 = vsel %vm849, 0, %v893
    %895 = vst [vmem:[#allocation2 + $0xb4] sm:$0x11] %v894
    %v896 = vld [vmem:[#allocation2 + $0xbc] sm:$0x1]
    %v897 = vsel %vm853, 0, %v896
    %898 = vst [vmem:[#allocation2 + $0xbc] sm:$0x1] %v897
    %v900 = vshrl.u32 %v772, 16
    %v902 = vrot.slane %v900, 7
    %v903 = vshll.u32 %v772, 16
    %v905 = vor.u32 %v902, %v903
    %v907 = vshrl.u32 %v773, 16
    %v909 = vrot.slane %v907, 7
    %v910 = vshll.u32 %v773, 16
    %v912 = vor.u32 %v909, %v910
    %v913 = vrot.slane %v902, 4
    %v914 = vrot.slane %v909, 4
    %v916 = vshrl.u32 %v774, 16
    %v918 = vrot.slane %v916, 7
    %v919 = vshll.u32 %v774, 16
    %v921 = vor.u32 %v918, %v919
    %v923 = vshrl.u32 %v775, 16
    %v925 = vrot.slane %v923, 7
    %v926 = vshll.u32 %v775, 16
    %v928 = vor.u32 %v925, %v926
    %v929 = vrot.slane %v918, 4
    %v930 = vrot.slane %v925, 4
    %v932 = vshrl.u32 %v776, 16
    %v934 = vrot.slane %v932, 7
    %v935 = vshll.u32 %v776, 16
    %v937 = vor.u32 %v934, %v935
    %v939 = vshrl.u32 %v777, 16
    %v941 = vrot.slane %v939, 7
    %v942 = vshll.u32 %v777, 16
    %v944 = vor.u32 %v941, %v942
    %v945 = vrot.slane %v934, 4
    %v946 = vrot.slane %v941, 4
    %v948 = vshrl.u32 %v778, 16
    %v950 = vrot.slane %v948, 7
    %v951 = vshll.u32 %v778, 16
    %v953 = vor.u32 %v950, %v951
    %v955 = vshrl.u32 %v779, 16
    %v957 = vrot.slane %v955, 7
    %v958 = vshll.u32 %v779, 16
    %v960 = vor.u32 %v957, %v958
    %v961 = vrot.slane %v950, 4
    %v962 = vrot.slane %v957, 4
    %v964 = vshrl.u32 %v780, 16
    %v966 = vrot.slane %v964, 7
    %v967 = vshll.u32 %v780, 16
    %v969 = vor.u32 %v966, %v967
    %v971 = vshrl.u32 %v781, 16
    %v973 = vrot.slane %v971, 7
    %v974 = vshll.u32 %v781, 16
    %v976 = vor.u32 %v973, %v974
    %v977 = vrot.slane %v966, 4
    %v978 = vrot.slane %v973, 4
    %v980 = vshrl.u32 %v782, 16
    %v982 = vrot.slane %v980, 7
    %v983 = vshll.u32 %v782, 16
    %v985 = vor.u32 %v982, %v983
    %v987 = vshrl.u32 %v783, 16
    %v989 = vrot.slane %v987, 7
    %v990 = vshll.u32 %v783, 16
    %v992 = vor.u32 %v989, %v990
    %v993 = vrot.slane %v982, 4
    %v994 = vrot.slane %v989, 4
    %v996 = vshrl.u32 %v784, 16
    %v998 = vrot.slane %v996, 7
    %v999 = vshll.u32 %v784, 16
    %v1001 = vor.u32 %v998, %v999
    %v1003 = vshrl.u32 %v785, 16
    %v1005 = vrot.slane %v1003, 7
    %v1006 = vshll.u32 %v785, 16
    %v1008 = vor.u32 %v1005, %v1006
    %v1009 = vrot.slane %v998, 4
    %v1010 = vrot.slane %v1005, 4
    %v1012 = vshrl.u32 %v786, 16
    %v1014 = vrot.slane %v1012, 7
    %v1015 = vshll.u32 %v786, 16
    %v1017 = vor.u32 %v1014, %v1015
    %v1019 = vshrl.u32 %v787, 16
    %v1021 = vrot.slane %v1019, 7
    %v1022 = vshll.u32 %v787, 16
    %v1024 = vor.u32 %v1021, %v1022
    %v1025 = vrot.slane %v1014, 4
    %v1026 = vrot.slane %v1021, 4
    %vm1059 = vcmask 1043456
    %vm1060 = vmand %vm1059, %vm845
    %vm1061 = vcmask 1047556
    %vm1062 = vmand %vm1061, %vm847
    %vm1063 = vmor %vm1062, %vm1060
    %v1064 = vld [vmem:[#allocation2] sm:$0xff]
    %v1065 = vsel %vm1063, %v905, %v1064
    %1066 = vst [vmem:[#allocation2] sm:$0xff] %v1065
    %vm1067 = vcmask 519168
    %vm1068 = vmand %vm1067, %vm845
    %v1069 = vld [vmem:[#allocation2 + $0x8] sm:$0xf]
    %v1070 = vsel %vm1068, %v912, %v1069
    %1071 = vst [vmem:[#allocation2 + $0x8] sm:$0xf] %v1070
    %v1072 = vld [vmem:[#allocation2 + $0xc] sm:$0x11]
    %v1073 = vsel %vm794, %v913, %v1072
    %1074 = vst [vmem:[#allocation2 + $0xc] sm:$0x11] %v1073
    %v1075 = vld [vmem:[#allocation2 + $0x14] sm:$0x1]
    %v1076 = vsel %vm799, %v914, %v1075
    %1077 = vst [vmem:[#allocation2 + $0x14] sm:$0x1] %v1076
    %v1078 = vld [vmem:[#allocation2 + $0x18] sm:$0xff]
    %v1079 = vsel %vm1063, %v921, %v1078
    %1080 = vst [vmem:[#allocation2 + $0x18] sm:$0xff] %v1079
    %v1081 = vld [vmem:[#allocation2 + $0x20] sm:$0xf]
    %v1082 = vsel %vm1068, %v928, %v1081
    %1083 = vst [vmem:[#allocation2 + $0x20] sm:$0xf] %v1082
    %v1084 = vld [vmem:[#allocation2 + $0x24] sm:$0x11]
    %v1085 = vsel %vm794, %v929, %v1084
    %1086 = vst [vmem:[#allocation2 + $0x24] sm:$0x11] %v1085
    %v1087 = vld [vmem:[#allocation2 + $0x2c] sm:$0x1]
    %v1088 = vsel %vm799, %v930, %v1087
    %1089 = vst [vmem:[#allocation2 + $0x2c] sm:$0x1] %v1088
    %v1090 = vld [vmem:[#allocation2 + $0x30] sm:$0xff]
    %v1091 = vsel %vm1063, %v937, %v1090
    %1092 = vst [vmem:[#allocation2 + $0x30] sm:$0xff] %v1091
    %v1093 = vld [vmem:[#allocation2 + $0x38] sm:$0xf]
    %v1094 = vsel %vm1068, %v944, %v1093
    %1095 = vst [vmem:[#allocation2 + $0x38] sm:$0xf] %v1094
    %v1096 = vld [vmem:[#allocation2 + $0x3c] sm:$0x11]
    %v1097 = vsel %vm794, %v945, %v1096
    %1098 = vst [vmem:[#allocation2 + $0x3c] sm:$0x11] %v1097
    %v1099 = vld [vmem:[#allocation2 + $0x44] sm:$0x1]
    %v1100 = vsel %vm799, %v946, %v1099
    %1101 = vst [vmem:[#allocation2 + $0x44] sm:$0x1] %v1100
    %v1102 = vld [vmem:[#allocation2 + $0x48] sm:$0xff]
    %v1103 = vsel %vm1063, %v953, %v1102
    %1104 = vst [vmem:[#allocation2 + $0x48] sm:$0xff] %v1103
    %v1105 = vld [vmem:[#allocation2 + $0x50] sm:$0xf]
    %v1106 = vsel %vm1068, %v960, %v1105
    %1107 = vst [vmem:[#allocation2 + $0x50] sm:$0xf] %v1106
    %v1108 = vld [vmem:[#allocation2 + $0x54] sm:$0x11]
    %v1109 = vsel %vm794, %v961, %v1108
    %1110 = vst [vmem:[#allocation2 + $0x54] sm:$0x11] %v1109
    %v1111 = vld [vmem:[#allocation2 + $0x5c] sm:$0x1]
    %v1112 = vsel %vm799, %v962, %v1111
    %1113 = vst [vmem:[#allocation2 + $0x5c] sm:$0x1] %v1112
    %v1114 = vld [vmem:[#allocation2 + $0x60] sm:$0xff]
    %v1115 = vsel %vm1063, %v969, %v1114
    %1116 = vst [vmem:[#allocation2 + $0x60] sm:$0xff] %v1115
    %v1117 = vld [vmem:[#allocation2 + $0x68] sm:$0xf]
    %v1118 = vsel %vm1068, %v976, %v1117
    %1119 = vst [vmem:[#allocation2 + $0x68] sm:$0xf] %v1118
    %v1120 = vld [vmem:[#allocation2 + $0x6c] sm:$0x11]
    %v1121 = vsel %vm794, %v977, %v1120
    %1122 = vst [vmem:[#allocation2 + $0x6c] sm:$0x11] %v1121
    %v1123 = vld [vmem:[#allocation2 + $0x74] sm:$0x1]
    %v1124 = vsel %vm799, %v978, %v1123
    %1125 = vst [vmem:[#allocation2 + $0x74] sm:$0x1] %v1124
    %v1126 = vld [vmem:[#allocation2 + $0x78] sm:$0xff]
    %v1127 = vsel %vm1063, %v985, %v1126
    %1128 = vst [vmem:[#allocation2 + $0x78] sm:$0xff] %v1127
    %v1129 = vld [vmem:[#allocation2 + $0x80] sm:$0xf]
    %v1130 = vsel %vm1068, %v992, %v1129
    %1131 = vst [vmem:[#allocation2 + $0x80] sm:$0xf] %v1130
    %v1132 = vld [vmem:[#allocation2 + $0x84] sm:$0x11]
    %v1133 = vsel %vm794, %v993, %v1132
    %1134 = vst [vmem:[#allocation2 + $0x84] sm:$0x11] %v1133
    %v1135 = vld [vmem:[#allocation2 + $0x8c] sm:$0x1]
    %v1136 = vsel %vm799, %v994, %v1135
    %1137 = vst [vmem:[#allocation2 + $0x8c] sm:$0x1] %v1136
    %v1138 = vld [vmem:[#allocation2 + $0x90] sm:$0xff]
    %v1139 = vsel %vm1063, %v1001, %v1138
    %1140 = vst [vmem:[#allocation2 + $0x90] sm:$0xff] %v1139
    %v1141 = vld [vmem:[#allocation2 + $0x98] sm:$0xf]
    %v1142 = vsel %vm1068, %v1008, %v1141
    %1143 = vst [vmem:[#allocation2 + $0x98] sm:$0xf] %v1142
    %v1144 = vld [vmem:[#allocation2 + $0x9c] sm:$0x11]
    %v1145 = vsel %vm794, %v1009, %v1144
    %1146 = vst [vmem:[#allocation2 + $0x9c] sm:$0x11] %v1145
    %v1147 = vld [vmem:[#allocation2 + $0xa4] sm:$0x1]
    %v1148 = vsel %vm799, %v1010, %v1147
    %1149 = vst [vmem:[#allocation2 + $0xa4] sm:$0x1] %v1148
    %v1150 = vld [vmem:[#allocation2 + $0xa8] sm:$0xff]
    %v1151 = vsel %vm1063, %v1017, %v1150
    %1152 = vst [vmem:[#allocation2 + $0xa8] sm:$0xff] %v1151
    %v1153 = vld [vmem:[#allocation2 + $0xb0] sm:$0xf]
    %v1154 = vsel %vm1068, %v1024, %v1153
    %1155 = vst [vmem:[#allocation2 + $0xb0] sm:$0xf] %v1154
    %v1156 = vld [vmem:[#allocation2 + $0xb4] sm:$0x11]
    %v1157 = vsel %vm794, %v1025, %v1156
    %1158 = vst [vmem:[#allocation2 + $0xb4] sm:$0x11] %v1157
    %v1159 = vld [vmem:[#allocation2 + $0xbc] sm:$0x1]
    %v1160 = vsel %vm799, %v1026, %v1159
    %1161 = vst [vmem:[#allocation2 + $0xbc] sm:$0x1] %v1160
    %v1162 = vld [vmem:[#allocation2] sm:$0xff]
    %v1163 = vld [vmem:[#allocation2 + $0x8] sm:$0xf]
    %v1164 = vld [vmem:[#allocation2 + $0x18] sm:$0xff]
    %v1165 = vld [vmem:[#allocation2 + $0x20] sm:$0xf]
    %v1166 = vld [vmem:[#allocation2 + $0x30] sm:$0xff]
    %v1167 = vld [vmem:[#allocation2 + $0x38] sm:$0xf]
    %v1168 = vld [vmem:[#allocation2 + $0x48] sm:$0xff]
    %v1169 = vld [vmem:[#allocation2 + $0x50] sm:$0xf]
    %v1170 = vld [vmem:[#allocation2 + $0x60] sm:$0xff]
    %v1171 = vld [vmem:[#allocation2 + $0x68] sm:$0xf]
    %v1172 = vld [vmem:[#allocation2 + $0x78] sm:$0xff]
    %v1173 = vld [vmem:[#allocation2 + $0x80] sm:$0xf]
    %v1174 = vld [vmem:[#allocation2 + $0x90] sm:$0xff]
    %v1175 = vld [vmem:[#allocation2 + $0x98] sm:$0xf]
    %v1176 = vld [vmem:[#allocation2 + $0xa8] sm:$0xff]
    %v1177 = vld [vmem:[#allocation2 + $0xb0] sm:$0xf]
    %v1178 = vld [vmem:[%s3] sm:$0xff]
    %v1179 = vld [vmem:[%s3 + $0x8] sm:$0xff]
    %v1180 = vld [vmem:[%s3 + $0x10] sm:$0xff]
    %v1181 = vld [vmem:[%s3 + $0x18] sm:$0xff]
    %v1182 = vld [vmem:[%s3 + $0x20] sm:$0xff]
    %v1183 = vld [vmem:[%s3 + $0x28] sm:$0xff]
    %v1184 = vld [vmem:[%s3 + $0x30] sm:$0xff]
    %v1185 = vld [vmem:[%s3 + $0x38] sm:$0xff]
    %v1186 = vld [vmem:[%s3 + $0x40] sm:$0xff]
    %v1187 = vld [vmem:[%s3 + $0x48] sm:$0xff]
    %v1188 = vld [vmem:[%s3 + $0x50] sm:$0xff]
    %v1189 = vld [vmem:[%s3 + $0x58] sm:$0xff]
    %v1190 = vld [vmem:[%s3 + $0x60] sm:$0xff]
    %v1191 = vld [vmem:[%s3 + $0x68] sm:$0xff]
    %v1192 = vld [vmem:[%s3 + $0x70] sm:$0xff]
    %v1193 = vld [vmem:[%s3 + $0x78] sm:$0xff]
    %v1194 = vld [vmem:[%s3 + $0x80] sm:$0xff]
    %v1195 = vld [vmem:[%s3 + $0x88] sm:$0xff]
    %v1196 = vld [vmem:[%s3 + $0x90] sm:$0xff]
    %v1197 = vld [vmem:[%s3 + $0x98] sm:$0xff]
    %v1198 = vld [vmem:[%s3 + $0xa0] sm:$0xff]
    %v1199 = vld [vmem:[%s3 + $0xa8] sm:$0xff]
    %v1200 = vld [vmem:[%s3 + $0xb0] sm:$0xff]
    %v1201 = vld [vmem:[%s3 + $0xb8] sm:$0xff]
    %v1202 = vld [vmem:[%s3 + $0xc0] sm:$0xff]
    %v1203 = vld [vmem:[%s3 + $0xc8] sm:$0xff]
    %v1204 = vld [vmem:[%s3 + $0xd0] sm:$0xff]
    %v1205 = vld [vmem:[%s3 + $0xd8] sm:$0xff]
    %v1206 = vld [vmem:[%s3 + $0xe0] sm:$0xff]
    %v1207 = vld [vmem:[%s3 + $0xe8] sm:$0xff]
    %v1208 = vld [vmem:[%s3 + $0xf0] sm:$0xff]
    %v1209 = vld [vmem:[%s3 + $0xf8] sm:$0xff]
    %v1210 = vld [vmem:[%s3 + $0x100] sm:$0xff]
    %v1211 = vld [vmem:[%s3 + $0x108] sm:$0xff]
    %v1212 = vld [vmem:[%s3 + $0x110] sm:$0xff]
    %v1213 = vld [vmem:[%s3 + $0x118] sm:$0xff]
    %v1214 = vld [vmem:[%s3 + $0x120] sm:$0xff]
    %v1215 = vld [vmem:[%s3 + $0x128] sm:$0xff]
    %v1216 = vld [vmem:[%s3 + $0x130] sm:$0xff]
    %v1217 = vld [vmem:[%s3 + $0x138] sm:$0xff]
    %v1218 = vld [vmem:[#allocation2 + $0xc] sm:$0x11]
    %v1219 = vld [vmem:[#allocation2 + $0x14] sm:$0x1]
    %v1220 = vld [vmem:[#allocation2 + $0x24] sm:$0x11]
    %v1221 = vld [vmem:[#allocation2 + $0x2c] sm:$0x1]
    %v1222 = vld [vmem:[#allocation2 + $0x3c] sm:$0x11]
    %v1223 = vld [vmem:[#allocation2 + $0x44] sm:$0x1]
    %v1224 = vld [vmem:[#allocation2 + $0x54] sm:$0x11]
    %v1225 = vld [vmem:[#allocation2 + $0x5c] sm:$0x1]
    %v1226 = vld [vmem:[#allocation2 + $0x6c] sm:$0x11]
    %v1227 = vld [vmem:[#allocation2 + $0x74] sm:$0x1]
    %v1228 = vld [vmem:[#allocation2 + $0x84] sm:$0x11]
    %v1229 = vld [vmem:[#allocation2 + $0x8c] sm:$0x1]
    %v1230 = vld [vmem:[#allocation2 + $0x9c] sm:$0x11]
    %v1231 = vld [vmem:[#allocation2 + $0xa4] sm:$0x1]
    %v1232 = vld [vmem:[#allocation2 + $0xb4] sm:$0x11]
    %v1233 = vld [vmem:[#allocation2 + $0xbc] sm:$0x1]
    %v1235 = vshrl.u32 %v1162, 16
    %v1237 = vrot.slane %v1235, 4
    %v1238 = vshll.u32 %v1162, 16
    %v1240 = vrot.slane %v1238, 5
    %v1241 = vor.u32 %v1237, %v1240
    %v1242 = vrot.slane %v1241, 4
    %v1244 = vshll.u32 %v1218, 16
    %v1246 = vrot.slane %v1244, 5
    %v1247 = vsel %vm120, %v1242, %v1246
    %v1249 = vshrl.u32 %v1163, 16
    %v1251 = vrot.slane %v1249, 4
    %v1252 = vshll.u32 %v1163, 16
    %v1254 = vrot.slane %v1252, 5
    %v1255 = vor.u32 %v1251, %v1254
    %v1256 = vrot.slane %v1255, 4
    %v1258 = vshll.u32 %v1219, 16
    %v1260 = vrot.slane %v1258, 5
    %v1261 = vsel %vm120, %v1256, %v1260
    %v1263 = vshrl.u32 %v1164, 16
    %v1265 = vrot.slane %v1263, 4
    %v1266 = vshll.u32 %v1164, 16
    %v1268 = vrot.slane %v1266, 5
    %v1269 = vor.u32 %v1265, %v1268
    %v1270 = vrot.slane %v1269, 4
    %v1272 = vshll.u32 %v1220, 16
    %v1274 = vrot.slane %v1272, 5
    %v1275 = vsel %vm120, %v1270, %v1274
    %v1277 = vshrl.u32 %v1165, 16
    %v1279 = vrot.slane %v1277, 4
    %v1280 = vshll.u32 %v1165, 16
    %v1282 = vrot.slane %v1280, 5
    %v1283 = vor.u32 %v1279, %v1282
    %v1284 = vrot.slane %v1283, 4
    %v1286 = vshll.u32 %v1221, 16
    %v1288 = vrot.slane %v1286, 5
    %v1289 = vsel %vm120, %v1284, %v1288
    %v1291 = vshrl.u32 %v1166, 16
    %v1293 = vrot.slane %v1291, 4
    %v1294 = vshll.u32 %v1166, 16
    %v1296 = vrot.slane %v1294, 5
    %v1297 = vor.u32 %v1293, %v1296
    %v1298 = vrot.slane %v1297, 4
    %v1300 = vshll.u32 %v1222, 16
    %v1302 = vrot.slane %v1300, 5
    %v1303 = vsel %vm120, %v1298, %v1302
    %v1305 = vshrl.u32 %v1167, 16
    %v1307 = vrot.slane %v1305, 4
    %v1308 = vshll.u32 %v1167, 16
    %v1310 = vrot.slane %v1308, 5
    %v1311 = vor.u32 %v1307, %v1310
    %v1312 = vrot.slane %v1311, 4
    %v1314 = vshll.u32 %v1223, 16
    %v1316 = vrot.slane %v1314, 5
    %v1317 = vsel %vm120, %v1312, %v1316
    %v1319 = vshrl.u32 %v1168, 16
    %v1321 = vrot.slane %v1319, 4
    %v1322 = vshll.u32 %v1168, 16
    %v1324 = vrot.slane %v1322, 5
    %v1325 = vor.u32 %v1321, %v1324
    %v1326 = vrot.slane %v1325, 4
    %v1328 = vshll.u32 %v1224, 16
    %v1330 = vrot.slane %v1328, 5
    %v1331 = vsel %vm120, %v1326, %v1330
    %v1333 = vshrl.u32 %v1169, 16
    %v1335 = vrot.slane %v1333, 4
    %v1336 = vshll.u32 %v1169, 16
    %v1338 = vrot.slane %v1336, 5
    %v1339 = vor.u32 %v1335, %v1338
    %v1340 = vrot.slane %v1339, 4
    %v1342 = vshll.u32 %v1225, 16
    %v1344 = vrot.slane %v1342, 5
    %v1345 = vsel %vm120, %v1340, %v1344
    %v1347 = vshrl.u32 %v1170, 16
    %v1349 = vrot.slane %v1347, 4
    %v1350 = vshll.u32 %v1170, 16
    %v1352 = vrot.slane %v1350, 5
    %v1353 = vor.u32 %v1349, %v1352
    %v1354 = vrot.slane %v1353, 4
    %v1356 = vshll.u32 %v1226, 16
    %v1358 = vrot.slane %v1356, 5
    %v1359 = vsel %vm120, %v1354, %v1358
    %v1361 = vshrl.u32 %v1171, 16
    %v1363 = vrot.slane %v1361, 4
    %v1364 = vshll.u32 %v1171, 16
    %v1366 = vrot.slane %v1364, 5
    %v1367 = vor.u32 %v1363, %v1366
    %v1368 = vrot.slane %v1367, 4
    %v1370 = vshll.u32 %v1227, 16
    %v1372 = vrot.slane %v1370, 5
    %v1373 = vsel %vm120, %v1368, %v1372
    %v1375 = vshrl.u32 %v1172, 16
    %v1377 = vrot.slane %v1375, 4
    %v1378 = vshll.u32 %v1172, 16
    %v1380 = vrot.slane %v1378, 5
    %v1381 = vor.u32 %v1377, %v1380
    %v1382 = vrot.slane %v1381, 4
    %v1384 = vshll.u32 %v1228, 16
    %v1386 = vrot.slane %v1384, 5
    %v1387 = vsel %vm120, %v1382, %v1386
    %v1389 = vshrl.u32 %v1173, 16
    %v1391 = vrot.slane %v1389, 4
    %v1392 = vshll.u32 %v1173, 16
    %v1394 = vrot.slane %v1392, 5
    %v1395 = vor.u32 %v1391, %v1394
    %v1396 = vrot.slane %v1395, 4
    %v1398 = vshll.u32 %v1229, 16
    %v1400 = vrot.slane %v1398, 5
    %v1401 = vsel %vm120, %v1396, %v1400
    %v1403 = vshrl.u32 %v1174, 16
    %v1405 = vrot.slane %v1403, 4
    %v1406 = vshll.u32 %v1174, 16
    %v1408 = vrot.slane %v1406, 5
    %v1409 = vor.u32 %v1405, %v1408
    %v1410 = vrot.slane %v1409, 4
    %v1412 = vshll.u32 %v1230, 16
    %v1414 = vrot.slane %v1412, 5
    %v1415 = vsel %vm120, %v1410, %v1414
    %v1417 = vshrl.u32 %v1175, 16
    %v1419 = vrot.slane %v1417, 4
    %v1420 = vshll.u32 %v1175, 16
    %v1422 = vrot.slane %v1420, 5
    %v1423 = vor.u32 %v1419, %v1422
    %v1424 = vrot.slane %v1423, 4
    %v1426 = vshll.u32 %v1231, 16
    %v1428 = vrot.slane %v1426, 5
    %v1429 = vsel %vm120, %v1424, %v1428
    %v1431 = vshrl.u32 %v1176, 16
    %v1433 = vrot.slane %v1431, 4
    %v1434 = vshll.u32 %v1176, 16
    %v1436 = vrot.slane %v1434, 5
    %v1437 = vor.u32 %v1433, %v1436
    %v1438 = vrot.slane %v1437, 4
    %v1440 = vshll.u32 %v1232, 16
    %v1442 = vrot.slane %v1440, 5
    %v1443 = vsel %vm120, %v1438, %v1442
    %v1445 = vshrl.u32 %v1177, 16
    %v1447 = vrot.slane %v1445, 4
    %v1448 = vshll.u32 %v1177, 16
    %v1450 = vrot.slane %v1448, 5
    %v1451 = vor.u32 %v1447, %v1450
    %v1452 = vrot.slane %v1451, 4
    %v1454 = vshll.u32 %v1233, 16
    %v1456 = vrot.slane %v1454, 5
    %v1457 = vsel %vm120, %v1452, %v1456
    %s1458 = scalar_lea.vmem %s3, 320
    %v1459 = vld [vmem:[%s1458] sm:$0xff]
    %v1460 = vld [vmem:[%s1458 + $0x8] sm:$0xff]
    %v1461 = vld [vmem:[%s1458 + $0x10] sm:$0xff]
    %v1462 = vld [vmem:[%s1458 + $0x18] sm:$0xff]
    %v1463 = vld [vmem:[%s1458 + $0x20] sm:$0xff]
    %v1464 = vld [vmem:[%s1458 + $0x28] sm:$0xff]
    %v1465 = vld [vmem:[%s1458 + $0x30] sm:$0xff]
    %v1466 = vld [vmem:[%s1458 + $0x38] sm:$0xff]
    %v1467 = vld [vmem:[%s1458 + $0x40] sm:$0xff]
    %v1468 = vld [vmem:[%s1458 + $0x48] sm:$0xff]
    %v1469 = vld [vmem:[%s1458 + $0x50] sm:$0xff]
    %v1470 = vld [vmem:[%s1458 + $0x58] sm:$0xff]
    %v1471 = vld [vmem:[%s1458 + $0x60] sm:$0xff]
    %v1472 = vld [vmem:[%s1458 + $0x68] sm:$0xff]
    %v1473 = vld [vmem:[%s1458 + $0x70] sm:$0xff]
    %v1474 = vld [vmem:[%s1458 + $0x78] sm:$0xff]
    %v1475 = vld [vmem:[%s1458 + $0x80] sm:$0xff]
    %v1476 = vld [vmem:[%s1458 + $0x88] sm:$0xff]
    %v1477 = vld [vmem:[%s1458 + $0x90] sm:$0xff]
    %v1478 = vld [vmem:[%s1458 + $0x98] sm:$0xff]
    %v1479 = vld [vmem:[%s1458 + $0xa0] sm:$0xff]
    %v1480 = vld [vmem:[%s1458 + $0xa8] sm:$0xff]
    %v1481 = vld [vmem:[%s1458 + $0xb0] sm:$0xff]
    %v1482 = vld [vmem:[%s1458 + $0xb8] sm:$0xff]
    %v1483 = vld [vmem:[%s1458 + $0xc0] sm:$0xff]
    %v1484 = vld [vmem:[%s1458 + $0xc8] sm:$0xff]
    %v1485 = vld [vmem:[%s1458 + $0xd0] sm:$0xff]
    %v1486 = vld [vmem:[%s1458 + $0xd8] sm:$0xff]
    %v1487 = vld [vmem:[%s1458 + $0xe0] sm:$0xff]
    %v1488 = vld [vmem:[%s1458 + $0xe8] sm:$0xff]
    %v1489 = vld [vmem:[%s1458 + $0xf0] sm:$0xff]
    %v1490 = vld [vmem:[%s1458 + $0xf8] sm:$0xff]
    %v1491 = vld [vmem:[%s1458 + $0x100] sm:$0xff]
    %v1492 = vld [vmem:[%s1458 + $0x108] sm:$0xff]
    %v1493 = vld [vmem:[%s1458 + $0x110] sm:$0xff]
    %v1494 = vld [vmem:[%s1458 + $0x118] sm:$0xff]
    %v1495 = vld [vmem:[%s1458 + $0x120] sm:$0xff]
    %v1496 = vld [vmem:[%s1458 + $0x128] sm:$0xff]
    %v1497 = vld [vmem:[%s1458 + $0x130] sm:$0xff]
    %v1498 = vld [vmem:[%s1458 + $0x138] sm:$0xff]
    %v1499 = vunpack.c.l.b16 %v1247
    %v1500 = vunpack.c.h.b16 %v1247
    %v1501 = vunpack.c.l.b16 %v1261
    %v1502 = vunpack.c.l.b16 %v1275
    %v1503 = vunpack.c.h.b16 %v1275
    %v1504 = vunpack.c.l.b16 %v1289
    %v1505 = vunpack.c.l.b16 %v1303
    %v1506 = vunpack.c.h.b16 %v1303
    %v1507 = vunpack.c.l.b16 %v1317
    %v1508 = vunpack.c.l.b16 %v1331
    %v1509 = vunpack.c.h.b16 %v1331
    %v1510 = vunpack.c.l.b16 %v1345
    %v1511 = vunpack.c.l.b16 %v1359
    %v1512 = vunpack.c.h.b16 %v1359
    %v1513 = vunpack.c.l.b16 %v1373
    %v1514 = vunpack.c.l.b16 %v1387
    %v1515 = vunpack.c.h.b16 %v1387
    %v1516 = vunpack.c.l.b16 %v1401
    %v1517 = vunpack.c.l.b16 %v1415
    %v1518 = vunpack.c.h.b16 %v1415
    %v1519 = vunpack.c.l.b16 %v1429
    %v1520 = vunpack.c.l.b16 %v1443
    %v1521 = vunpack.c.h.b16 %v1443
    %v1522 = vunpack.c.l.b16 %v1457
    %v1523 = vpack.c.b16 %v1502, %v1499
    %v1524 = vpack.c.b16 %v1503, %v1500
    %v1525 = vpack.c.b16 %v1504, %v1501
    %v1526 = vpack.c.b16 %v1508, %v1505
    %v1527 = vpack.c.b16 %v1509, %v1506
    %v1528 = vpack.c.b16 %v1510, %v1507
    %v1529 = vpack.c.b16 %v1514, %v1511
    %v1530 = vpack.c.b16 %v1515, %v1512
    %v1531 = vpack.c.b16 %v1516, %v1513
    %v1532 = vpack.c.b16 %v1520, %v1517
    %v1533 = vpack.c.b16 %v1521, %v1518
    %v1534 = vpack.c.b16 %v1522, %v1519
    %v1583 = vunpack.c.l.b16 %v1459
    %v1584 = vunpack.c.h.b16 %v1459
    %v1585 = vunpack.c.l.b16 %v1460
    %v1586 = vunpack.c.h.b16 %v1460
    %v1587 = vunpack.c.l.b16 %v1461
    %v1588 = vunpack.c.h.b16 %v1461
    %v1589 = vunpack.c.l.b16 %v1462
    %v1590 = vunpack.c.h.b16 %v1462
    %v1591 = vunpack.c.l.b16 %v1463
    %v1592 = vunpack.c.h.b16 %v1463
    %v1593 = vunpack.c.l.b16 %v1464
    %v1594 = vunpack.c.h.b16 %v1464
    %v1595 = vunpack.c.l.b16 %v1465
    %v1596 = vunpack.c.h.b16 %v1465
    %v1597 = vunpack.c.l.b16 %v1466
    %v1598 = vunpack.c.h.b16 %v1466
    %v1599 = vunpack.c.l.b16 %v1467
    %v1600 = vunpack.c.h.b16 %v1467
    %v1601 = vunpack.c.l.b16 %v1468
    %v1602 = vunpack.c.h.b16 %v1468
    %v1603 = vunpack.c.l.b16 %v1469
    %v1604 = vunpack.c.h.b16 %v1469
    %v1605 = vunpack.c.l.b16 %v1470
    %v1606 = vunpack.c.h.b16 %v1470
    %v1607 = vunpack.c.l.b16 %v1471
    %v1608 = vunpack.c.h.b16 %v1471
    %v1609 = vunpack.c.l.b16 %v1472
    %v1610 = vunpack.c.h.b16 %v1472
    %v1611 = vunpack.c.l.b16 %v1473
    %v1612 = vunpack.c.h.b16 %v1473
    %v1613 = vunpack.c.l.b16 %v1474
    %v1614 = vunpack.c.h.b16 %v1474
    %v1615 = vunpack.c.l.b16 %v1475
    %v1616 = vunpack.c.h.b16 %v1475
    %v1617 = vunpack.c.l.b16 %v1476
    %v1618 = vunpack.c.h.b16 %v1476
    %v1619 = vunpack.c.l.b16 %v1477
    %v1620 = vunpack.c.h.b16 %v1477
    %v1621 = vunpack.c.l.b16 %v1478
    %v1622 = vunpack.c.h.b16 %v1478
    %v1623 = vunpack.c.l.b16 %v1479
    %v1624 = vunpack.c.h.b16 %v1479
    %v1625 = vunpack.c.l.b16 %v1480
    %v1626 = vunpack.c.h.b16 %v1480
    %v1627 = vunpack.c.l.b16 %v1481
    %v1628 = vunpack.c.h.b16 %v1481
    %v1629 = vunpack.c.l.b16 %v1482
    %v1630 = vunpack.c.h.b16 %v1482
    %v1631 = vunpack.c.l.b16 %v1483
    %v1632 = vunpack.c.h.b16 %v1483
    %v1633 = vunpack.c.l.b16 %v1484
    %v1634 = vunpack.c.h.b16 %v1484
    %v1635 = vunpack.c.l.b16 %v1485
    %v1636 = vunpack.c.h.b16 %v1485
    %v1637 = vunpack.c.l.b16 %v1486
    %v1638 = vunpack.c.h.b16 %v1486
    %v1639 = vunpack.c.l.b16 %v1487
    %v1640 = vunpack.c.h.b16 %v1487
    %v1641 = vunpack.c.l.b16 %v1488
    %v1642 = vunpack.c.h.b16 %v1488
    %v1643 = vunpack.c.l.b16 %v1489
    %v1644 = vunpack.c.h.b16 %v1489
    %v1645 = vunpack.c.l.b16 %v1490
    %v1646 = vunpack.c.h.b16 %v1490
    %v1647 = vunpack.c.l.b16 %v1491
    %v1648 = vunpack.c.h.b16 %v1491
    %v1649 = vunpack.c.l.b16 %v1492
    %v1650 = vunpack.c.h.b16 %v1492
    %v1651 = vunpack.c.l.b16 %v1493
    %v1652 = vunpack.c.h.b16 %v1493
    %v1653 = vunpack.c.l.b16 %v1494
    %v1654 = vunpack.c.h.b16 %v1494
    %v1655 = vunpack.c.l.b16 %v1495
    %v1656 = vunpack.c.h.b16 %v1495
    %v1657 = vunpack.c.l.b16 %v1496
    %v1658 = vunpack.c.h.b16 %v1496
    %v1659 = vunpack.c.l.b16 %v1497
    %v1660 = vunpack.c.h.b16 %v1497
    %v1661 = vunpack.c.l.b16 %v1498
    %v1662 = vunpack.c.h.b16 %v1498
    %v1663 = vpack.c.b16 %v1585, %v1583
    %v1664 = vpack.c.b16 %v1586, %v1584
    %v1665 = vpack.c.b16 %v1589, %v1587
    %v1666 = vpack.c.b16 %v1590, %v1588
    %v1667 = vpack.c.b16 %v1593, %v1591
    %v1668 = vpack.c.b16 %v1594, %v1592
    %v1669 = vpack.c.b16 %v1597, %v1595
    %v1670 = vpack.c.b16 %v1598, %v1596
    %v1671 = vpack.c.b16 %v1601, %v1599
    %v1672 = vpack.c.b16 %v1602, %v1600
    %v1673 = vpack.c.b16 %v1605, %v1603
    %v1674 = vpack.c.b16 %v1606, %v1604
    %v1675 = vpack.c.b16 %v1609, %v1607
    %v1676 = vpack.c.b16 %v1610, %v1608
    %v1677 = vpack.c.b16 %v1613, %v1611
    %v1678 = vpack.c.b16 %v1614, %v1612
    %v1679 = vpack.c.b16 %v1617, %v1615
    %v1680 = vpack.c.b16 %v1618, %v1616
    %v1681 = vpack.c.b16 %v1621, %v1619
    %v1682 = vpack.c.b16 %v1622, %v1620
    %v1683 = vpack.c.b16 %v1625, %v1623
    %v1684 = vpack.c.b16 %v1626, %v1624
    %v1685 = vpack.c.b16 %v1629, %v1627
    %v1686 = vpack.c.b16 %v1630, %v1628
    %v1687 = vpack.c.b16 %v1633, %v1631
    %v1688 = vpack.c.b16 %v1634, %v1632
    %v1689 = vpack.c.b16 %v1637, %v1635
    %v1690 = vpack.c.b16 %v1638, %v1636
    %v1691 = vpack.c.b16 %v1641, %v1639
    %v1692 = vpack.c.b16 %v1642, %v1640
    %v1693 = vpack.c.b16 %v1645, %v1643
    %v1694 = vpack.c.b16 %v1646, %v1644
    %v1695 = vpack.c.b16 %v1649, %v1647
    %v1696 = vpack.c.b16 %v1650, %v1648
    %v1697 = vpack.c.b16 %v1653, %v1651
    %v1698 = vpack.c.b16 %v1654, %v1652
    %v1699 = vpack.c.b16 %v1657, %v1655
    %v1700 = vpack.c.b16 %v1658, %v1656
    %v1701 = vpack.c.b16 %v1661, %v1659
    %v1702 = vpack.c.b16 %v1662, %v1660
    %vm1743 = vcmask 523264
    %v1745 = vsel %vm1743, %v1525, 0
    %v1748 = vsel %vm1743, %v1528, 0
    %v1751 = vsel %vm1743, %v1531, 0
    %v1754 = vsel %vm1743, %v1534, 0
    %1756 = vmatpush.bf16.msra.mxu0 %v1677
    %1757 = vmatpush.bf16.msra.mxu0 %v1675
    %1758 = vmatpush.bf16.msra.mxu0 %v1673
    %1759 = vmatpush.bf16.msra.mxu0 %v1671
    %1760 = vmatpush.bf16.msra.mxu0 %v1669
    %1761 = vmatpush.bf16.msra.mxu0 %v1667
    %1762 = vmatpush.bf16.msra.mxu0 %v1665
    %1763 = vmatpush.bf16.msra.mxu0 %v1663
    %1764 = vmatmul.bf16.gmra.mxu0 %v1523
    %v1765 = vpop.f32.mrf.mxu0
    %v1766 = vadd.f32 0.0, %v1765
    %v1767 = vpop.f32.mrf.mxu0
    %v1768 = vadd.f32 0.0, %v1767
    %1769 = vmatmul.bf16.gmra.mxu0 %v1526
    %v1770 = vpop.f32.mrf.mxu0
    %v1771 = vadd.f32 0.0, %v1770
    %v1772 = vpop.f32.mrf.mxu0
    %v1773 = vadd.f32 0.0, %v1772
    %1774 = vmatmul.bf16.gmra.mxu0 %v1529
    %v1775 = vpop.f32.mrf.mxu0
    %v1776 = vadd.f32 0.0, %v1775
    %v1777 = vpop.f32.mrf.mxu0
    %v1778 = vadd.f32 0.0, %v1777
    %1779 = vmatmul.bf16.gmra.mxu0 %v1532
    %v1780 = vpop.f32.mrf.mxu0
    %v1781 = vadd.f32 0.0, %v1780
    %v1782 = vpop.f32.mrf.mxu0
    %v1783 = vadd.f32 0.0, %v1782
    %1784 = vdwg.mxu0
    %1785 = vmatpush.bf16.msra.mxu0 %v1693
    %1786 = vmatpush.bf16.msra.mxu0 %v1691
    %1787 = vmatpush.bf16.msra.mxu0 %v1689
    %1788 = vmatpush.bf16.msra.mxu0 %v1687
    %1789 = vmatpush.bf16.msra.mxu0 %v1685
    %1790 = vmatpush.bf16.msra.mxu0 %v1683
    %1791 = vmatpush.bf16.msra.mxu0 %v1681
    %1792 = vmatpush.bf16.msra.mxu0 %v1679
    %1793 = vmatmul.bf16.gmra.mxu0 %v1524
    %v1794 = vpop.f32.mrf.mxu0
    %v1795 = vadd.f32 %v1766, %v1794
    %v1796 = vpop.f32.mrf.mxu0
    %v1797 = vadd.f32 %v1768, %v1796
    %1798 = vmatmul.bf16.gmra.mxu0 %v1527
    %v1799 = vpop.f32.mrf.mxu0
    %v1800 = vadd.f32 %v1771, %v1799
    %v1801 = vpop.f32.mrf.mxu0
    %v1802 = vadd.f32 %v1773, %v1801
    %1803 = vmatmul.bf16.gmra.mxu0 %v1530
    %v1804 = vpop.f32.mrf.mxu0
    %v1805 = vadd.f32 %v1776, %v1804
    %v1806 = vpop.f32.mrf.mxu0
    %v1807 = vadd.f32 %v1778, %v1806
    %1808 = vmatmul.bf16.gmra.mxu0 %v1533
    %v1809 = vpop.f32.mrf.mxu0
    %v1810 = vadd.f32 %v1781, %v1809
    %v1811 = vpop.f32.mrf.mxu0
    %v1812 = vadd.f32 %v1783, %v1811
    %1813 = vdwg.mxu0
    %1814 = vmatpush.bf16.msra.mxu0 0
    %1815 = vmatpush.bf16.msra.mxu0 0
    %1816 = vmatpush.bf16.msra.mxu0 0
    %1817 = vmatpush.bf16.msra.mxu0 0
    %1818 = vmatpush.bf16.msra.mxu0 %v1701
    %1819 = vmatpush.bf16.msra.mxu0 %v1699
    %1820 = vmatpush.bf16.msra.mxu0 %v1697
    %1821 = vmatpush.bf16.msra.mxu0 %v1695
    %1822 = vmatmul.bf16.gmra.mxu0 %v1745
    %v1823 = vpop.f32.mrf.mxu0
    %v1824 = vadd.f32 %v1795, %v1823
    %v1825 = vpop.f32.mrf.mxu0
    %v1826 = vadd.f32 %v1797, %v1825
    %1827 = vmatmul.bf16.gmra.mxu0 %v1748
    %v1828 = vpop.f32.mrf.mxu0
    %v1829 = vadd.f32 %v1800, %v1828
    %v1830 = vpop.f32.mrf.mxu0
    %v1831 = vadd.f32 %v1802, %v1830
    %1832 = vmatmul.bf16.gmra.mxu0 %v1751
    %v1833 = vpop.f32.mrf.mxu0
    %v1834 = vadd.f32 %v1805, %v1833
    %v1835 = vpop.f32.mrf.mxu0
    %v1836 = vadd.f32 %v1807, %v1835
    %1837 = vmatmul.bf16.gmra.mxu0 %v1754
    %v1838 = vpop.f32.mrf.mxu0
    %v1839 = vadd.f32 %v1810, %v1838
    %v1840 = vpop.f32.mrf.mxu0
    %v1841 = vadd.f32 %v1812, %v1840
    %1842 = vdwg.mxu0
    %1843 = vmatpush.bf16.msra.mxu0 %v1678
    %1844 = vmatpush.bf16.msra.mxu0 %v1676
    %1845 = vmatpush.bf16.msra.mxu0 %v1674
    %1846 = vmatpush.bf16.msra.mxu0 %v1672
    %1847 = vmatpush.bf16.msra.mxu0 %v1670
    %1848 = vmatpush.bf16.msra.mxu0 %v1668
    %1849 = vmatpush.bf16.msra.mxu0 %v1666
    %1850 = vmatpush.bf16.msra.mxu0 %v1664
    %1851 = vmatmul.bf16.gmra.mxu0 %v1523
    %v1852 = vpop.f32.mrf.mxu0
    %v1853 = vadd.f32 0.0, %v1852
    %v1854 = vpop.f32.mrf.mxu0
    %v1855 = vadd.f32 0.0, %v1854
    %1856 = vmatmul.bf16.gmra.mxu0 %v1526
    %v1857 = vpop.f32.mrf.mxu0
    %v1858 = vadd.f32 0.0, %v1857
    %v1859 = vpop.f32.mrf.mxu0
    %v1860 = vadd.f32 0.0, %v1859
    %1861 = vmatmul.bf16.gmra.mxu0 %v1529
    %v1862 = vpop.f32.mrf.mxu0
    %v1863 = vadd.f32 0.0, %v1862
    %v1864 = vpop.f32.mrf.mxu0
    %v1865 = vadd.f32 0.0, %v1864
    %1866 = vmatmul.bf16.gmra.mxu0 %v1532
    %v1867 = vpop.f32.mrf.mxu0
    %v1868 = vadd.f32 0.0, %v1867
    %v1869 = vpop.f32.mrf.mxu0
    %v1870 = vadd.f32 0.0, %v1869
    %1871 = vdwg.mxu0
    %1872 = vmatpush.bf16.msra.mxu0 %v1694
    %1873 = vmatpush.bf16.msra.mxu0 %v1692
    %1874 = vmatpush.bf16.msra.mxu0 %v1690
    %1875 = vmatpush.bf16.msra.mxu0 %v1688
    %1876 = vmatpush.bf16.msra.mxu0 %v1686
    %1877 = vmatpush.bf16.msra.mxu0 %v1684
    %1878 = vmatpush.bf16.msra.mxu0 %v1682
    %1879 = vmatpush.bf16.msra.mxu0 %v1680
    %1880 = vmatmul.bf16.gmra.mxu0 %v1524
    %v1881 = vpop.f32.mrf.mxu0
    %v1882 = vadd.f32 %v1853, %v1881
    %v1883 = vpop.f32.mrf.mxu0
    %v1884 = vadd.f32 %v1855, %v1883
    %1885 = vmatmul.bf16.gmra.mxu0 %v1527
    %v1886 = vpop.f32.mrf.mxu0
    %v1887 = vadd.f32 %v1858, %v1886
    %v1888 = vpop.f32.mrf.mxu0
    %v1889 = vadd.f32 %v1860, %v1888
    %1890 = vmatmul.bf16.gmra.mxu0 %v1530
    %v1891 = vpop.f32.mrf.mxu0
    %v1892 = vadd.f32 %v1863, %v1891
    %v1893 = vpop.f32.mrf.mxu0
    %v1894 = vadd.f32 %v1865, %v1893
    %1895 = vmatmul.bf16.gmra.mxu0 %v1533
    %v1896 = vpop.f32.mrf.mxu0
    %v1897 = vadd.f32 %v1868, %v1896
    %v1898 = vpop.f32.mrf.mxu0
    %v1899 = vadd.f32 %v1870, %v1898
    %1900 = vdwg.mxu0
    %1901 = vmatpush.bf16.msra.mxu0 0
    %1902 = vmatpush.bf16.msra.mxu0 0
    %1903 = vmatpush.bf16.msra.mxu0 0
    %1904 = vmatpush.bf16.msra.mxu0 0
    %1905 = vmatpush.bf16.msra.mxu0 %v1702
    %1906 = vmatpush.bf16.msra.mxu0 %v1700
    %1907 = vmatpush.bf16.msra.mxu0 %v1698
    %1908 = vmatpush.bf16.msra.mxu0 %v1696
    %1909 = vmatmul.bf16.gmra.mxu0 %v1745
    %v1910 = vpop.f32.mrf.mxu0
    %v1911 = vadd.f32 %v1882, %v1910
    %v1912 = vpop.f32.mrf.mxu0
    %v1913 = vadd.f32 %v1884, %v1912
    %1914 = vmatmul.bf16.gmra.mxu0 %v1748
    %v1915 = vpop.f32.mrf.mxu0
    %v1916 = vadd.f32 %v1887, %v1915
    %v1917 = vpop.f32.mrf.mxu0
    %v1918 = vadd.f32 %v1889, %v1917
    %1919 = vmatmul.bf16.gmra.mxu0 %v1751
    %v1920 = vpop.f32.mrf.mxu0
    %v1921 = vadd.f32 %v1892, %v1920
    %v1922 = vpop.f32.mrf.mxu0
    %v1923 = vadd.f32 %v1894, %v1922
    %1924 = vmatmul.bf16.gmra.mxu0 %v1754
    %v1925 = vpop.f32.mrf.mxu0
    %v1926 = vadd.f32 %v1897, %v1925
    %v1927 = vpop.f32.mrf.mxu0
    %v1928 = vadd.f32 %v1899, %v1927
    %1929 = vdwg.mxu0
    %v1946 = vunpack.c.l.b16 %v1162
    %v1947 = vunpack.c.h.b16 %v1162
    %v1948 = vunpack.c.l.b16 %v1163
    %v1949 = vunpack.c.l.b16 %v1164
    %v1950 = vunpack.c.h.b16 %v1164
    %v1951 = vunpack.c.l.b16 %v1165
    %v1952 = vunpack.c.l.b16 %v1166
    %v1953 = vunpack.c.h.b16 %v1166
    %v1954 = vunpack.c.l.b16 %v1167
    %v1955 = vunpack.c.l.b16 %v1168
    %v1956 = vunpack.c.h.b16 %v1168
    %v1957 = vunpack.c.l.b16 %v1169
    %v1958 = vunpack.c.l.b16 %v1170
    %v1959 = vunpack.c.h.b16 %v1170
    %v1960 = vunpack.c.l.b16 %v1171
    %v1961 = vunpack.c.l.b16 %v1172
    %v1962 = vunpack.c.h.b16 %v1172
    %v1963 = vunpack.c.l.b16 %v1173
    %v1964 = vunpack.c.l.b16 %v1174
    %v1965 = vunpack.c.h.b16 %v1174
    %v1966 = vunpack.c.l.b16 %v1175
    %v1967 = vunpack.c.l.b16 %v1176
    %v1968 = vunpack.c.h.b16 %v1176
    %v1969 = vunpack.c.l.b16 %v1177
    %v1970 = vpack.c.b16 %v1949, %v1946
    %v1971 = vpack.c.b16 %v1950, %v1947
    %v1972 = vpack.c.b16 %v1951, %v1948
    %v1973 = vpack.c.b16 %v1955, %v1952
    %v1974 = vpack.c.b16 %v1956, %v1953
    %v1975 = vpack.c.b16 %v1957, %v1954
    %v1976 = vpack.c.b16 %v1961, %v1958
    %v1977 = vpack.c.b16 %v1962, %v1959
    %v1978 = vpack.c.b16 %v1963, %v1960
    %v1979 = vpack.c.b16 %v1967, %v1964
    %v1980 = vpack.c.b16 %v1968, %v1965
    %v1981 = vpack.c.b16 %v1969, %v1966
    %v2030 = vunpack.c.l.b16 %v1178
    %v2031 = vunpack.c.h.b16 %v1178
    %v2032 = vunpack.c.l.b16 %v1179
    %v2033 = vunpack.c.h.b16 %v1179
    %v2034 = vunpack.c.l.b16 %v1180
    %v2035 = vunpack.c.h.b16 %v1180
    %v2036 = vunpack.c.l.b16 %v1181
    %v2037 = vunpack.c.h.b16 %v1181
    %v2038 = vunpack.c.l.b16 %v1182
    %v2039 = vunpack.c.h.b16 %v1182
    %v2040 = vunpack.c.l.b16 %v1183
    %v2041 = vunpack.c.h.b16 %v1183
    %v2042 = vunpack.c.l.b16 %v1184
    %v2043 = vunpack.c.h.b16 %v1184
    %v2044 = vunpack.c.l.b16 %v1185
    %v2045 = vunpack.c.h.b16 %v1185
    %v2046 = vunpack.c.l.b16 %v1186
    %v2047 = vunpack.c.h.b16 %v1186
    %v2048 = vunpack.c.l.b16 %v1187
    %v2049 = vunpack.c.h.b16 %v1187
    %v2050 = vunpack.c.l.b16 %v1188
    %v2051 = vunpack.c.h.b16 %v1188
    %v2052 = vunpack.c.l.b16 %v1189
    %v2053 = vunpack.c.h.b16 %v1189
    %v2054 = vunpack.c.l.b16 %v1190
    %v2055 = vunpack.c.h.b16 %v1190
    %v2056 = vunpack.c.l.b16 %v1191
    %v2057 = vunpack.c.h.b16 %v1191
    %v2058 = vunpack.c.l.b16 %v1192
    %v2059 = vunpack.c.h.b16 %v1192
    %v2060 = vunpack.c.l.b16 %v1193
    %v2061 = vunpack.c.h.b16 %v1193
    %v2062 = vunpack.c.l.b16 %v1194
    %v2063 = vunpack.c.h.b16 %v1194
    %v2064 = vunpack.c.l.b16 %v1195
    %v2065 = vunpack.c.h.b16 %v1195
    %v2066 = vunpack.c.l.b16 %v1196
    %v2067 = vunpack.c.h.b16 %v1196
    %v2068 = vunpack.c.l.b16 %v1197
    %v2069 = vunpack.c.h.b16 %v1197
    %v2070 = vunpack.c.l.b16 %v1198
    %v2071 = vunpack.c.h.b16 %v1198
    %v2072 = vunpack.c.l.b16 %v1199
    %v2073 = vunpack.c.h.b16 %v1199
    %v2074 = vunpack.c.l.b16 %v1200
    %v2075 = vunpack.c.h.b16 %v1200
    %v2076 = vunpack.c.l.b16 %v1201
    %v2077 = vunpack.c.h.b16 %v1201
    %v2078 = vunpack.c.l.b16 %v1202
    %v2079 = vunpack.c.h.b16 %v1202
    %v2080 = vunpack.c.l.b16 %v1203
    %v2081 = vunpack.c.h.b16 %v1203
    %v2082 = vunpack.c.l.b16 %v1204
    %v2083 = vunpack.c.h.b16 %v1204
    %v2084 = vunpack.c.l.b16 %v1205
    %v2085 = vunpack.c.h.b16 %v1205
    %v2086 = vunpack.c.l.b16 %v1206
    %v2087 = vunpack.c.h.b16 %v1206
    %v2088 = vunpack.c.l.b16 %v1207
    %v2089 = vunpack.c.h.b16 %v1207
    %v2090 = vunpack.c.l.b16 %v1208
    %v2091 = vunpack.c.h.b16 %v1208
    %v2092 = vunpack.c.l.b16 %v1209
    %v2093 = vunpack.c.h.b16 %v1209
    %v2094 = vunpack.c.l.b16 %v1210
    %v2095 = vunpack.c.h.b16 %v1210
    %v2096 = vunpack.c.l.b16 %v1211
    %v2097 = vunpack.c.h.b16 %v1211
    %v2098 = vunpack.c.l.b16 %v1212
    %v2099 = vunpack.c.h.b16 %v1212
    %v2100 = vunpack.c.l.b16 %v1213
    %v2101 = vunpack.c.h.b16 %v1213
    %v2102 = vunpack.c.l.b16 %v1214
    %v2103 = vunpack.c.h.b16 %v1214
    %v2104 = vunpack.c.l.b16 %v1215
    %v2105 = vunpack.c.h.b16 %v1215
    %v2106 = vunpack.c.l.b16 %v1216
    %v2107 = vunpack.c.h.b16 %v1216
    %v2108 = vunpack.c.l.b16 %v1217
    %v2109 = vunpack.c.h.b16 %v1217
    %v2110 = vpack.c.b16 %v2032, %v2030
    %v2111 = vpack.c.b16 %v2033, %v2031
    %v2112 = vpack.c.b16 %v2036, %v2034
    %v2113 = vpack.c.b16 %v2037, %v2035
    %v2114 = vpack.c.b16 %v2040, %v2038
    %v2115 = vpack.c.b16 %v2041, %v2039
    %v2116 = vpack.c.b16 %v2044, %v2042
    %v2117 = vpack.c.b16 %v2045, %v2043
    %v2118 = vpack.c.b16 %v2048, %v2046
    %v2119 = vpack.c.b16 %v2049, %v2047
    %v2120 = vpack.c.b16 %v2052, %v2050
    %v2121 = vpack.c.b16 %v2053, %v2051
    %v2122 = vpack.c.b16 %v2056, %v2054
    %v2123 = vpack.c.b16 %v2057, %v2055
    %v2124 = vpack.c.b16 %v2060, %v2058
    %v2125 = vpack.c.b16 %v2061, %v2059
    %v2126 = vpack.c.b16 %v2064, %v2062
    %v2127 = vpack.c.b16 %v2065, %v2063
    %v2128 = vpack.c.b16 %v2068, %v2066
    %v2129 = vpack.c.b16 %v2069, %v2067
    %v2130 = vpack.c.b16 %v2072, %v2070
    %v2131 = vpack.c.b16 %v2073, %v2071
    %v2132 = vpack.c.b16 %v2076, %v2074
    %v2133 = vpack.c.b16 %v2077, %v2075
    %v2134 = vpack.c.b16 %v2080, %v2078
    %v2135 = vpack.c.b16 %v2081, %v2079
    %v2136 = vpack.c.b16 %v2084, %v2082
    %v2137 = vpack.c.b16 %v2085, %v2083
    %v2138 = vpack.c.b16 %v2088, %v2086
    %v2139 = vpack.c.b16 %v2089, %v2087
    %v2140 = vpack.c.b16 %v2092, %v2090
    %v2141 = vpack.c.b16 %v2093, %v2091
    %v2142 = vpack.c.b16 %v2096, %v2094
    %v2143 = vpack.c.b16 %v2097, %v2095
    %v2144 = vpack.c.b16 %v2100, %v2098
    %v2145 = vpack.c.b16 %v2101, %v2099
    %v2146 = vpack.c.b16 %v2104, %v2102
    %v2147 = vpack.c.b16 %v2105, %v2103
    %v2148 = vpack.c.b16 %v2108, %v2106
    %v2149 = vpack.c.b16 %v2109, %v2107
    %v2191 = vsel %vm1743, %v1972, 0
    %v2194 = vsel %vm1743, %v1975, 0
    %v2197 = vsel %vm1743, %v1978, 0
    %v2200 = vsel %vm1743, %v1981, 0
    %2202 = vmatpush.bf16.msra.mxu0 %v2124
    %2203 = vmatpush.bf16.msra.mxu0 %v2122
    %2204 = vmatpush.bf16.msra.mxu0 %v2120
    %2205 = vmatpush.bf16.msra.mxu0 %v2118
    %2206 = vmatpush.bf16.msra.mxu0 %v2116
    %2207 = vmatpush.bf16.msra.mxu0 %v2114
    %2208 = vmatpush.bf16.msra.mxu0 %v2112
    %2209 = vmatpush.bf16.msra.mxu0 %v2110
    %2210 = vmatmul.bf16.gmra.mxu0 %v1970
    %v2211 = vpop.f32.mrf.mxu0
    %v2212 = vadd.f32 %v1824, %v2211
    %v2213 = vpop.f32.mrf.mxu0
    %v2214 = vadd.f32 %v1826, %v2213
    %2215 = vmatmul.bf16.gmra.mxu0 %v1973
    %v2216 = vpop.f32.mrf.mxu0
    %v2217 = vadd.f32 %v1829, %v2216
    %v2218 = vpop.f32.mrf.mxu0
    %v2219 = vadd.f32 %v1831, %v2218
    %2220 = vmatmul.bf16.gmra.mxu0 %v1976
    %v2221 = vpop.f32.mrf.mxu0
    %v2222 = vadd.f32 %v1834, %v2221
    %v2223 = vpop.f32.mrf.mxu0
    %v2224 = vadd.f32 %v1836, %v2223
    %2225 = vmatmul.bf16.gmra.mxu0 %v1979
    %v2226 = vpop.f32.mrf.mxu0
    %v2227 = vadd.f32 %v1839, %v2226
    %v2228 = vpop.f32.mrf.mxu0
    %v2229 = vadd.f32 %v1841, %v2228
    %2230 = vdwg.mxu0
    %2231 = vmatpush.bf16.msra.mxu0 %v2140
    %2232 = vmatpush.bf16.msra.mxu0 %v2138
    %2233 = vmatpush.bf16.msra.mxu0 %v2136
    %2234 = vmatpush.bf16.msra.mxu0 %v2134
    %2235 = vmatpush.bf16.msra.mxu0 %v2132
    %2236 = vmatpush.bf16.msra.mxu0 %v2130
    %2237 = vmatpush.bf16.msra.mxu0 %v2128
    %2238 = vmatpush.bf16.msra.mxu0 %v2126
    %2239 = vmatmul.bf16.gmra.mxu0 %v1971
    %v2240 = vpop.f32.mrf.mxu0
    %v2241 = vadd.f32 %v2212, %v2240
    %v2242 = vpop.f32.mrf.mxu0
    %v2243 = vadd.f32 %v2214, %v2242
    %2244 = vmatmul.bf16.gmra.mxu0 %v1974
    %v2245 = vpop.f32.mrf.mxu0
    %v2246 = vadd.f32 %v2217, %v2245
    %v2247 = vpop.f32.mrf.mxu0
    %v2248 = vadd.f32 %v2219, %v2247
    %2249 = vmatmul.bf16.gmra.mxu0 %v1977
    %v2250 = vpop.f32.mrf.mxu0
    %v2251 = vadd.f32 %v2222, %v2250
    %v2252 = vpop.f32.mrf.mxu0
    %v2253 = vadd.f32 %v2224, %v2252
    %2254 = vmatmul.bf16.gmra.mxu0 %v1980
    %v2255 = vpop.f32.mrf.mxu0
    %v2256 = vadd.f32 %v2227, %v2255
    %v2257 = vpop.f32.mrf.mxu0
    %v2258 = vadd.f32 %v2229, %v2257
    %2259 = vdwg.mxu0
    %2260 = vmatpush.bf16.msra.mxu0 0
    %2261 = vmatpush.bf16.msra.mxu0 0
    %2262 = vmatpush.bf16.msra.mxu0 0
    %2263 = vmatpush.bf16.msra.mxu0 0
    %2264 = vmatpush.bf16.msra.mxu0 %v2148
    %2265 = vmatpush.bf16.msra.mxu0 %v2146
    %2266 = vmatpush.bf16.msra.mxu0 %v2144
    %2267 = vmatpush.bf16.msra.mxu0 %v2142
    %2268 = vmatmul.bf16.gmra.mxu0 %v2191
    %v2269 = vpop.f32.mrf.mxu0
    %v2270 = vadd.f32 %v2241, %v2269
    %v2271 = vpop.f32.mrf.mxu0
    %v2272 = vadd.f32 %v2243, %v2271
    %2273 = vmatmul.bf16.gmra.mxu0 %v2194
    %v2274 = vpop.f32.mrf.mxu0
    %v2275 = vadd.f32 %v2246, %v2274
    %v2276 = vpop.f32.mrf.mxu0
    %v2277 = vadd.f32 %v2248, %v2276
    %2278 = vmatmul.bf16.gmra.mxu0 %v2197
    %v2279 = vpop.f32.mrf.mxu0
    %v2280 = vadd.f32 %v2251, %v2279
    %v2281 = vpop.f32.mrf.mxu0
    %v2282 = vadd.f32 %v2253, %v2281
    %2283 = vmatmul.bf16.gmra.mxu0 %v2200
    %v2284 = vpop.f32.mrf.mxu0
    %v2285 = vadd.f32 %v2256, %v2284
    %v2286 = vpop.f32.mrf.mxu0
    %v2287 = vadd.f32 %v2258, %v2286
    %2288 = vdwg.mxu0
    %2289 = vmatpush.bf16.msra.mxu0 %v2125
    %2290 = vmatpush.bf16.msra.mxu0 %v2123
    %2291 = vmatpush.bf16.msra.mxu0 %v2121
    %2292 = vmatpush.bf16.msra.mxu0 %v2119
    %2293 = vmatpush.bf16.msra.mxu0 %v2117
    %2294 = vmatpush.bf16.msra.mxu0 %v2115
    %2295 = vmatpush.bf16.msra.mxu0 %v2113
    %2296 = vmatpush.bf16.msra.mxu0 %v2111
    %2297 = vmatmul.bf16.gmra.mxu0 %v1970
    %v2298 = vpop.f32.mrf.mxu0
    %v2299 = vadd.f32 %v1911, %v2298
    %v2300 = vpop.f32.mrf.mxu0
    %v2301 = vadd.f32 %v1913, %v2300
    %2302 = vmatmul.bf16.gmra.mxu0 %v1973
    %v2303 = vpop.f32.mrf.mxu0
    %v2304 = vadd.f32 %v1916, %v2303
    %v2305 = vpop.f32.mrf.mxu0
    %v2306 = vadd.f32 %v1918, %v2305
    %2307 = vmatmul.bf16.gmra.mxu0 %v1976
    %v2308 = vpop.f32.mrf.mxu0
    %v2309 = vadd.f32 %v1921, %v2308
    %v2310 = vpop.f32.mrf.mxu0
    %v2311 = vadd.f32 %v1923, %v2310
    %2312 = vmatmul.bf16.gmra.mxu0 %v1979
    %v2313 = vpop.f32.mrf.mxu0
    %v2314 = vadd.f32 %v1926, %v2313
    %v2315 = vpop.f32.mrf.mxu0
    %v2316 = vadd.f32 %v1928, %v2315
    %2317 = vdwg.mxu0
    %2318 = vmatpush.bf16.msra.mxu0 %v2141
    %2319 = vmatpush.bf16.msra.mxu0 %v2139
    %2320 = vmatpush.bf16.msra.mxu0 %v2137
    %2321 = vmatpush.bf16.msra.mxu0 %v2135
    %2322 = vmatpush.bf16.msra.mxu0 %v2133
    %2323 = vmatpush.bf16.msra.mxu0 %v2131
    %2324 = vmatpush.bf16.msra.mxu0 %v2129
    %2325 = vmatpush.bf16.msra.mxu0 %v2127
    %2326 = vmatmul.bf16.gmra.mxu0 %v1971
    %v2327 = vpop.f32.mrf.mxu0
    %v2328 = vadd.f32 %v2299, %v2327
    %v2329 = vpop.f32.mrf.mxu0
    %v2330 = vadd.f32 %v2301, %v2329
    %2331 = vmatmul.bf16.gmra.mxu0 %v1974
    %v2332 = vpop.f32.mrf.mxu0
    %v2333 = vadd.f32 %v2304, %v2332
    %v2334 = vpop.f32.mrf.mxu0
    %v2335 = vadd.f32 %v2306, %v2334
    %2336 = vmatmul.bf16.gmra.mxu0 %v1977
    %v2337 = vpop.f32.mrf.mxu0
    %v2338 = vadd.f32 %v2309, %v2337
    %v2339 = vpop.f32.mrf.mxu0
    %v2340 = vadd.f32 %v2311, %v2339
    %2341 = vmatmul.bf16.gmra.mxu0 %v1980
    %v2342 = vpop.f32.mrf.mxu0
    %v2343 = vadd.f32 %v2314, %v2342
    %v2344 = vpop.f32.mrf.mxu0
    %v2345 = vadd.f32 %v2316, %v2344
    %2346 = vdwg.mxu0
    %2347 = vmatpush.bf16.msra.mxu0 0
    %2348 = vmatpush.bf16.msra.mxu0 0
    %2349 = vmatpush.bf16.msra.mxu0 0
    %2350 = vmatpush.bf16.msra.mxu0 0
    %2351 = vmatpush.bf16.msra.mxu0 %v2149
    %2352 = vmatpush.bf16.msra.mxu0 %v2147
    %2353 = vmatpush.bf16.msra.mxu0 %v2145
    %2354 = vmatpush.bf16.msra.mxu0 %v2143
    %2355 = vmatmul.bf16.gmra.mxu0 %v2191
    %v2356 = vpop.f32.mrf.mxu0
    %v2357 = vadd.f32 %v2328, %v2356
    %v2358 = vpop.f32.mrf.mxu0
    %v2359 = vadd.f32 %v2330, %v2358
    %2360 = vmatmul.bf16.gmra.mxu0 %v2194
    %v2361 = vpop.f32.mrf.mxu0
    %v2362 = vadd.f32 %v2333, %v2361
    %v2363 = vpop.f32.mrf.mxu0
    %v2364 = vadd.f32 %v2335, %v2363
    %2365 = vmatmul.bf16.gmra.mxu0 %v2197
    %v2366 = vpop.f32.mrf.mxu0
    %v2367 = vadd.f32 %v2338, %v2366
    %v2368 = vpop.f32.mrf.mxu0
    %v2369 = vadd.f32 %v2340, %v2368
    %2370 = vmatmul.bf16.gmra.mxu0 %v2200
    %v2371 = vpop.f32.mrf.mxu0
    %v2372 = vadd.f32 %v2343, %v2371
    %v2373 = vpop.f32.mrf.mxu0
    %v2374 = vadd.f32 %v2345, %v2373
    %2375 = vdwg.mxu0
    %v2376 = vld [vmem:[#allocation2] sm:$0xee]
    %v2377 = vld [vmem:[#allocation2 + $0x8] sm:$0xe]
    %v2378 = vld [vmem:[#allocation2 + $0x18] sm:$0xee]
    %v2379 = vld [vmem:[#allocation2 + $0x20] sm:$0xe]
    %v2380 = vld [vmem:[#allocation2 + $0x30] sm:$0xee]
    %v2381 = vld [vmem:[#allocation2 + $0x38] sm:$0xe]
    %v2382 = vld [vmem:[#allocation2 + $0x48] sm:$0xee]
    %v2383 = vld [vmem:[#allocation2 + $0x50] sm:$0xe]
    %v2384 = vld [vmem:[#allocation2 + $0x60] sm:$0xee]
    %v2385 = vld [vmem:[#allocation2 + $0x68] sm:$0xe]
    %v2386 = vld [vmem:[#allocation2 + $0x78] sm:$0xee]
    %v2387 = vld [vmem:[#allocation2 + $0x80] sm:$0xe]
    %v2388 = vld [vmem:[#allocation2 + $0x90] sm:$0xee]
    %v2389 = vld [vmem:[#allocation2 + $0x98] sm:$0xe]
    %v2390 = vld [vmem:[#allocation2 + $0xa8] sm:$0xee]
    %v2391 = vld [vmem:[#allocation2 + $0xb0] sm:$0xe]
    %v2424 = vrot.slane %v2376, 5
    %v2425 = vrot.slane %v2424, 4
    %v2426 = vrot.slane %v1218, 5
    %v2427 = vsel %vm527, %v2425, %v2426
    %v2428 = vrot.slane %v2377, 5
    %v2429 = vrot.slane %v2428, 4
    %v2430 = vrot.slane %v1219, 5
    %v2431 = vsel %vm527, %v2429, %v2430
    %v2432 = vrot.slane %v2378, 5
    %v2433 = vrot.slane %v2432, 4
    %v2434 = vrot.slane %v1220, 5
    %v2435 = vsel %vm527, %v2433, %v2434
    %v2436 = vrot.slane %v2379, 5
    %v2437 = vrot.slane %v2436, 4
    %v2438 = vrot.slane %v1221, 5
    %v2439 = vsel %vm527, %v2437, %v2438
    %v2440 = vrot.slane %v2380, 5
    %v2441 = vrot.slane %v2440, 4
    %v2442 = vrot.slane %v1222, 5
    %v2443 = vsel %vm527, %v2441, %v2442
    %v2444 = vrot.slane %v2381, 5
    %v2445 = vrot.slane %v2444, 4
    %v2446 = vrot.slane %v1223, 5
    %v2447 = vsel %vm527, %v2445, %v2446
    %v2448 = vrot.slane %v2382, 5
    %v2449 = vrot.slane %v2448, 4
    %v2450 = vrot.slane %v1224, 5
    %v2451 = vsel %vm527, %v2449, %v2450
    %v2452 = vrot.slane %v2383, 5
    %v2453 = vrot.slane %v2452, 4
    %v2454 = vrot.slane %v1225, 5
    %v2455 = vsel %vm527, %v2453, %v2454
    %v2456 = vrot.slane %v2384, 5
    %v2457 = vrot.slane %v2456, 4
    %v2458 = vrot.slane %v1226, 5
    %v2459 = vsel %vm527, %v2457, %v2458
    %v2460 = vrot.slane %v2385, 5
    %v2461 = vrot.slane %v2460, 4
    %v2462 = vrot.slane %v1227, 5
    %v2463 = vsel %vm527, %v2461, %v2462
    %v2464 = vrot.slane %v2386, 5
    %v2465 = vrot.slane %v2464, 4
    %v2466 = vrot.slane %v1228, 5
    %v2467 = vsel %vm527, %v2465, %v2466
    %v2468 = vrot.slane %v2387, 5
    %v2469 = vrot.slane %v2468, 4
    %v2470 = vrot.slane %v1229, 5
    %v2471 = vsel %vm527, %v2469, %v2470
    %v2472 = vrot.slane %v2388, 5
    %v2473 = vrot.slane %v2472, 4
    %v2474 = vrot.slane %v1230, 5
    %v2475 = vsel %vm527, %v2473, %v2474
    %v2476 = vrot.slane %v2389, 5
    %v2477 = vrot.slane %v2476, 4
    %v2478 = vrot.slane %v1231, 5
    %v2479 = vsel %vm527, %v2477, %v2478
    %v2480 = vrot.slane %v2390, 5
    %v2481 = vrot.slane %v2480, 4
    %v2482 = vrot.slane %v1232, 5
    %v2483 = vsel %vm527, %v2481, %v2482
    %v2484 = vrot.slane %v2391, 5
    %v2485 = vrot.slane %v2484, 4
    %v2486 = vrot.slane %v1233, 5
    %v2487 = vsel %vm527, %v2485, %v2486
    %s2488 = scalar_lea.vmem %s3, 640
    %v2489 = vld [vmem:[%s2488] sm:$0xff]
    %v2490 = vld [vmem:[%s2488 + $0x8] sm:$0xff]
    %v2491 = vld [vmem:[%s2488 + $0x10] sm:$0xff]
    %v2492 = vld [vmem:[%s2488 + $0x18] sm:$0xff]
    %v2493 = vld [vmem:[%s2488 + $0x20] sm:$0xff]
    %v2494 = vld [vmem:[%s2488 + $0x28] sm:$0xff]
    %v2495 = vld [vmem:[%s2488 + $0x30] sm:$0xff]
    %v2496 = vld [vmem:[%s2488 + $0x38] sm:$0xff]
    %v2497 = vld [vmem:[%s2488 + $0x40] sm:$0xff]
    %v2498 = vld [vmem:[%s2488 + $0x48] sm:$0xff]
    %v2499 = vld [vmem:[%s2488 + $0x50] sm:$0xff]
    %v2500 = vld [vmem:[%s2488 + $0x58] sm:$0xff]
    %v2501 = vld [vmem:[%s2488 + $0x60] sm:$0xff]
    %v2502 = vld [vmem:[%s2488 + $0x68] sm:$0xff]
    %v2503 = vld [vmem:[%s2488 + $0x70] sm:$0xff]
    %v2504 = vld [vmem:[%s2488 + $0x78] sm:$0xff]
    %v2505 = vld [vmem:[%s2488 + $0x80] sm:$0xff]
    %v2506 = vld [vmem:[%s2488 + $0x88] sm:$0xff]
    %v2507 = vld [vmem:[%s2488 + $0x90] sm:$0xff]
    %v2508 = vld [vmem:[%s2488 + $0x98] sm:$0xff]
    %v2509 = vld [vmem:[%s2488 + $0xa0] sm:$0xff]
    %v2510 = vld [vmem:[%s2488 + $0xa8] sm:$0xff]
    %v2511 = vld [vmem:[%s2488 + $0xb0] sm:$0xff]
    %v2512 = vld [vmem:[%s2488 + $0xb8] sm:$0xff]
    %v2513 = vld [vmem:[%s2488 + $0xc0] sm:$0xff]
    %v2514 = vld [vmem:[%s2488 + $0xc8] sm:$0xff]
    %v2515 = vld [vmem:[%s2488 + $0xd0] sm:$0xff]
    %v2516 = vld [vmem:[%s2488 + $0xd8] sm:$0xff]
    %v2517 = vld [vmem:[%s2488 + $0xe0] sm:$0xff]
    %v2518 = vld [vmem:[%s2488 + $0xe8] sm:$0xff]
    %v2519 = vld [vmem:[%s2488 + $0xf0] sm:$0xff]
    %v2520 = vld [vmem:[%s2488 + $0xf8] sm:$0xff]
    %v2521 = vld [vmem:[%s2488 + $0x100] sm:$0xff]
    %v2522 = vld [vmem:[%s2488 + $0x108] sm:$0xff]
    %v2523 = vld [vmem:[%s2488 + $0x110] sm:$0xff]
    %v2524 = vld [vmem:[%s2488 + $0x118] sm:$0xff]
    %v2525 = vld [vmem:[%s2488 + $0x120] sm:$0xff]
    %v2526 = vld [vmem:[%s2488 + $0x128] sm:$0xff]
    %v2527 = vld [vmem:[%s2488 + $0x130] sm:$0xff]
    %v2528 = vld [vmem:[%s2488 + $0x138] sm:$0xff]
    %v2529 = vunpack.c.l.b16 %v2427
    %v2530 = vunpack.c.h.b16 %v2427
    %v2531 = vunpack.c.l.b16 %v2431
    %v2532 = vunpack.c.l.b16 %v2435
    %v2533 = vunpack.c.h.b16 %v2435
    %v2534 = vunpack.c.l.b16 %v2439
    %v2535 = vunpack.c.l.b16 %v2443
    %v2536 = vunpack.c.h.b16 %v2443
    %v2537 = vunpack.c.l.b16 %v2447
    %v2538 = vunpack.c.l.b16 %v2451
    %v2539 = vunpack.c.h.b16 %v2451
    %v2540 = vunpack.c.l.b16 %v2455
    %v2541 = vunpack.c.l.b16 %v2459
    %v2542 = vunpack.c.h.b16 %v2459
    %v2543 = vunpack.c.l.b16 %v2463
    %v2544 = vunpack.c.l.b16 %v2467
    %v2545 = vunpack.c.h.b16 %v2467
    %v2546 = vunpack.c.l.b16 %v2471
    %v2547 = vunpack.c.l.b16 %v2475
    %v2548 = vunpack.c.h.b16 %v2475
    %v2549 = vunpack.c.l.b16 %v2479
    %v2550 = vunpack.c.l.b16 %v2483
    %v2551 = vunpack.c.h.b16 %v2483
    %v2552 = vunpack.c.l.b16 %v2487
    %v2553 = vpack.c.b16 %v2532, %v2529
    %v2554 = vpack.c.b16 %v2533, %v2530
    %v2555 = vpack.c.b16 %v2534, %v2531
    %v2556 = vpack.c.b16 %v2538, %v2535
    %v2557 = vpack.c.b16 %v2539, %v2536
    %v2558 = vpack.c.b16 %v2540, %v2537
    %v2559 = vpack.c.b16 %v2544, %v2541
    %v2560 = vpack.c.b16 %v2545, %v2542
    %v2561 = vpack.c.b16 %v2546, %v2543
    %v2562 = vpack.c.b16 %v2550, %v2547
    %v2563 = vpack.c.b16 %v2551, %v2548
    %v2564 = vpack.c.b16 %v2552, %v2549
    %v2613 = vunpack.c.l.b16 %v2489
    %v2614 = vunpack.c.h.b16 %v2489
    %v2615 = vunpack.c.l.b16 %v2490
    %v2616 = vunpack.c.h.b16 %v2490
    %v2617 = vunpack.c.l.b16 %v2491
    %v2618 = vunpack.c.h.b16 %v2491
    %v2619 = vunpack.c.l.b16 %v2492
    %v2620 = vunpack.c.h.b16 %v2492
    %v2621 = vunpack.c.l.b16 %v2493
    %v2622 = vunpack.c.h.b16 %v2493
    %v2623 = vunpack.c.l.b16 %v2494
    %v2624 = vunpack.c.h.b16 %v2494
    %v2625 = vunpack.c.l.b16 %v2495
    %v2626 = vunpack.c.h.b16 %v2495
    %v2627 = vunpack.c.l.b16 %v2496
    %v2628 = vunpack.c.h.b16 %v2496
    %v2629 = vunpack.c.l.b16 %v2497
    %v2630 = vunpack.c.h.b16 %v2497
    %v2631 = vunpack.c.l.b16 %v2498
    %v2632 = vunpack.c.h.b16 %v2498
    %v2633 = vunpack.c.l.b16 %v2499
    %v2634 = vunpack.c.h.b16 %v2499
    %v2635 = vunpack.c.l.b16 %v2500
    %v2636 = vunpack.c.h.b16 %v2500
    %v2637 = vunpack.c.l.b16 %v2501
    %v2638 = vunpack.c.h.b16 %v2501
    %v2639 = vunpack.c.l.b16 %v2502
    %v2640 = vunpack.c.h.b16 %v2502
    %v2641 = vunpack.c.l.b16 %v2503
    %v2642 = vunpack.c.h.b16 %v2503
    %v2643 = vunpack.c.l.b16 %v2504
    %v2644 = vunpack.c.h.b16 %v2504
    %v2645 = vunpack.c.l.b16 %v2505
    %v2646 = vunpack.c.h.b16 %v2505
    %v2647 = vunpack.c.l.b16 %v2506
    %v2648 = vunpack.c.h.b16 %v2506
    %v2649 = vunpack.c.l.b16 %v2507
    %v2650 = vunpack.c.h.b16 %v2507
    %v2651 = vunpack.c.l.b16 %v2508
    %v2652 = vunpack.c.h.b16 %v2508
    %v2653 = vunpack.c.l.b16 %v2509
    %v2654 = vunpack.c.h.b16 %v2509
    %v2655 = vunpack.c.l.b16 %v2510
    %v2656 = vunpack.c.h.b16 %v2510
    %v2657 = vunpack.c.l.b16 %v2511
    %v2658 = vunpack.c.h.b16 %v2511
    %v2659 = vunpack.c.l.b16 %v2512
    %v2660 = vunpack.c.h.b16 %v2512
    %v2661 = vunpack.c.l.b16 %v2513
    %v2662 = vunpack.c.h.b16 %v2513
    %v2663 = vunpack.c.l.b16 %v2514
    %v2664 = vunpack.c.h.b16 %v2514
    %v2665 = vunpack.c.l.b16 %v2515
    %v2666 = vunpack.c.h.b16 %v2515
    %v2667 = vunpack.c.l.b16 %v2516
    %v2668 = vunpack.c.h.b16 %v2516
    %v2669 = vunpack.c.l.b16 %v2517
    %v2670 = vunpack.c.h.b16 %v2517
    %v2671 = vunpack.c.l.b16 %v2518
    %v2672 = vunpack.c.h.b16 %v2518
    %v2673 = vunpack.c.l.b16 %v2519
    %v2674 = vunpack.c.h.b16 %v2519
    %v2675 = vunpack.c.l.b16 %v2520
    %v2676 = vunpack.c.h.b16 %v2520
    %v2677 = vunpack.c.l.b16 %v2521
    %v2678 = vunpack.c.h.b16 %v2521
    %v2679 = vunpack.c.l.b16 %v2522
    %v2680 = vunpack.c.h.b16 %v2522
    %v2681 = vunpack.c.l.b16 %v2523
    %v2682 = vunpack.c.h.b16 %v2523
    %v2683 = vunpack.c.l.b16 %v2524
    %v2684 = vunpack.c.h.b16 %v2524
    %v2685 = vunpack.c.l.b16 %v2525
    %v2686 = vunpack.c.h.b16 %v2525
    %v2687 = vunpack.c.l.b16 %v2526
    %v2688 = vunpack.c.h.b16 %v2526
    %v2689 = vunpack.c.l.b16 %v2527
    %v2690 = vunpack.c.h.b16 %v2527
    %v2691 = vunpack.c.l.b16 %v2528
    %v2692 = vunpack.c.h.b16 %v2528
    %v2693 = vpack.c.b16 %v2615, %v2613
    %v2694 = vpack.c.b16 %v2616, %v2614
    %v2695 = vpack.c.b16 %v2619, %v2617
    %v2696 = vpack.c.b16 %v2620, %v2618
    %v2697 = vpack.c.b16 %v2623, %v2621
    %v2698 = vpack.c.b16 %v2624, %v2622
    %v2699 = vpack.c.b16 %v2627, %v2625
    %v2700 = vpack.c.b16 %v2628, %v2626
    %v2701 = vpack.c.b16 %v2631, %v2629
    %v2702 = vpack.c.b16 %v2632, %v2630
    %v2703 = vpack.c.b16 %v2635, %v2633
    %v2704 = vpack.c.b16 %v2636, %v2634
    %v2705 = vpack.c.b16 %v2639, %v2637
    %v2706 = vpack.c.b16 %v2640, %v2638
    %v2707 = vpack.c.b16 %v2643, %v2641
    %v2708 = vpack.c.b16 %v2644, %v2642
    %v2709 = vpack.c.b16 %v2647, %v2645
    %v2710 = vpack.c.b16 %v2648, %v2646
    %v2711 = vpack.c.b16 %v2651, %v2649
    %v2712 = vpack.c.b16 %v2652, %v2650
    %v2713 = vpack.c.b16 %v2655, %v2653
    %v2714 = vpack.c.b16 %v2656, %v2654
    %v2715 = vpack.c.b16 %v2659, %v2657
    %v2716 = vpack.c.b16 %v2660, %v2658
    %v2717 = vpack.c.b16 %v2663, %v2661
    %v2718 = vpack.c.b16 %v2664, %v2662
    %v2719 = vpack.c.b16 %v2667, %v2665
    %v2720 = vpack.c.b16 %v2668, %v2666
    %v2721 = vpack.c.b16 %v2671, %v2669
    %v2722 = vpack.c.b16 %v2672, %v2670
    %v2723 = vpack.c.b16 %v2675, %v2673
    %v2724 = vpack.c.b16 %v2676, %v2674
    %v2725 = vpack.c.b16 %v2679, %v2677
    %v2726 = vpack.c.b16 %v2680, %v2678
    %v2727 = vpack.c.b16 %v2683, %v2681
    %v2728 = vpack.c.b16 %v2684, %v2682
    %v2729 = vpack.c.b16 %v2687, %v2685
    %v2730 = vpack.c.b16 %v2688, %v2686
    %v2731 = vpack.c.b16 %v2691, %v2689
    %v2732 = vpack.c.b16 %v2692, %v2690
    %v2774 = vsel %vm1743, %v2555, 0
    %v2777 = vsel %vm1743, %v2558, 0
    %v2780 = vsel %vm1743, %v2561, 0
    %v2783 = vsel %vm1743, %v2564, 0
    %2785 = vmatpush.bf16.msra.mxu0 %v2707
    %2786 = vmatpush.bf16.msra.mxu0 %v2705
    %2787 = vmatpush.bf16.msra.mxu0 %v2703
    %2788 = vmatpush.bf16.msra.mxu0 %v2701
    %2789 = vmatpush.bf16.msra.mxu0 %v2699
    %2790 = vmatpush.bf16.msra.mxu0 %v2697
    %2791 = vmatpush.bf16.msra.mxu0 %v2695
    %2792 = vmatpush.bf16.msra.mxu0 %v2693
    %2793 = vmatmul.bf16.gmra.mxu0 %v2553
    %v2794 = vpop.f32.mrf.mxu0
    %v2795 = vadd.f32 0.0, %v2794
    %v2796 = vpop.f32.mrf.mxu0
    %v2797 = vadd.f32 0.0, %v2796
    %2798 = vmatmul.bf16.gmra.mxu0 %v2556
    %v2799 = vpop.f32.mrf.mxu0
    %v2800 = vadd.f32 0.0, %v2799
    %v2801 = vpop.f32.mrf.mxu0
    %v2802 = vadd.f32 0.0, %v2801
    %2803 = vmatmul.bf16.gmra.mxu0 %v2559
    %v2804 = vpop.f32.mrf.mxu0
    %v2805 = vadd.f32 0.0, %v2804
    %v2806 = vpop.f32.mrf.mxu0
    %v2807 = vadd.f32 0.0, %v2806
    %2808 = vmatmul.bf16.gmra.mxu0 %v2562
    %v2809 = vpop.f32.mrf.mxu0
    %v2810 = vadd.f32 0.0, %v2809
    %v2811 = vpop.f32.mrf.mxu0
    %v2812 = vadd.f32 0.0, %v2811
    %2813 = vdwg.mxu0
    %2814 = vmatpush.bf16.msra.mxu0 %v2723
    %2815 = vmatpush.bf16.msra.mxu0 %v2721
    %2816 = vmatpush.bf16.msra.mxu0 %v2719
    %2817 = vmatpush.bf16.msra.mxu0 %v2717
    %2818 = vmatpush.bf16.msra.mxu0 %v2715
    %2819 = vmatpush.bf16.msra.mxu0 %v2713
    %2820 = vmatpush.bf16.msra.mxu0 %v2711
    %2821 = vmatpush.bf16.msra.mxu0 %v2709
    %2822 = vmatmul.bf16.gmra.mxu0 %v2554
    %v2823 = vpop.f32.mrf.mxu0
    %v2824 = vadd.f32 %v2795, %v2823
    %v2825 = vpop.f32.mrf.mxu0
    %v2826 = vadd.f32 %v2797, %v2825
    %2827 = vmatmul.bf16.gmra.mxu0 %v2557
    %v2828 = vpop.f32.mrf.mxu0
    %v2829 = vadd.f32 %v2800, %v2828
    %v2830 = vpop.f32.mrf.mxu0
    %v2831 = vadd.f32 %v2802, %v2830
    %2832 = vmatmul.bf16.gmra.mxu0 %v2560
    %v2833 = vpop.f32.mrf.mxu0
    %v2834 = vadd.f32 %v2805, %v2833
    %v2835 = vpop.f32.mrf.mxu0
    %v2836 = vadd.f32 %v2807, %v2835
    %2837 = vmatmul.bf16.gmra.mxu0 %v2563
    %v2838 = vpop.f32.mrf.mxu0
    %v2839 = vadd.f32 %v2810, %v2838
    %v2840 = vpop.f32.mrf.mxu0
    %v2841 = vadd.f32 %v2812, %v2840
    %2842 = vdwg.mxu0
    %2843 = vmatpush.bf16.msra.mxu0 0
    %2844 = vmatpush.bf16.msra.mxu0 0
    %2845 = vmatpush.bf16.msra.mxu0 0
    %2846 = vmatpush.bf16.msra.mxu0 0
    %2847 = vmatpush.bf16.msra.mxu0 %v2731
    %2848 = vmatpush.bf16.msra.mxu0 %v2729
    %2849 = vmatpush.bf16.msra.mxu0 %v2727
    %2850 = vmatpush.bf16.msra.mxu0 %v2725
    %2851 = vmatmul.bf16.gmra.mxu0 %v2774
    %v2852 = vpop.f32.mrf.mxu0
    %v2853 = vadd.f32 %v2824, %v2852
    %v2854 = vpop.f32.mrf.mxu0
    %v2855 = vadd.f32 %v2826, %v2854
    %2856 = vmatmul.bf16.gmra.mxu0 %v2777
    %v2857 = vpop.f32.mrf.mxu0
    %v2858 = vadd.f32 %v2829, %v2857
    %v2859 = vpop.f32.mrf.mxu0
    %v2860 = vadd.f32 %v2831, %v2859
    %2861 = vmatmul.bf16.gmra.mxu0 %v2780
    %v2862 = vpop.f32.mrf.mxu0
    %v2863 = vadd.f32 %v2834, %v2862
    %v2864 = vpop.f32.mrf.mxu0
    %v2865 = vadd.f32 %v2836, %v2864
    %2866 = vmatmul.bf16.gmra.mxu0 %v2783
    %v2867 = vpop.f32.mrf.mxu0
    %v2868 = vadd.f32 %v2839, %v2867
    %v2869 = vpop.f32.mrf.mxu0
    %v2870 = vadd.f32 %v2841, %v2869
    %2871 = vdwg.mxu0
    %2872 = vmatpush.bf16.msra.mxu0 %v2708
    %2873 = vmatpush.bf16.msra.mxu0 %v2706
    %2874 = vmatpush.bf16.msra.mxu0 %v2704
    %2875 = vmatpush.bf16.msra.mxu0 %v2702
    %2876 = vmatpush.bf16.msra.mxu0 %v2700
    %2877 = vmatpush.bf16.msra.mxu0 %v2698
    %2878 = vmatpush.bf16.msra.mxu0 %v2696
    %2879 = vmatpush.bf16.msra.mxu0 %v2694
    %2880 = vmatmul.bf16.gmra.mxu0 %v2553
    %v2881 = vpop.f32.mrf.mxu0
    %v2882 = vadd.f32 0.0, %v2881
    %v2883 = vpop.f32.mrf.mxu0
    %v2884 = vadd.f32 0.0, %v2883
    %2885 = vmatmul.bf16.gmra.mxu0 %v2556
    %v2886 = vpop.f32.mrf.mxu0
    %v2887 = vadd.f32 0.0, %v2886
    %v2888 = vpop.f32.mrf.mxu0
    %v2889 = vadd.f32 0.0, %v2888
    %2890 = vmatmul.bf16.gmra.mxu0 %v2559
    %v2891 = vpop.f32.mrf.mxu0
    %v2892 = vadd.f32 0.0, %v2891
    %v2893 = vpop.f32.mrf.mxu0
    %v2894 = vadd.f32 0.0, %v2893
    %2895 = vmatmul.bf16.gmra.mxu0 %v2562
    %v2896 = vpop.f32.mrf.mxu0
    %v2897 = vadd.f32 0.0, %v2896
    %v2898 = vpop.f32.mrf.mxu0
    %v2899 = vadd.f32 0.0, %v2898
    %2900 = vdwg.mxu0
    %2901 = vmatpush.bf16.msra.mxu0 %v2724
    %2902 = vmatpush.bf16.msra.mxu0 %v2722
    %2903 = vmatpush.bf16.msra.mxu0 %v2720
    %2904 = vmatpush.bf16.msra.mxu0 %v2718
    %2905 = vmatpush.bf16.msra.mxu0 %v2716
    %2906 = vmatpush.bf16.msra.mxu0 %v2714
    %2907 = vmatpush.bf16.msra.mxu0 %v2712
    %2908 = vmatpush.bf16.msra.mxu0 %v2710
    %2909 = vmatmul.bf16.gmra.mxu0 %v2554
    %v2910 = vpop.f32.mrf.mxu0
    %v2911 = vadd.f32 %v2882, %v2910
    %v2912 = vpop.f32.mrf.mxu0
    %v2913 = vadd.f32 %v2884, %v2912
    %2914 = vmatmul.bf16.gmra.mxu0 %v2557
    %v2915 = vpop.f32.mrf.mxu0
    %v2916 = vadd.f32 %v2887, %v2915
    %v2917 = vpop.f32.mrf.mxu0
    %v2918 = vadd.f32 %v2889, %v2917
    %2919 = vmatmul.bf16.gmra.mxu0 %v2560
    %v2920 = vpop.f32.mrf.mxu0
    %v2921 = vadd.f32 %v2892, %v2920
    %v2922 = vpop.f32.mrf.mxu0
    %v2923 = vadd.f32 %v2894, %v2922
    %2924 = vmatmul.bf16.gmra.mxu0 %v2563
    %v2925 = vpop.f32.mrf.mxu0
    %v2926 = vadd.f32 %v2897, %v2925
    %v2927 = vpop.f32.mrf.mxu0
    %v2928 = vadd.f32 %v2899, %v2927
    %2929 = vdwg.mxu0
    %2930 = vmatpush.bf16.msra.mxu0 0
    %2931 = vmatpush.bf16.msra.mxu0 0
    %2932 = vmatpush.bf16.msra.mxu0 0
    %2933 = vmatpush.bf16.msra.mxu0 0
    %2934 = vmatpush.bf16.msra.mxu0 %v2732
    %2935 = vmatpush.bf16.msra.mxu0 %v2730
    %2936 = vmatpush.bf16.msra.mxu0 %v2728
    %2937 = vmatpush.bf16.msra.mxu0 %v2726
    %2938 = vmatmul.bf16.gmra.mxu0 %v2774
    %v2939 = vpop.f32.mrf.mxu0
    %v2940 = vadd.f32 %v2911, %v2939
    %v2941 = vpop.f32.mrf.mxu0
    %v2942 = vadd.f32 %v2913, %v2941
    %2943 = vmatmul.bf16.gmra.mxu0 %v2777
    %v2944 = vpop.f32.mrf.mxu0
    %v2945 = vadd.f32 %v2916, %v2944
    %v2946 = vpop.f32.mrf.mxu0
    %v2947 = vadd.f32 %v2918, %v2946
    %2948 = vmatmul.bf16.gmra.mxu0 %v2780
    %v2949 = vpop.f32.mrf.mxu0
    %v2950 = vadd.f32 %v2921, %v2949
    %v2951 = vpop.f32.mrf.mxu0
    %v2952 = vadd.f32 %v2923, %v2951
    %2953 = vmatmul.bf16.gmra.mxu0 %v2783
    %v2954 = vpop.f32.mrf.mxu0
    %v2955 = vadd.f32 %v2926, %v2954
    %v2956 = vpop.f32.mrf.mxu0
    %v2957 = vadd.f32 %v2928, %v2956
    %2958 = vdwg.mxu0
    %v2959 = vadd.f32 %v2270, %v2853
    %v2960 = vadd.f32 %v2357, %v2940
    %v2961 = vadd.f32 %v2272, %v2855
    %v2962 = vadd.f32 %v2359, %v2942
    %v2963 = vadd.f32 %v2275, %v2858
    %v2964 = vadd.f32 %v2362, %v2945
    %v2965 = vadd.f32 %v2277, %v2860
    %v2966 = vadd.f32 %v2364, %v2947
    %v2967 = vadd.f32 %v2280, %v2863
    %v2968 = vadd.f32 %v2367, %v2950
    %v2969 = vadd.f32 %v2282, %v2865
    %v2970 = vadd.f32 %v2369, %v2952
    %v2971 = vadd.f32 %v2285, %v2868
    %v2972 = vadd.f32 %v2372, %v2955
    %v2973 = vadd.f32 %v2287, %v2870
    %v2974 = vadd.f32 %v2374, %v2957
    %v2975 = vld [vmem:[%s4] sm:$0x3]
    %v2977 = vperm.slane %v2975, 0
    %v2978 = vperm.slane %v2975, 1
    %v2981 = vadd.f32 %v2959, %v2977
    %v2982 = vadd.f32 %v2960, %v2978
    %v2983 = vadd.f32 %v2961, %v2977
    %v2984 = vadd.f32 %v2962, %v2978
    %v2985 = vadd.f32 %v2963, %v2977
    %v2986 = vadd.f32 %v2964, %v2978
    %v2987 = vadd.f32 %v2965, %v2977
    %v2988 = vadd.f32 %v2966, %v2978
    %v2989 = vadd.f32 %v2967, %v2977
    %v2990 = vadd.f32 %v2968, %v2978
    %v2991 = vadd.f32 %v2969, %v2977
    %v2992 = vadd.f32 %v2970, %v2978
    %v2993 = vadd.f32 %v2971, %v2977
    %v2994 = vadd.f32 %v2972, %v2978
    %v2995 = vadd.f32 %v2973, %v2977
    %v2996 = vadd.f32 %v2974, %v2978
    %v2997 = vmax.f32 %v2981, 0.0
    %v2998 = vmax.f32 %v2982, 0.0
    %v2999 = vmax.f32 %v2983, 0.0
    %v3000 = vmax.f32 %v2984, 0.0
    %v3001 = vmax.f32 %v2985, 0.0
    %v3002 = vmax.f32 %v2986, 0.0
    %v3003 = vmax.f32 %v2987, 0.0
    %v3004 = vmax.f32 %v2988, 0.0
    %v3005 = vmax.f32 %v2989, 0.0
    %v3006 = vmax.f32 %v2990, 0.0
    %v3007 = vmax.f32 %v2991, 0.0
    %v3008 = vmax.f32 %v2992, 0.0
    %v3009 = vmax.f32 %v2993, 0.0
    %v3010 = vmax.f32 %v2994, 0.0
    %v3011 = vmax.f32 %v2995, 0.0
    %v3012 = vmax.f32 %v2996, 0.0
    %v3013 = vpack.c.bf16 %v2998, %v2997
    %v3014 = vpack.c.bf16 %v3000, %v2999
    %v3015 = vpack.c.bf16 %v3002, %v3001
    %v3016 = vpack.c.bf16 %v3004, %v3003
    %v3017 = vpack.c.bf16 %v3006, %v3005
    %v3018 = vpack.c.bf16 %v3008, %v3007
    %v3019 = vpack.c.bf16 %v3010, %v3009
    %v3020 = vpack.c.bf16 %v3012, %v3011
    %3021 = vst [vmem:[#allocation2] sm:$0xff] %v3013
    %3022 = vst [vmem:[#allocation2 + $0x18] sm:$0xff] %v3014
    %3023 = vst [vmem:[#allocation2 + $0x30] sm:$0xff] %v3015
    %3024 = vst [vmem:[#allocation2 + $0x48] sm:$0xff] %v3016
    %3025 = vst [vmem:[#allocation2 + $0x60] sm:$0xff] %v3017
    %3026 = vst [vmem:[#allocation2 + $0x78] sm:$0xff] %v3018
    %3027 = vst [vmem:[#allocation2 + $0x90] sm:$0xff] %v3019
    %3028 = vst [vmem:[#allocation2 + $0xa8] sm:$0xff] %v3020
    %v3029 = vld [vmem:[#allocation2] sm:$0xff]
    %v3030 = vld [vmem:[#allocation2 + $0x18] sm:$0xff]
    %v3031 = vld [vmem:[#allocation2 + $0x30] sm:$0xff]
    %v3032 = vld [vmem:[#allocation2 + $0x48] sm:$0xff]
    %v3033 = vld [vmem:[#allocation2 + $0x60] sm:$0xff]
    %v3034 = vld [vmem:[#allocation2 + $0x78] sm:$0xff]
    %v3035 = vld [vmem:[#allocation2 + $0x90] sm:$0xff]
    %v3036 = vld [vmem:[#allocation2 + $0xa8] sm:$0xff]
    %v3037 = vld [vmem:[%s5] sm:$0xff]
    %v3038 = vld [vmem:[%s5 + $0x8] sm:$0xff]
    %v3039 = vld [vmem:[%s5 + $0x10] sm:$0xff]
    %v3040 = vld [vmem:[%s5 + $0x18] sm:$0xff]
    %v3041 = vld [vmem:[%s5 + $0x20] sm:$0xff]
    %v3042 = vld [vmem:[%s5 + $0x28] sm:$0xff]
    %v3043 = vld [vmem:[%s5 + $0x30] sm:$0xff]
    %v3044 = vld [vmem:[%s5 + $0x38] sm:$0xff]
    %v3045 = vld [vmem:[%s5 + $0x40] sm:$0xff]
    %v3046 = vld [vmem:[%s5 + $0x48] sm:$0xff]
    %v3047 = vld [vmem:[%s5 + $0x50] sm:$0xff]
    %v3048 = vld [vmem:[%s5 + $0x58] sm:$0xff]
    %v3049 = vld [vmem:[%s5 + $0x60] sm:$0xff]
    %v3050 = vld [vmem:[%s5 + $0x68] sm:$0xff]
    %v3051 = vld [vmem:[%s5 + $0x70] sm:$0xff]
    %v3052 = vld [vmem:[%s5 + $0x78] sm:$0xff]
    %v3053 = vld [vmem:[%s5 + $0x80] sm:$0xff]
    %v3054 = vld [vmem:[%s5 + $0x88] sm:$0xff]
    %v3055 = vld [vmem:[%s5 + $0x90] sm:$0xff]
    %v3056 = vld [vmem:[%s5 + $0x98] sm:$0xff]
    %v3057 = vld [vmem:[%s5 + $0xa0] sm:$0xff]
    %v3058 = vld [vmem:[%s5 + $0xa8] sm:$0xff]
    %v3059 = vld [vmem:[%s5 + $0xb0] sm:$0xff]
    %v3060 = vld [vmem:[%s5 + $0xb8] sm:$0xff]
    %v3061 = vld [vmem:[%s5 + $0xc0] sm:$0xff]
    %v3062 = vld [vmem:[%s5 + $0xc8] sm:$0xff]
    %v3063 = vld [vmem:[%s5 + $0xd0] sm:$0xff]
    %v3064 = vld [vmem:[%s5 + $0xd8] sm:$0xff]
    %v3065 = vld [vmem:[%s5 + $0xe0] sm:$0xff]
    %v3066 = vld [vmem:[%s5 + $0xe8] sm:$0xff]
    %v3067 = vld [vmem:[%s5 + $0xf0] sm:$0xff]
    %v3068 = vld [vmem:[%s5 + $0xf8] sm:$0xff]
    %v3069 = vld [vmem:[#allocation2 + $0xc] sm:$0x11]
    %v3070 = vld [vmem:[#allocation2 + $0x24] sm:$0x11]
    %v3071 = vld [vmem:[#allocation2 + $0x3c] sm:$0x11]
    %v3072 = vld [vmem:[#allocation2 + $0x54] sm:$0x11]
    %v3073 = vld [vmem:[#allocation2 + $0x6c] sm:$0x11]
    %v3074 = vld [vmem:[#allocation2 + $0x84] sm:$0x11]
    %v3075 = vld [vmem:[#allocation2 + $0x9c] sm:$0x11]
    %v3076 = vld [vmem:[#allocation2 + $0xb4] sm:$0x11]
    %v3078 = vshrl.u32 %v3029, 16
    %v3080 = vrot.slane %v3078, 4
    %v3081 = vshll.u32 %v3029, 16
    %v3083 = vrot.slane %v3081, 5
    %v3084 = vor.u32 %v3080, %v3083
    %v3085 = vrot.slane %v3084, 4
    %v3087 = vshll.u32 %v3069, 16
    %v3089 = vrot.slane %v3087, 5
    %v3090 = vsel %vm120, %v3085, %v3089
    %v3092 = vshrl.u32 %v3030, 16
    %v3094 = vrot.slane %v3092, 4
    %v3095 = vshll.u32 %v3030, 16
    %v3097 = vrot.slane %v3095, 5
    %v3098 = vor.u32 %v3094, %v3097
    %v3099 = vrot.slane %v3098, 4
    %v3101 = vshll.u32 %v3070, 16
    %v3103 = vrot.slane %v3101, 5
    %v3104 = vsel %vm120, %v3099, %v3103
    %v3106 = vshrl.u32 %v3031, 16
    %v3108 = vrot.slane %v3106, 4
    %v3109 = vshll.u32 %v3031, 16
    %v3111 = vrot.slane %v3109, 5
    %v3112 = vor.u32 %v3108, %v3111
    %v3113 = vrot.slane %v3112, 4
    %v3115 = vshll.u32 %v3071, 16
    %v3117 = vrot.slane %v3115, 5
    %v3118 = vsel %vm120, %v3113, %v3117
    %v3120 = vshrl.u32 %v3032, 16
    %v3122 = vrot.slane %v3120, 4
    %v3123 = vshll.u32 %v3032, 16
    %v3125 = vrot.slane %v3123, 5
    %v3126 = vor.u32 %v3122, %v3125
    %v3127 = vrot.slane %v3126, 4
    %v3129 = vshll.u32 %v3072, 16
    %v3131 = vrot.slane %v3129, 5
    %v3132 = vsel %vm120, %v3127, %v3131
    %v3134 = vshrl.u32 %v3033, 16
    %v3136 = vrot.slane %v3134, 4
    %v3137 = vshll.u32 %v3033, 16
    %v3139 = vrot.slane %v3137, 5
    %v3140 = vor.u32 %v3136, %v3139
    %v3141 = vrot.slane %v3140, 4
    %v3143 = vshll.u32 %v3073, 16
    %v3145 = vrot.slane %v3143, 5
    %v3146 = vsel %vm120, %v3141, %v3145
    %v3148 = vshrl.u32 %v3034, 16
    %v3150 = vrot.slane %v3148, 4
    %v3151 = vshll.u32 %v3034, 16
    %v3153 = vrot.slane %v3151, 5
    %v3154 = vor.u32 %v3150, %v3153
    %v3155 = vrot.slane %v3154, 4
    %v3157 = vshll.u32 %v3074, 16
    %v3159 = vrot.slane %v3157, 5
    %v3160 = vsel %vm120, %v3155, %v3159
    %v3162 = vshrl.u32 %v3035, 16
    %v3164 = vrot.slane %v3162, 4
    %v3165 = vshll.u32 %v3035, 16
    %v3167 = vrot.slane %v3165, 5
    %v3168 = vor.u32 %v3164, %v3167
    %v3169 = vrot.slane %v3168, 4
    %v3171 = vshll.u32 %v3075, 16
    %v3173 = vrot.slane %v3171, 5
    %v3174 = vsel %vm120, %v3169, %v3173
    %v3176 = vshrl.u32 %v3036, 16
    %v3178 = vrot.slane %v3176, 4
    %v3179 = vshll.u32 %v3036, 16
    %v3181 = vrot.slane %v3179, 5
    %v3182 = vor.u32 %v3178, %v3181
    %v3183 = vrot.slane %v3182, 4
    %v3185 = vshll.u32 %v3076, 16
    %v3187 = vrot.slane %v3185, 5
    %v3188 = vsel %vm120, %v3183, %v3187
    %s3189 = scalar_lea.vmem %s5, 256
    %v3190 = vld [vmem:[%s3189] sm:$0xff]
    %v3191 = vld [vmem:[%s3189 + $0x8] sm:$0xff]
    %v3192 = vld [vmem:[%s3189 + $0x10] sm:$0xff]
    %v3193 = vld [vmem:[%s3189 + $0x18] sm:$0xff]
    %v3194 = vld [vmem:[%s3189 + $0x20] sm:$0xff]
    %v3195 = vld [vmem:[%s3189 + $0x28] sm:$0xff]
    %v3196 = vld [vmem:[%s3189 + $0x30] sm:$0xff]
    %v3197 = vld [vmem:[%s3189 + $0x38] sm:$0xff]
    %v3198 = vld [vmem:[%s3189 + $0x40] sm:$0xff]
    %v3199 = vld [vmem:[%s3189 + $0x48] sm:$0xff]
    %v3200 = vld [vmem:[%s3189 + $0x50] sm:$0xff]
    %v3201 = vld [vmem:[%s3189 + $0x58] sm:$0xff]
    %v3202 = vld [vmem:[%s3189 + $0x60] sm:$0xff]
    %v3203 = vld [vmem:[%s3189 + $0x68] sm:$0xff]
    %v3204 = vld [vmem:[%s3189 + $0x70] sm:$0xff]
    %v3205 = vld [vmem:[%s3189 + $0x78] sm:$0xff]
    %v3206 = vld [vmem:[%s3189 + $0x80] sm:$0xff]
    %v3207 = vld [vmem:[%s3189 + $0x88] sm:$0xff]
    %v3208 = vld [vmem:[%s3189 + $0x90] sm:$0xff]
    %v3209 = vld [vmem:[%s3189 + $0x98] sm:$0xff]
    %v3210 = vld [vmem:[%s3189 + $0xa0] sm:$0xff]
    %v3211 = vld [vmem:[%s3189 + $0xa8] sm:$0xff]
    %v3212 = vld [vmem:[%s3189 + $0xb0] sm:$0xff]
    %v3213 = vld [vmem:[%s3189 + $0xb8] sm:$0xff]
    %v3214 = vld [vmem:[%s3189 + $0xc0] sm:$0xff]
    %v3215 = vld [vmem:[%s3189 + $0xc8] sm:$0xff]
    %v3216 = vld [vmem:[%s3189 + $0xd0] sm:$0xff]
    %v3217 = vld [vmem:[%s3189 + $0xd8] sm:$0xff]
    %v3218 = vld [vmem:[%s3189 + $0xe0] sm:$0xff]
    %v3219 = vld [vmem:[%s3189 + $0xe8] sm:$0xff]
    %v3220 = vld [vmem:[%s3189 + $0xf0] sm:$0xff]
    %v3221 = vld [vmem:[%s3189 + $0xf8] sm:$0xff]
    %v3222 = vunpack.c.l.b16 %v3090
    %v3223 = vunpack.c.h.b16 %v3090
    %v3224 = vunpack.c.l.b16 %v3104
    %v3225 = vunpack.c.h.b16 %v3104
    %v3226 = vunpack.c.l.b16 %v3118
    %v3227 = vunpack.c.h.b16 %v3118
    %v3228 = vunpack.c.l.b16 %v3132
    %v3229 = vunpack.c.h.b16 %v3132
    %v3230 = vunpack.c.l.b16 %v3146
    %v3231 = vunpack.c.h.b16 %v3146
    %v3232 = vunpack.c.l.b16 %v3160
    %v3233 = vunpack.c.h.b16 %v3160
    %v3234 = vunpack.c.l.b16 %v3174
    %v3235 = vunpack.c.h.b16 %v3174
    %v3236 = vunpack.c.l.b16 %v3188
    %v3237 = vunpack.c.h.b16 %v3188
    %v3238 = vpack.c.b16 %v3224, %v3222
    %v3239 = vpack.c.b16 %v3225, %v3223
    %v3240 = vpack.c.b16 %v3228, %v3226
    %v3241 = vpack.c.b16 %v3229, %v3227
    %v3242 = vpack.c.b16 %v3232, %v3230
    %v3243 = vpack.c.b16 %v3233, %v3231
    %v3244 = vpack.c.b16 %v3236, %v3234
    %v3245 = vpack.c.b16 %v3237, %v3235
    %v3286 = vunpack.c.l.b16 %v3190
    %v3287 = vunpack.c.h.b16 %v3190
    %v3288 = vunpack.c.l.b16 %v3191
    %v3289 = vunpack.c.h.b16 %v3191
    %v3290 = vunpack.c.l.b16 %v3192
    %v3291 = vunpack.c.h.b16 %v3192
    %v3292 = vunpack.c.l.b16 %v3193
    %v3293 = vunpack.c.h.b16 %v3193
    %v3294 = vunpack.c.l.b16 %v3194
    %v3295 = vunpack.c.h.b16 %v3194
    %v3296 = vunpack.c.l.b16 %v3195
    %v3297 = vunpack.c.h.b16 %v3195
    %v3298 = vunpack.c.l.b16 %v3196
    %v3299 = vunpack.c.h.b16 %v3196
    %v3300 = vunpack.c.l.b16 %v3197
    %v3301 = vunpack.c.h.b16 %v3197
    %v3302 = vunpack.c.l.b16 %v3198
    %v3303 = vunpack.c.h.b16 %v3198
    %v3304 = vunpack.c.l.b16 %v3199
    %v3305 = vunpack.c.h.b16 %v3199
    %v3306 = vunpack.c.l.b16 %v3200
    %v3307 = vunpack.c.h.b16 %v3200
    %v3308 = vunpack.c.l.b16 %v3201
    %v3309 = vunpack.c.h.b16 %v3201
    %v3310 = vunpack.c.l.b16 %v3202
    %v3311 = vunpack.c.h.b16 %v3202
    %v3312 = vunpack.c.l.b16 %v3203
    %v3313 = vunpack.c.h.b16 %v3203
    %v3314 = vunpack.c.l.b16 %v3204
    %v3315 = vunpack.c.h.b16 %v3204
    %v3316 = vunpack.c.l.b16 %v3205
    %v3317 = vunpack.c.h.b16 %v3205
    %v3318 = vunpack.c.l.b16 %v3206
    %v3319 = vunpack.c.h.b16 %v3206
    %v3320 = vunpack.c.l.b16 %v3207
    %v3321 = vunpack.c.h.b16 %v3207
    %v3322 = vunpack.c.l.b16 %v3208
    %v3323 = vunpack.c.h.b16 %v3208
    %v3324 = vunpack.c.l.b16 %v3209
    %v3325 = vunpack.c.h.b16 %v3209
    %v3326 = vunpack.c.l.b16 %v3210
    %v3327 = vunpack.c.h.b16 %v3210
    %v3328 = vunpack.c.l.b16 %v3211
    %v3329 = vunpack.c.h.b16 %v3211
    %v3330 = vunpack.c.l.b16 %v3212
    %v3331 = vunpack.c.h.b16 %v3212
    %v3332 = vunpack.c.l.b16 %v3213
    %v3333 = vunpack.c.h.b16 %v3213
    %v3334 = vunpack.c.l.b16 %v3214
    %v3335 = vunpack.c.h.b16 %v3214
    %v3336 = vunpack.c.l.b16 %v3215
    %v3337 = vunpack.c.h.b16 %v3215
    %v3338 = vunpack.c.l.b16 %v3216
    %v3339 = vunpack.c.h.b16 %v3216
    %v3340 = vunpack.c.l.b16 %v3217
    %v3341 = vunpack.c.h.b16 %v3217
    %v3342 = vunpack.c.l.b16 %v3218
    %v3343 = vunpack.c.h.b16 %v3218
    %v3344 = vunpack.c.l.b16 %v3219
    %v3345 = vunpack.c.h.b16 %v3219
    %v3346 = vunpack.c.l.b16 %v3220
    %v3347 = vunpack.c.h.b16 %v3220
    %v3348 = vunpack.c.l.b16 %v3221
    %v3349 = vunpack.c.h.b16 %v3221
    %v3350 = vpack.c.b16 %v3288, %v3286
    %v3351 = vpack.c.b16 %v3289, %v3287
    %v3352 = vpack.c.b16 %v3292, %v3290
    %v3353 = vpack.c.b16 %v3293, %v3291
    %v3354 = vpack.c.b16 %v3296, %v3294
    %v3355 = vpack.c.b16 %v3297, %v3295
    %v3356 = vpack.c.b16 %v3300, %v3298
    %v3357 = vpack.c.b16 %v3301, %v3299
    %v3358 = vpack.c.b16 %v3304, %v3302
    %v3359 = vpack.c.b16 %v3305, %v3303
    %v3360 = vpack.c.b16 %v3308, %v3306
    %v3361 = vpack.c.b16 %v3309, %v3307
    %v3362 = vpack.c.b16 %v3312, %v3310
    %v3363 = vpack.c.b16 %v3313, %v3311
    %v3364 = vpack.c.b16 %v3316, %v3314
    %v3365 = vpack.c.b16 %v3317, %v3315
    %v3366 = vpack.c.b16 %v3320, %v3318
    %v3367 = vpack.c.b16 %v3321, %v3319
    %v3368 = vpack.c.b16 %v3324, %v3322
    %v3369 = vpack.c.b16 %v3325, %v3323
    %v3370 = vpack.c.b16 %v3328, %v3326
    %v3371 = vpack.c.b16 %v3329, %v3327
    %v3372 = vpack.c.b16 %v3332, %v3330
    %v3373 = vpack.c.b16 %v3333, %v3331
    %v3374 = vpack.c.b16 %v3336, %v3334
    %v3375 = vpack.c.b16 %v3337, %v3335
    %v3376 = vpack.c.b16 %v3340, %v3338
    %v3377 = vpack.c.b16 %v3341, %v3339
    %v3378 = vpack.c.b16 %v3344, %v3342
    %v3379 = vpack.c.b16 %v3345, %v3343
    %v3380 = vpack.c.b16 %v3348, %v3346
    %v3381 = vpack.c.b16 %v3349, %v3347
    %3414 = vmatpush.bf16.msra.mxu0 %v3364
    %3415 = vmatpush.bf16.msra.mxu0 %v3362
    %3416 = vmatpush.bf16.msra.mxu0 %v3360
    %3417 = vmatpush.bf16.msra.mxu0 %v3358
    %3418 = vmatpush.bf16.msra.mxu0 %v3356
    %3419 = vmatpush.bf16.msra.mxu0 %v3354
    %3420 = vmatpush.bf16.msra.mxu0 %v3352
    %3421 = vmatpush.bf16.msra.mxu0 %v3350
    %3422 = vmatmul.bf16.gmra.mxu0 %v3238
    %v3423 = vpop.f32.mrf.mxu0
    %v3424 = vadd.f32 0.0, %v3423
    %v3425 = vpop.f32.mrf.mxu0
    %v3426 = vadd.f32 0.0, %v3425
    %3427 = vmatmul.bf16.gmra.mxu0 %v3240
    %v3428 = vpop.f32.mrf.mxu0
    %v3429 = vadd.f32 0.0, %v3428
    %v3430 = vpop.f32.mrf.mxu0
    %v3431 = vadd.f32 0.0, %v3430
    %3432 = vmatmul.bf16.gmra.mxu0 %v3242
    %v3433 = vpop.f32.mrf.mxu0
    %v3434 = vadd.f32 0.0, %v3433
    %v3435 = vpop.f32.mrf.mxu0
    %v3436 = vadd.f32 0.0, %v3435
    %3437 = vmatmul.bf16.gmra.mxu0 %v3244
    %v3438 = vpop.f32.mrf.mxu0
    %v3439 = vadd.f32 0.0, %v3438
    %v3440 = vpop.f32.mrf.mxu0
    %v3441 = vadd.f32 0.0, %v3440
    %3442 = vdwg.mxu0
    %3443 = vmatpush.bf16.msra.mxu0 %v3380
    %3444 = vmatpush.bf16.msra.mxu0 %v3378
    %3445 = vmatpush.bf16.msra.mxu0 %v3376
    %3446 = vmatpush.bf16.msra.mxu0 %v3374
    %3447 = vmatpush.bf16.msra.mxu0 %v3372
    %3448 = vmatpush.bf16.msra.mxu0 %v3370
    %3449 = vmatpush.bf16.msra.mxu0 %v3368
    %3450 = vmatpush.bf16.msra.mxu0 %v3366
    %3451 = vmatmul.bf16.gmra.mxu0 %v3239
    %v3452 = vpop.f32.mrf.mxu0
    %v3453 = vadd.f32 %v3424, %v3452
    %v3454 = vpop.f32.mrf.mxu0
    %v3455 = vadd.f32 %v3426, %v3454
    %3456 = vmatmul.bf16.gmra.mxu0 %v3241
    %v3457 = vpop.f32.mrf.mxu0
    %v3458 = vadd.f32 %v3429, %v3457
    %v3459 = vpop.f32.mrf.mxu0
    %v3460 = vadd.f32 %v3431, %v3459
    %3461 = vmatmul.bf16.gmra.mxu0 %v3243
    %v3462 = vpop.f32.mrf.mxu0
    %v3463 = vadd.f32 %v3434, %v3462
    %v3464 = vpop.f32.mrf.mxu0
    %v3465 = vadd.f32 %v3436, %v3464
    %3466 = vmatmul.bf16.gmra.mxu0 %v3245
    %v3467 = vpop.f32.mrf.mxu0
    %v3468 = vadd.f32 %v3439, %v3467
    %v3469 = vpop.f32.mrf.mxu0
    %v3470 = vadd.f32 %v3441, %v3469
    %3471 = vdwg.mxu0
    %3472 = vmatpush.bf16.msra.mxu0 %v3365
    %3473 = vmatpush.bf16.msra.mxu0 %v3363
    %3474 = vmatpush.bf16.msra.mxu0 %v3361
    %3475 = vmatpush.bf16.msra.mxu0 %v3359
    %3476 = vmatpush.bf16.msra.mxu0 %v3357
    %3477 = vmatpush.bf16.msra.mxu0 %v3355
    %3478 = vmatpush.bf16.msra.mxu0 %v3353
    %3479 = vmatpush.bf16.msra.mxu0 %v3351
    %3480 = vmatmul.bf16.gmra.mxu0 %v3238
    %v3481 = vpop.f32.mrf.mxu0
    %v3482 = vadd.f32 0.0, %v3481
    %v3483 = vpop.f32.mrf.mxu0
    %v3484 = vadd.f32 0.0, %v3483
    %3485 = vmatmul.bf16.gmra.mxu0 %v3240
    %v3486 = vpop.f32.mrf.mxu0
    %v3487 = vadd.f32 0.0, %v3486
    %v3488 = vpop.f32.mrf.mxu0
    %v3489 = vadd.f32 0.0, %v3488
    %3490 = vmatmul.bf16.gmra.mxu0 %v3242
    %v3491 = vpop.f32.mrf.mxu0
    %v3492 = vadd.f32 0.0, %v3491
    %v3493 = vpop.f32.mrf.mxu0
    %v3494 = vadd.f32 0.0, %v3493
    %3495 = vmatmul.bf16.gmra.mxu0 %v3244
    %v3496 = vpop.f32.mrf.mxu0
    %v3497 = vadd.f32 0.0, %v3496
    %v3498 = vpop.f32.mrf.mxu0
    %v3499 = vadd.f32 0.0, %v3498
    %3500 = vdwg.mxu0
    %3501 = vmatpush.bf16.msra.mxu0 %v3381
    %3502 = vmatpush.bf16.msra.mxu0 %v3379
    %3503 = vmatpush.bf16.msra.mxu0 %v3377
    %3504 = vmatpush.bf16.msra.mxu0 %v3375
    %3505 = vmatpush.bf16.msra.mxu0 %v3373
    %3506 = vmatpush.bf16.msra.mxu0 %v3371
    %3507 = vmatpush.bf16.msra.mxu0 %v3369
    %3508 = vmatpush.bf16.msra.mxu0 %v3367
    %3509 = vmatmul.bf16.gmra.mxu0 %v3239
    %v3510 = vpop.f32.mrf.mxu0
    %v3511 = vadd.f32 %v3482, %v3510
    %v3512 = vpop.f32.mrf.mxu0
    %v3513 = vadd.f32 %v3484, %v3512
    %3514 = vmatmul.bf16.gmra.mxu0 %v3241
    %v3515 = vpop.f32.mrf.mxu0
    %v3516 = vadd.f32 %v3487, %v3515
    %v3517 = vpop.f32.mrf.mxu0
    %v3518 = vadd.f32 %v3489, %v3517
    %3519 = vmatmul.bf16.gmra.mxu0 %v3243
    %v3520 = vpop.f32.mrf.mxu0
    %v3521 = vadd.f32 %v3492, %v3520
    %v3522 = vpop.f32.mrf.mxu0
    %v3523 = vadd.f32 %v3494, %v3522
    %3524 = vmatmul.bf16.gmra.mxu0 %v3245
    %v3525 = vpop.f32.mrf.mxu0
    %v3526 = vadd.f32 %v3497, %v3525
    %v3527 = vpop.f32.mrf.mxu0
    %v3528 = vadd.f32 %v3499, %v3527
    %3529 = vdwg.mxu0
    %v3538 = vunpack.c.l.b16 %v3029
    %v3539 = vunpack.c.h.b16 %v3029
    %v3540 = vunpack.c.l.b16 %v3030
    %v3541 = vunpack.c.h.b16 %v3030
    %v3542 = vunpack.c.l.b16 %v3031
    %v3543 = vunpack.c.h.b16 %v3031
    %v3544 = vunpack.c.l.b16 %v3032
    %v3545 = vunpack.c.h.b16 %v3032
    %v3546 = vunpack.c.l.b16 %v3033
    %v3547 = vunpack.c.h.b16 %v3033
    %v3548 = vunpack.c.l.b16 %v3034
    %v3549 = vunpack.c.h.b16 %v3034
    %v3550 = vunpack.c.l.b16 %v3035
    %v3551 = vunpack.c.h.b16 %v3035
    %v3552 = vunpack.c.l.b16 %v3036
    %v3553 = vunpack.c.h.b16 %v3036
    %v3554 = vpack.c.b16 %v3540, %v3538
    %v3555 = vpack.c.b16 %v3541, %v3539
    %v3556 = vpack.c.b16 %v3544, %v3542
    %v3557 = vpack.c.b16 %v3545, %v3543
    %v3558 = vpack.c.b16 %v3548, %v3546
    %v3559 = vpack.c.b16 %v3549, %v3547
    %v3560 = vpack.c.b16 %v3552, %v3550
    %v3561 = vpack.c.b16 %v3553, %v3551
    %v3602 = vunpack.c.l.b16 %v3037
    %v3603 = vunpack.c.h.b16 %v3037
    %v3604 = vunpack.c.l.b16 %v3038
    %v3605 = vunpack.c.h.b16 %v3038
    %v3606 = vunpack.c.l.b16 %v3039
    %v3607 = vunpack.c.h.b16 %v3039
    %v3608 = vunpack.c.l.b16 %v3040
    %v3609 = vunpack.c.h.b16 %v3040
    %v3610 = vunpack.c.l.b16 %v3041
    %v3611 = vunpack.c.h.b16 %v3041
    %v3612 = vunpack.c.l.b16 %v3042
    %v3613 = vunpack.c.h.b16 %v3042
    %v3614 = vunpack.c.l.b16 %v3043
    %v3615 = vunpack.c.h.b16 %v3043
    %v3616 = vunpack.c.l.b16 %v3044
    %v3617 = vunpack.c.h.b16 %v3044
    %v3618 = vunpack.c.l.b16 %v3045
    %v3619 = vunpack.c.h.b16 %v3045
    %v3620 = vunpack.c.l.b16 %v3046
    %v3621 = vunpack.c.h.b16 %v3046
    %v3622 = vunpack.c.l.b16 %v3047
    %v3623 = vunpack.c.h.b16 %v3047
    %v3624 = vunpack.c.l.b16 %v3048
    %v3625 = vunpack.c.h.b16 %v3048
    %v3626 = vunpack.c.l.b16 %v3049
    %v3627 = vunpack.c.h.b16 %v3049
    %v3628 = vunpack.c.l.b16 %v3050
    %v3629 = vunpack.c.h.b16 %v3050
    %v3630 = vunpack.c.l.b16 %v3051
    %v3631 = vunpack.c.h.b16 %v3051
    %v3632 = vunpack.c.l.b16 %v3052
    %v3633 = vunpack.c.h.b16 %v3052
    %v3634 = vunpack.c.l.b16 %v3053
    %v3635 = vunpack.c.h.b16 %v3053
    %v3636 = vunpack.c.l.b16 %v3054
    %v3637 = vunpack.c.h.b16 %v3054
    %v3638 = vunpack.c.l.b16 %v3055
    %v3639 = vunpack.c.h.b16 %v3055
    %v3640 = vunpack.c.l.b16 %v3056
    %v3641 = vunpack.c.h.b16 %v3056
    %v3642 = vunpack.c.l.b16 %v3057
    %v3643 = vunpack.c.h.b16 %v3057
    %v3644 = vunpack.c.l.b16 %v3058
    %v3645 = vunpack.c.h.b16 %v3058
    %v3646 = vunpack.c.l.b16 %v3059
    %v3647 = vunpack.c.h.b16 %v3059
    %v3648 = vunpack.c.l.b16 %v3060
    %v3649 = vunpack.c.h.b16 %v3060
    %v3650 = vunpack.c.l.b16 %v3061
    %v3651 = vunpack.c.h.b16 %v3061
    %v3652 = vunpack.c.l.b16 %v3062
    %v3653 = vunpack.c.h.b16 %v3062
    %v3654 = vunpack.c.l.b16 %v3063
    %v3655 = vunpack.c.h.b16 %v3063
    %v3656 = vunpack.c.l.b16 %v3064
    %v3657 = vunpack.c.h.b16 %v3064
    %v3658 = vunpack.c.l.b16 %v3065
    %v3659 = vunpack.c.h.b16 %v3065
    %v3660 = vunpack.c.l.b16 %v3066
    %v3661 = vunpack.c.h.b16 %v3066
    %v3662 = vunpack.c.l.b16 %v3067
    %v3663 = vunpack.c.h.b16 %v3067
    %v3664 = vunpack.c.l.b16 %v3068
    %v3665 = vunpack.c.h.b16 %v3068
    %v3666 = vpack.c.b16 %v3604, %v3602
    %v3667 = vpack.c.b16 %v3605, %v3603
    %v3668 = vpack.c.b16 %v3608, %v3606
    %v3669 = vpack.c.b16 %v3609, %v3607
    %v3670 = vpack.c.b16 %v3612, %v3610
    %v3671 = vpack.c.b16 %v3613, %v3611
    %v3672 = vpack.c.b16 %v3616, %v3614
    %v3673 = vpack.c.b16 %v3617, %v3615
    %v3674 = vpack.c.b16 %v3620, %v3618
    %v3675 = vpack.c.b16 %v3621, %v3619
    %v3676 = vpack.c.b16 %v3624, %v3622
    %v3677 = vpack.c.b16 %v3625, %v3623
    %v3678 = vpack.c.b16 %v3628, %v3626
    %v3679 = vpack.c.b16 %v3629, %v3627
    %v3680 = vpack.c.b16 %v3632, %v3630
    %v3681 = vpack.c.b16 %v3633, %v3631
    %v3682 = vpack.c.b16 %v3636, %v3634
    %v3683 = vpack.c.b16 %v3637, %v3635
    %v3684 = vpack.c.b16 %v3640, %v3638
    %v3685 = vpack.c.b16 %v3641, %v3639
    %v3686 = vpack.c.b16 %v3644, %v3642
    %v3687 = vpack.c.b16 %v3645, %v3643
    %v3688 = vpack.c.b16 %v3648, %v3646
    %v3689 = vpack.c.b16 %v3649, %v3647
    %v3690 = vpack.c.b16 %v3652, %v3650
    %v3691 = vpack.c.b16 %v3653, %v3651
    %v3692 = vpack.c.b16 %v3656, %v3654
    %v3693 = vpack.c.b16 %v3657, %v3655
    %v3694 = vpack.c.b16 %v3660, %v3658
    %v3695 = vpack.c.b16 %v3661, %v3659
    %v3696 = vpack.c.b16 %v3664, %v3662
    %v3697 = vpack.c.b16 %v3665, %v3663
    %3730 = vmatpush.bf16.msra.mxu0 %v3680
    %3731 = vmatpush.bf16.msra.mxu0 %v3678
    %3732 = vmatpush.bf16.msra.mxu0 %v3676
    %3733 = vmatpush.bf16.msra.mxu0 %v3674
    %3734 = vmatpush.bf16.msra.mxu0 %v3672
    %3735 = vmatpush.bf16.msra.mxu0 %v3670
    %3736 = vmatpush.bf16.msra.mxu0 %v3668
    %3737 = vmatpush.bf16.msra.mxu0 %v3666
    %3738 = vmatmul.bf16.gmra.mxu0 %v3554
    %v3739 = vpop.f32.mrf.mxu0
    %v3740 = vadd.f32 %v3453, %v3739
    %v3741 = vpop.f32.mrf.mxu0
    %v3742 = vadd.f32 %v3455, %v3741
    %3743 = vmatmul.bf16.gmra.mxu0 %v3556
    %v3744 = vpop.f32.mrf.mxu0
    %v3745 = vadd.f32 %v3458, %v3744
    %v3746 = vpop.f32.mrf.mxu0
    %v3747 = vadd.f32 %v3460, %v3746
    %3748 = vmatmul.bf16.gmra.mxu0 %v3558
    %v3749 = vpop.f32.mrf.mxu0
    %v3750 = vadd.f32 %v3463, %v3749
    %v3751 = vpop.f32.mrf.mxu0
    %v3752 = vadd.f32 %v3465, %v3751
    %3753 = vmatmul.bf16.gmra.mxu0 %v3560
    %v3754 = vpop.f32.mrf.mxu0
    %v3755 = vadd.f32 %v3468, %v3754
    %v3756 = vpop.f32.mrf.mxu0
    %v3757 = vadd.f32 %v3470, %v3756
    %3758 = vdwg.mxu0
    %3759 = vmatpush.bf16.msra.mxu0 %v3696
    %3760 = vmatpush.bf16.msra.mxu0 %v3694
    %3761 = vmatpush.bf16.msra.mxu0 %v3692
    %3762 = vmatpush.bf16.msra.mxu0 %v3690
    %3763 = vmatpush.bf16.msra.mxu0 %v3688
    %3764 = vmatpush.bf16.msra.mxu0 %v3686
    %3765 = vmatpush.bf16.msra.mxu0 %v3684
    %3766 = vmatpush.bf16.msra.mxu0 %v3682
    %3767 = vmatmul.bf16.gmra.mxu0 %v3555
    %v3768 = vpop.f32.mrf.mxu0
    %v3769 = vadd.f32 %v3740, %v3768
    %v3770 = vpop.f32.mrf.mxu0
    %v3771 = vadd.f32 %v3742, %v3770
    %3772 = vmatmul.bf16.gmra.mxu0 %v3557
    %v3773 = vpop.f32.mrf.mxu0
    %v3774 = vadd.f32 %v3745, %v3773
    %v3775 = vpop.f32.mrf.mxu0
    %v3776 = vadd.f32 %v3747, %v3775
    %3777 = vmatmul.bf16.gmra.mxu0 %v3559
    %v3778 = vpop.f32.mrf.mxu0
    %v3779 = vadd.f32 %v3750, %v3778
    %v3780 = vpop.f32.mrf.mxu0
    %v3781 = vadd.f32 %v3752, %v3780
    %3782 = vmatmul.bf16.gmra.mxu0 %v3561
    %v3783 = vpop.f32.mrf.mxu0
    %v3784 = vadd.f32 %v3755, %v3783
    %v3785 = vpop.f32.mrf.mxu0
    %v3786 = vadd.f32 %v3757, %v3785
    %3787 = vdwg.mxu0
    %3788 = vmatpush.bf16.msra.mxu0 %v3681
    %3789 = vmatpush.bf16.msra.mxu0 %v3679
    %3790 = vmatpush.bf16.msra.mxu0 %v3677
    %3791 = vmatpush.bf16.msra.mxu0 %v3675
    %3792 = vmatpush.bf16.msra.mxu0 %v3673
    %3793 = vmatpush.bf16.msra.mxu0 %v3671
    %3794 = vmatpush.bf16.msra.mxu0 %v3669
    %3795 = vmatpush.bf16.msra.mxu0 %v3667
    %3796 = vmatmul.bf16.gmra.mxu0 %v3554
    %v3797 = vpop.f32.mrf.mxu0
    %v3798 = vadd.f32 %v3511, %v3797
    %v3799 = vpop.f32.mrf.mxu0
    %v3800 = vadd.f32 %v3513, %v3799
    %3801 = vmatmul.bf16.gmra.mxu0 %v3556
    %v3802 = vpop.f32.mrf.mxu0
    %v3803 = vadd.f32 %v3516, %v3802
    %v3804 = vpop.f32.mrf.mxu0
    %v3805 = vadd.f32 %v3518, %v3804
    %3806 = vmatmul.bf16.gmra.mxu0 %v3558
    %v3807 = vpop.f32.mrf.mxu0
    %v3808 = vadd.f32 %v3521, %v3807
    %v3809 = vpop.f32.mrf.mxu0
    %v3810 = vadd.f32 %v3523, %v3809
    %3811 = vmatmul.bf16.gmra.mxu0 %v3560
    %v3812 = vpop.f32.mrf.mxu0
    %v3813 = vadd.f32 %v3526, %v3812
    %v3814 = vpop.f32.mrf.mxu0
    %v3815 = vadd.f32 %v3528, %v3814
    %3816 = vdwg.mxu0
    %3817 = vmatpush.bf16.msra.mxu0 %v3697
    %3818 = vmatpush.bf16.msra.mxu0 %v3695
    %3819 = vmatpush.bf16.msra.mxu0 %v3693
    %3820 = vmatpush.bf16.msra.mxu0 %v3691
    %3821 = vmatpush.bf16.msra.mxu0 %v3689
    %3822 = vmatpush.bf16.msra.mxu0 %v3687
    %3823 = vmatpush.bf16.msra.mxu0 %v3685
    %3824 = vmatpush.bf16.msra.mxu0 %v3683
    %3825 = vmatmul.bf16.gmra.mxu0 %v3555
    %v3826 = vpop.f32.mrf.mxu0
    %v3827 = vadd.f32 %v3798, %v3826
    %v3828 = vpop.f32.mrf.mxu0
    %v3829 = vadd.f32 %v3800, %v3828
    %3830 = vmatmul.bf16.gmra.mxu0 %v3557
    %v3831 = vpop.f32.mrf.mxu0
    %v3832 = vadd.f32 %v3803, %v3831
    %v3833 = vpop.f32.mrf.mxu0
    %v3834 = vadd.f32 %v3805, %v3833
    %3835 = vmatmul.bf16.gmra.mxu0 %v3559
    %v3836 = vpop.f32.mrf.mxu0
    %v3837 = vadd.f32 %v3808, %v3836
    %v3838 = vpop.f32.mrf.mxu0
    %v3839 = vadd.f32 %v3810, %v3838
    %3840 = vmatmul.bf16.gmra.mxu0 %v3561
    %v3841 = vpop.f32.mrf.mxu0
    %v3842 = vadd.f32 %v3813, %v3841
    %v3843 = vpop.f32.mrf.mxu0
    %v3844 = vadd.f32 %v3815, %v3843
    %3845 = vdwg.mxu0
    %v3846 = vld [vmem:[#allocation2] sm:$0xee]
    %v3847 = vld [vmem:[#allocation2 + $0x18] sm:$0xee]
    %v3848 = vld [vmem:[#allocation2 + $0x30] sm:$0xee]
    %v3849 = vld [vmem:[#allocation2 + $0x48] sm:$0xee]
    %v3850 = vld [vmem:[#allocation2 + $0x60] sm:$0xee]
    %v3851 = vld [vmem:[#allocation2 + $0x78] sm:$0xee]
    %v3852 = vld [vmem:[#allocation2 + $0x90] sm:$0xee]
    %v3853 = vld [vmem:[#allocation2 + $0xa8] sm:$0xee]
    %v3870 = vrot.slane %v3846, 5
    %v3871 = vrot.slane %v3870, 4
    %v3872 = vrot.slane %v3069, 5
    %v3873 = vsel %vm527, %v3871, %v3872
    %v3874 = vrot.slane %v3847, 5
    %v3875 = vrot.slane %v3874, 4
    %v3876 = vrot.slane %v3070, 5
    %v3877 = vsel %vm527, %v3875, %v3876
    %v3878 = vrot.slane %v3848, 5
    %v3879 = vrot.slane %v3878, 4
    %v3880 = vrot.slane %v3071, 5
    %v3881 = vsel %vm527, %v3879, %v3880
    %v3882 = vrot.slane %v3849, 5
    %v3883 = vrot.slane %v3882, 4
    %v3884 = vrot.slane %v3072, 5
    %v3885 = vsel %vm527, %v3883, %v3884
    %v3886 = vrot.slane %v3850, 5
    %v3887 = vrot.slane %v3886, 4
    %v3888 = vrot.slane %v3073, 5
    %v3889 = vsel %vm527, %v3887, %v3888
    %v3890 = vrot.slane %v3851, 5
    %v3891 = vrot.slane %v3890, 4
    %v3892 = vrot.slane %v3074, 5
    %v3893 = vsel %vm527, %v3891, %v3892
    %v3894 = vrot.slane %v3852, 5
    %v3895 = vrot.slane %v3894, 4
    %v3896 = vrot.slane %v3075, 5
    %v3897 = vsel %vm527, %v3895, %v3896
    %v3898 = vrot.slane %v3853, 5
    %v3899 = vrot.slane %v3898, 4
    %v3900 = vrot.slane %v3076, 5
    %v3901 = vsel %vm527, %v3899, %v3900
    %s3902 = scalar_lea.vmem %s5, 512
    %v3903 = vld [vmem:[%s3902] sm:$0xff]
    %v3904 = vld [vmem:[%s3902 + $0x8] sm:$0xff]
    %v3905 = vld [vmem:[%s3902 + $0x10] sm:$0xff]
    %v3906 = vld [vmem:[%s3902 + $0x18] sm:$0xff]
    %v3907 = vld [vmem:[%s3902 + $0x20] sm:$0xff]
    %v3908 = vld [vmem:[%s3902 + $0x28] sm:$0xff]
    %v3909 = vld [vmem:[%s3902 + $0x30] sm:$0xff]
    %v3910 = vld [vmem:[%s3902 + $0x38] sm:$0xff]
    %v3911 = vld [vmem:[%s3902 + $0x40] sm:$0xff]
    %v3912 = vld [vmem:[%s3902 + $0x48] sm:$0xff]
    %v3913 = vld [vmem:[%s3902 + $0x50] sm:$0xff]
    %v3914 = vld [vmem:[%s3902 + $0x58] sm:$0xff]
    %v3915 = vld [vmem:[%s3902 + $0x60] sm:$0xff]
    %v3916 = vld [vmem:[%s3902 + $0x68] sm:$0xff]
    %v3917 = vld [vmem:[%s3902 + $0x70] sm:$0xff]
    %v3918 = vld [vmem:[%s3902 + $0x78] sm:$0xff]
    %v3919 = vld [vmem:[%s3902 + $0x80] sm:$0xff]
    %v3920 = vld [vmem:[%s3902 + $0x88] sm:$0xff]
    %v3921 = vld [vmem:[%s3902 + $0x90] sm:$0xff]
    %v3922 = vld [vmem:[%s3902 + $0x98] sm:$0xff]
    %v3923 = vld [vmem:[%s3902 + $0xa0] sm:$0xff]
    %v3924 = vld [vmem:[%s3902 + $0xa8] sm:$0xff]
    %v3925 = vld [vmem:[%s3902 + $0xb0] sm:$0xff]
    %v3926 = vld [vmem:[%s3902 + $0xb8] sm:$0xff]
    %v3927 = vld [vmem:[%s3902 + $0xc0] sm:$0xff]
    %v3928 = vld [vmem:[%s3902 + $0xc8] sm:$0xff]
    %v3929 = vld [vmem:[%s3902 + $0xd0] sm:$0xff]
    %v3930 = vld [vmem:[%s3902 + $0xd8] sm:$0xff]
    %v3931 = vld [vmem:[%s3902 + $0xe0] sm:$0xff]
    %v3932 = vld [vmem:[%s3902 + $0xe8] sm:$0xff]
    %v3933 = vld [vmem:[%s3902 + $0xf0] sm:$0xff]
    %v3934 = vld [vmem:[%s3902 + $0xf8] sm:$0xff]
    %v3935 = vunpack.c.l.b16 %v3873
    %v3936 = vunpack.c.h.b16 %v3873
    %v3937 = vunpack.c.l.b16 %v3877
    %v3938 = vunpack.c.h.b16 %v3877
    %v3939 = vunpack.c.l.b16 %v3881
    %v3940 = vunpack.c.h.b16 %v3881
    %v3941 = vunpack.c.l.b16 %v3885
    %v3942 = vunpack.c.h.b16 %v3885
    %v3943 = vunpack.c.l.b16 %v3889
    %v3944 = vunpack.c.h.b16 %v3889
    %v3945 = vunpack.c.l.b16 %v3893
    %v3946 = vunpack.c.h.b16 %v3893
    %v3947 = vunpack.c.l.b16 %v3897
    %v3948 = vunpack.c.h.b16 %v3897
    %v3949 = vunpack.c.l.b16 %v3901
    %v3950 = vunpack.c.h.b16 %v3901
    %v3951 = vpack.c.b16 %v3937, %v3935
    %v3952 = vpack.c.b16 %v3938, %v3936
    %v3953 = vpack.c.b16 %v3941, %v3939
    %v3954 = vpack.c.b16 %v3942, %v3940
    %v3955 = vpack.c.b16 %v3945, %v3943
    %v3956 = vpack.c.b16 %v3946, %v3944
    %v3957 = vpack.c.b16 %v3949, %v3947
    %v3958 = vpack.c.b16 %v3950, %v3948
    %v3999 = vunpack.c.l.b16 %v3903
    %v4000 = vunpack.c.h.b16 %v3903
    %v4001 = vunpack.c.l.b16 %v3904
    %v4002 = vunpack.c.h.b16 %v3904
    %v4003 = vunpack.c.l.b16 %v3905
    %v4004 = vunpack.c.h.b16 %v3905
    %v4005 = vunpack.c.l.b16 %v3906
    %v4006 = vunpack.c.h.b16 %v3906
    %v4007 = vunpack.c.l.b16 %v3907
    %v4008 = vunpack.c.h.b16 %v3907
    %v4009 = vunpack.c.l.b16 %v3908
    %v4010 = vunpack.c.h.b16 %v3908
    %v4011 = vunpack.c.l.b16 %v3909
    %v4012 = vunpack.c.h.b16 %v3909
    %v4013 = vunpack.c.l.b16 %v3910
    %v4014 = vunpack.c.h.b16 %v3910
    %v4015 = vunpack.c.l.b16 %v3911
    %v4016 = vunpack.c.h.b16 %v3911
    %v4017 = vunpack.c.l.b16 %v3912
    %v4018 = vunpack.c.h.b16 %v3912
    %v4019 = vunpack.c.l.b16 %v3913
    %v4020 = vunpack.c.h.b16 %v3913
    %v4021 = vunpack.c.l.b16 %v3914
    %v4022 = vunpack.c.h.b16 %v3914
    %v4023 = vunpack.c.l.b16 %v3915
    %v4024 = vunpack.c.h.b16 %v3915
    %v4025 = vunpack.c.l.b16 %v3916
    %v4026 = vunpack.c.h.b16 %v3916
    %v4027 = vunpack.c.l.b16 %v3917
    %v4028 = vunpack.c.h.b16 %v3917
    %v4029 = vunpack.c.l.b16 %v3918
    %v4030 = vunpack.c.h.b16 %v3918
    %v4031 = vunpack.c.l.b16 %v3919
    %v4032 = vunpack.c.h.b16 %v3919
    %v4033 = vunpack.c.l.b16 %v3920
    %v4034 = vunpack.c.h.b16 %v3920
    %v4035 = vunpack.c.l.b16 %v3921
    %v4036 = vunpack.c.h.b16 %v3921
    %v4037 = vunpack.c.l.b16 %v3922
    %v4038 = vunpack.c.h.b16 %v3922
    %v4039 = vunpack.c.l.b16 %v3923
    %v4040 = vunpack.c.h.b16 %v3923
    %v4041 = vunpack.c.l.b16 %v3924
    %v4042 = vunpack.c.h.b16 %v3924
    %v4043 = vunpack.c.l.b16 %v3925
    %v4044 = vunpack.c.h.b16 %v3925
    %v4045 = vunpack.c.l.b16 %v3926
    %v4046 = vunpack.c.h.b16 %v3926
    %v4047 = vunpack.c.l.b16 %v3927
    %v4048 = vunpack.c.h.b16 %v3927
    %v4049 = vunpack.c.l.b16 %v3928
    %v4050 = vunpack.c.h.b16 %v3928
    %v4051 = vunpack.c.l.b16 %v3929
    %v4052 = vunpack.c.h.b16 %v3929
    %v4053 = vunpack.c.l.b16 %v3930
    %v4054 = vunpack.c.h.b16 %v3930
    %v4055 = vunpack.c.l.b16 %v3931
    %v4056 = vunpack.c.h.b16 %v3931
    %v4057 = vunpack.c.l.b16 %v3932
    %v4058 = vunpack.c.h.b16 %v3932
    %v4059 = vunpack.c.l.b16 %v3933
    %v4060 = vunpack.c.h.b16 %v3933
    %v4061 = vunpack.c.l.b16 %v3934
    %v4062 = vunpack.c.h.b16 %v3934
    %v4063 = vpack.c.b16 %v4001, %v3999
    %v4064 = vpack.c.b16 %v4002, %v4000
    %v4065 = vpack.c.b16 %v4005, %v4003
    %v4066 = vpack.c.b16 %v4006, %v4004
    %v4067 = vpack.c.b16 %v4009, %v4007
    %v4068 = vpack.c.b16 %v4010, %v4008
    %v4069 = vpack.c.b16 %v4013, %v4011
    %v4070 = vpack.c.b16 %v4014, %v4012
    %v4071 = vpack.c.b16 %v4017, %v4015
    %v4072 = vpack.c.b16 %v4018, %v4016
    %v4073 = vpack.c.b16 %v4021, %v4019
    %v4074 = vpack.c.b16 %v4022, %v4020
    %v4075 = vpack.c.b16 %v4025, %v4023
    %v4076 = vpack.c.b16 %v4026, %v4024
    %v4077 = vpack.c.b16 %v4029, %v4027
    %v4078 = vpack.c.b16 %v4030, %v4028
    %v4079 = vpack.c.b16 %v4033, %v4031
    %v4080 = vpack.c.b16 %v4034, %v4032
    %v4081 = vpack.c.b16 %v4037, %v4035
    %v4082 = vpack.c.b16 %v4038, %v4036
    %v4083 = vpack.c.b16 %v4041, %v4039
    %v4084 = vpack.c.b16 %v4042, %v4040
    %v4085 = vpack.c.b16 %v4045, %v4043
    %v4086 = vpack.c.b16 %v4046, %v4044
    %v4087 = vpack.c.b16 %v4049, %v4047
    %v4088 = vpack.c.b16 %v4050, %v4048
    %v4089 = vpack.c.b16 %v4053, %v4051
    %v4090 = vpack.c.b16 %v4054, %v4052
    %v4091 = vpack.c.b16 %v4057, %v4055
    %v4092 = vpack.c.b16 %v4058, %v4056
    %v4093 = vpack.c.b16 %v4061, %v4059
    %v4094 = vpack.c.b16 %v4062, %v4060
    %4127 = vmatpush.bf16.msra.mxu0 %v4077
    %4128 = vmatpush.bf16.msra.mxu0 %v4075
    %4129 = vmatpush.bf16.msra.mxu0 %v4073
    %4130 = vmatpush.bf16.msra.mxu0 %v4071
    %4131 = vmatpush.bf16.msra.mxu0 %v4069
    %4132 = vmatpush.bf16.msra.mxu0 %v4067
    %4133 = vmatpush.bf16.msra.mxu0 %v4065
    %4134 = vmatpush.bf16.msra.mxu0 %v4063
    %4135 = vmatmul.bf16.gmra.mxu0 %v3951
    %v4136 = vpop.f32.mrf.mxu0
    %v4137 = vadd.f32 0.0, %v4136
    %v4138 = vpop.f32.mrf.mxu0
    %v4139 = vadd.f32 0.0, %v4138
    %4140 = vmatmul.bf16.gmra.mxu0 %v3953
    %v4141 = vpop.f32.mrf.mxu0
    %v4142 = vadd.f32 0.0, %v4141
    %v4143 = vpop.f32.mrf.mxu0
    %v4144 = vadd.f32 0.0, %v4143
    %4145 = vmatmul.bf16.gmra.mxu0 %v3955
    %v4146 = vpop.f32.mrf.mxu0
    %v4147 = vadd.f32 0.0, %v4146
    %v4148 = vpop.f32.mrf.mxu0
    %v4149 = vadd.f32 0.0, %v4148
    %4150 = vmatmul.bf16.gmra.mxu0 %v3957
    %v4151 = vpop.f32.mrf.mxu0
    %v4152 = vadd.f32 0.0, %v4151
    %v4153 = vpop.f32.mrf.mxu0
    %v4154 = vadd.f32 0.0, %v4153
    %4155 = vdwg.mxu0
    %4156 = vmatpush.bf16.msra.mxu0 %v4093
    %4157 = vmatpush.bf16.msra.mxu0 %v4091
    %4158 = vmatpush.bf16.msra.mxu0 %v4089
    %4159 = vmatpush.bf16.msra.mxu0 %v4087
    %4160 = vmatpush.bf16.msra.mxu0 %v4085
    %4161 = vmatpush.bf16.msra.mxu0 %v4083
    %4162 = vmatpush.bf16.msra.mxu0 %v4081
    %4163 = vmatpush.bf16.msra.mxu0 %v4079
    %4164 = vmatmul.bf16.gmra.mxu0 %v3952
    %v4165 = vpop.f32.mrf.mxu0
    %v4166 = vadd.f32 %v4137, %v4165
    %v4167 = vpop.f32.mrf.mxu0
    %v4168 = vadd.f32 %v4139, %v4167
    %4169 = vmatmul.bf16.gmra.mxu0 %v3954
    %v4170 = vpop.f32.mrf.mxu0
    %v4171 = vadd.f32 %v4142, %v4170
    %v4172 = vpop.f32.mrf.mxu0
    %v4173 = vadd.f32 %v4144, %v4172
    %4174 = vmatmul.bf16.gmra.mxu0 %v3956
    %v4175 = vpop.f32.mrf.mxu0
    %v4176 = vadd.f32 %v4147, %v4175
    %v4177 = vpop.f32.mrf.mxu0
    %v4178 = vadd.f32 %v4149, %v4177
    %4179 = vmatmul.bf16.gmra.mxu0 %v3958
    %v4180 = vpop.f32.mrf.mxu0
    %v4181 = vadd.f32 %v4152, %v4180
    %v4182 = vpop.f32.mrf.mxu0
    %v4183 = vadd.f32 %v4154, %v4182
    %4184 = vdwg.mxu0
    %4185 = vmatpush.bf16.msra.mxu0 %v4078
    %4186 = vmatpush.bf16.msra.mxu0 %v4076
    %4187 = vmatpush.bf16.msra.mxu0 %v4074
    %4188 = vmatpush.bf16.msra.mxu0 %v4072
    %4189 = vmatpush.bf16.msra.mxu0 %v4070
    %4190 = vmatpush.bf16.msra.mxu0 %v4068
    %4191 = vmatpush.bf16.msra.mxu0 %v4066
    %4192 = vmatpush.bf16.msra.mxu0 %v4064
    %4193 = vmatmul.bf16.gmra.mxu0 %v3951
    %v4194 = vpop.f32.mrf.mxu0
    %v4195 = vadd.f32 0.0, %v4194
    %v4196 = vpop.f32.mrf.mxu0
    %v4197 = vadd.f32 0.0, %v4196
    %4198 = vmatmul.bf16.gmra.mxu0 %v3953
    %v4199 = vpop.f32.mrf.mxu0
    %v4200 = vadd.f32 0.0, %v4199
    %v4201 = vpop.f32.mrf.mxu0
    %v4202 = vadd.f32 0.0, %v4201
    %4203 = vmatmul.bf16.gmra.mxu0 %v3955
    %v4204 = vpop.f32.mrf.mxu0
    %v4205 = vadd.f32 0.0, %v4204
    %v4206 = vpop.f32.mrf.mxu0
    %v4207 = vadd.f32 0.0, %v4206
    %4208 = vmatmul.bf16.gmra.mxu0 %v3957
    %v4209 = vpop.f32.mrf.mxu0
    %v4210 = vadd.f32 0.0, %v4209
    %v4211 = vpop.f32.mrf.mxu0
    %v4212 = vadd.f32 0.0, %v4211
    %4213 = vdwg.mxu0
    %4214 = vmatpush.bf16.msra.mxu0 %v4094
    %4215 = vmatpush.bf16.msra.mxu0 %v4092
    %4216 = vmatpush.bf16.msra.mxu0 %v4090
    %4217 = vmatpush.bf16.msra.mxu0 %v4088
    %4218 = vmatpush.bf16.msra.mxu0 %v4086
    %4219 = vmatpush.bf16.msra.mxu0 %v4084
    %4220 = vmatpush.bf16.msra.mxu0 %v4082
    %4221 = vmatpush.bf16.msra.mxu0 %v4080
    %4222 = vmatmul.bf16.gmra.mxu0 %v3952
    %v4223 = vpop.f32.mrf.mxu0
    %v4224 = vadd.f32 %v4195, %v4223
    %v4225 = vpop.f32.mrf.mxu0
    %v4226 = vadd.f32 %v4197, %v4225
    %4227 = vmatmul.bf16.gmra.mxu0 %v3954
    %v4228 = vpop.f32.mrf.mxu0
    %v4229 = vadd.f32 %v4200, %v4228
    %v4230 = vpop.f32.mrf.mxu0
    %v4231 = vadd.f32 %v4202, %v4230
    %4232 = vmatmul.bf16.gmra.mxu0 %v3956
    %v4233 = vpop.f32.mrf.mxu0
    %v4234 = vadd.f32 %v4205, %v4233
    %v4235 = vpop.f32.mrf.mxu0
    %v4236 = vadd.f32 %v4207, %v4235
    %4237 = vmatmul.bf16.gmra.mxu0 %v3958
    %v4238 = vpop.f32.mrf.mxu0
    %v4239 = vadd.f32 %v4210, %v4238
    %v4240 = vpop.f32.mrf.mxu0
    %v4241 = vadd.f32 %v4212, %v4240
    %4242 = vdwg.mxu0
    %v4243 = vadd.f32 %v3769, %v4166
    %v4244 = vadd.f32 %v3827, %v4224
    %v4245 = vadd.f32 %v3771, %v4168
    %v4246 = vadd.f32 %v3829, %v4226
    %v4247 = vadd.f32 %v3774, %v4171
    %v4248 = vadd.f32 %v3832, %v4229
    %v4249 = vadd.f32 %v3776, %v4173
    %v4250 = vadd.f32 %v3834, %v4231
    %v4251 = vadd.f32 %v3779, %v4176
    %v4252 = vadd.f32 %v3837, %v4234
    %v4253 = vadd.f32 %v3781, %v4178
    %v4254 = vadd.f32 %v3839, %v4236
    %v4255 = vadd.f32 %v3784, %v4181
    %v4256 = vadd.f32 %v3842, %v4239
    %v4257 = vadd.f32 %v3786, %v4183
    %v4258 = vadd.f32 %v3844, %v4241
    %v4259 = vld [vmem:[%s6] sm:$0x3]
    %v4261 = vperm.slane %v4259, 0
    %v4262 = vperm.slane %v4259, 1
    %v4265 = vadd.f32 %v4243, %v4261
    %v4266 = vadd.f32 %v4244, %v4262
    %v4267 = vadd.f32 %v4245, %v4261
    %v4268 = vadd.f32 %v4246, %v4262
    %v4269 = vadd.f32 %v4247, %v4261
    %v4270 = vadd.f32 %v4248, %v4262
    %v4271 = vadd.f32 %v4249, %v4261
    %v4272 = vadd.f32 %v4250, %v4262
    %v4273 = vadd.f32 %v4251, %v4261
    %v4274 = vadd.f32 %v4252, %v4262
    %v4275 = vadd.f32 %v4253, %v4261
    %v4276 = vadd.f32 %v4254, %v4262
    %v4277 = vadd.f32 %v4255, %v4261
    %v4278 = vadd.f32 %v4256, %v4262
    %v4279 = vadd.f32 %v4257, %v4261
    %v4280 = vadd.f32 %v4258, %v4262
    %v4281 = vmax.f32 %v4265, 0.0
    %v4282 = vmax.f32 %v4266, 0.0
    %v4283 = vmax.f32 %v4267, 0.0
    %v4284 = vmax.f32 %v4268, 0.0
    %v4285 = vmax.f32 %v4269, 0.0
    %v4286 = vmax.f32 %v4270, 0.0
    %v4287 = vmax.f32 %v4271, 0.0
    %v4288 = vmax.f32 %v4272, 0.0
    %v4289 = vmax.f32 %v4273, 0.0
    %v4290 = vmax.f32 %v4274, 0.0
    %v4291 = vmax.f32 %v4275, 0.0
    %v4292 = vmax.f32 %v4276, 0.0
    %v4293 = vmax.f32 %v4277, 0.0
    %v4294 = vmax.f32 %v4278, 0.0
    %v4295 = vmax.f32 %v4279, 0.0
    %v4296 = vmax.f32 %v4280, 0.0
    %v4297 = vpack.c.bf16 %v4282, %v4281
    %v4298 = vpack.c.bf16 %v4284, %v4283
    %v4299 = vpack.c.bf16 %v4286, %v4285
    %v4300 = vpack.c.bf16 %v4288, %v4287
    %v4301 = vpack.c.bf16 %v4290, %v4289
    %v4302 = vpack.c.bf16 %v4292, %v4291
    %v4303 = vpack.c.bf16 %v4294, %v4293
    %v4304 = vpack.c.bf16 %v4296, %v4295
    %vm4305 = vcmask 1043456
    %vm4306 = vcmask 523268
    %vm4307 = vmor %vm4306, %vm4305
    %4308 = vst.msk [vmem:[#allocation2] sm:$0xff] %vm4307, %v4297
    %4309 = vst.msk [vmem:[#allocation2 + $0x18] sm:$0xff] %vm4307, %v4298
    %4310 = vst.msk [vmem:[#allocation2 + $0x30] sm:$0xff] %vm4307, %v4299
    %4311 = vst.msk [vmem:[#allocation2 + $0x48] sm:$0xff] %vm4307, %v4300
    %4312 = vst.msk [vmem:[#allocation2 + $0x60] sm:$0xff] %vm4307, %v4301
    %4313 = vst.msk [vmem:[#allocation2 + $0x78] sm:$0xff] %vm4307, %v4302
    %4314 = vst.msk [vmem:[#allocation2 + $0x90] sm:$0xff] %vm4307, %v4303
    %4315 = vst.msk [vmem:[#allocation2 + $0xa8] sm:$0xff] %vm4307, %v4304
    %v4316 = vld [vmem:[#allocation2] sm:$0xff]
    %v4317 = vld [vmem:[#allocation2 + $0x18] sm:$0xff]
    %v4318 = vld [vmem:[#allocation2 + $0x30] sm:$0xff]
    %v4319 = vld [vmem:[#allocation2 + $0x48] sm:$0xff]
    %v4320 = vld [vmem:[#allocation2 + $0x60] sm:$0xff]
    %v4321 = vld [vmem:[#allocation2 + $0x78] sm:$0xff]
    %v4322 = vld [vmem:[#allocation2 + $0x90] sm:$0xff]
    %v4323 = vld [vmem:[#allocation2 + $0xa8] sm:$0xff]
    %v4324 = vld [vmem:[%s7] sm:$0xf]
    %v4325 = vld [vmem:[%s7 + $0x4] sm:$0xf]
    %v4326 = vld [vmem:[%s7 + $0x8] sm:$0xf]
    %v4327 = vld [vmem:[%s7 + $0xc] sm:$0xf]
    %v4328 = vld [vmem:[%s7 + $0x10] sm:$0xf]
    %v4329 = vld [vmem:[%s7 + $0x14] sm:$0xf]
    %v4330 = vld [vmem:[%s7 + $0x18] sm:$0xf]
    %v4331 = vld [vmem:[%s7 + $0x1c] sm:$0xf]
    %v4332 = vld [vmem:[%s7 + $0x20] sm:$0xf]
    %v4333 = vld [vmem:[%s7 + $0x24] sm:$0xf]
    %v4334 = vld [vmem:[%s7 + $0x28] sm:$0xf]
    %v4335 = vld [vmem:[%s7 + $0x2c] sm:$0xf]
    %v4336 = vld [vmem:[%s7 + $0x30] sm:$0xf]
    %v4337 = vld [vmem:[%s7 + $0x34] sm:$0xf]
    %v4338 = vld [vmem:[%s7 + $0x38] sm:$0xf]
    %v4339 = vld [vmem:[%s7 + $0x3c] sm:$0xf]
    %v4340 = vld [vmem:[%s7 + $0x40] sm:$0xf]
    %v4341 = vld [vmem:[%s7 + $0x44] sm:$0xf]
    %v4342 = vld [vmem:[%s7 + $0x48] sm:$0xf]
    %v4343 = vld [vmem:[%s7 + $0x4c] sm:$0xf]
    %v4344 = vld [vmem:[%s7 + $0x50] sm:$0xf]
    %v4345 = vld [vmem:[%s7 + $0x54] sm:$0xf]
    %v4346 = vld [vmem:[%s7 + $0x58] sm:$0xf]
    %v4347 = vld [vmem:[%s7 + $0x5c] sm:$0xf]
    %v4348 = vld [vmem:[#allocation2 + $0xc] sm:$0x11]
    %v4349 = vld [vmem:[#allocation2 + $0x24] sm:$0x11]
    %v4350 = vld [vmem:[#allocation2 + $0x3c] sm:$0x11]
    %v4351 = vld [vmem:[#allocation2 + $0x54] sm:$0x11]
    %v4352 = vld [vmem:[#allocation2 + $0x6c] sm:$0x11]
    %v4353 = vld [vmem:[#allocation2 + $0x84] sm:$0x11]
    %v4354 = vld [vmem:[#allocation2 + $0x9c] sm:$0x11]
    %v4355 = vld [vmem:[#allocation2 + $0xb4] sm:$0x11]
    %v4357 = vshrl.u32 %v4316, 16
    %v4359 = vrot.slane %v4357, 4
    %v4360 = vshll.u32 %v4316, 16
    %v4362 = vrot.slane %v4360, 5
    %v4363 = vor.u32 %v4359, %v4362
    %v4364 = vrot.slane %v4363, 4
    %v4366 = vshll.u32 %v4348, 16
    %v4368 = vrot.slane %v4366, 5
    %v4369 = vsel %vm120, %v4364, %v4368
    %v4371 = vshrl.u32 %v4317, 16
    %v4373 = vrot.slane %v4371, 4
    %v4374 = vshll.u32 %v4317, 16
    %v4376 = vrot.slane %v4374, 5
    %v4377 = vor.u32 %v4373, %v4376
    %v4378 = vrot.slane %v4377, 4
    %v4380 = vshll.u32 %v4349, 16
    %v4382 = vrot.slane %v4380, 5
    %v4383 = vsel %vm120, %v4378, %v4382
    %v4385 = vshrl.u32 %v4318, 16
    %v4387 = vrot.slane %v4385, 4
    %v4388 = vshll.u32 %v4318, 16
    %v4390 = vrot.slane %v4388, 5
    %v4391 = vor.u32 %v4387, %v4390
    %v4392 = vrot.slane %v4391, 4
    %v4394 = vshll.u32 %v4350, 16
    %v4396 = vrot.slane %v4394, 5
    %v4397 = vsel %vm120, %v4392, %v4396
    %v4399 = vshrl.u32 %v4319, 16
    %v4401 = vrot.slane %v4399, 4
    %v4402 = vshll.u32 %v4319, 16
    %v4404 = vrot.slane %v4402, 5
    %v4405 = vor.u32 %v4401, %v4404
    %v4406 = vrot.slane %v4405, 4
    %v4408 = vshll.u32 %v4351, 16
    %v4410 = vrot.slane %v4408, 5
    %v4411 = vsel %vm120, %v4406, %v4410
    %v4413 = vshrl.u32 %v4320, 16
    %v4415 = vrot.slane %v4413, 4
    %v4416 = vshll.u32 %v4320, 16
    %v4418 = vrot.slane %v4416, 5
    %v4419 = vor.u32 %v4415, %v4418
    %v4420 = vrot.slane %v4419, 4
    %v4422 = vshll.u32 %v4352, 16
    %v4424 = vrot.slane %v4422, 5
    %v4425 = vsel %vm120, %v4420, %v4424
    %v4427 = vshrl.u32 %v4321, 16
    %v4429 = vrot.slane %v4427, 4
    %v4430 = vshll.u32 %v4321, 16
    %v4432 = vrot.slane %v4430, 5
    %v4433 = vor.u32 %v4429, %v4432
    %v4434 = vrot.slane %v4433, 4
    %v4436 = vshll.u32 %v4353, 16
    %v4438 = vrot.slane %v4436, 5
    %v4439 = vsel %vm120, %v4434, %v4438
    %v4441 = vshrl.u32 %v4322, 16
    %v4443 = vrot.slane %v4441, 4
    %v4444 = vshll.u32 %v4322, 16
    %v4446 = vrot.slane %v4444, 5
    %v4447 = vor.u32 %v4443, %v4446
    %v4448 = vrot.slane %v4447, 4
    %v4450 = vshll.u32 %v4354, 16
    %v4452 = vrot.slane %v4450, 5
    %v4453 = vsel %vm120, %v4448, %v4452
    %v4455 = vshrl.u32 %v4323, 16
    %v4457 = vrot.slane %v4455, 4
    %v4458 = vshll.u32 %v4323, 16
    %v4460 = vrot.slane %v4458, 5
    %v4461 = vor.u32 %v4457, %v4460
    %v4462 = vrot.slane %v4461, 4
    %v4464 = vshll.u32 %v4355, 16
    %v4466 = vrot.slane %v4464, 5
    %v4467 = vsel %vm120, %v4462, %v4466
    %s4468 = scalar_lea.vmem %s7, 96
    %v4469 = vld [vmem:[%s4468] sm:$0xf]
    %v4470 = vld [vmem:[%s4468 + $0x4] sm:$0xf]
    %v4471 = vld [vmem:[%s4468 + $0x8] sm:$0xf]
    %v4472 = vld [vmem:[%s4468 + $0xc] sm:$0xf]
    %v4473 = vld [vmem:[%s4468 + $0x10] sm:$0xf]
    %v4474 = vld [vmem:[%s4468 + $0x14] sm:$0xf]
    %v4475 = vld [vmem:[%s4468 + $0x18] sm:$0xf]
    %v4476 = vld [vmem:[%s4468 + $0x1c] sm:$0xf]
    %v4477 = vld [vmem:[%s4468 + $0x20] sm:$0xf]
    %v4478 = vld [vmem:[%s4468 + $0x24] sm:$0xf]
    %v4479 = vld [vmem:[%s4468 + $0x28] sm:$0xf]
    %v4480 = vld [vmem:[%s4468 + $0x2c] sm:$0xf]
    %v4481 = vld [vmem:[%s4468 + $0x30] sm:$0xf]
    %v4482 = vld [vmem:[%s4468 + $0x34] sm:$0xf]
    %v4483 = vld [vmem:[%s4468 + $0x38] sm:$0xf]
    %v4484 = vld [vmem:[%s4468 + $0x3c] sm:$0xf]
    %v4485 = vld [vmem:[%s4468 + $0x40] sm:$0xf]
    %v4486 = vld [vmem:[%s4468 + $0x44] sm:$0xf]
    %v4487 = vld [vmem:[%s4468 + $0x48] sm:$0xf]
    %v4488 = vld [vmem:[%s4468 + $0x4c] sm:$0xf]
    %v4489 = vld [vmem:[%s4468 + $0x50] sm:$0xf]
    %v4490 = vld [vmem:[%s4468 + $0x54] sm:$0xf]
    %v4491 = vld [vmem:[%s4468 + $0x58] sm:$0xf]
    %v4492 = vld [vmem:[%s4468 + $0x5c] sm:$0xf]
    %v4493 = vunpack.c.l.b16 %v4369
    %v4494 = vunpack.c.h.b16 %v4369
    %v4495 = vunpack.c.l.b16 %v4383
    %v4496 = vunpack.c.h.b16 %v4383
    %v4497 = vunpack.c.l.b16 %v4397
    %v4498 = vunpack.c.h.b16 %v4397
    %v4499 = vunpack.c.l.b16 %v4411
    %v4500 = vunpack.c.h.b16 %v4411
    %v4501 = vunpack.c.l.b16 %v4425
    %v4502 = vunpack.c.h.b16 %v4425
    %v4503 = vunpack.c.l.b16 %v4439
    %v4504 = vunpack.c.h.b16 %v4439
    %v4505 = vunpack.c.l.b16 %v4453
    %v4506 = vunpack.c.h.b16 %v4453
    %v4507 = vunpack.c.l.b16 %v4467
    %v4508 = vunpack.c.h.b16 %v4467
    %v4509 = vpack.c.b16 %v4495, %v4493
    %v4510 = vpack.c.b16 %v4496, %v4494
    %v4511 = vpack.c.b16 %v4499, %v4497
    %v4512 = vpack.c.b16 %v4500, %v4498
    %v4513 = vpack.c.b16 %v4503, %v4501
    %v4514 = vpack.c.b16 %v4504, %v4502
    %v4515 = vpack.c.b16 %v4507, %v4505
    %v4516 = vpack.c.b16 %v4508, %v4506
    %v4545 = vunpack.c.l.b16 %v4469
    %v4546 = vunpack.c.l.b16 %v4470
    %v4547 = vunpack.c.l.b16 %v4471
    %v4548 = vunpack.c.l.b16 %v4472
    %v4549 = vunpack.c.l.b16 %v4473
    %v4550 = vunpack.c.l.b16 %v4474
    %v4551 = vunpack.c.l.b16 %v4475
    %v4552 = vunpack.c.l.b16 %v4476
    %v4553 = vunpack.c.l.b16 %v4477
    %v4554 = vunpack.c.l.b16 %v4478
    %v4555 = vunpack.c.l.b16 %v4479
    %v4556 = vunpack.c.l.b16 %v4480
    %v4557 = vunpack.c.l.b16 %v4481
    %v4558 = vunpack.c.l.b16 %v4482
    %v4559 = vunpack.c.l.b16 %v4483
    %v4560 = vunpack.c.l.b16 %v4484
    %v4561 = vunpack.c.l.b16 %v4485
    %v4562 = vunpack.c.l.b16 %v4486
    %v4563 = vunpack.c.l.b16 %v4487
    %v4564 = vunpack.c.l.b16 %v4488
    %v4565 = vunpack.c.l.b16 %v4489
    %v4566 = vunpack.c.l.b16 %v4490
    %v4567 = vunpack.c.l.b16 %v4491
    %v4568 = vunpack.c.l.b16 %v4492
    %v4569 = vpack.c.b16 %v4546, %v4545
    %v4570 = vpack.c.b16 %v4548, %v4547
    %v4571 = vpack.c.b16 %v4550, %v4549
    %v4572 = vpack.c.b16 %v4552, %v4551
    %v4573 = vpack.c.b16 %v4554, %v4553
    %v4574 = vpack.c.b16 %v4556, %v4555
    %v4575 = vpack.c.b16 %v4558, %v4557
    %v4576 = vpack.c.b16 %v4560, %v4559
    %v4577 = vpack.c.b16 %v4562, %v4561
    %v4578 = vpack.c.b16 %v4564, %v4563
    %v4579 = vpack.c.b16 %v4566, %v4565
    %v4580 = vpack.c.b16 %v4568, %v4567
    %v4594 = vsel %vm1743, %v4510, 0
    %v4597 = vsel %vm1743, %v4512, 0
    %v4600 = vsel %vm1743, %v4514, 0
    %v4603 = vsel %vm1743, %v4516, 0
    %4605 = vmatpush.bf16.msra.mxu0 %v4576
    %4606 = vmatpush.bf16.msra.mxu0 %v4575
    %4607 = vmatpush.bf16.msra.mxu0 %v4574
    %4608 = vmatpush.bf16.msra.mxu0 %v4573
    %4609 = vmatpush.bf16.msra.mxu0 %v4572
    %4610 = vmatpush.bf16.msra.mxu0 %v4571
    %4611 = vmatpush.bf16.msra.mxu0 %v4570
    %4612 = vmatpush.bf16.msra.mxu0 %v4569
    %4613 = vmatmul.bf16.gmra.mxu0 %v4509
    %v4614 = vpop.f32.mrf.mxu0
    %v4615 = vadd.f32 0.0, %v4614
    %v4616 = vpop.f32.mrf.mxu0
    %v4617 = vadd.f32 0.0, %v4616
    %4618 = vmatmul.bf16.gmra.mxu0 %v4511
    %v4619 = vpop.f32.mrf.mxu0
    %v4620 = vadd.f32 0.0, %v4619
    %v4621 = vpop.f32.mrf.mxu0
    %v4622 = vadd.f32 0.0, %v4621
    %4623 = vmatmul.bf16.gmra.mxu0 %v4513
    %v4624 = vpop.f32.mrf.mxu0
    %v4625 = vadd.f32 0.0, %v4624
    %v4626 = vpop.f32.mrf.mxu0
    %v4627 = vadd.f32 0.0, %v4626
    %4628 = vmatmul.bf16.gmra.mxu0 %v4515
    %v4629 = vpop.f32.mrf.mxu0
    %v4630 = vadd.f32 0.0, %v4629
    %v4631 = vpop.f32.mrf.mxu0
    %v4632 = vadd.f32 0.0, %v4631
    %4633 = vdwg.mxu0
    %4634 = vmatpush.bf16.msra.mxu0 0
    %4635 = vmatpush.bf16.msra.mxu0 0
    %4636 = vmatpush.bf16.msra.mxu0 0
    %4637 = vmatpush.bf16.msra.mxu0 0
    %4638 = vmatpush.bf16.msra.mxu0 %v4580
    %4639 = vmatpush.bf16.msra.mxu0 %v4579
    %4640 = vmatpush.bf16.msra.mxu0 %v4578
    %4641 = vmatpush.bf16.msra.mxu0 %v4577
    %4642 = vmatmul.bf16.gmra.mxu0 %v4594
    %v4643 = vpop.f32.mrf.mxu0
    %v4644 = vadd.f32 %v4615, %v4643
    %v4645 = vpop.f32.mrf.mxu0
    %v4646 = vadd.f32 %v4617, %v4645
    %4647 = vmatmul.bf16.gmra.mxu0 %v4597
    %v4648 = vpop.f32.mrf.mxu0
    %v4649 = vadd.f32 %v4620, %v4648
    %v4650 = vpop.f32.mrf.mxu0
    %v4651 = vadd.f32 %v4622, %v4650
    %4652 = vmatmul.bf16.gmra.mxu0 %v4600
    %v4653 = vpop.f32.mrf.mxu0
    %v4654 = vadd.f32 %v4625, %v4653
    %v4655 = vpop.f32.mrf.mxu0
    %v4656 = vadd.f32 %v4627, %v4655
    %4657 = vmatmul.bf16.gmra.mxu0 %v4603
    %v4658 = vpop.f32.mrf.mxu0
    %v4659 = vadd.f32 %v4630, %v4658
    %v4660 = vpop.f32.mrf.mxu0
    %v4661 = vadd.f32 %v4632, %v4660
    %4662 = vdwg.mxu0
    %v4671 = vunpack.c.l.b16 %v4316
    %v4672 = vunpack.c.h.b16 %v4316
    %v4673 = vunpack.c.l.b16 %v4317
    %v4674 = vunpack.c.h.b16 %v4317
    %v4675 = vunpack.c.l.b16 %v4318
    %v4676 = vunpack.c.h.b16 %v4318
    %v4677 = vunpack.c.l.b16 %v4319
    %v4678 = vunpack.c.h.b16 %v4319
    %v4679 = vunpack.c.l.b16 %v4320
    %v4680 = vunpack.c.h.b16 %v4320
    %v4681 = vunpack.c.l.b16 %v4321
    %v4682 = vunpack.c.h.b16 %v4321
    %v4683 = vunpack.c.l.b16 %v4322
    %v4684 = vunpack.c.h.b16 %v4322
    %v4685 = vunpack.c.l.b16 %v4323
    %v4686 = vunpack.c.h.b16 %v4323
    %v4687 = vpack.c.b16 %v4673, %v4671
    %v4688 = vpack.c.b16 %v4674, %v4672
    %v4689 = vpack.c.b16 %v4677, %v4675
    %v4690 = vpack.c.b16 %v4678, %v4676
    %v4691 = vpack.c.b16 %v4681, %v4679
    %v4692 = vpack.c.b16 %v4682, %v4680
    %v4693 = vpack.c.b16 %v4685, %v4683
    %v4694 = vpack.c.b16 %v4686, %v4684
    %v4723 = vunpack.c.l.b16 %v4324
    %v4724 = vunpack.c.l.b16 %v4325
    %v4725 = vunpack.c.l.b16 %v4326
    %v4726 = vunpack.c.l.b16 %v4327
    %v4727 = vunpack.c.l.b16 %v4328
    %v4728 = vunpack.c.l.b16 %v4329
    %v4729 = vunpack.c.l.b16 %v4330
    %v4730 = vunpack.c.l.b16 %v4331
    %v4731 = vunpack.c.l.b16 %v4332
    %v4732 = vunpack.c.l.b16 %v4333
    %v4733 = vunpack.c.l.b16 %v4334
    %v4734 = vunpack.c.l.b16 %v4335
    %v4735 = vunpack.c.l.b16 %v4336
    %v4736 = vunpack.c.l.b16 %v4337
    %v4737 = vunpack.c.l.b16 %v4338
    %v4738 = vunpack.c.l.b16 %v4339
    %v4739 = vunpack.c.l.b16 %v4340
    %v4740 = vunpack.c.l.b16 %v4341
    %v4741 = vunpack.c.l.b16 %v4342
    %v4742 = vunpack.c.l.b16 %v4343
    %v4743 = vunpack.c.l.b16 %v4344
    %v4744 = vunpack.c.l.b16 %v4345
    %v4745 = vunpack.c.l.b16 %v4346
    %v4746 = vunpack.c.l.b16 %v4347
    %v4747 = vpack.c.b16 %v4724, %v4723
    %v4748 = vpack.c.b16 %v4726, %v4725
    %v4749 = vpack.c.b16 %v4728, %v4727
    %v4750 = vpack.c.b16 %v4730, %v4729
    %v4751 = vpack.c.b16 %v4732, %v4731
    %v4752 = vpack.c.b16 %v4734, %v4733
    %v4753 = vpack.c.b16 %v4736, %v4735
    %v4754 = vpack.c.b16 %v4738, %v4737
    %v4755 = vpack.c.b16 %v4740, %v4739
    %v4756 = vpack.c.b16 %v4742, %v4741
    %v4757 = vpack.c.b16 %v4744, %v4743
    %v4758 = vpack.c.b16 %v4746, %v4745
    %v4772 = vsel %vm1743, %v4688, 0
    %v4775 = vsel %vm1743, %v4690, 0
    %v4778 = vsel %vm1743, %v4692, 0
    %v4781 = vsel %vm1743, %v4694, 0
    %4783 = vmatpush.bf16.msra.mxu0 %v4754
    %4784 = vmatpush.bf16.msra.mxu0 %v4753
    %4785 = vmatpush.bf16.msra.mxu0 %v4752
    %4786 = vmatpush.bf16.msra.mxu0 %v4751
    %4787 = vmatpush.bf16.msra.mxu0 %v4750
    %4788 = vmatpush.bf16.msra.mxu0 %v4749
    %4789 = vmatpush.bf16.msra.mxu0 %v4748
    %4790 = vmatpush.bf16.msra.mxu0 %v4747
    %4791 = vmatmul.bf16.gmra.mxu0 %v4687
    %v4792 = vpop.f32.mrf.mxu0
    %v4793 = vadd.f32 %v4644, %v4792
    %v4794 = vpop.f32.mrf.mxu0
    %v4795 = vadd.f32 %v4646, %v4794
    %4796 = vmatmul.bf16.gmra.mxu0 %v4689
    %v4797 = vpop.f32.mrf.mxu0
    %v4798 = vadd.f32 %v4649, %v4797
    %v4799 = vpop.f32.mrf.mxu0
    %v4800 = vadd.f32 %v4651, %v4799
    %4801 = vmatmul.bf16.gmra.mxu0 %v4691
    %v4802 = vpop.f32.mrf.mxu0
    %v4803 = vadd.f32 %v4654, %v4802
    %v4804 = vpop.f32.mrf.mxu0
    %v4805 = vadd.f32 %v4656, %v4804
    %4806 = vmatmul.bf16.gmra.mxu0 %v4693
    %v4807 = vpop.f32.mrf.mxu0
    %v4808 = vadd.f32 %v4659, %v4807
    %v4809 = vpop.f32.mrf.mxu0
    %v4810 = vadd.f32 %v4661, %v4809
    %4811 = vdwg.mxu0
    %4812 = vmatpush.bf16.msra.mxu0 0
    %4813 = vmatpush.bf16.msra.mxu0 0
    %4814 = vmatpush.bf16.msra.mxu0 0
    %4815 = vmatpush.bf16.msra.mxu0 0
    %4816 = vmatpush.bf16.msra.mxu0 %v4758
    %4817 = vmatpush.bf16.msra.mxu0 %v4757
    %4818 = vmatpush.bf16.msra.mxu0 %v4756
    %4819 = vmatpush.bf16.msra.mxu0 %v4755
    %4820 = vmatmul.bf16.gmra.mxu0 %v4772
    %v4821 = vpop.f32.mrf.mxu0
    %v4822 = vadd.f32 %v4793, %v4821
    %v4823 = vpop.f32.mrf.mxu0
    %v4824 = vadd.f32 %v4795, %v4823
    %4825 = vmatmul.bf16.gmra.mxu0 %v4775
    %v4826 = vpop.f32.mrf.mxu0
    %v4827 = vadd.f32 %v4798, %v4826
    %v4828 = vpop.f32.mrf.mxu0
    %v4829 = vadd.f32 %v4800, %v4828
    %4830 = vmatmul.bf16.gmra.mxu0 %v4778
    %v4831 = vpop.f32.mrf.mxu0
    %v4832 = vadd.f32 %v4803, %v4831
    %v4833 = vpop.f32.mrf.mxu0
    %v4834 = vadd.f32 %v4805, %v4833
    %4835 = vmatmul.bf16.gmra.mxu0 %v4781
    %v4836 = vpop.f32.mrf.mxu0
    %v4837 = vadd.f32 %v4808, %v4836
    %v4838 = vpop.f32.mrf.mxu0
    %v4839 = vadd.f32 %v4810, %v4838
    %4840 = vdwg.mxu0
    %v4841 = vld [vmem:[#allocation2] sm:$0xee]
    %v4842 = vld [vmem:[#allocation2 + $0x18] sm:$0xee]
    %v4843 = vld [vmem:[#allocation2 + $0x30] sm:$0xee]
    %v4844 = vld [vmem:[#allocation2 + $0x48] sm:$0xee]
    %v4845 = vld [vmem:[#allocation2 + $0x60] sm:$0xee]
    %v4846 = vld [vmem:[#allocation2 + $0x78] sm:$0xee]
    %v4847 = vld [vmem:[#allocation2 + $0x90] sm:$0xee]
    %v4848 = vld [vmem:[#allocation2 + $0xa8] sm:$0xee]
    %v4865 = vrot.slane %v4841, 5
    %v4866 = vrot.slane %v4865, 4
    %v4867 = vrot.slane %v4348, 5
    %v4868 = vsel %vm527, %v4866, %v4867
    %v4869 = vrot.slane %v4842, 5
    %v4870 = vrot.slane %v4869, 4
    %v4871 = vrot.slane %v4349, 5
    %v4872 = vsel %vm527, %v4870, %v4871
    %v4873 = vrot.slane %v4843, 5
    %v4874 = vrot.slane %v4873, 4
    %v4875 = vrot.slane %v4350, 5
    %v4876 = vsel %vm527, %v4874, %v4875
    %v4877 = vrot.slane %v4844, 5
    %v4878 = vrot.slane %v4877, 4
    %v4879 = vrot.slane %v4351, 5
    %v4880 = vsel %vm527, %v4878, %v4879
    %v4881 = vrot.slane %v4845, 5
    %v4882 = vrot.slane %v4881, 4
    %v4883 = vrot.slane %v4352, 5
    %v4884 = vsel %vm527, %v4882, %v4883
    %v4885 = vrot.slane %v4846, 5
    %v4886 = vrot.slane %v4885, 4
    %v4887 = vrot.slane %v4353, 5
    %v4888 = vsel %vm527, %v4886, %v4887
    %v4889 = vrot.slane %v4847, 5
    %v4890 = vrot.slane %v4889, 4
    %v4891 = vrot.slane %v4354, 5
    %v4892 = vsel %vm527, %v4890, %v4891
    %v4893 = vrot.slane %v4848, 5
    %v4894 = vrot.slane %v4893, 4
    %v4895 = vrot.slane %v4355, 5
    %v4896 = vsel %vm527, %v4894, %v4895
    %s4897 = scalar_lea.vmem %s7, 192
    %v4898 = vld [vmem:[%s4897] sm:$0xf]
    %v4899 = vld [vmem:[%s4897 + $0x4] sm:$0xf]
    %v4900 = vld [vmem:[%s4897 + $0x8] sm:$0xf]
    %v4901 = vld [vmem:[%s4897 + $0xc] sm:$0xf]
    %v4902 = vld [vmem:[%s4897 + $0x10] sm:$0xf]
    %v4903 = vld [vmem:[%s4897 + $0x14] sm:$0xf]
    %v4904 = vld [vmem:[%s4897 + $0x18] sm:$0xf]
    %v4905 = vld [vmem:[%s4897 + $0x1c] sm:$0xf]
    %v4906 = vld [vmem:[%s4897 + $0x20] sm:$0xf]
    %v4907 = vld [vmem:[%s4897 + $0x24] sm:$0xf]
    %v4908 = vld [vmem:[%s4897 + $0x28] sm:$0xf]
    %v4909 = vld [vmem:[%s4897 + $0x2c] sm:$0xf]
    %v4910 = vld [vmem:[%s4897 + $0x30] sm:$0xf]
    %v4911 = vld [vmem:[%s4897 + $0x34] sm:$0xf]
    %v4912 = vld [vmem:[%s4897 + $0x38] sm:$0xf]
    %v4913 = vld [vmem:[%s4897 + $0x3c] sm:$0xf]
    %v4914 = vld [vmem:[%s4897 + $0x40] sm:$0xf]
    %v4915 = vld [vmem:[%s4897 + $0x44] sm:$0xf]
    %v4916 = vld [vmem:[%s4897 + $0x48] sm:$0xf]
    %v4917 = vld [vmem:[%s4897 + $0x4c] sm:$0xf]
    %v4918 = vld [vmem:[%s4897 + $0x50] sm:$0xf]
    %v4919 = vld [vmem:[%s4897 + $0x54] sm:$0xf]
    %v4920 = vld [vmem:[%s4897 + $0x58] sm:$0xf]
    %v4921 = vld [vmem:[%s4897 + $0x5c] sm:$0xf]
    %v4922 = vunpack.c.l.b16 %v4868
    %v4923 = vunpack.c.h.b16 %v4868
    %v4924 = vunpack.c.l.b16 %v4872
    %v4925 = vunpack.c.h.b16 %v4872
    %v4926 = vunpack.c.l.b16 %v4876
    %v4927 = vunpack.c.h.b16 %v4876
    %v4928 = vunpack.c.l.b16 %v4880
    %v4929 = vunpack.c.h.b16 %v4880
    %v4930 = vunpack.c.l.b16 %v4884
    %v4931 = vunpack.c.h.b16 %v4884
    %v4932 = vunpack.c.l.b16 %v4888
    %v4933 = vunpack.c.h.b16 %v4888
    %v4934 = vunpack.c.l.b16 %v4892
    %v4935 = vunpack.c.h.b16 %v4892
    %v4936 = vunpack.c.l.b16 %v4896
    %v4937 = vunpack.c.h.b16 %v4896
    %v4938 = vpack.c.b16 %v4924, %v4922
    %v4939 = vpack.c.b16 %v4925, %v4923
    %v4940 = vpack.c.b16 %v4928, %v4926
    %v4941 = vpack.c.b16 %v4929, %v4927
    %v4942 = vpack.c.b16 %v4932, %v4930
    %v4943 = vpack.c.b16 %v4933, %v4931
    %v4944 = vpack.c.b16 %v4936, %v4934
    %v4945 = vpack.c.b16 %v4937, %v4935
    %v4974 = vunpack.c.l.b16 %v4898
    %v4975 = vunpack.c.l.b16 %v4899
    %v4976 = vunpack.c.l.b16 %v4900
    %v4977 = vunpack.c.l.b16 %v4901
    %v4978 = vunpack.c.l.b16 %v4902
    %v4979 = vunpack.c.l.b16 %v4903
    %v4980 = vunpack.c.l.b16 %v4904
    %v4981 = vunpack.c.l.b16 %v4905
    %v4982 = vunpack.c.l.b16 %v4906
    %v4983 = vunpack.c.l.b16 %v4907
    %v4984 = vunpack.c.l.b16 %v4908
    %v4985 = vunpack.c.l.b16 %v4909
    %v4986 = vunpack.c.l.b16 %v4910
    %v4987 = vunpack.c.l.b16 %v4911
    %v4988 = vunpack.c.l.b16 %v4912
    %v4989 = vunpack.c.l.b16 %v4913
    %v4990 = vunpack.c.l.b16 %v4914
    %v4991 = vunpack.c.l.b16 %v4915
    %v4992 = vunpack.c.l.b16 %v4916
    %v4993 = vunpack.c.l.b16 %v4917
    %v4994 = vunpack.c.l.b16 %v4918
    %v4995 = vunpack.c.l.b16 %v4919
    %v4996 = vunpack.c.l.b16 %v4920
    %v4997 = vunpack.c.l.b16 %v4921
    %v4998 = vpack.c.b16 %v4975, %v4974
    %v4999 = vpack.c.b16 %v4977, %v4976
    %v5000 = vpack.c.b16 %v4979, %v4978
    %v5001 = vpack.c.b16 %v4981, %v4980
    %v5002 = vpack.c.b16 %v4983, %v4982
    %v5003 = vpack.c.b16 %v4985, %v4984
    %v5004 = vpack.c.b16 %v4987, %v4986
    %v5005 = vpack.c.b16 %v4989, %v4988
    %v5006 = vpack.c.b16 %v4991, %v4990
    %v5007 = vpack.c.b16 %v4993, %v4992
    %v5008 = vpack.c.b16 %v4995, %v4994
    %v5009 = vpack.c.b16 %v4997, %v4996
    %v5023 = vsel %vm1743, %v4939, 0
    %v5026 = vsel %vm1743, %v4941, 0
    %v5029 = vsel %vm1743, %v4943, 0
    %v5032 = vsel %vm1743, %v4945, 0
    %5034 = vmatpush.bf16.msra.mxu0 %v5005
    %5035 = vmatpush.bf16.msra.mxu0 %v5004
    %5036 = vmatpush.bf16.msra.mxu0 %v5003
    %5037 = vmatpush.bf16.msra.mxu0 %v5002
    %5038 = vmatpush.bf16.msra.mxu0 %v5001
    %5039 = vmatpush.bf16.msra.mxu0 %v5000
    %5040 = vmatpush.bf16.msra.mxu0 %v4999
    %5041 = vmatpush.bf16.msra.mxu0 %v4998
    %5042 = vmatmul.bf16.gmra.mxu0 %v4938
    %v5043 = vpop.f32.mrf.mxu0
    %v5044 = vadd.f32 0.0, %v5043
    %v5045 = vpop.f32.mrf.mxu0
    %v5046 = vadd.f32 0.0, %v5045
    %5047 = vmatmul.bf16.gmra.mxu0 %v4940
    %v5048 = vpop.f32.mrf.mxu0
    %v5049 = vadd.f32 0.0, %v5048
    %v5050 = vpop.f32.mrf.mxu0
    %v5051 = vadd.f32 0.0, %v5050
    %5052 = vmatmul.bf16.gmra.mxu0 %v4942
    %v5053 = vpop.f32.mrf.mxu0
    %v5054 = vadd.f32 0.0, %v5053
    %v5055 = vpop.f32.mrf.mxu0
    %v5056 = vadd.f32 0.0, %v5055
    %5057 = vmatmul.bf16.gmra.mxu0 %v4944
    %v5058 = vpop.f32.mrf.mxu0
    %v5059 = vadd.f32 0.0, %v5058
    %v5060 = vpop.f32.mrf.mxu0
    %v5061 = vadd.f32 0.0, %v5060
    %5062 = vdwg.mxu0
    %5063 = vmatpush.bf16.msra.mxu0 0
    %5064 = vmatpush.bf16.msra.mxu0 0
    %5065 = vmatpush.bf16.msra.mxu0 0
    %5066 = vmatpush.bf16.msra.mxu0 0
    %5067 = vmatpush.bf16.msra.mxu0 %v5009
    %5068 = vmatpush.bf16.msra.mxu0 %v5008
    %5069 = vmatpush.bf16.msra.mxu0 %v5007
    %5070 = vmatpush.bf16.msra.mxu0 %v5006
    %5071 = vmatmul.bf16.gmra.mxu0 %v5023
    %v5072 = vpop.f32.mrf.mxu0
    %v5073 = vadd.f32 %v5044, %v5072
    %v5074 = vpop.f32.mrf.mxu0
    %v5075 = vadd.f32 %v5046, %v5074
    %5076 = vmatmul.bf16.gmra.mxu0 %v5026
    %v5077 = vpop.f32.mrf.mxu0
    %v5078 = vadd.f32 %v5049, %v5077
    %v5079 = vpop.f32.mrf.mxu0
    %v5080 = vadd.f32 %v5051, %v5079
    %5081 = vmatmul.bf16.gmra.mxu0 %v5029
    %v5082 = vpop.f32.mrf.mxu0
    %v5083 = vadd.f32 %v5054, %v5082
    %v5084 = vpop.f32.mrf.mxu0
    %v5085 = vadd.f32 %v5056, %v5084
    %5086 = vmatmul.bf16.gmra.mxu0 %v5032
    %v5087 = vpop.f32.mrf.mxu0
    %v5088 = vadd.f32 %v5059, %v5087
    %v5089 = vpop.f32.mrf.mxu0
    %v5090 = vadd.f32 %v5061, %v5089
    %5091 = vdwg.mxu0
    %v5092 = vadd.f32 %v4822, %v5073
    %v5093 = vadd.f32 %v4824, %v5075
    %v5094 = vadd.f32 %v4827, %v5078
    %v5095 = vadd.f32 %v4829, %v5080
    %v5096 = vadd.f32 %v4832, %v5083
    %v5097 = vadd.f32 %v4834, %v5085
    %v5098 = vadd.f32 %v4837, %v5088
    %v5099 = vadd.f32 %v4839, %v5090
    %v5100 = vld [vmem:[%s8] sm:$0x1]
    %v5102 = vperm.slane %v5100, 0
    %v5104 = vadd.f32 %v5092, %v5102
    %v5105 = vadd.f32 %v5093, %v5102
    %v5106 = vadd.f32 %v5094, %v5102
    %v5107 = vadd.f32 %v5095, %v5102
    %v5108 = vadd.f32 %v5096, %v5102
    %v5109 = vadd.f32 %v5097, %v5102
    %v5110 = vadd.f32 %v5098, %v5102
    %v5111 = vadd.f32 %v5099, %v5102
    %v5112 = vmax.f32 %v5104, 0.0
    %v5113 = vmax.f32 %v5105, 0.0
    %v5114 = vmax.f32 %v5106, 0.0
    %v5115 = vmax.f32 %v5107, 0.0
    %v5116 = vmax.f32 %v5108, 0.0
    %v5117 = vmax.f32 %v5109, 0.0
    %v5118 = vmax.f32 %v5110, 0.0
    %v5119 = vmax.f32 %v5111, 0.0
    %v5120 = vpack.c.bf16 %v5112, %v5112
    %v5121 = vpack.c.bf16 %v5113, %v5113
    %v5122 = vpack.c.bf16 %v5114, %v5114
    %v5123 = vpack.c.bf16 %v5115, %v5115
    %v5124 = vpack.c.bf16 %v5116, %v5116
    %v5125 = vpack.c.bf16 %v5117, %v5117
    %v5126 = vpack.c.bf16 %v5118, %v5118
    %v5127 = vpack.c.bf16 %v5119, %v5119
    %v5128 = vld [vmem:[#allocation3] sm:$0xff]
    %v5129 = vld [vmem:[#allocation3 + $0x8] sm:$0xff]
    %v5130 = vld [vmem:[#allocation3 + $0x10] sm:$0xff]
    %v5131 = vld [vmem:[#allocation3 + $0x18] sm:$0xff]
    %v5132 = vld [vmem:[#allocation3 + $0x20] sm:$0xff]
    %v5133 = vld [vmem:[#allocation3 + $0x28] sm:$0xff]
    %v5134 = vld [vmem:[#allocation3 + $0x30] sm:$0xff]
    %v5135 = vld [vmem:[#allocation3 + $0x38] sm:$0xff]
    %v5136 = vld [vmem:[#allocation3 + $0x40] sm:$0xff]
    %v5137 = vld [vmem:[#allocation3 + $0x48] sm:$0xff]
    %v5138 = vld [vmem:[#allocation3 + $0x50] sm:$0xff]
    %v5139 = vld [vmem:[#allocation3 + $0x58] sm:$0xff]
    %v5140 = vld [vmem:[#allocation3 + $0x60] sm:$0xff]
    %v5141 = vld [vmem:[#allocation3 + $0x68] sm:$0xff]
    %v5142 = vld [vmem:[#allocation3 + $0x70] sm:$0xff]
    %v5143 = vld [vmem:[#allocation3 + $0x78] sm:$0xff]
    %v5144 = vld [vmem:[#allocation3 + $0x80] sm:$0xff]
    %v5145 = vld [vmem:[#allocation3 + $0x88] sm:$0xff]
    %v5146 = vld [vmem:[#allocation3 + $0x90] sm:$0xff]
    %v5147 = vld [vmem:[#allocation3 + $0x98] sm:$0xff]
    %v5148 = vld [vmem:[#allocation3 + $0xa0] sm:$0xff]
    %v5149 = vld [vmem:[#allocation3 + $0xa8] sm:$0xff]
    %v5150 = vld [vmem:[#allocation3 + $0xb0] sm:$0xff]
    %v5151 = vld [vmem:[#allocation3 + $0xb8] sm:$0xff]
    %v5152 = vld [vmem:[#allocation3 + $0xc0] sm:$0xff]
    %v5153 = vld [vmem:[#allocation3 + $0xc8] sm:$0xff]
    %v5154 = vld [vmem:[#allocation3 + $0xd0] sm:$0xff]
    %v5155 = vld [vmem:[#allocation3 + $0xd8] sm:$0xff]
    %v5156 = vld [vmem:[#allocation3 + $0xe0] sm:$0xff]
    %v5157 = vld [vmem:[#allocation3 + $0xe8] sm:$0xff]
    %v5158 = vld [vmem:[#allocation3 + $0xf0] sm:$0xff]
    %v5159 = vld [vmem:[#allocation3 + $0xf8] sm:$0xff]
    %v5160 = vld [vmem:[#allocation3 + $0x100] sm:$0xff]
    %v5161 = vld [vmem:[#allocation3 + $0x108] sm:$0xff]
    %v5162 = vld [vmem:[#allocation3 + $0x110] sm:$0xff]
    %v5163 = vld [vmem:[#allocation3 + $0x118] sm:$0xff]
    %v5164 = vld [vmem:[#allocation3 + $0x120] sm:$0xff]
    %v5165 = vld [vmem:[#allocation3 + $0x128] sm:$0xff]
    %v5166 = vld [vmem:[#allocation3 + $0x130] sm:$0xff]
    %v5167 = vld [vmem:[#allocation3 + $0x138] sm:$0xff]
    %v5168 = vld [vmem:[#allocation3 + $0x140] sm:$0xff]
    %v5169 = vld [vmem:[#allocation3 + $0x148] sm:$0xff]
    %v5170 = vld [vmem:[#allocation3 + $0x150] sm:$0xff]
    %v5171 = vld [vmem:[#allocation3 + $0x158] sm:$0xff]
    %v5172 = vld [vmem:[#allocation3 + $0x160] sm:$0xff]
    %v5173 = vld [vmem:[#allocation3 + $0x168] sm:$0xff]
    %v5174 = vld [vmem:[#allocation3 + $0x170] sm:$0xff]
    %v5175 = vld [vmem:[#allocation3 + $0x178] sm:$0xff]
    %v5176 = vld [vmem:[#allocation3 + $0x180] sm:$0xff]
    %v5177 = vld [vmem:[#allocation3 + $0x188] sm:$0xff]
    %v5178 = vld [vmem:[#allocation3 + $0x190] sm:$0xff]
    %v5179 = vld [vmem:[#allocation3 + $0x198] sm:$0xff]
    %v5180 = vld [vmem:[#allocation3 + $0x1a0] sm:$0xff]
    %v5181 = vld [vmem:[#allocation3 + $0x1a8] sm:$0xff]
    %v5182 = vld [vmem:[#allocation3 + $0x1b0] sm:$0xff]
    %v5183 = vld [vmem:[#allocation3 + $0x1b8] sm:$0xff]
    %v5184 = vld [vmem:[#allocation3 + $0x1c0] sm:$0xff]
    %v5185 = vld [vmem:[#allocation3 + $0x1c8] sm:$0xff]
    %v5186 = vld [vmem:[#allocation3 + $0x1d0] sm:$0xff]
    %v5187 = vld [vmem:[#allocation3 + $0x1d8] sm:$0xff]
    %v5188 = vld [vmem:[#allocation3 + $0x1e0] sm:$0xff]
    %v5189 = vld [vmem:[#allocation3 + $0x1e8] sm:$0xff]
    %v5190 = vld [vmem:[#allocation3 + $0x1f0] sm:$0xff]
    %v5191 = vld [vmem:[#allocation3 + $0x1f8] sm:$0xff]
    %s5192 = scalar_lea.vmem [#allocation3], 512
    %v5193 = vld [vmem:[%s5192] sm:$0xff]
    %v5194 = vld [vmem:[%s5192 + $0x8] sm:$0xff]
    %v5195 = vld [vmem:[%s5192 + $0x10] sm:$0xff]
    %v5196 = vld [vmem:[%s5192 + $0x18] sm:$0xff]
    %v5197 = vld [vmem:[%s5192 + $0x20] sm:$0xff]
    %v5198 = vld [vmem:[%s5192 + $0x28] sm:$0xff]
    %v5199 = vld [vmem:[%s5192 + $0x30] sm:$0xff]
    %v5200 = vld [vmem:[%s5192 + $0x38] sm:$0xff]
    %v5201 = vld [vmem:[%s5192 + $0x40] sm:$0xff]
    %v5202 = vld [vmem:[%s5192 + $0x48] sm:$0xff]
    %v5203 = vld [vmem:[%s5192 + $0x50] sm:$0xff]
    %v5204 = vld [vmem:[%s5192 + $0x58] sm:$0xff]
    %v5205 = vld [vmem:[%s5192 + $0x60] sm:$0xff]
    %v5206 = vld [vmem:[%s5192 + $0x68] sm:$0xff]
    %v5207 = vld [vmem:[%s5192 + $0x70] sm:$0xff]
    %v5208 = vld [vmem:[%s5192 + $0x78] sm:$0xff]
    %v5209 = vld [vmem:[%s5192 + $0x80] sm:$0xff]
    %v5210 = vld [vmem:[%s5192 + $0x88] sm:$0xff]
    %v5211 = vld [vmem:[%s5192 + $0x90] sm:$0xff]
    %v5212 = vld [vmem:[%s5192 + $0x98] sm:$0xff]
    %v5213 = vld [vmem:[%s5192 + $0xa0] sm:$0xff]
    %v5214 = vld [vmem:[%s5192 + $0xa8] sm:$0xff]
    %v5215 = vld [vmem:[%s5192 + $0xb0] sm:$0xff]
    %v5216 = vld [vmem:[%s5192 + $0xb8] sm:$0xff]
    %v5217 = vld [vmem:[%s5192 + $0xc0] sm:$0xff]
    %v5218 = vld [vmem:[%s5192 + $0xc8] sm:$0xff]
    %v5219 = vld [vmem:[%s5192 + $0xd0] sm:$0xff]
    %v5220 = vld [vmem:[%s5192 + $0xd8] sm:$0xff]
    %v5221 = vld [vmem:[%s5192 + $0xe0] sm:$0xff]
    %v5222 = vld [vmem:[%s5192 + $0xe8] sm:$0xff]
    %v5223 = vld [vmem:[%s5192 + $0xf0] sm:$0xff]
    %v5224 = vld [vmem:[%s5192 + $0xf8] sm:$0xff]
    %v5225 = vld [vmem:[%s5192 + $0x100] sm:$0xff]
    %v5226 = vld [vmem:[%s5192 + $0x108] sm:$0xff]
    %v5227 = vld [vmem:[%s5192 + $0x110] sm:$0xff]
    %v5228 = vld [vmem:[%s5192 + $0x118] sm:$0xff]
    %v5229 = vld [vmem:[%s5192 + $0x120] sm:$0xff]
    %v5230 = vld [vmem:[%s5192 + $0x128] sm:$0xff]
    %v5231 = vld [vmem:[%s5192 + $0x130] sm:$0xff]
    %v5232 = vld [vmem:[%s5192 + $0x138] sm:$0xff]
    %v5233 = vld [vmem:[%s5192 + $0x140] sm:$0xff]
    %v5234 = vld [vmem:[%s5192 + $0x148] sm:$0xff]
    %v5235 = vld [vmem:[%s5192 + $0x150] sm:$0xff]
    %v5236 = vld [vmem:[%s5192 + $0x158] sm:$0xff]
    %v5237 = vld [vmem:[%s5192 + $0x160] sm:$0xff]
    %v5238 = vld [vmem:[%s5192 + $0x168] sm:$0xff]
    %v5239 = vld [vmem:[%s5192 + $0x170] sm:$0xff]
    %v5240 = vld [vmem:[%s5192 + $0x178] sm:$0xff]
    %v5241 = vld [vmem:[%s5192 + $0x180] sm:$0xff]
    %v5242 = vld [vmem:[%s5192 + $0x188] sm:$0xff]
    %v5243 = vld [vmem:[%s5192 + $0x190] sm:$0xff]
    %v5244 = vld [vmem:[%s5192 + $0x198] sm:$0xff]
    %v5245 = vld [vmem:[%s5192 + $0x1a0] sm:$0xff]
    %v5246 = vld [vmem:[%s5192 + $0x1a8] sm:$0xff]
    %v5247 = vld [vmem:[%s5192 + $0x1b0] sm:$0xff]
    %v5248 = vld [vmem:[%s5192 + $0x1b8] sm:$0xff]
    %v5249 = vld [vmem:[%s5192 + $0x1c0] sm:$0xff]
    %v5250 = vld [vmem:[%s5192 + $0x1c8] sm:$0xff]
    %v5251 = vld [vmem:[%s5192 + $0x1d0] sm:$0xff]
    %v5252 = vld [vmem:[%s5192 + $0x1d8] sm:$0xff]
    %v5253 = vld [vmem:[%s5192 + $0x1e0] sm:$0xff]
    %v5254 = vld [vmem:[%s5192 + $0x1e8] sm:$0xff]
    %v5255 = vld [vmem:[%s5192 + $0x1f0] sm:$0xff]
    %v5256 = vld [vmem:[%s5192 + $0x1f8] sm:$0xff]
    %v5265 = vunpack.c.l.b16 %v5120
    %v5266 = vunpack.c.l.b16 %v5121
    %v5267 = vunpack.c.l.b16 %v5122
    %v5268 = vunpack.c.l.b16 %v5123
    %v5269 = vunpack.c.l.b16 %v5124
    %v5270 = vunpack.c.l.b16 %v5125
    %v5271 = vunpack.c.l.b16 %v5126
    %v5272 = vunpack.c.l.b16 %v5127
    %v5273 = vpack.c.b16 %v5265, %v5265
    %v5274 = vpack.c.b16 %v5266, %v5266
    %v5275 = vpack.c.b16 %v5267, %v5267
    %v5276 = vpack.c.b16 %v5268, %v5268
    %v5277 = vpack.c.b16 %v5269, %v5269
    %v5278 = vpack.c.b16 %v5270, %v5270
    %v5279 = vpack.c.b16 %v5271, %v5271
    %v5280 = vpack.c.b16 %v5272, %v5272
    %v5281 = vunpack.c.l.b16 %v5273
    %v5282 = vunpack.c.l.b16 %v5274
    %v5283 = vunpack.c.l.b16 %v5275
    %v5284 = vunpack.c.l.b16 %v5276
    %v5285 = vunpack.c.l.b16 %v5277
    %v5286 = vunpack.c.l.b16 %v5278
    %v5287 = vunpack.c.l.b16 %v5279
    %v5288 = vunpack.c.l.b16 %v5280
    %v5289 = vrot.slane %v5281, 1
    %vm5290 = vcmask 1041409
    %v5291 = vsel %vm5290, %v5282, %v5289
    %v5292 = vrot.slane %v5283, 7
    %vm5293 = vcmask 1042434
    %v5294 = vsel %vm5293, %v5292, %v5291
    %v5295 = vrot.slane %v5284, 6
    %vm5296 = vcmask 1043459
    %v5297 = vsel %vm5296, %v5295, %v5294
    %v5298 = vrot.slane %v5285, 5
    %vm5299 = vcmask 1044484
    %v5300 = vsel %vm5299, %v5298, %v5297
    %v5301 = vrot.slane %v5286, 4
    %vm5302 = vcmask 1045509
    %v5303 = vsel %vm5302, %v5301, %v5300
    %v5304 = vrot.slane %v5287, 3
    %vm5305 = vcmask 1046534
    %v5306 = vsel %vm5305, %v5304, %v5303
    %v5307 = vrot.slane %v5288, 2
    %vm5308 = vcmask 1047559
    %v5309 = vsel %vm5308, %v5307, %v5306
    %v5310 = vpack.c.b16 %v5309, %v5309
    %v5376 = vunpack.c.l.b16 %v5193
    %v5377 = vunpack.c.h.b16 %v5193
    %v5378 = vunpack.c.l.b16 %v5194
    %v5379 = vunpack.c.h.b16 %v5194
    %v5380 = vunpack.c.l.b16 %v5195
    %v5381 = vunpack.c.h.b16 %v5195
    %v5382 = vunpack.c.l.b16 %v5196
    %v5383 = vunpack.c.h.b16 %v5196
    %v5384 = vunpack.c.l.b16 %v5197
    %v5385 = vunpack.c.h.b16 %v5197
    %v5386 = vunpack.c.l.b16 %v5198
    %v5387 = vunpack.c.h.b16 %v5198
    %v5388 = vunpack.c.l.b16 %v5199
    %v5389 = vunpack.c.h.b16 %v5199
    %v5390 = vunpack.c.l.b16 %v5200
    %v5391 = vunpack.c.h.b16 %v5200
    %v5392 = vunpack.c.l.b16 %v5201
    %v5393 = vunpack.c.h.b16 %v5201
    %v5394 = vunpack.c.l.b16 %v5202
    %v5395 = vunpack.c.h.b16 %v5202
    %v5396 = vunpack.c.l.b16 %v5203
    %v5397 = vunpack.c.h.b16 %v5203
    %v5398 = vunpack.c.l.b16 %v5204
    %v5399 = vunpack.c.h.b16 %v5204
    %v5400 = vunpack.c.l.b16 %v5205
    %v5401 = vunpack.c.h.b16 %v5205
    %v5402 = vunpack.c.l.b16 %v5206
    %v5403 = vunpack.c.h.b16 %v5206
    %v5404 = vunpack.c.l.b16 %v5207
    %v5405 = vunpack.c.h.b16 %v5207
    %v5406 = vunpack.c.l.b16 %v5208
    %v5407 = vunpack.c.h.b16 %v5208
    %v5408 = vunpack.c.l.b16 %v5209
    %v5409 = vunpack.c.h.b16 %v5209
    %v5410 = vunpack.c.l.b16 %v5210
    %v5411 = vunpack.c.h.b16 %v5210
    %v5412 = vunpack.c.l.b16 %v5211
    %v5413 = vunpack.c.h.b16 %v5211
    %v5414 = vunpack.c.l.b16 %v5212
    %v5415 = vunpack.c.h.b16 %v5212
    %v5416 = vunpack.c.l.b16 %v5213
    %v5417 = vunpack.c.h.b16 %v5213
    %v5418 = vunpack.c.l.b16 %v5214
    %v5419 = vunpack.c.h.b16 %v5214
    %v5420 = vunpack.c.l.b16 %v5215
    %v5421 = vunpack.c.h.b16 %v5215
    %v5422 = vunpack.c.l.b16 %v5216
    %v5423 = vunpack.c.h.b16 %v5216
    %v5424 = vunpack.c.l.b16 %v5217
    %v5425 = vunpack.c.h.b16 %v5217
    %v5426 = vunpack.c.l.b16 %v5218
    %v5427 = vunpack.c.h.b16 %v5218
    %v5428 = vunpack.c.l.b16 %v5219
    %v5429 = vunpack.c.h.b16 %v5219
    %v5430 = vunpack.c.l.b16 %v5220
    %v5431 = vunpack.c.h.b16 %v5220
    %v5432 = vunpack.c.l.b16 %v5221
    %v5433 = vunpack.c.h.b16 %v5221
    %v5434 = vunpack.c.l.b16 %v5222
    %v5435 = vunpack.c.h.b16 %v5222
    %v5436 = vunpack.c.l.b16 %v5223
    %v5437 = vunpack.c.h.b16 %v5223
    %v5438 = vunpack.c.l.b16 %v5224
    %v5439 = vunpack.c.h.b16 %v5224
    %v5440 = vunpack.c.l.b16 %v5225
    %v5441 = vunpack.c.h.b16 %v5225
    %v5442 = vunpack.c.l.b16 %v5226
    %v5443 = vunpack.c.h.b16 %v5226
    %v5444 = vunpack.c.l.b16 %v5227
    %v5445 = vunpack.c.h.b16 %v5227
    %v5446 = vunpack.c.l.b16 %v5228
    %v5447 = vunpack.c.h.b16 %v5228
    %v5448 = vunpack.c.l.b16 %v5229
    %v5449 = vunpack.c.h.b16 %v5229
    %v5450 = vunpack.c.l.b16 %v5230
    %v5451 = vunpack.c.h.b16 %v5230
    %v5452 = vunpack.c.l.b16 %v5231
    %v5453 = vunpack.c.h.b16 %v5231
    %v5454 = vunpack.c.l.b16 %v5232
    %v5455 = vunpack.c.h.b16 %v5232
    %v5456 = vunpack.c.l.b16 %v5233
    %v5457 = vunpack.c.h.b16 %v5233
    %v5458 = vunpack.c.l.b16 %v5234
    %v5459 = vunpack.c.h.b16 %v5234
    %v5460 = vunpack.c.l.b16 %v5235
    %v5461 = vunpack.c.h.b16 %v5235
    %v5462 = vunpack.c.l.b16 %v5236
    %v5463 = vunpack.c.h.b16 %v5236
    %v5464 = vunpack.c.l.b16 %v5237
    %v5465 = vunpack.c.h.b16 %v5237
    %v5466 = vunpack.c.l.b16 %v5238
    %v5467 = vunpack.c.h.b16 %v5238
    %v5468 = vunpack.c.l.b16 %v5239
    %v5469 = vunpack.c.h.b16 %v5239
    %v5470 = vunpack.c.l.b16 %v5240
    %v5471 = vunpack.c.h.b16 %v5240
    %v5472 = vunpack.c.l.b16 %v5241
    %v5473 = vunpack.c.h.b16 %v5241
    %v5474 = vunpack.c.l.b16 %v5242
    %v5475 = vunpack.c.h.b16 %v5242
    %v5476 = vunpack.c.l.b16 %v5243
    %v5477 = vunpack.c.h.b16 %v5243
    %v5478 = vunpack.c.l.b16 %v5244
    %v5479 = vunpack.c.h.b16 %v5244
    %v5480 = vunpack.c.l.b16 %v5245
    %v5481 = vunpack.c.h.b16 %v5245
    %v5482 = vunpack.c.l.b16 %v5246
    %v5483 = vunpack.c.h.b16 %v5246
    %v5484 = vunpack.c.l.b16 %v5247
    %v5485 = vunpack.c.h.b16 %v5247
    %v5486 = vunpack.c.l.b16 %v5248
    %v5487 = vunpack.c.h.b16 %v5248
    %v5488 = vunpack.c.l.b16 %v5249
    %v5489 = vunpack.c.h.b16 %v5249
    %v5490 = vunpack.c.l.b16 %v5250
    %v5491 = vunpack.c.h.b16 %v5250
    %v5492 = vunpack.c.l.b16 %v5251
    %v5493 = vunpack.c.h.b16 %v5251
    %v5494 = vunpack.c.l.b16 %v5252
    %v5495 = vunpack.c.h.b16 %v5252
    %v5496 = vunpack.c.l.b16 %v5253
    %v5497 = vunpack.c.h.b16 %v5253
    %v5498 = vunpack.c.l.b16 %v5254
    %v5499 = vunpack.c.h.b16 %v5254
    %v5500 = vunpack.c.l.b16 %v5255
    %v5501 = vunpack.c.h.b16 %v5255
    %v5502 = vunpack.c.l.b16 %v5256
    %v5503 = vunpack.c.h.b16 %v5256
    %v5504 = vpack.c.b16 %v5384, %v5376
    %v5505 = vpack.c.b16 %v5385, %v5377
    %v5506 = vpack.c.b16 %v5386, %v5378
    %v5507 = vpack.c.b16 %v5387, %v5379
    %v5508 = vpack.c.b16 %v5388, %v5380
    %v5509 = vpack.c.b16 %v5389, %v5381
    %v5510 = vpack.c.b16 %v5390, %v5382
    %v5511 = vpack.c.b16 %v5391, %v5383
    %v5512 = vpack.c.b16 %v5400, %v5392
    %v5513 = vpack.c.b16 %v5401, %v5393
    %v5514 = vpack.c.b16 %v5402, %v5394
    %v5515 = vpack.c.b16 %v5403, %v5395
    %v5516 = vpack.c.b16 %v5404, %v5396
    %v5517 = vpack.c.b16 %v5405, %v5397
    %v5518 = vpack.c.b16 %v5406, %v5398
    %v5519 = vpack.c.b16 %v5407, %v5399
    %v5520 = vpack.c.b16 %v5416, %v5408
    %v5521 = vpack.c.b16 %v5417, %v5409
    %v5522 = vpack.c.b16 %v5418, %v5410
    %v5523 = vpack.c.b16 %v5419, %v5411
    %v5524 = vpack.c.b16 %v5420, %v5412
    %v5525 = vpack.c.b16 %v5421, %v5413
    %v5526 = vpack.c.b16 %v5422, %v5414
    %v5527 = vpack.c.b16 %v5423, %v5415
    %v5528 = vpack.c.b16 %v5432, %v5424
    %v5529 = vpack.c.b16 %v5433, %v5425
    %v5530 = vpack.c.b16 %v5434, %v5426
    %v5531 = vpack.c.b16 %v5435, %v5427
    %v5532 = vpack.c.b16 %v5436, %v5428
    %v5533 = vpack.c.b16 %v5437, %v5429
    %v5534 = vpack.c.b16 %v5438, %v5430
    %v5535 = vpack.c.b16 %v5439, %v5431
    %v5536 = vpack.c.b16 %v5448, %v5440
    %v5537 = vpack.c.b16 %v5449, %v5441
    %v5538 = vpack.c.b16 %v5450, %v5442
    %v5539 = vpack.c.b16 %v5451, %v5443
    %v5540 = vpack.c.b16 %v5452, %v5444
    %v5541 = vpack.c.b16 %v5453, %v5445
    %v5542 = vpack.c.b16 %v5454, %v5446
    %v5543 = vpack.c.b16 %v5455, %v5447
    %v5544 = vpack.c.b16 %v5464, %v5456
    %v5545 = vpack.c.b16 %v5465, %v5457
    %v5546 = vpack.c.b16 %v5466, %v5458
    %v5547 = vpack.c.b16 %v5467, %v5459
    %v5548 = vpack.c.b16 %v5468, %v5460
    %v5549 = vpack.c.b16 %v5469, %v5461
    %v5550 = vpack.c.b16 %v5470, %v5462
    %v5551 = vpack.c.b16 %v5471, %v5463
    %v5552 = vpack.c.b16 %v5480, %v5472
    %v5553 = vpack.c.b16 %v5481, %v5473
    %v5554 = vpack.c.b16 %v5482, %v5474
    %v5555 = vpack.c.b16 %v5483, %v5475
    %v5556 = vpack.c.b16 %v5484, %v5476
    %v5557 = vpack.c.b16 %v5485, %v5477
    %v5558 = vpack.c.b16 %v5486, %v5478
    %v5559 = vpack.c.b16 %v5487, %v5479
    %v5560 = vpack.c.b16 %v5496, %v5488
    %v5561 = vpack.c.b16 %v5497, %v5489
    %v5562 = vpack.c.b16 %v5498, %v5490
    %v5563 = vpack.c.b16 %v5499, %v5491
    %v5564 = vpack.c.b16 %v5500, %v5492
    %v5565 = vpack.c.b16 %v5501, %v5493
    %v5566 = vpack.c.b16 %v5502, %v5494
    %v5567 = vpack.c.b16 %v5503, %v5495
    %5632 = vmatpush.bf16.msra.mxu0 %v5560
    %5633 = vmatpush.bf16.msra.mxu0 %v5552
    %5634 = vmatpush.bf16.msra.mxu0 %v5544
    %5635 = vmatpush.bf16.msra.mxu0 %v5536
    %5636 = vmatpush.bf16.msra.mxu0 %v5528
    %5637 = vmatpush.bf16.msra.mxu0 %v5520
    %5638 = vmatpush.bf16.msra.mxu0 %v5512
    %5639 = vmatpush.bf16.msra.mxu0 %v5504
    %5640 = vmatmul.bf16.gmra.mxu0 %v5310
    %v5641 = vpop.f32.mrf.mxu0
    %v5642 = vadd.f32 0.0, %v5641
    %v5643 = vpop.f32.mrf.mxu0
    %5644 = vdwg.mxu0
    %5645 = vmatpush.bf16.msra.mxu0 %v5561
    %5646 = vmatpush.bf16.msra.mxu0 %v5553
    %5647 = vmatpush.bf16.msra.mxu0 %v5545
    %5648 = vmatpush.bf16.msra.mxu0 %v5537
    %5649 = vmatpush.bf16.msra.mxu0 %v5529
    %5650 = vmatpush.bf16.msra.mxu0 %v5521
    %5651 = vmatpush.bf16.msra.mxu0 %v5513
    %5652 = vmatpush.bf16.msra.mxu0 %v5505
    %5653 = vmatmul.bf16.gmra.mxu0 %v5310
    %v5654 = vpop.f32.mrf.mxu0
    %v5655 = vadd.f32 0.0, %v5654
    %v5656 = vpop.f32.mrf.mxu0
    %5657 = vdwg.mxu0
    %5658 = vmatpush.bf16.msra.mxu0 %v5562
    %5659 = vmatpush.bf16.msra.mxu0 %v5554
    %5660 = vmatpush.bf16.msra.mxu0 %v5546
    %5661 = vmatpush.bf16.msra.mxu0 %v5538
    %5662 = vmatpush.bf16.msra.mxu0 %v5530
    %5663 = vmatpush.bf16.msra.mxu0 %v5522
    %5664 = vmatpush.bf16.msra.mxu0 %v5514
    %5665 = vmatpush.bf16.msra.mxu0 %v5506
    %5666 = vmatmul.bf16.gmra.mxu0 %v5310
    %v5667 = vpop.f32.mrf.mxu0
    %v5668 = vadd.f32 0.0, %v5667
    %v5669 = vpop.f32.mrf.mxu0
    %5670 = vdwg.mxu0
    %5671 = vmatpush.bf16.msra.mxu0 %v5563
    %5672 = vmatpush.bf16.msra.mxu0 %v5555
    %5673 = vmatpush.bf16.msra.mxu0 %v5547
    %5674 = vmatpush.bf16.msra.mxu0 %v5539
    %5675 = vmatpush.bf16.msra.mxu0 %v5531
    %5676 = vmatpush.bf16.msra.mxu0 %v5523
    %5677 = vmatpush.bf16.msra.mxu0 %v5515
    %5678 = vmatpush.bf16.msra.mxu0 %v5507
    %5679 = vmatmul.bf16.gmra.mxu0 %v5310
    %v5680 = vpop.f32.mrf.mxu0
    %v5681 = vadd.f32 0.0, %v5680
    %v5682 = vpop.f32.mrf.mxu0
    %5683 = vdwg.mxu0
    %5684 = vmatpush.bf16.msra.mxu0 %v5564
    %5685 = vmatpush.bf16.msra.mxu0 %v5556
    %5686 = vmatpush.bf16.msra.mxu0 %v5548
    %5687 = vmatpush.bf16.msra.mxu0 %v5540
    %5688 = vmatpush.bf16.msra.mxu0 %v5532
    %5689 = vmatpush.bf16.msra.mxu0 %v5524
    %5690 = vmatpush.bf16.msra.mxu0 %v5516
    %5691 = vmatpush.bf16.msra.mxu0 %v5508
    %5692 = vmatmul.bf16.gmra.mxu0 %v5310
    %v5693 = vpop.f32.mrf.mxu0
    %v5694 = vadd.f32 0.0, %v5693
    %v5695 = vpop.f32.mrf.mxu0
    %5696 = vdwg.mxu0
    %5697 = vmatpush.bf16.msra.mxu0 %v5565
    %5698 = vmatpush.bf16.msra.mxu0 %v5557
    %5699 = vmatpush.bf16.msra.mxu0 %v5549
    %5700 = vmatpush.bf16.msra.mxu0 %v5541
    %5701 = vmatpush.bf16.msra.mxu0 %v5533
    %5702 = vmatpush.bf16.msra.mxu0 %v5525
    %5703 = vmatpush.bf16.msra.mxu0 %v5517
    %5704 = vmatpush.bf16.msra.mxu0 %v5509
    %5705 = vmatmul.bf16.gmra.mxu0 %v5310
    %v5706 = vpop.f32.mrf.mxu0
    %v5707 = vadd.f32 0.0, %v5706
    %v5708 = vpop.f32.mrf.mxu0
    %5709 = vdwg.mxu0
    %5710 = vmatpush.bf16.msra.mxu0 %v5566
    %5711 = vmatpush.bf16.msra.mxu0 %v5558
    %5712 = vmatpush.bf16.msra.mxu0 %v5550
    %5713 = vmatpush.bf16.msra.mxu0 %v5542
    %5714 = vmatpush.bf16.msra.mxu0 %v5534
    %5715 = vmatpush.bf16.msra.mxu0 %v5526
    %5716 = vmatpush.bf16.msra.mxu0 %v5518
    %5717 = vmatpush.bf16.msra.mxu0 %v5510
    %5718 = vmatmul.bf16.gmra.mxu0 %v5310
    %v5719 = vpop.f32.mrf.mxu0
    %v5720 = vadd.f32 0.0, %v5719
    %v5721 = vpop.f32.mrf.mxu0
    %5722 = vdwg.mxu0
    %5723 = vmatpush.bf16.msra.mxu0 %v5567
    %5724 = vmatpush.bf16.msra.mxu0 %v5559
    %5725 = vmatpush.bf16.msra.mxu0 %v5551
    %5726 = vmatpush.bf16.msra.mxu0 %v5543
    %5727 = vmatpush.bf16.msra.mxu0 %v5535
    %5728 = vmatpush.bf16.msra.mxu0 %v5527
    %5729 = vmatpush.bf16.msra.mxu0 %v5519
    %5730 = vmatpush.bf16.msra.mxu0 %v5511
    %5731 = vmatmul.bf16.gmra.mxu0 %v5310
    %v5732 = vpop.f32.mrf.mxu0
    %v5733 = vadd.f32 0.0, %v5732
    %v5734 = vpop.f32.mrf.mxu0
    %5735 = vdwg.mxu0
    %v5736 = vrot.slane %v5282, 7
    %v5737 = vsel %vm5290, %v5736, %v5281
    %v5738 = vrot.slane %v5283, 6
    %v5739 = vsel %vm5293, %v5738, %v5737
    %v5740 = vrot.slane %v5284, 5
    %v5741 = vsel %vm5296, %v5740, %v5739
    %v5742 = vrot.slane %v5285, 4
    %v5743 = vsel %vm5299, %v5742, %v5741
    %v5744 = vrot.slane %v5286, 3
    %v5745 = vsel %vm5302, %v5744, %v5743
    %v5746 = vrot.slane %v5287, 2
    %v5747 = vsel %vm5305, %v5746, %v5745
    %v5748 = vrot.slane %v5288, 1
    %v5749 = vsel %vm5308, %v5748, %v5747
    %v5750 = vpack.c.b16 %v5749, %v5749
    %v5816 = vunpack.c.l.b16 %v5128
    %v5817 = vunpack.c.h.b16 %v5128
    %v5818 = vunpack.c.l.b16 %v5129
    %v5819 = vunpack.c.h.b16 %v5129
    %v5820 = vunpack.c.l.b16 %v5130
    %v5821 = vunpack.c.h.b16 %v5130
    %v5822 = vunpack.c.l.b16 %v5131
    %v5823 = vunpack.c.h.b16 %v5131
    %v5824 = vunpack.c.l.b16 %v5132
    %v5825 = vunpack.c.h.b16 %v5132
    %v5826 = vunpack.c.l.b16 %v5133
    %v5827 = vunpack.c.h.b16 %v5133
    %v5828 = vunpack.c.l.b16 %v5134
    %v5829 = vunpack.c.h.b16 %v5134
    %v5830 = vunpack.c.l.b16 %v5135
    %v5831 = vunpack.c.h.b16 %v5135
    %v5832 = vunpack.c.l.b16 %v5136
    %v5833 = vunpack.c.h.b16 %v5136
    %v5834 = vunpack.c.l.b16 %v5137
    %v5835 = vunpack.c.h.b16 %v5137
    %v5836 = vunpack.c.l.b16 %v5138
    %v5837 = vunpack.c.h.b16 %v5138
    %v5838 = vunpack.c.l.b16 %v5139
    %v5839 = vunpack.c.h.b16 %v5139
    %v5840 = vunpack.c.l.b16 %v5140
    %v5841 = vunpack.c.h.b16 %v5140
    %v5842 = vunpack.c.l.b16 %v5141
    %v5843 = vunpack.c.h.b16 %v5141
    %v5844 = vunpack.c.l.b16 %v5142
    %v5845 = vunpack.c.h.b16 %v5142
    %v5846 = vunpack.c.l.b16 %v5143
    %v5847 = vunpack.c.h.b16 %v5143
    %v5848 = vunpack.c.l.b16 %v5144
    %v5849 = vunpack.c.h.b16 %v5144
    %v5850 = vunpack.c.l.b16 %v5145
    %v5851 = vunpack.c.h.b16 %v5145
    %v5852 = vunpack.c.l.b16 %v5146
    %v5853 = vunpack.c.h.b16 %v5146
    %v5854 = vunpack.c.l.b16 %v5147
    %v5855 = vunpack.c.h.b16 %v5147
    %v5856 = vunpack.c.l.b16 %v5148
    %v5857 = vunpack.c.h.b16 %v5148
    %v5858 = vunpack.c.l.b16 %v5149
    %v5859 = vunpack.c.h.b16 %v5149
    %v5860 = vunpack.c.l.b16 %v5150
    %v5861 = vunpack.c.h.b16 %v5150
    %v5862 = vunpack.c.l.b16 %v5151
    %v5863 = vunpack.c.h.b16 %v5151
    %v5864 = vunpack.c.l.b16 %v5152
    %v5865 = vunpack.c.h.b16 %v5152
    %v5866 = vunpack.c.l.b16 %v5153
    %v5867 = vunpack.c.h.b16 %v5153
    %v5868 = vunpack.c.l.b16 %v5154
    %v5869 = vunpack.c.h.b16 %v5154
    %v5870 = vunpack.c.l.b16 %v5155
    %v5871 = vunpack.c.h.b16 %v5155
    %v5872 = vunpack.c.l.b16 %v5156
    %v5873 = vunpack.c.h.b16 %v5156
    %v5874 = vunpack.c.l.b16 %v5157
    %v5875 = vunpack.c.h.b16 %v5157
    %v5876 = vunpack.c.l.b16 %v5158
    %v5877 = vunpack.c.h.b16 %v5158
    %v5878 = vunpack.c.l.b16 %v5159
    %v5879 = vunpack.c.h.b16 %v5159
    %v5880 = vunpack.c.l.b16 %v5160
    %v5881 = vunpack.c.h.b16 %v5160
    %v5882 = vunpack.c.l.b16 %v5161
    %v5883 = vunpack.c.h.b16 %v5161
    %v5884 = vunpack.c.l.b16 %v5162
    %v5885 = vunpack.c.h.b16 %v5162
    %v5886 = vunpack.c.l.b16 %v5163
    %v5887 = vunpack.c.h.b16 %v5163
    %v5888 = vunpack.c.l.b16 %v5164
    %v5889 = vunpack.c.h.b16 %v5164
    %v5890 = vunpack.c.l.b16 %v5165
    %v5891 = vunpack.c.h.b16 %v5165
    %v5892 = vunpack.c.l.b16 %v5166
    %v5893 = vunpack.c.h.b16 %v5166
    %v5894 = vunpack.c.l.b16 %v5167
    %v5895 = vunpack.c.h.b16 %v5167
    %v5896 = vunpack.c.l.b16 %v5168
    %v5897 = vunpack.c.h.b16 %v5168
    %v5898 = vunpack.c.l.b16 %v5169
    %v5899 = vunpack.c.h.b16 %v5169
    %v5900 = vunpack.c.l.b16 %v5170
    %v5901 = vunpack.c.h.b16 %v5170
    %v5902 = vunpack.c.l.b16 %v5171
    %v5903 = vunpack.c.h.b16 %v5171
    %v5904 = vunpack.c.l.b16 %v5172
    %v5905 = vunpack.c.h.b16 %v5172
    %v5906 = vunpack.c.l.b16 %v5173
    %v5907 = vunpack.c.h.b16 %v5173
    %v5908 = vunpack.c.l.b16 %v5174
    %v5909 = vunpack.c.h.b16 %v5174
    %v5910 = vunpack.c.l.b16 %v5175
    %v5911 = vunpack.c.h.b16 %v5175
    %v5912 = vunpack.c.l.b16 %v5176
    %v5913 = vunpack.c.h.b16 %v5176
    %v5914 = vunpack.c.l.b16 %v5177
    %v5915 = vunpack.c.h.b16 %v5177
    %v5916 = vunpack.c.l.b16 %v5178
    %v5917 = vunpack.c.h.b16 %v5178
    %v5918 = vunpack.c.l.b16 %v5179
    %v5919 = vunpack.c.h.b16 %v5179
    %v5920 = vunpack.c.l.b16 %v5180
    %v5921 = vunpack.c.h.b16 %v5180
    %v5922 = vunpack.c.l.b16 %v5181
    %v5923 = vunpack.c.h.b16 %v5181
    %v5924 = vunpack.c.l.b16 %v5182
    %v5925 = vunpack.c.h.b16 %v5182
    %v5926 = vunpack.c.l.b16 %v5183
    %v5927 = vunpack.c.h.b16 %v5183
    %v5928 = vunpack.c.l.b16 %v5184
    %v5929 = vunpack.c.h.b16 %v5184
    %v5930 = vunpack.c.l.b16 %v5185
    %v5931 = vunpack.c.h.b16 %v5185
    %v5932 = vunpack.c.l.b16 %v5186
    %v5933 = vunpack.c.h.b16 %v5186
    %v5934 = vunpack.c.l.b16 %v5187
    %v5935 = vunpack.c.h.b16 %v5187
    %v5936 = vunpack.c.l.b16 %v5188
    %v5937 = vunpack.c.h.b16 %v5188
    %v5938 = vunpack.c.l.b16 %v5189
    %v5939 = vunpack.c.h.b16 %v5189
    %v5940 = vunpack.c.l.b16 %v5190
    %v5941 = vunpack.c.h.b16 %v5190
    %v5942 = vunpack.c.l.b16 %v5191
    %v5943 = vunpack.c.h.b16 %v5191
    %v5944 = vpack.c.b16 %v5824, %v5816
    %v5945 = vpack.c.b16 %v5825, %v5817
    %v5946 = vpack.c.b16 %v5826, %v5818
    %v5947 = vpack.c.b16 %v5827, %v5819
    %v5948 = vpack.c.b16 %v5828, %v5820
    %v5949 = vpack.c.b16 %v5829, %v5821
    %v5950 = vpack.c.b16 %v5830, %v5822
    %v5951 = vpack.c.b16 %v5831, %v5823
    %v5952 = vpack.c.b16 %v5840, %v5832
    %v5953 = vpack.c.b16 %v5841, %v5833
    %v5954 = vpack.c.b16 %v5842, %v5834
    %v5955 = vpack.c.b16 %v5843, %v5835
    %v5956 = vpack.c.b16 %v5844, %v5836
    %v5957 = vpack.c.b16 %v5845, %v5837
    %v5958 = vpack.c.b16 %v5846, %v5838
    %v5959 = vpack.c.b16 %v5847, %v5839
    %v5960 = vpack.c.b16 %v5856, %v5848
    %v5961 = vpack.c.b16 %v5857, %v5849
    %v5962 = vpack.c.b16 %v5858, %v5850
    %v5963 = vpack.c.b16 %v5859, %v5851
    %v5964 = vpack.c.b16 %v5860, %v5852
    %v5965 = vpack.c.b16 %v5861, %v5853
    %v5966 = vpack.c.b16 %v5862, %v5854
    %v5967 = vpack.c.b16 %v5863, %v5855
    %v5968 = vpack.c.b16 %v5872, %v5864
    %v5969 = vpack.c.b16 %v5873, %v5865
    %v5970 = vpack.c.b16 %v5874, %v5866
    %v5971 = vpack.c.b16 %v5875, %v5867
    %v5972 = vpack.c.b16 %v5876, %v5868
    %v5973 = vpack.c.b16 %v5877, %v5869
    %v5974 = vpack.c.b16 %v5878, %v5870
    %v5975 = vpack.c.b16 %v5879, %v5871
    %v5976 = vpack.c.b16 %v5888, %v5880
    %v5977 = vpack.c.b16 %v5889, %v5881
    %v5978 = vpack.c.b16 %v5890, %v5882
    %v5979 = vpack.c.b16 %v5891, %v5883
    %v5980 = vpack.c.b16 %v5892, %v5884
    %v5981 = vpack.c.b16 %v5893, %v5885
    %v5982 = vpack.c.b16 %v5894, %v5886
    %v5983 = vpack.c.b16 %v5895, %v5887
    %v5984 = vpack.c.b16 %v5904, %v5896
    %v5985 = vpack.c.b16 %v5905, %v5897
    %v5986 = vpack.c.b16 %v5906, %v5898
    %v5987 = vpack.c.b16 %v5907, %v5899
    %v5988 = vpack.c.b16 %v5908, %v5900
    %v5989 = vpack.c.b16 %v5909, %v5901
    %v5990 = vpack.c.b16 %v5910, %v5902
    %v5991 = vpack.c.b16 %v5911, %v5903
    %v5992 = vpack.c.b16 %v5920, %v5912
    %v5993 = vpack.c.b16 %v5921, %v5913
    %v5994 = vpack.c.b16 %v5922, %v5914
    %v5995 = vpack.c.b16 %v5923, %v5915
    %v5996 = vpack.c.b16 %v5924, %v5916
    %v5997 = vpack.c.b16 %v5925, %v5917
    %v5998 = vpack.c.b16 %v5926, %v5918
    %v5999 = vpack.c.b16 %v5927, %v5919
    %v6000 = vpack.c.b16 %v5936, %v5928
    %v6001 = vpack.c.b16 %v5937, %v5929
    %v6002 = vpack.c.b16 %v5938, %v5930
    %v6003 = vpack.c.b16 %v5939, %v5931
    %v6004 = vpack.c.b16 %v5940, %v5932
    %v6005 = vpack.c.b16 %v5941, %v5933
    %v6006 = vpack.c.b16 %v5942, %v5934
    %v6007 = vpack.c.b16 %v5943, %v5935
    %6072 = vmatpush.bf16.msra.mxu0 %v6000
    %6073 = vmatpush.bf16.msra.mxu0 %v5992
    %6074 = vmatpush.bf16.msra.mxu0 %v5984
    %6075 = vmatpush.bf16.msra.mxu0 %v5976
    %6076 = vmatpush.bf16.msra.mxu0 %v5968
    %6077 = vmatpush.bf16.msra.mxu0 %v5960
    %6078 = vmatpush.bf16.msra.mxu0 %v5952
    %6079 = vmatpush.bf16.msra.mxu0 %v5944
    %6080 = vmatmul.bf16.gmra.mxu0 %v5750
    %v6081 = vpop.f32.mrf.mxu0
    %v6082 = vadd.f32 %v5642, %v6081
    %v6083 = vpop.f32.mrf.mxu0
    %6084 = vdwg.mxu0
    %6085 = vmatpush.bf16.msra.mxu0 %v6001
    %6086 = vmatpush.bf16.msra.mxu0 %v5993
    %6087 = vmatpush.bf16.msra.mxu0 %v5985
    %6088 = vmatpush.bf16.msra.mxu0 %v5977
    %6089 = vmatpush.bf16.msra.mxu0 %v5969
    %6090 = vmatpush.bf16.msra.mxu0 %v5961
    %6091 = vmatpush.bf16.msra.mxu0 %v5953
    %6092 = vmatpush.bf16.msra.mxu0 %v5945
    %6093 = vmatmul.bf16.gmra.mxu0 %v5750
    %v6094 = vpop.f32.mrf.mxu0
    %v6095 = vadd.f32 %v5655, %v6094
    %v6096 = vpop.f32.mrf.mxu0
    %6097 = vdwg.mxu0
    %6098 = vmatpush.bf16.msra.mxu0 %v6002
    %6099 = vmatpush.bf16.msra.mxu0 %v5994
    %6100 = vmatpush.bf16.msra.mxu0 %v5986
    %6101 = vmatpush.bf16.msra.mxu0 %v5978
    %6102 = vmatpush.bf16.msra.mxu0 %v5970
    %6103 = vmatpush.bf16.msra.mxu0 %v5962
    %6104 = vmatpush.bf16.msra.mxu0 %v5954
    %6105 = vmatpush.bf16.msra.mxu0 %v5946
    %6106 = vmatmul.bf16.gmra.mxu0 %v5750
    %v6107 = vpop.f32.mrf.mxu0
    %v6108 = vadd.f32 %v5668, %v6107
    %v6109 = vpop.f32.mrf.mxu0
    %6110 = vdwg.mxu0
    %6111 = vmatpush.bf16.msra.mxu0 %v6003
    %6112 = vmatpush.bf16.msra.mxu0 %v5995
    %6113 = vmatpush.bf16.msra.mxu0 %v5987
    %6114 = vmatpush.bf16.msra.mxu0 %v5979
    %6115 = vmatpush.bf16.msra.mxu0 %v5971
    %6116 = vmatpush.bf16.msra.mxu0 %v5963
    %6117 = vmatpush.bf16.msra.mxu0 %v5955
    %6118 = vmatpush.bf16.msra.mxu0 %v5947
    %6119 = vmatmul.bf16.gmra.mxu0 %v5750
    %v6120 = vpop.f32.mrf.mxu0
    %v6121 = vadd.f32 %v5681, %v6120
    %v6122 = vpop.f32.mrf.mxu0
    %6123 = vdwg.mxu0
    %6124 = vmatpush.bf16.msra.mxu0 %v6004
    %6125 = vmatpush.bf16.msra.mxu0 %v5996
    %6126 = vmatpush.bf16.msra.mxu0 %v5988
    %6127 = vmatpush.bf16.msra.mxu0 %v5980
    %6128 = vmatpush.bf16.msra.mxu0 %v5972
    %6129 = vmatpush.bf16.msra.mxu0 %v5964
    %6130 = vmatpush.bf16.msra.mxu0 %v5956
    %6131 = vmatpush.bf16.msra.mxu0 %v5948
    %6132 = vmatmul.bf16.gmra.mxu0 %v5750
    %v6133 = vpop.f32.mrf.mxu0
    %v6134 = vadd.f32 %v5694, %v6133
    %v6135 = vpop.f32.mrf.mxu0
    %6136 = vdwg.mxu0
    %6137 = vmatpush.bf16.msra.mxu0 %v6005
    %6138 = vmatpush.bf16.msra.mxu0 %v5997
    %6139 = vmatpush.bf16.msra.mxu0 %v5989
    %6140 = vmatpush.bf16.msra.mxu0 %v5981
    %6141 = vmatpush.bf16.msra.mxu0 %v5973
    %6142 = vmatpush.bf16.msra.mxu0 %v5965
    %6143 = vmatpush.bf16.msra.mxu0 %v5957
    %6144 = vmatpush.bf16.msra.mxu0 %v5949
    %6145 = vmatmul.bf16.gmra.mxu0 %v5750
    %v6146 = vpop.f32.mrf.mxu0
    %v6147 = vadd.f32 %v5707, %v6146
    %v6148 = vpop.f32.mrf.mxu0
    %6149 = vdwg.mxu0
    %6150 = vmatpush.bf16.msra.mxu0 %v6006
    %6151 = vmatpush.bf16.msra.mxu0 %v5998
    %6152 = vmatpush.bf16.msra.mxu0 %v5990
    %6153 = vmatpush.bf16.msra.mxu0 %v5982
    %6154 = vmatpush.bf16.msra.mxu0 %v5974
    %6155 = vmatpush.bf16.msra.mxu0 %v5966
    %6156 = vmatpush.bf16.msra.mxu0 %v5958
    %6157 = vmatpush.bf16.msra.mxu0 %v5950
    %6158 = vmatmul.bf16.gmra.mxu0 %v5750
    %v6159 = vpop.f32.mrf.mxu0
    %v6160 = vadd.f32 %v5720, %v6159
    %v6161 = vpop.f32.mrf.mxu0
    %6162 = vdwg.mxu0
    %6163 = vmatpush.bf16.msra.mxu0 %v6007
    %6164 = vmatpush.bf16.msra.mxu0 %v5999
    %6165 = vmatpush.bf16.msra.mxu0 %v5991
    %6166 = vmatpush.bf16.msra.mxu0 %v5983
    %6167 = vmatpush.bf16.msra.mxu0 %v5975
    %6168 = vmatpush.bf16.msra.mxu0 %v5967
    %6169 = vmatpush.bf16.msra.mxu0 %v5959
    %6170 = vmatpush.bf16.msra.mxu0 %v5951
    %6171 = vmatmul.bf16.gmra.mxu0 %v5750
    %v6172 = vpop.f32.mrf.mxu0
    %v6173 = vadd.f32 %v5733, %v6172
    %v6174 = vpop.f32.mrf.mxu0
    %6175 = vdwg.mxu0
    %s6176 = scalar_lea.vmem [#allocation3], 1024
    %v6177 = vld [vmem:[%s6176] sm:$0xff]
    %v6178 = vld [vmem:[%s6176 + $0x8] sm:$0xff]
    %v6179 = vld [vmem:[%s6176 + $0x10] sm:$0xff]
    %v6180 = vld [vmem:[%s6176 + $0x18] sm:$0xff]
    %v6181 = vld [vmem:[%s6176 + $0x20] sm:$0xff]
    %v6182 = vld [vmem:[%s6176 + $0x28] sm:$0xff]
    %v6183 = vld [vmem:[%s6176 + $0x30] sm:$0xff]
    %v6184 = vld [vmem:[%s6176 + $0x38] sm:$0xff]
    %v6185 = vld [vmem:[%s6176 + $0x40] sm:$0xff]
    %v6186 = vld [vmem:[%s6176 + $0x48] sm:$0xff]
    %v6187 = vld [vmem:[%s6176 + $0x50] sm:$0xff]
    %v6188 = vld [vmem:[%s6176 + $0x58] sm:$0xff]
    %v6189 = vld [vmem:[%s6176 + $0x60] sm:$0xff]
    %v6190 = vld [vmem:[%s6176 + $0x68] sm:$0xff]
    %v6191 = vld [vmem:[%s6176 + $0x70] sm:$0xff]
    %v6192 = vld [vmem:[%s6176 + $0x78] sm:$0xff]
    %v6193 = vld [vmem:[%s6176 + $0x80] sm:$0xff]
    %v6194 = vld [vmem:[%s6176 + $0x88] sm:$0xff]
    %v6195 = vld [vmem:[%s6176 + $0x90] sm:$0xff]
    %v6196 = vld [vmem:[%s6176 + $0x98] sm:$0xff]
    %v6197 = vld [vmem:[%s6176 + $0xa0] sm:$0xff]
    %v6198 = vld [vmem:[%s6176 + $0xa8] sm:$0xff]
    %v6199 = vld [vmem:[%s6176 + $0xb0] sm:$0xff]
    %v6200 = vld [vmem:[%s6176 + $0xb8] sm:$0xff]
    %v6201 = vld [vmem:[%s6176 + $0xc0] sm:$0xff]
    %v6202 = vld [vmem:[%s6176 + $0xc8] sm:$0xff]
    %v6203 = vld [vmem:[%s6176 + $0xd0] sm:$0xff]
    %v6204 = vld [vmem:[%s6176 + $0xd8] sm:$0xff]
    %v6205 = vld [vmem:[%s6176 + $0xe0] sm:$0xff]
    %v6206 = vld [vmem:[%s6176 + $0xe8] sm:$0xff]
    %v6207 = vld [vmem:[%s6176 + $0xf0] sm:$0xff]
    %v6208 = vld [vmem:[%s6176 + $0xf8] sm:$0xff]
    %v6209 = vld [vmem:[%s6176 + $0x100] sm:$0xff]
    %v6210 = vld [vmem:[%s6176 + $0x108] sm:$0xff]
    %v6211 = vld [vmem:[%s6176 + $0x110] sm:$0xff]
    %v6212 = vld [vmem:[%s6176 + $0x118] sm:$0xff]
    %v6213 = vld [vmem:[%s6176 + $0x120] sm:$0xff]
    %v6214 = vld [vmem:[%s6176 + $0x128] sm:$0xff]
    %v6215 = vld [vmem:[%s6176 + $0x130] sm:$0xff]
    %v6216 = vld [vmem:[%s6176 + $0x138] sm:$0xff]
    %v6217 = vld [vmem:[%s6176 + $0x140] sm:$0xff]
    %v6218 = vld [vmem:[%s6176 + $0x148] sm:$0xff]
    %v6219 = vld [vmem:[%s6176 + $0x150] sm:$0xff]
    %v6220 = vld [vmem:[%s6176 + $0x158] sm:$0xff]
    %v6221 = vld [vmem:[%s6176 + $0x160] sm:$0xff]
    %v6222 = vld [vmem:[%s6176 + $0x168] sm:$0xff]
    %v6223 = vld [vmem:[%s6176 + $0x170] sm:$0xff]
    %v6224 = vld [vmem:[%s6176 + $0x178] sm:$0xff]
    %v6225 = vld [vmem:[%s6176 + $0x180] sm:$0xff]
    %v6226 = vld [vmem:[%s6176 + $0x188] sm:$0xff]
    %v6227 = vld [vmem:[%s6176 + $0x190] sm:$0xff]
    %v6228 = vld [vmem:[%s6176 + $0x198] sm:$0xff]
    %v6229 = vld [vmem:[%s6176 + $0x1a0] sm:$0xff]
    %v6230 = vld [vmem:[%s6176 + $0x1a8] sm:$0xff]
    %v6231 = vld [vmem:[%s6176 + $0x1b0] sm:$0xff]
    %v6232 = vld [vmem:[%s6176 + $0x1b8] sm:$0xff]
    %v6233 = vld [vmem:[%s6176 + $0x1c0] sm:$0xff]
    %v6234 = vld [vmem:[%s6176 + $0x1c8] sm:$0xff]
    %v6235 = vld [vmem:[%s6176 + $0x1d0] sm:$0xff]
    %v6236 = vld [vmem:[%s6176 + $0x1d8] sm:$0xff]
    %v6237 = vld [vmem:[%s6176 + $0x1e0] sm:$0xff]
    %v6238 = vld [vmem:[%s6176 + $0x1e8] sm:$0xff]
    %v6239 = vld [vmem:[%s6176 + $0x1f0] sm:$0xff]
    %v6240 = vld [vmem:[%s6176 + $0x1f8] sm:$0xff]
    %v6241 = vrot.slane %v5281, 2
    %v6242 = vrot.slane %v5282, 1
    %v6243 = vsel %vm5290, %v6242, %v6241
    %v6244 = vsel %vm5293, %v5283, %v6243
    %v6245 = vrot.slane %v5284, 7
    %v6246 = vsel %vm5296, %v6245, %v6244
    %v6247 = vrot.slane %v5285, 6
    %v6248 = vsel %vm5299, %v6247, %v6246
    %v6249 = vrot.slane %v5286, 5
    %v6250 = vsel %vm5302, %v6249, %v6248
    %v6251 = vrot.slane %v5287, 4
    %v6252 = vsel %vm5305, %v6251, %v6250
    %v6253 = vrot.slane %v5288, 3
    %v6254 = vsel %vm5308, %v6253, %v6252
    %v6255 = vpack.c.b16 %v6254, %v6254
    %v6321 = vunpack.c.l.b16 %v6177
    %v6322 = vunpack.c.h.b16 %v6177
    %v6323 = vunpack.c.l.b16 %v6178
    %v6324 = vunpack.c.h.b16 %v6178
    %v6325 = vunpack.c.l.b16 %v6179
    %v6326 = vunpack.c.h.b16 %v6179
    %v6327 = vunpack.c.l.b16 %v6180
    %v6328 = vunpack.c.h.b16 %v6180
    %v6329 = vunpack.c.l.b16 %v6181
    %v6330 = vunpack.c.h.b16 %v6181
    %v6331 = vunpack.c.l.b16 %v6182
    %v6332 = vunpack.c.h.b16 %v6182
    %v6333 = vunpack.c.l.b16 %v6183
    %v6334 = vunpack.c.h.b16 %v6183
    %v6335 = vunpack.c.l.b16 %v6184
    %v6336 = vunpack.c.h.b16 %v6184
    %v6337 = vunpack.c.l.b16 %v6185
    %v6338 = vunpack.c.h.b16 %v6185
    %v6339 = vunpack.c.l.b16 %v6186
    %v6340 = vunpack.c.h.b16 %v6186
    %v6341 = vunpack.c.l.b16 %v6187
    %v6342 = vunpack.c.h.b16 %v6187
    %v6343 = vunpack.c.l.b16 %v6188
    %v6344 = vunpack.c.h.b16 %v6188
    %v6345 = vunpack.c.l.b16 %v6189
    %v6346 = vunpack.c.h.b16 %v6189
    %v6347 = vunpack.c.l.b16 %v6190
    %v6348 = vunpack.c.h.b16 %v6190
    %v6349 = vunpack.c.l.b16 %v6191
    %v6350 = vunpack.c.h.b16 %v6191
    %v6351 = vunpack.c.l.b16 %v6192
    %v6352 = vunpack.c.h.b16 %v6192
    %v6353 = vunpack.c.l.b16 %v6193
    %v6354 = vunpack.c.h.b16 %v6193
    %v6355 = vunpack.c.l.b16 %v6194
    %v6356 = vunpack.c.h.b16 %v6194
    %v6357 = vunpack.c.l.b16 %v6195
    %v6358 = vunpack.c.h.b16 %v6195
    %v6359 = vunpack.c.l.b16 %v6196
    %v6360 = vunpack.c.h.b16 %v6196
    %v6361 = vunpack.c.l.b16 %v6197
    %v6362 = vunpack.c.h.b16 %v6197
    %v6363 = vunpack.c.l.b16 %v6198
    %v6364 = vunpack.c.h.b16 %v6198
    %v6365 = vunpack.c.l.b16 %v6199
    %v6366 = vunpack.c.h.b16 %v6199
    %v6367 = vunpack.c.l.b16 %v6200
    %v6368 = vunpack.c.h.b16 %v6200
    %v6369 = vunpack.c.l.b16 %v6201
    %v6370 = vunpack.c.h.b16 %v6201
    %v6371 = vunpack.c.l.b16 %v6202
    %v6372 = vunpack.c.h.b16 %v6202
    %v6373 = vunpack.c.l.b16 %v6203
    %v6374 = vunpack.c.h.b16 %v6203
    %v6375 = vunpack.c.l.b16 %v6204
    %v6376 = vunpack.c.h.b16 %v6204
    %v6377 = vunpack.c.l.b16 %v6205
    %v6378 = vunpack.c.h.b16 %v6205
    %v6379 = vunpack.c.l.b16 %v6206
    %v6380 = vunpack.c.h.b16 %v6206
    %v6381 = vunpack.c.l.b16 %v6207
    %v6382 = vunpack.c.h.b16 %v6207
    %v6383 = vunpack.c.l.b16 %v6208
    %v6384 = vunpack.c.h.b16 %v6208
    %v6385 = vunpack.c.l.b16 %v6209
    %v6386 = vunpack.c.h.b16 %v6209
    %v6387 = vunpack.c.l.b16 %v6210
    %v6388 = vunpack.c.h.b16 %v6210
    %v6389 = vunpack.c.l.b16 %v6211
    %v6390 = vunpack.c.h.b16 %v6211
    %v6391 = vunpack.c.l.b16 %v6212
    %v6392 = vunpack.c.h.b16 %v6212
    %v6393 = vunpack.c.l.b16 %v6213
    %v6394 = vunpack.c.h.b16 %v6213
    %v6395 = vunpack.c.l.b16 %v6214
    %v6396 = vunpack.c.h.b16 %v6214
    %v6397 = vunpack.c.l.b16 %v6215
    %v6398 = vunpack.c.h.b16 %v6215
    %v6399 = vunpack.c.l.b16 %v6216
    %v6400 = vunpack.c.h.b16 %v6216
    %v6401 = vunpack.c.l.b16 %v6217
    %v6402 = vunpack.c.h.b16 %v6217
    %v6403 = vunpack.c.l.b16 %v6218
    %v6404 = vunpack.c.h.b16 %v6218
    %v6405 = vunpack.c.l.b16 %v6219
    %v6406 = vunpack.c.h.b16 %v6219
    %v6407 = vunpack.c.l.b16 %v6220
    %v6408 = vunpack.c.h.b16 %v6220
    %v6409 = vunpack.c.l.b16 %v6221
    %v6410 = vunpack.c.h.b16 %v6221
    %v6411 = vunpack.c.l.b16 %v6222
    %v6412 = vunpack.c.h.b16 %v6222
    %v6413 = vunpack.c.l.b16 %v6223
    %v6414 = vunpack.c.h.b16 %v6223
    %v6415 = vunpack.c.l.b16 %v6224
    %v6416 = vunpack.c.h.b16 %v6224
    %v6417 = vunpack.c.l.b16 %v6225
    %v6418 = vunpack.c.h.b16 %v6225
    %v6419 = vunpack.c.l.b16 %v6226
    %v6420 = vunpack.c.h.b16 %v6226
    %v6421 = vunpack.c.l.b16 %v6227
    %v6422 = vunpack.c.h.b16 %v6227
    %v6423 = vunpack.c.l.b16 %v6228
    %v6424 = vunpack.c.h.b16 %v6228
    %v6425 = vunpack.c.l.b16 %v6229
    %v6426 = vunpack.c.h.b16 %v6229
    %v6427 = vunpack.c.l.b16 %v6230
    %v6428 = vunpack.c.h.b16 %v6230
    %v6429 = vunpack.c.l.b16 %v6231
    %v6430 = vunpack.c.h.b16 %v6231
    %v6431 = vunpack.c.l.b16 %v6232
    %v6432 = vunpack.c.h.b16 %v6232
    %v6433 = vunpack.c.l.b16 %v6233
    %v6434 = vunpack.c.h.b16 %v6233
    %v6435 = vunpack.c.l.b16 %v6234
    %v6436 = vunpack.c.h.b16 %v6234
    %v6437 = vunpack.c.l.b16 %v6235
    %v6438 = vunpack.c.h.b16 %v6235
    %v6439 = vunpack.c.l.b16 %v6236
    %v6440 = vunpack.c.h.b16 %v6236
    %v6441 = vunpack.c.l.b16 %v6237
    %v6442 = vunpack.c.h.b16 %v6237
    %v6443 = vunpack.c.l.b16 %v6238
    %v6444 = vunpack.c.h.b16 %v6238
    %v6445 = vunpack.c.l.b16 %v6239
    %v6446 = vunpack.c.h.b16 %v6239
    %v6447 = vunpack.c.l.b16 %v6240
    %v6448 = vunpack.c.h.b16 %v6240
    %v6449 = vpack.c.b16 %v6329, %v6321
    %v6450 = vpack.c.b16 %v6330, %v6322
    %v6451 = vpack.c.b16 %v6331, %v6323
    %v6452 = vpack.c.b16 %v6332, %v6324
    %v6453 = vpack.c.b16 %v6333, %v6325
    %v6454 = vpack.c.b16 %v6334, %v6326
    %v6455 = vpack.c.b16 %v6335, %v6327
    %v6456 = vpack.c.b16 %v6336, %v6328
    %v6457 = vpack.c.b16 %v6345, %v6337
    %v6458 = vpack.c.b16 %v6346, %v6338
    %v6459 = vpack.c.b16 %v6347, %v6339
    %v6460 = vpack.c.b16 %v6348, %v6340
    %v6461 = vpack.c.b16 %v6349, %v6341
    %v6462 = vpack.c.b16 %v6350, %v6342
    %v6463 = vpack.c.b16 %v6351, %v6343
    %v6464 = vpack.c.b16 %v6352, %v6344
    %v6465 = vpack.c.b16 %v6361, %v6353
    %v6466 = vpack.c.b16 %v6362, %v6354
    %v6467 = vpack.c.b16 %v6363, %v6355
    %v6468 = vpack.c.b16 %v6364, %v6356
    %v6469 = vpack.c.b16 %v6365, %v6357
    %v6470 = vpack.c.b16 %v6366, %v6358
    %v6471 = vpack.c.b16 %v6367, %v6359
    %v6472 = vpack.c.b16 %v6368, %v6360
    %v6473 = vpack.c.b16 %v6377, %v6369
    %v6474 = vpack.c.b16 %v6378, %v6370
    %v6475 = vpack.c.b16 %v6379, %v6371
    %v6476 = vpack.c.b16 %v6380, %v6372
    %v6477 = vpack.c.b16 %v6381, %v6373
    %v6478 = vpack.c.b16 %v6382, %v6374
    %v6479 = vpack.c.b16 %v6383, %v6375
    %v6480 = vpack.c.b16 %v6384, %v6376
    %v6481 = vpack.c.b16 %v6393, %v6385
    %v6482 = vpack.c.b16 %v6394, %v6386
    %v6483 = vpack.c.b16 %v6395, %v6387
    %v6484 = vpack.c.b16 %v6396, %v6388
    %v6485 = vpack.c.b16 %v6397, %v6389
    %v6486 = vpack.c.b16 %v6398, %v6390
    %v6487 = vpack.c.b16 %v6399, %v6391
    %v6488 = vpack.c.b16 %v6400, %v6392
    %v6489 = vpack.c.b16 %v6409, %v6401
    %v6490 = vpack.c.b16 %v6410, %v6402
    %v6491 = vpack.c.b16 %v6411, %v6403
    %v6492 = vpack.c.b16 %v6412, %v6404
    %v6493 = vpack.c.b16 %v6413, %v6405
    %v6494 = vpack.c.b16 %v6414, %v6406
    %v6495 = vpack.c.b16 %v6415, %v6407
    %v6496 = vpack.c.b16 %v6416, %v6408
    %v6497 = vpack.c.b16 %v6425, %v6417
    %v6498 = vpack.c.b16 %v6426, %v6418
    %v6499 = vpack.c.b16 %v6427, %v6419
    %v6500 = vpack.c.b16 %v6428, %v6420
    %v6501 = vpack.c.b16 %v6429, %v6421
    %v6502 = vpack.c.b16 %v6430, %v6422
    %v6503 = vpack.c.b16 %v6431, %v6423
    %v6504 = vpack.c.b16 %v6432, %v6424
    %v6505 = vpack.c.b16 %v6441, %v6433
    %v6506 = vpack.c.b16 %v6442, %v6434
    %v6507 = vpack.c.b16 %v6443, %v6435
    %v6508 = vpack.c.b16 %v6444, %v6436
    %v6509 = vpack.c.b16 %v6445, %v6437
    %v6510 = vpack.c.b16 %v6446, %v6438
    %v6511 = vpack.c.b16 %v6447, %v6439
    %v6512 = vpack.c.b16 %v6448, %v6440
    %6577 = vmatpush.bf16.msra.mxu0 %v6505
    %6578 = vmatpush.bf16.msra.mxu0 %v6497
    %6579 = vmatpush.bf16.msra.mxu0 %v6489
    %6580 = vmatpush.bf16.msra.mxu0 %v6481
    %6581 = vmatpush.bf16.msra.mxu0 %v6473
    %6582 = vmatpush.bf16.msra.mxu0 %v6465
    %6583 = vmatpush.bf16.msra.mxu0 %v6457
    %6584 = vmatpush.bf16.msra.mxu0 %v6449
    %6585 = vmatmul.bf16.gmra.mxu0 %v6255
    %v6586 = vpop.f32.mrf.mxu0
    %v6587 = vadd.f32 0.0, %v6586
    %v6588 = vpop.f32.mrf.mxu0
    %6589 = vdwg.mxu0
    %6590 = vmatpush.bf16.msra.mxu0 %v6506
    %6591 = vmatpush.bf16.msra.mxu0 %v6498
    %6592 = vmatpush.bf16.msra.mxu0 %v6490
    %6593 = vmatpush.bf16.msra.mxu0 %v6482
    %6594 = vmatpush.bf16.msra.mxu0 %v6474
    %6595 = vmatpush.bf16.msra.mxu0 %v6466
    %6596 = vmatpush.bf16.msra.mxu0 %v6458
    %6597 = vmatpush.bf16.msra.mxu0 %v6450
    %6598 = vmatmul.bf16.gmra.mxu0 %v6255
    %v6599 = vpop.f32.mrf.mxu0
    %v6600 = vadd.f32 0.0, %v6599
    %v6601 = vpop.f32.mrf.mxu0
    %6602 = vdwg.mxu0
    %6603 = vmatpush.bf16.msra.mxu0 %v6507
    %6604 = vmatpush.bf16.msra.mxu0 %v6499
    %6605 = vmatpush.bf16.msra.mxu0 %v6491
    %6606 = vmatpush.bf16.msra.mxu0 %v6483
    %6607 = vmatpush.bf16.msra.mxu0 %v6475
    %6608 = vmatpush.bf16.msra.mxu0 %v6467
    %6609 = vmatpush.bf16.msra.mxu0 %v6459
    %6610 = vmatpush.bf16.msra.mxu0 %v6451
    %6611 = vmatmul.bf16.gmra.mxu0 %v6255
    %v6612 = vpop.f32.mrf.mxu0
    %v6613 = vadd.f32 0.0, %v6612
    %v6614 = vpop.f32.mrf.mxu0
    %6615 = vdwg.mxu0
    %6616 = vmatpush.bf16.msra.mxu0 %v6508
    %6617 = vmatpush.bf16.msra.mxu0 %v6500
    %6618 = vmatpush.bf16.msra.mxu0 %v6492
    %6619 = vmatpush.bf16.msra.mxu0 %v6484
    %6620 = vmatpush.bf16.msra.mxu0 %v6476
    %6621 = vmatpush.bf16.msra.mxu0 %v6468
    %6622 = vmatpush.bf16.msra.mxu0 %v6460
    %6623 = vmatpush.bf16.msra.mxu0 %v6452
    %6624 = vmatmul.bf16.gmra.mxu0 %v6255
    %v6625 = vpop.f32.mrf.mxu0
    %v6626 = vadd.f32 0.0, %v6625
    %v6627 = vpop.f32.mrf.mxu0
    %6628 = vdwg.mxu0
    %6629 = vmatpush.bf16.msra.mxu0 %v6509
    %6630 = vmatpush.bf16.msra.mxu0 %v6501
    %6631 = vmatpush.bf16.msra.mxu0 %v6493
    %6632 = vmatpush.bf16.msra.mxu0 %v6485
    %6633 = vmatpush.bf16.msra.mxu0 %v6477
    %6634 = vmatpush.bf16.msra.mxu0 %v6469
    %6635 = vmatpush.bf16.msra.mxu0 %v6461
    %6636 = vmatpush.bf16.msra.mxu0 %v6453
    %6637 = vmatmul.bf16.gmra.mxu0 %v6255
    %v6638 = vpop.f32.mrf.mxu0
    %v6639 = vadd.f32 0.0, %v6638
    %v6640 = vpop.f32.mrf.mxu0
    %6641 = vdwg.mxu0
    %6642 = vmatpush.bf16.msra.mxu0 %v6510
    %6643 = vmatpush.bf16.msra.mxu0 %v6502
    %6644 = vmatpush.bf16.msra.mxu0 %v6494
    %6645 = vmatpush.bf16.msra.mxu0 %v6486
    %6646 = vmatpush.bf16.msra.mxu0 %v6478
    %6647 = vmatpush.bf16.msra.mxu0 %v6470
    %6648 = vmatpush.bf16.msra.mxu0 %v6462
    %6649 = vmatpush.bf16.msra.mxu0 %v6454
    %6650 = vmatmul.bf16.gmra.mxu0 %v6255
    %v6651 = vpop.f32.mrf.mxu0
    %v6652 = vadd.f32 0.0, %v6651
    %v6653 = vpop.f32.mrf.mxu0
    %6654 = vdwg.mxu0
    %6655 = vmatpush.bf16.msra.mxu0 %v6511
    %6656 = vmatpush.bf16.msra.mxu0 %v6503
    %6657 = vmatpush.bf16.msra.mxu0 %v6495
    %6658 = vmatpush.bf16.msra.mxu0 %v6487
    %6659 = vmatpush.bf16.msra.mxu0 %v6479
    %6660 = vmatpush.bf16.msra.mxu0 %v6471
    %6661 = vmatpush.bf16.msra.mxu0 %v6463
    %6662 = vmatpush.bf16.msra.mxu0 %v6455
    %6663 = vmatmul.bf16.gmra.mxu0 %v6255
    %v6664 = vpop.f32.mrf.mxu0
    %v6665 = vadd.f32 0.0, %v6664
    %v6666 = vpop.f32.mrf.mxu0
    %6667 = vdwg.mxu0
    %6668 = vmatpush.bf16.msra.mxu0 %v6512
    %6669 = vmatpush.bf16.msra.mxu0 %v6504
    %6670 = vmatpush.bf16.msra.mxu0 %v6496
    %6671 = vmatpush.bf16.msra.mxu0 %v6488
    %6672 = vmatpush.bf16.msra.mxu0 %v6480
    %6673 = vmatpush.bf16.msra.mxu0 %v6472
    %6674 = vmatpush.bf16.msra.mxu0 %v6464
    %6675 = vmatpush.bf16.msra.mxu0 %v6456
    %6676 = vmatmul.bf16.gmra.mxu0 %v6255
    %v6677 = vpop.f32.mrf.mxu0
    %v6678 = vadd.f32 0.0, %v6677
    %v6679 = vpop.f32.mrf.mxu0
    %6680 = vdwg.mxu0
    %v6681 = vadd.f32 %v6082, %v6587
    %v6682 = vadd.f32 %v6095, %v6600
    %v6683 = vadd.f32 %v6108, %v6613
    %v6684 = vadd.f32 %v6121, %v6626
    %v6685 = vadd.f32 %v6134, %v6639
    %v6686 = vadd.f32 %v6147, %v6652
    %v6687 = vadd.f32 %v6160, %v6665
    %v6688 = vadd.f32 %v6173, %v6678
    %s6689 = scalar_lea.vmem [#allocation3], 1536
    %v6690 = vld [vmem:[%s6689] sm:$0xff]
    %v6691 = vld [vmem:[%s6689 + $0x8] sm:$0xff]
    %v6692 = vld [vmem:[%s6689 + $0x10] sm:$0xff]
    %v6693 = vld [vmem:[%s6689 + $0x18] sm:$0xff]
    %v6694 = vld [vmem:[%s6689 + $0x20] sm:$0xff]
    %v6695 = vld [vmem:[%s6689 + $0x28] sm:$0xff]
    %v6696 = vld [vmem:[%s6689 + $0x30] sm:$0xff]
    %v6697 = vld [vmem:[%s6689 + $0x38] sm:$0xff]
    %v6698 = vld [vmem:[%s6689 + $0x40] sm:$0xff]
    %v6699 = vld [vmem:[%s6689 + $0x48] sm:$0xff]
    %v6700 = vld [vmem:[%s6689 + $0x50] sm:$0xff]
    %v6701 = vld [vmem:[%s6689 + $0x58] sm:$0xff]
    %v6702 = vld [vmem:[%s6689 + $0x60] sm:$0xff]
    %v6703 = vld [vmem:[%s6689 + $0x68] sm:$0xff]
    %v6704 = vld [vmem:[%s6689 + $0x70] sm:$0xff]
    %v6705 = vld [vmem:[%s6689 + $0x78] sm:$0xff]
    %v6706 = vld [vmem:[%s6689 + $0x80] sm:$0xff]
    %v6707 = vld [vmem:[%s6689 + $0x88] sm:$0xff]
    %v6708 = vld [vmem:[%s6689 + $0x90] sm:$0xff]
    %v6709 = vld [vmem:[%s6689 + $0x98] sm:$0xff]
    %v6710 = vld [vmem:[%s6689 + $0xa0] sm:$0xff]
    %v6711 = vld [vmem:[%s6689 + $0xa8] sm:$0xff]
    %v6712 = vld [vmem:[%s6689 + $0xb0] sm:$0xff]
    %v6713 = vld [vmem:[%s6689 + $0xb8] sm:$0xff]
    %v6714 = vld [vmem:[%s6689 + $0xc0] sm:$0xff]
    %v6715 = vld [vmem:[%s6689 + $0xc8] sm:$0xff]
    %v6716 = vld [vmem:[%s6689 + $0xd0] sm:$0xff]
    %v6717 = vld [vmem:[%s6689 + $0xd8] sm:$0xff]
    %v6718 = vld [vmem:[%s6689 + $0xe0] sm:$0xff]
    %v6719 = vld [vmem:[%s6689 + $0xe8] sm:$0xff]
    %v6720 = vld [vmem:[%s6689 + $0xf0] sm:$0xff]
    %v6721 = vld [vmem:[%s6689 + $0xf8] sm:$0xff]
    %v6722 = vld [vmem:[%s6689 + $0x100] sm:$0xff]
    %v6723 = vld [vmem:[%s6689 + $0x108] sm:$0xff]
    %v6724 = vld [vmem:[%s6689 + $0x110] sm:$0xff]
    %v6725 = vld [vmem:[%s6689 + $0x118] sm:$0xff]
    %v6726 = vld [vmem:[%s6689 + $0x120] sm:$0xff]
    %v6727 = vld [vmem:[%s6689 + $0x128] sm:$0xff]
    %v6728 = vld [vmem:[%s6689 + $0x130] sm:$0xff]
    %v6729 = vld [vmem:[%s6689 + $0x138] sm:$0xff]
    %v6730 = vld [vmem:[%s6689 + $0x140] sm:$0xff]
    %v6731 = vld [vmem:[%s6689 + $0x148] sm:$0xff]
    %v6732 = vld [vmem:[%s6689 + $0x150] sm:$0xff]
    %v6733 = vld [vmem:[%s6689 + $0x158] sm:$0xff]
    %v6734 = vld [vmem:[%s6689 + $0x160] sm:$0xff]
    %v6735 = vld [vmem:[%s6689 + $0x168] sm:$0xff]
    %v6736 = vld [vmem:[%s6689 + $0x170] sm:$0xff]
    %v6737 = vld [vmem:[%s6689 + $0x178] sm:$0xff]
    %v6738 = vld [vmem:[%s6689 + $0x180] sm:$0xff]
    %v6739 = vld [vmem:[%s6689 + $0x188] sm:$0xff]
    %v6740 = vld [vmem:[%s6689 + $0x190] sm:$0xff]
    %v6741 = vld [vmem:[%s6689 + $0x198] sm:$0xff]
    %v6742 = vld [vmem:[%s6689 + $0x1a0] sm:$0xff]
    %v6743 = vld [vmem:[%s6689 + $0x1a8] sm:$0xff]
    %v6744 = vld [vmem:[%s6689 + $0x1b0] sm:$0xff]
    %v6745 = vld [vmem:[%s6689 + $0x1b8] sm:$0xff]
    %v6746 = vld [vmem:[%s6689 + $0x1c0] sm:$0xff]
    %v6747 = vld [vmem:[%s6689 + $0x1c8] sm:$0xff]
    %v6748 = vld [vmem:[%s6689 + $0x1d0] sm:$0xff]
    %v6749 = vld [vmem:[%s6689 + $0x1d8] sm:$0xff]
    %v6750 = vld [vmem:[%s6689 + $0x1e0] sm:$0xff]
    %v6751 = vld [vmem:[%s6689 + $0x1e8] sm:$0xff]
    %v6752 = vld [vmem:[%s6689 + $0x1f0] sm:$0xff]
    %v6753 = vld [vmem:[%s6689 + $0x1f8] sm:$0xff]
    %v6754 = vrot.slane %v5281, 3
    %v6755 = vrot.slane %v5282, 2
    %v6756 = vsel %vm5290, %v6755, %v6754
    %v6757 = vrot.slane %v5283, 1
    %v6758 = vsel %vm5293, %v6757, %v6756
    %v6759 = vsel %vm5296, %v5284, %v6758
    %v6760 = vrot.slane %v5285, 7
    %v6761 = vsel %vm5299, %v6760, %v6759
    %v6762 = vrot.slane %v5286, 6
    %v6763 = vsel %vm5302, %v6762, %v6761
    %v6764 = vrot.slane %v5287, 5
    %v6765 = vsel %vm5305, %v6764, %v6763
    %v6766 = vrot.slane %v5288, 4
    %v6767 = vsel %vm5308, %v6766, %v6765
    %v6768 = vpack.c.b16 %v6767, %v6767
    %v6834 = vunpack.c.l.b16 %v6690
    %v6835 = vunpack.c.h.b16 %v6690
    %v6836 = vunpack.c.l.b16 %v6691
    %v6837 = vunpack.c.h.b16 %v6691
    %v6838 = vunpack.c.l.b16 %v6692
    %v6839 = vunpack.c.h.b16 %v6692
    %v6840 = vunpack.c.l.b16 %v6693
    %v6841 = vunpack.c.h.b16 %v6693
    %v6842 = vunpack.c.l.b16 %v6694
    %v6843 = vunpack.c.h.b16 %v6694
    %v6844 = vunpack.c.l.b16 %v6695
    %v6845 = vunpack.c.h.b16 %v6695
    %v6846 = vunpack.c.l.b16 %v6696
    %v6847 = vunpack.c.h.b16 %v6696
    %v6848 = vunpack.c.l.b16 %v6697
    %v6849 = vunpack.c.h.b16 %v6697
    %v6850 = vunpack.c.l.b16 %v6698
    %v6851 = vunpack.c.h.b16 %v6698
    %v6852 = vunpack.c.l.b16 %v6699
    %v6853 = vunpack.c.h.b16 %v6699
    %v6854 = vunpack.c.l.b16 %v6700
    %v6855 = vunpack.c.h.b16 %v6700
    %v6856 = vunpack.c.l.b16 %v6701
    %v6857 = vunpack.c.h.b16 %v6701
    %v6858 = vunpack.c.l.b16 %v6702
    %v6859 = vunpack.c.h.b16 %v6702
    %v6860 = vunpack.c.l.b16 %v6703
    %v6861 = vunpack.c.h.b16 %v6703
    %v6862 = vunpack.c.l.b16 %v6704
    %v6863 = vunpack.c.h.b16 %v6704
    %v6864 = vunpack.c.l.b16 %v6705
    %v6865 = vunpack.c.h.b16 %v6705
    %v6866 = vunpack.c.l.b16 %v6706
    %v6867 = vunpack.c.h.b16 %v6706
    %v6868 = vunpack.c.l.b16 %v6707
    %v6869 = vunpack.c.h.b16 %v6707
    %v6870 = vunpack.c.l.b16 %v6708
    %v6871 = vunpack.c.h.b16 %v6708
    %v6872 = vunpack.c.l.b16 %v6709
    %v6873 = vunpack.c.h.b16 %v6709
    %v6874 = vunpack.c.l.b16 %v6710
    %v6875 = vunpack.c.h.b16 %v6710
    %v6876 = vunpack.c.l.b16 %v6711
    %v6877 = vunpack.c.h.b16 %v6711
    %v6878 = vunpack.c.l.b16 %v6712
    %v6879 = vunpack.c.h.b16 %v6712
    %v6880 = vunpack.c.l.b16 %v6713
    %v6881 = vunpack.c.h.b16 %v6713
    %v6882 = vunpack.c.l.b16 %v6714
    %v6883 = vunpack.c.h.b16 %v6714
    %v6884 = vunpack.c.l.b16 %v6715
    %v6885 = vunpack.c.h.b16 %v6715
    %v6886 = vunpack.c.l.b16 %v6716
    %v6887 = vunpack.c.h.b16 %v6716
    %v6888 = vunpack.c.l.b16 %v6717
    %v6889 = vunpack.c.h.b16 %v6717
    %v6890 = vunpack.c.l.b16 %v6718
    %v6891 = vunpack.c.h.b16 %v6718
    %v6892 = vunpack.c.l.b16 %v6719
    %v6893 = vunpack.c.h.b16 %v6719
    %v6894 = vunpack.c.l.b16 %v6720
    %v6895 = vunpack.c.h.b16 %v6720
    %v6896 = vunpack.c.l.b16 %v6721
    %v6897 = vunpack.c.h.b16 %v6721
    %v6898 = vunpack.c.l.b16 %v6722
    %v6899 = vunpack.c.h.b16 %v6722
    %v6900 = vunpack.c.l.b16 %v6723
    %v6901 = vunpack.c.h.b16 %v6723
    %v6902 = vunpack.c.l.b16 %v6724
    %v6903 = vunpack.c.h.b16 %v6724
    %v6904 = vunpack.c.l.b16 %v6725
    %v6905 = vunpack.c.h.b16 %v6725
    %v6906 = vunpack.c.l.b16 %v6726
    %v6907 = vunpack.c.h.b16 %v6726
    %v6908 = vunpack.c.l.b16 %v6727
    %v6909 = vunpack.c.h.b16 %v6727
    %v6910 = vunpack.c.l.b16 %v6728
    %v6911 = vunpack.c.h.b16 %v6728
    %v6912 = vunpack.c.l.b16 %v6729
    %v6913 = vunpack.c.h.b16 %v6729
    %v6914 = vunpack.c.l.b16 %v6730
    %v6915 = vunpack.c.h.b16 %v6730
    %v6916 = vunpack.c.l.b16 %v6731
    %v6917 = vunpack.c.h.b16 %v6731
    %v6918 = vunpack.c.l.b16 %v6732
    %v6919 = vunpack.c.h.b16 %v6732
    %v6920 = vunpack.c.l.b16 %v6733
    %v6921 = vunpack.c.h.b16 %v6733
    %v6922 = vunpack.c.l.b16 %v6734
    %v6923 = vunpack.c.h.b16 %v6734
    %v6924 = vunpack.c.l.b16 %v6735
    %v6925 = vunpack.c.h.b16 %v6735
    %v6926 = vunpack.c.l.b16 %v6736
    %v6927 = vunpack.c.h.b16 %v6736
    %v6928 = vunpack.c.l.b16 %v6737
    %v6929 = vunpack.c.h.b16 %v6737
    %v6930 = vunpack.c.l.b16 %v6738
    %v6931 = vunpack.c.h.b16 %v6738
    %v6932 = vunpack.c.l.b16 %v6739
    %v6933 = vunpack.c.h.b16 %v6739
    %v6934 = vunpack.c.l.b16 %v6740
    %v6935 = vunpack.c.h.b16 %v6740
    %v6936 = vunpack.c.l.b16 %v6741
    %v6937 = vunpack.c.h.b16 %v6741
    %v6938 = vunpack.c.l.b16 %v6742
    %v6939 = vunpack.c.h.b16 %v6742
    %v6940 = vunpack.c.l.b16 %v6743
    %v6941 = vunpack.c.h.b16 %v6743
    %v6942 = vunpack.c.l.b16 %v6744
    %v6943 = vunpack.c.h.b16 %v6744
    %v6944 = vunpack.c.l.b16 %v6745
    %v6945 = vunpack.c.h.b16 %v6745
    %v6946 = vunpack.c.l.b16 %v6746
    %v6947 = vunpack.c.h.b16 %v6746
    %v6948 = vunpack.c.l.b16 %v6747
    %v6949 = vunpack.c.h.b16 %v6747
    %v6950 = vunpack.c.l.b16 %v6748
    %v6951 = vunpack.c.h.b16 %v6748
    %v6952 = vunpack.c.l.b16 %v6749
    %v6953 = vunpack.c.h.b16 %v6749
    %v6954 = vunpack.c.l.b16 %v6750
    %v6955 = vunpack.c.h.b16 %v6750
    %v6956 = vunpack.c.l.b16 %v6751
    %v6957 = vunpack.c.h.b16 %v6751
    %v6958 = vunpack.c.l.b16 %v6752
    %v6959 = vunpack.c.h.b16 %v6752
    %v6960 = vunpack.c.l.b16 %v6753
    %v6961 = vunpack.c.h.b16 %v6753
    %v6962 = vpack.c.b16 %v6842, %v6834
    %v6963 = vpack.c.b16 %v6843, %v6835
    %v6964 = vpack.c.b16 %v6844, %v6836
    %v6965 = vpack.c.b16 %v6845, %v6837
    %v6966 = vpack.c.b16 %v6846, %v6838
    %v6967 = vpack.c.b16 %v6847, %v6839
    %v6968 = vpack.c.b16 %v6848, %v6840
    %v6969 = vpack.c.b16 %v6849, %v6841
    %v6970 = vpack.c.b16 %v6858, %v6850
    %v6971 = vpack.c.b16 %v6859, %v6851
    %v6972 = vpack.c.b16 %v6860, %v6852
    %v6973 = vpack.c.b16 %v6861, %v6853
    %v6974 = vpack.c.b16 %v6862, %v6854
    %v6975 = vpack.c.b16 %v6863, %v6855
    %v6976 = vpack.c.b16 %v6864, %v6856
    %v6977 = vpack.c.b16 %v6865, %v6857
    %v6978 = vpack.c.b16 %v6874, %v6866
    %v6979 = vpack.c.b16 %v6875, %v6867
    %v6980 = vpack.c.b16 %v6876, %v6868
    %v6981 = vpack.c.b16 %v6877, %v6869
    %v6982 = vpack.c.b16 %v6878, %v6870
    %v6983 = vpack.c.b16 %v6879, %v6871
    %v6984 = vpack.c.b16 %v6880, %v6872
    %v6985 = vpack.c.b16 %v6881, %v6873
    %v6986 = vpack.c.b16 %v6890, %v6882
    %v6987 = vpack.c.b16 %v6891, %v6883
    %v6988 = vpack.c.b16 %v6892, %v6884
    %v6989 = vpack.c.b16 %v6893, %v6885
    %v6990 = vpack.c.b16 %v6894, %v6886
    %v6991 = vpack.c.b16 %v6895, %v6887
    %v6992 = vpack.c.b16 %v6896, %v6888
    %v6993 = vpack.c.b16 %v6897, %v6889
    %v6994 = vpack.c.b16 %v6906, %v6898
    %v6995 = vpack.c.b16 %v6907, %v6899
    %v6996 = vpack.c.b16 %v6908, %v6900
    %v6997 = vpack.c.b16 %v6909, %v6901
    %v6998 = vpack.c.b16 %v6910, %v6902
    %v6999 = vpack.c.b16 %v6911, %v6903
    %v7000 = vpack.c.b16 %v6912, %v6904
    %v7001 = vpack.c.b16 %v6913, %v6905
    %v7002 = vpack.c.b16 %v6922, %v6914
    %v7003 = vpack.c.b16 %v6923, %v6915
    %v7004 = vpack.c.b16 %v6924, %v6916
    %v7005 = vpack.c.b16 %v6925, %v6917
    %v7006 = vpack.c.b16 %v6926, %v6918
    %v7007 = vpack.c.b16 %v6927, %v6919
    %v7008 = vpack.c.b16 %v6928, %v6920
    %v7009 = vpack.c.b16 %v6929, %v6921
    %v7010 = vpack.c.b16 %v6938, %v6930
    %v7011 = vpack.c.b16 %v6939, %v6931
    %v7012 = vpack.c.b16 %v6940, %v6932
    %v7013 = vpack.c.b16 %v6941, %v6933
    %v7014 = vpack.c.b16 %v6942, %v6934
    %v7015 = vpack.c.b16 %v6943, %v6935
    %v7016 = vpack.c.b16 %v6944, %v6936
    %v7017 = vpack.c.b16 %v6945, %v6937
    %v7018 = vpack.c.b16 %v6954, %v6946
    %v7019 = vpack.c.b16 %v6955, %v6947
    %v7020 = vpack.c.b16 %v6956, %v6948
    %v7021 = vpack.c.b16 %v6957, %v6949
    %v7022 = vpack.c.b16 %v6958, %v6950
    %v7023 = vpack.c.b16 %v6959, %v6951
    %v7024 = vpack.c.b16 %v6960, %v6952
    %v7025 = vpack.c.b16 %v6961, %v6953
    %7090 = vmatpush.bf16.msra.mxu0 %v7018
    %7091 = vmatpush.bf16.msra.mxu0 %v7010
    %7092 = vmatpush.bf16.msra.mxu0 %v7002
    %7093 = vmatpush.bf16.msra.mxu0 %v6994
    %7094 = vmatpush.bf16.msra.mxu0 %v6986
    %7095 = vmatpush.bf16.msra.mxu0 %v6978
    %7096 = vmatpush.bf16.msra.mxu0 %v6970
    %7097 = vmatpush.bf16.msra.mxu0 %v6962
    %7098 = vmatmul.bf16.gmra.mxu0 %v6768
    %v7099 = vpop.f32.mrf.mxu0
    %v7100 = vadd.f32 0.0, %v7099
    %v7101 = vpop.f32.mrf.mxu0
    %7102 = vdwg.mxu0
    %7103 = vmatpush.bf16.msra.mxu0 %v7019
    %7104 = vmatpush.bf16.msra.mxu0 %v7011
    %7105 = vmatpush.bf16.msra.mxu0 %v7003
    %7106 = vmatpush.bf16.msra.mxu0 %v6995
    %7107 = vmatpush.bf16.msra.mxu0 %v6987
    %7108 = vmatpush.bf16.msra.mxu0 %v6979
    %7109 = vmatpush.bf16.msra.mxu0 %v6971
    %7110 = vmatpush.bf16.msra.mxu0 %v6963
    %7111 = vmatmul.bf16.gmra.mxu0 %v6768
    %v7112 = vpop.f32.mrf.mxu0
    %v7113 = vadd.f32 0.0, %v7112
    %v7114 = vpop.f32.mrf.mxu0
    %7115 = vdwg.mxu0
    %7116 = vmatpush.bf16.msra.mxu0 %v7020
    %7117 = vmatpush.bf16.msra.mxu0 %v7012
    %7118 = vmatpush.bf16.msra.mxu0 %v7004
    %7119 = vmatpush.bf16.msra.mxu0 %v6996
    %7120 = vmatpush.bf16.msra.mxu0 %v6988
    %7121 = vmatpush.bf16.msra.mxu0 %v6980
    %7122 = vmatpush.bf16.msra.mxu0 %v6972
    %7123 = vmatpush.bf16.msra.mxu0 %v6964
    %7124 = vmatmul.bf16.gmra.mxu0 %v6768
    %v7125 = vpop.f32.mrf.mxu0
    %v7126 = vadd.f32 0.0, %v7125
    %v7127 = vpop.f32.mrf.mxu0
    %7128 = vdwg.mxu0
    %7129 = vmatpush.bf16.msra.mxu0 %v7021
    %7130 = vmatpush.bf16.msra.mxu0 %v7013
    %7131 = vmatpush.bf16.msra.mxu0 %v7005
    %7132 = vmatpush.bf16.msra.mxu0 %v6997
    %7133 = vmatpush.bf16.msra.mxu0 %v6989
    %7134 = vmatpush.bf16.msra.mxu0 %v6981
    %7135 = vmatpush.bf16.msra.mxu0 %v6973
    %7136 = vmatpush.bf16.msra.mxu0 %v6965
    %7137 = vmatmul.bf16.gmra.mxu0 %v6768
    %v7138 = vpop.f32.mrf.mxu0
    %v7139 = vadd.f32 0.0, %v7138
    %v7140 = vpop.f32.mrf.mxu0
    %7141 = vdwg.mxu0
    %7142 = vmatpush.bf16.msra.mxu0 %v7022
    %7143 = vmatpush.bf16.msra.mxu0 %v7014
    %7144 = vmatpush.bf16.msra.mxu0 %v7006
    %7145 = vmatpush.bf16.msra.mxu0 %v6998
    %7146 = vmatpush.bf16.msra.mxu0 %v6990
    %7147 = vmatpush.bf16.msra.mxu0 %v6982
    %7148 = vmatpush.bf16.msra.mxu0 %v6974
    %7149 = vmatpush.bf16.msra.mxu0 %v6966
    %7150 = vmatmul.bf16.gmra.mxu0 %v6768
    %v7151 = vpop.f32.mrf.mxu0
    %v7152 = vadd.f32 0.0, %v7151
    %v7153 = vpop.f32.mrf.mxu0
    %7154 = vdwg.mxu0
    %7155 = vmatpush.bf16.msra.mxu0 %v7023
    %7156 = vmatpush.bf16.msra.mxu0 %v7015
    %7157 = vmatpush.bf16.msra.mxu0 %v7007
    %7158 = vmatpush.bf16.msra.mxu0 %v6999
    %7159 = vmatpush.bf16.msra.mxu0 %v6991
    %7160 = vmatpush.bf16.msra.mxu0 %v6983
    %7161 = vmatpush.bf16.msra.mxu0 %v6975
    %7162 = vmatpush.bf16.msra.mxu0 %v6967
    %7163 = vmatmul.bf16.gmra.mxu0 %v6768
    %v7164 = vpop.f32.mrf.mxu0
    %v7165 = vadd.f32 0.0, %v7164
    %v7166 = vpop.f32.mrf.mxu0
    %7167 = vdwg.mxu0
    %7168 = vmatpush.bf16.msra.mxu0 %v7024
    %7169 = vmatpush.bf16.msra.mxu0 %v7016
    %7170 = vmatpush.bf16.msra.mxu0 %v7008
    %7171 = vmatpush.bf16.msra.mxu0 %v7000
    %7172 = vmatpush.bf16.msra.mxu0 %v6992
    %7173 = vmatpush.bf16.msra.mxu0 %v6984
    %7174 = vmatpush.bf16.msra.mxu0 %v6976
    %7175 = vmatpush.bf16.msra.mxu0 %v6968
    %7176 = vmatmul.bf16.gmra.mxu0 %v6768
    %v7177 = vpop.f32.mrf.mxu0
    %v7178 = vadd.f32 0.0, %v7177
    %v7179 = vpop.f32.mrf.mxu0
    %7180 = vdwg.mxu0
    %7181 = vmatpush.bf16.msra.mxu0 %v7025
    %7182 = vmatpush.bf16.msra.mxu0 %v7017
    %7183 = vmatpush.bf16.msra.mxu0 %v7009
    %7184 = vmatpush.bf16.msra.mxu0 %v7001
    %7185 = vmatpush.bf16.msra.mxu0 %v6993
    %7186 = vmatpush.bf16.msra.mxu0 %v6985
    %7187 = vmatpush.bf16.msra.mxu0 %v6977
    %7188 = vmatpush.bf16.msra.mxu0 %v6969
    %7189 = vmatmul.bf16.gmra.mxu0 %v6768
    %v7190 = vpop.f32.mrf.mxu0
    %v7191 = vadd.f32 0.0, %v7190
    %v7192 = vpop.f32.mrf.mxu0
    %7193 = vdwg.mxu0
    %v7194 = vadd.f32 %v6681, %v7100
    %v7195 = vadd.f32 %v6682, %v7113
    %v7196 = vadd.f32 %v6683, %v7126
    %v7197 = vadd.f32 %v6684, %v7139
    %v7198 = vadd.f32 %v6685, %v7152
    %v7199 = vadd.f32 %v6686, %v7165
    %v7200 = vadd.f32 %v6687, %v7178
    %v7201 = vadd.f32 %v6688, %v7191
    %v7202 = vld [vmem:[%s10] sm:$0xff]
    %v7204 = vperm.slane %v7202, 0
    %v7205 = vperm.slane %v7202, 1
    %v7206 = vperm.slane %v7202, 2
    %v7207 = vperm.slane %v7202, 3
    %v7208 = vperm.slane %v7202, 4
    %v7209 = vperm.slane %v7202, 5
    %v7210 = vperm.slane %v7202, 6
    %v7211 = vperm.slane %v7202, 7
    %v7220 = vadd.f32 %v7194, %v7204
    %v7221 = vadd.f32 %v7195, %v7205
    %v7222 = vadd.f32 %v7196, %v7206
    %v7223 = vadd.f32 %v7197, %v7207
    %v7224 = vadd.f32 %v7198, %v7208
    %v7225 = vadd.f32 %v7199, %v7209
    %v7226 = vadd.f32 %v7200, %v7210
    %v7227 = vadd.f32 %v7201, %v7211
    %v7228 = vmax.f32 %v7220, 0.0
    %v7229 = vmax.f32 %v7221, 0.0
    %v7230 = vmax.f32 %v7222, 0.0
    %v7231 = vmax.f32 %v7223, 0.0
    %v7232 = vmax.f32 %v7224, 0.0
    %v7233 = vmax.f32 %v7225, 0.0
    %v7234 = vmax.f32 %v7226, 0.0
    %v7235 = vmax.f32 %v7227, 0.0
    %v7236 = vpack.c.bf16 %v7228, %v7228
    %v7237 = vpack.c.bf16 %v7229, %v7229
    %v7238 = vpack.c.bf16 %v7230, %v7230
    %v7239 = vpack.c.bf16 %v7231, %v7231
    %v7240 = vpack.c.bf16 %v7232, %v7232
    %v7241 = vpack.c.bf16 %v7233, %v7233
    %v7242 = vpack.c.bf16 %v7234, %v7234
    %v7243 = vpack.c.bf16 %v7235, %v7235
    %v7244 = vld [vmem:[#allocation5] sm:$0xff]
    %v7245 = vld [vmem:[#allocation5 + $0x8] sm:$0xff]
    %v7246 = vld [vmem:[#allocation5 + $0x10] sm:$0xff]
    %v7247 = vld [vmem:[#allocation5 + $0x18] sm:$0xff]
    %v7248 = vld [vmem:[#allocation5 + $0x20] sm:$0xff]
    %v7249 = vld [vmem:[#allocation5 + $0x28] sm:$0xff]
    %v7250 = vld [vmem:[#allocation5 + $0x30] sm:$0xff]
    %v7251 = vld [vmem:[#allocation5 + $0x38] sm:$0xff]
    %v7252 = vld [vmem:[#allocation5 + $0x40] sm:$0xff]
    %v7253 = vld [vmem:[#allocation5 + $0x48] sm:$0xff]
    %v7254 = vld [vmem:[#allocation5 + $0x50] sm:$0xff]
    %v7255 = vld [vmem:[#allocation5 + $0x58] sm:$0xff]
    %v7256 = vld [vmem:[#allocation5 + $0x60] sm:$0xff]
    %v7257 = vld [vmem:[#allocation5 + $0x68] sm:$0xff]
    %v7258 = vld [vmem:[#allocation5 + $0x70] sm:$0xff]
    %v7259 = vld [vmem:[#allocation5 + $0x78] sm:$0xff]
    %v7260 = vld [vmem:[#allocation5 + $0x80] sm:$0xff]
    %v7261 = vld [vmem:[#allocation5 + $0x88] sm:$0xff]
    %v7262 = vld [vmem:[#allocation5 + $0x90] sm:$0xff]
    %v7263 = vld [vmem:[#allocation5 + $0x98] sm:$0xff]
    %v7264 = vld [vmem:[#allocation5 + $0xa0] sm:$0xff]
    %v7265 = vld [vmem:[#allocation5 + $0xa8] sm:$0xff]
    %v7266 = vld [vmem:[#allocation5 + $0xb0] sm:$0xff]
    %v7267 = vld [vmem:[#allocation5 + $0xb8] sm:$0xff]
    %v7268 = vld [vmem:[#allocation5 + $0xc0] sm:$0xff]
    %v7269 = vld [vmem:[#allocation5 + $0xc8] sm:$0xff]
    %v7270 = vld [vmem:[#allocation5 + $0xd0] sm:$0xff]
    %v7271 = vld [vmem:[#allocation5 + $0xd8] sm:$0xff]
    %v7272 = vld [vmem:[#allocation5 + $0xe0] sm:$0xff]
    %v7273 = vld [vmem:[#allocation5 + $0xe8] sm:$0xff]
    %v7274 = vld [vmem:[#allocation5 + $0xf0] sm:$0xff]
    %v7275 = vld [vmem:[#allocation5 + $0xf8] sm:$0xff]
    %v7276 = vld [vmem:[#allocation5 + $0x100] sm:$0xff]
    %v7277 = vld [vmem:[#allocation5 + $0x108] sm:$0xff]
    %v7278 = vld [vmem:[#allocation5 + $0x110] sm:$0xff]
    %v7279 = vld [vmem:[#allocation5 + $0x118] sm:$0xff]
    %v7280 = vld [vmem:[#allocation5 + $0x120] sm:$0xff]
    %v7281 = vld [vmem:[#allocation5 + $0x128] sm:$0xff]
    %v7282 = vld [vmem:[#allocation5 + $0x130] sm:$0xff]
    %v7283 = vld [vmem:[#allocation5 + $0x138] sm:$0xff]
    %v7284 = vld [vmem:[#allocation5 + $0x140] sm:$0xff]
    %v7285 = vld [vmem:[#allocation5 + $0x148] sm:$0xff]
    %v7286 = vld [vmem:[#allocation5 + $0x150] sm:$0xff]
    %v7287 = vld [vmem:[#allocation5 + $0x158] sm:$0xff]
    %v7288 = vld [vmem:[#allocation5 + $0x160] sm:$0xff]
    %v7289 = vld [vmem:[#allocation5 + $0x168] sm:$0xff]
    %v7290 = vld [vmem:[#allocation5 + $0x170] sm:$0xff]
    %v7291 = vld [vmem:[#allocation5 + $0x178] sm:$0xff]
    %v7292 = vld [vmem:[#allocation5 + $0x180] sm:$0xff]
    %v7293 = vld [vmem:[#allocation5 + $0x188] sm:$0xff]
    %v7294 = vld [vmem:[#allocation5 + $0x190] sm:$0xff]
    %v7295 = vld [vmem:[#allocation5 + $0x198] sm:$0xff]
    %v7296 = vld [vmem:[#allocation5 + $0x1a0] sm:$0xff]
    %v7297 = vld [vmem:[#allocation5 + $0x1a8] sm:$0xff]
    %v7298 = vld [vmem:[#allocation5 + $0x1b0] sm:$0xff]
    %v7299 = vld [vmem:[#allocation5 + $0x1b8] sm:$0xff]
    %v7300 = vld [vmem:[#allocation5 + $0x1c0] sm:$0xff]
    %v7301 = vld [vmem:[#allocation5 + $0x1c8] sm:$0xff]
    %v7302 = vld [vmem:[#allocation5 + $0x1d0] sm:$0xff]
    %v7303 = vld [vmem:[#allocation5 + $0x1d8] sm:$0xff]
    %v7304 = vld [vmem:[#allocation5 + $0x1e0] sm:$0xff]
    %v7305 = vld [vmem:[#allocation5 + $0x1e8] sm:$0xff]
    %v7306 = vld [vmem:[#allocation5 + $0x1f0] sm:$0xff]
    %v7307 = vld [vmem:[#allocation5 + $0x1f8] sm:$0xff]
    %v7308 = vld [vmem:[#allocation5 + $0x200] sm:$0xff]
    %v7309 = vld [vmem:[#allocation5 + $0x208] sm:$0xff]
    %v7310 = vld [vmem:[#allocation5 + $0x210] sm:$0xff]
    %v7311 = vld [vmem:[#allocation5 + $0x218] sm:$0xff]
    %v7312 = vld [vmem:[#allocation5 + $0x220] sm:$0xff]
    %v7313 = vld [vmem:[#allocation5 + $0x228] sm:$0xff]
    %v7314 = vld [vmem:[#allocation5 + $0x230] sm:$0xff]
    %v7315 = vld [vmem:[#allocation5 + $0x238] sm:$0xff]
    %v7316 = vld [vmem:[#allocation5 + $0x240] sm:$0xff]
    %v7317 = vld [vmem:[#allocation5 + $0x248] sm:$0xff]
    %v7318 = vld [vmem:[#allocation5 + $0x250] sm:$0xff]
    %v7319 = vld [vmem:[#allocation5 + $0x258] sm:$0xff]
    %v7320 = vld [vmem:[#allocation5 + $0x260] sm:$0xff]
    %v7321 = vld [vmem:[#allocation5 + $0x268] sm:$0xff]
    %v7322 = vld [vmem:[#allocation5 + $0x270] sm:$0xff]
    %v7323 = vld [vmem:[#allocation5 + $0x278] sm:$0xff]
    %v7324 = vld [vmem:[#allocation5 + $0x280] sm:$0xff]
    %v7325 = vld [vmem:[#allocation5 + $0x288] sm:$0xff]
    %v7326 = vld [vmem:[#allocation5 + $0x290] sm:$0xff]
    %v7327 = vld [vmem:[#allocation5 + $0x298] sm:$0xff]
    %v7328 = vld [vmem:[#allocation5 + $0x2a0] sm:$0xff]
    %v7329 = vld [vmem:[#allocation5 + $0x2a8] sm:$0xff]
    %v7330 = vld [vmem:[#allocation5 + $0x2b0] sm:$0xff]
    %v7331 = vld [vmem:[#allocation5 + $0x2b8] sm:$0xff]
    %v7332 = vld [vmem:[#allocation5 + $0x2c0] sm:$0xff]
    %v7333 = vld [vmem:[#allocation5 + $0x2c8] sm:$0xff]
    %v7334 = vld [vmem:[#allocation5 + $0x2d0] sm:$0xff]
    %v7335 = vld [vmem:[#allocation5 + $0x2d8] sm:$0xff]
    %v7336 = vld [vmem:[#allocation5 + $0x2e0] sm:$0xff]
    %v7337 = vld [vmem:[#allocation5 + $0x2e8] sm:$0xff]
    %v7338 = vld [vmem:[#allocation5 + $0x2f0] sm:$0xff]
    %v7339 = vld [vmem:[#allocation5 + $0x2f8] sm:$0xff]
    %v7340 = vld [vmem:[#allocation5 + $0x300] sm:$0xff]
    %v7341 = vld [vmem:[#allocation5 + $0x308] sm:$0xff]
    %v7342 = vld [vmem:[#allocation5 + $0x310] sm:$0xff]
    %v7343 = vld [vmem:[#allocation5 + $0x318] sm:$0xff]
    %v7344 = vld [vmem:[#allocation5 + $0x320] sm:$0xff]
    %v7345 = vld [vmem:[#allocation5 + $0x328] sm:$0xff]
    %v7346 = vld [vmem:[#allocation5 + $0x330] sm:$0xff]
    %v7347 = vld [vmem:[#allocation5 + $0x338] sm:$0xff]
    %v7348 = vld [vmem:[#allocation5 + $0x340] sm:$0xff]
    %v7349 = vld [vmem:[#allocation5 + $0x348] sm:$0xff]
    %v7350 = vld [vmem:[#allocation5 + $0x350] sm:$0xff]
    %v7351 = vld [vmem:[#allocation5 + $0x358] sm:$0xff]
    %v7352 = vld [vmem:[#allocation5 + $0x360] sm:$0xff]
    %v7353 = vld [vmem:[#allocation5 + $0x368] sm:$0xff]
    %v7354 = vld [vmem:[#allocation5 + $0x370] sm:$0xff]
    %v7355 = vld [vmem:[#allocation5 + $0x378] sm:$0xff]
    %v7356 = vld [vmem:[#allocation5 + $0x380] sm:$0xff]
    %v7357 = vld [vmem:[#allocation5 + $0x388] sm:$0xff]
    %v7358 = vld [vmem:[#allocation5 + $0x390] sm:$0xff]
    %v7359 = vld [vmem:[#allocation5 + $0x398] sm:$0xff]
    %v7360 = vld [vmem:[#allocation5 + $0x3a0] sm:$0xff]
    %v7361 = vld [vmem:[#allocation5 + $0x3a8] sm:$0xff]
    %v7362 = vld [vmem:[#allocation5 + $0x3b0] sm:$0xff]
    %v7363 = vld [vmem:[#allocation5 + $0x3b8] sm:$0xff]
    %v7364 = vld [vmem:[#allocation5 + $0x3c0] sm:$0xff]
    %v7365 = vld [vmem:[#allocation5 + $0x3c8] sm:$0xff]
    %v7366 = vld [vmem:[#allocation5 + $0x3d0] sm:$0xff]
    %v7367 = vld [vmem:[#allocation5 + $0x3d8] sm:$0xff]
    %v7368 = vld [vmem:[#allocation5 + $0x3e0] sm:$0xff]
    %v7369 = vld [vmem:[#allocation5 + $0x3e8] sm:$0xff]
    %v7370 = vld [vmem:[#allocation5 + $0x3f0] sm:$0xff]
    %v7371 = vld [vmem:[#allocation5 + $0x3f8] sm:$0xff]
    %v7372 = vld [vmem:[#allocation5 + $0x400] sm:$0xff]
    %v7373 = vld [vmem:[#allocation5 + $0x408] sm:$0xff]
    %v7374 = vld [vmem:[#allocation5 + $0x410] sm:$0xff]
    %v7375 = vld [vmem:[#allocation5 + $0x418] sm:$0xff]
    %v7376 = vld [vmem:[#allocation5 + $0x420] sm:$0xff]
    %v7377 = vld [vmem:[#allocation5 + $0x428] sm:$0xff]
    %v7378 = vld [vmem:[#allocation5 + $0x430] sm:$0xff]
    %v7379 = vld [vmem:[#allocation5 + $0x438] sm:$0xff]
    %v7380 = vld [vmem:[#allocation5 + $0x440] sm:$0xff]
    %v7381 = vld [vmem:[#allocation5 + $0x448] sm:$0xff]
    %v7382 = vld [vmem:[#allocation5 + $0x450] sm:$0xff]
    %v7383 = vld [vmem:[#allocation5 + $0x458] sm:$0xff]
    %v7384 = vld [vmem:[#allocation5 + $0x460] sm:$0xff]
    %v7385 = vld [vmem:[#allocation5 + $0x468] sm:$0xff]
    %v7386 = vld [vmem:[#allocation5 + $0x470] sm:$0xff]
    %v7387 = vld [vmem:[#allocation5 + $0x478] sm:$0xff]
    %v7388 = vld [vmem:[#allocation5 + $0x480] sm:$0xff]
    %v7389 = vld [vmem:[#allocation5 + $0x488] sm:$0xff]
    %v7390 = vld [vmem:[#allocation5 + $0x490] sm:$0xff]
    %v7391 = vld [vmem:[#allocation5 + $0x498] sm:$0xff]
    %v7392 = vld [vmem:[#allocation5 + $0x4a0] sm:$0xff]
    %v7393 = vld [vmem:[#allocation5 + $0x4a8] sm:$0xff]
    %v7394 = vld [vmem:[#allocation5 + $0x4b0] sm:$0xff]
    %v7395 = vld [vmem:[#allocation5 + $0x4b8] sm:$0xff]
    %v7396 = vld [vmem:[#allocation5 + $0x4c0] sm:$0xff]
    %v7397 = vld [vmem:[#allocation5 + $0x4c8] sm:$0xff]
    %v7398 = vld [vmem:[#allocation5 + $0x4d0] sm:$0xff]
    %v7399 = vld [vmem:[#allocation5 + $0x4d8] sm:$0xff]
    %v7400 = vld [vmem:[#allocation5 + $0x4e0] sm:$0xff]
    %v7401 = vld [vmem:[#allocation5 + $0x4e8] sm:$0xff]
    %v7402 = vld [vmem:[#allocation5 + $0x4f0] sm:$0xff]
    %v7403 = vld [vmem:[#allocation5 + $0x4f8] sm:$0xff]
    %v7404 = vld [vmem:[#allocation5 + $0x500] sm:$0xff]
    %v7405 = vld [vmem:[#allocation5 + $0x508] sm:$0xff]
    %v7406 = vld [vmem:[#allocation5 + $0x510] sm:$0xff]
    %v7407 = vld [vmem:[#allocation5 + $0x518] sm:$0xff]
    %v7408 = vld [vmem:[#allocation5 + $0x520] sm:$0xff]
    %v7409 = vld [vmem:[#allocation5 + $0x528] sm:$0xff]
    %v7410 = vld [vmem:[#allocation5 + $0x530] sm:$0xff]
    %v7411 = vld [vmem:[#allocation5 + $0x538] sm:$0xff]
    %v7412 = vld [vmem:[#allocation5 + $0x540] sm:$0xff]
    %v7413 = vld [vmem:[#allocation5 + $0x548] sm:$0xff]
    %v7414 = vld [vmem:[#allocation5 + $0x550] sm:$0xff]
    %v7415 = vld [vmem:[#allocation5 + $0x558] sm:$0xff]
    %v7416 = vld [vmem:[#allocation5 + $0x560] sm:$0xff]
    %v7417 = vld [vmem:[#allocation5 + $0x568] sm:$0xff]
    %v7418 = vld [vmem:[#allocation5 + $0x570] sm:$0xff]
    %v7419 = vld [vmem:[#allocation5 + $0x578] sm:$0xff]
    %v7420 = vld [vmem:[#allocation5 + $0x580] sm:$0xff]
    %v7421 = vld [vmem:[#allocation5 + $0x588] sm:$0xff]
    %v7422 = vld [vmem:[#allocation5 + $0x590] sm:$0xff]
    %v7423 = vld [vmem:[#allocation5 + $0x598] sm:$0xff]
    %v7424 = vld [vmem:[#allocation5 + $0x5a0] sm:$0xff]
    %v7425 = vld [vmem:[#allocation5 + $0x5a8] sm:$0xff]
    %v7426 = vld [vmem:[#allocation5 + $0x5b0] sm:$0xff]
    %v7427 = vld [vmem:[#allocation5 + $0x5b8] sm:$0xff]
    %v7428 = vld [vmem:[#allocation5 + $0x5c0] sm:$0xff]
    %v7429 = vld [vmem:[#allocation5 + $0x5c8] sm:$0xff]
    %v7430 = vld [vmem:[#allocation5 + $0x5d0] sm:$0xff]
    %v7431 = vld [vmem:[#allocation5 + $0x5d8] sm:$0xff]
    %v7432 = vld [vmem:[#allocation5 + $0x5e0] sm:$0xff]
    %v7433 = vld [vmem:[#allocation5 + $0x5e8] sm:$0xff]
    %v7434 = vld [vmem:[#allocation5 + $0x5f0] sm:$0xff]
    %v7435 = vld [vmem:[#allocation5 + $0x5f8] sm:$0xff]
    %v7436 = vld [vmem:[#allocation5 + $0x600] sm:$0xff]
    %v7437 = vld [vmem:[#allocation5 + $0x608] sm:$0xff]
    %v7438 = vld [vmem:[#allocation5 + $0x610] sm:$0xff]
    %v7439 = vld [vmem:[#allocation5 + $0x618] sm:$0xff]
    %v7440 = vld [vmem:[#allocation5 + $0x620] sm:$0xff]
    %v7441 = vld [vmem:[#allocation5 + $0x628] sm:$0xff]
    %v7442 = vld [vmem:[#allocation5 + $0x630] sm:$0xff]
    %v7443 = vld [vmem:[#allocation5 + $0x638] sm:$0xff]
    %v7444 = vld [vmem:[#allocation5 + $0x640] sm:$0xff]
    %v7445 = vld [vmem:[#allocation5 + $0x648] sm:$0xff]
    %v7446 = vld [vmem:[#allocation5 + $0x650] sm:$0xff]
    %v7447 = vld [vmem:[#allocation5 + $0x658] sm:$0xff]
    %v7448 = vld [vmem:[#allocation5 + $0x660] sm:$0xff]
    %v7449 = vld [vmem:[#allocation5 + $0x668] sm:$0xff]
    %v7450 = vld [vmem:[#allocation5 + $0x670] sm:$0xff]
    %v7451 = vld [vmem:[#allocation5 + $0x678] sm:$0xff]
    %v7452 = vld [vmem:[#allocation5 + $0x680] sm:$0xff]
    %v7453 = vld [vmem:[#allocation5 + $0x688] sm:$0xff]
    %v7454 = vld [vmem:[#allocation5 + $0x690] sm:$0xff]
    %v7455 = vld [vmem:[#allocation5 + $0x698] sm:$0xff]
    %v7456 = vld [vmem:[#allocation5 + $0x6a0] sm:$0xff]
    %v7457 = vld [vmem:[#allocation5 + $0x6a8] sm:$0xff]
    %v7458 = vld [vmem:[#allocation5 + $0x6b0] sm:$0xff]
    %v7459 = vld [vmem:[#allocation5 + $0x6b8] sm:$0xff]
    %v7460 = vld [vmem:[#allocation5 + $0x6c0] sm:$0xff]
    %v7461 = vld [vmem:[#allocation5 + $0x6c8] sm:$0xff]
    %v7462 = vld [vmem:[#allocation5 + $0x6d0] sm:$0xff]
    %v7463 = vld [vmem:[#allocation5 + $0x6d8] sm:$0xff]
    %v7464 = vld [vmem:[#allocation5 + $0x6e0] sm:$0xff]
    %v7465 = vld [vmem:[#allocation5 + $0x6e8] sm:$0xff]
    %v7466 = vld [vmem:[#allocation5 + $0x6f0] sm:$0xff]
    %v7467 = vld [vmem:[#allocation5 + $0x6f8] sm:$0xff]
    %v7468 = vld [vmem:[#allocation5 + $0x700] sm:$0xff]
    %v7469 = vld [vmem:[#allocation5 + $0x708] sm:$0xff]
    %v7470 = vld [vmem:[#allocation5 + $0x710] sm:$0xff]
    %v7471 = vld [vmem:[#allocation5 + $0x718] sm:$0xff]
    %v7472 = vld [vmem:[#allocation5 + $0x720] sm:$0xff]
    %v7473 = vld [vmem:[#allocation5 + $0x728] sm:$0xff]
    %v7474 = vld [vmem:[#allocation5 + $0x730] sm:$0xff]
    %v7475 = vld [vmem:[#allocation5 + $0x738] sm:$0xff]
    %v7476 = vld [vmem:[#allocation5 + $0x740] sm:$0xff]
    %v7477 = vld [vmem:[#allocation5 + $0x748] sm:$0xff]
    %v7478 = vld [vmem:[#allocation5 + $0x750] sm:$0xff]
    %v7479 = vld [vmem:[#allocation5 + $0x758] sm:$0xff]
    %v7480 = vld [vmem:[#allocation5 + $0x760] sm:$0xff]
    %v7481 = vld [vmem:[#allocation5 + $0x768] sm:$0xff]
    %v7482 = vld [vmem:[#allocation5 + $0x770] sm:$0xff]
    %v7483 = vld [vmem:[#allocation5 + $0x778] sm:$0xff]
    %v7484 = vld [vmem:[#allocation5 + $0x780] sm:$0xff]
    %v7485 = vld [vmem:[#allocation5 + $0x788] sm:$0xff]
    %v7486 = vld [vmem:[#allocation5 + $0x790] sm:$0xff]
    %v7487 = vld [vmem:[#allocation5 + $0x798] sm:$0xff]
    %v7488 = vld [vmem:[#allocation5 + $0x7a0] sm:$0xff]
    %v7489 = vld [vmem:[#allocation5 + $0x7a8] sm:$0xff]
    %v7490 = vld [vmem:[#allocation5 + $0x7b0] sm:$0xff]
    %v7491 = vld [vmem:[#allocation5 + $0x7b8] sm:$0xff]
    %v7492 = vld [vmem:[#allocation5 + $0x7c0] sm:$0xff]
    %v7493 = vld [vmem:[#allocation5 + $0x7c8] sm:$0xff]
    %v7494 = vld [vmem:[#allocation5 + $0x7d0] sm:$0xff]
    %v7495 = vld [vmem:[#allocation5 + $0x7d8] sm:$0xff]
    %v7496 = vld [vmem:[#allocation5 + $0x7e0] sm:$0xff]
    %v7497 = vld [vmem:[#allocation5 + $0x7e8] sm:$0xff]
    %v7498 = vld [vmem:[#allocation5 + $0x7f0] sm:$0xff]
    %v7499 = vld [vmem:[#allocation5 + $0x7f8] sm:$0xff]
    %v7500 = vld [vmem:[%s12] sm:$0xf]
    %v7502 = vperm.slane %v7500, 0
    %v7503 = vperm.slane %v7500, 1
    %v7504 = vperm.slane %v7500, 2
    %v7505 = vperm.slane %v7500, 3
    %v7766 = vunpack.c.l.b16 %v7244
    %v7767 = vunpack.c.h.b16 %v7244
    %v7768 = vunpack.c.l.b16 %v7245
    %v7769 = vunpack.c.h.b16 %v7245
    %v7770 = vunpack.c.l.b16 %v7246
    %v7771 = vunpack.c.h.b16 %v7246
    %v7772 = vunpack.c.l.b16 %v7247
    %v7773 = vunpack.c.h.b16 %v7247
    %v7774 = vunpack.c.l.b16 %v7248
    %v7775 = vunpack.c.h.b16 %v7248
    %v7776 = vunpack.c.l.b16 %v7249
    %v7777 = vunpack.c.h.b16 %v7249
    %v7778 = vunpack.c.l.b16 %v7250
    %v7779 = vunpack.c.h.b16 %v7250
    %v7780 = vunpack.c.l.b16 %v7251
    %v7781 = vunpack.c.h.b16 %v7251
    %v7782 = vunpack.c.l.b16 %v7252
    %v7783 = vunpack.c.h.b16 %v7252
    %v7784 = vunpack.c.l.b16 %v7253
    %v7785 = vunpack.c.h.b16 %v7253
    %v7786 = vunpack.c.l.b16 %v7254
    %v7787 = vunpack.c.h.b16 %v7254
    %v7788 = vunpack.c.l.b16 %v7255
    %v7789 = vunpack.c.h.b16 %v7255
    %v7790 = vunpack.c.l.b16 %v7256
    %v7791 = vunpack.c.h.b16 %v7256
    %v7792 = vunpack.c.l.b16 %v7257
    %v7793 = vunpack.c.h.b16 %v7257
    %v7794 = vunpack.c.l.b16 %v7258
    %v7795 = vunpack.c.h.b16 %v7258
    %v7796 = vunpack.c.l.b16 %v7259
    %v7797 = vunpack.c.h.b16 %v7259
    %v7798 = vunpack.c.l.b16 %v7260
    %v7799 = vunpack.c.h.b16 %v7260
    %v7800 = vunpack.c.l.b16 %v7261
    %v7801 = vunpack.c.h.b16 %v7261
    %v7802 = vunpack.c.l.b16 %v7262
    %v7803 = vunpack.c.h.b16 %v7262
    %v7804 = vunpack.c.l.b16 %v7263
    %v7805 = vunpack.c.h.b16 %v7263
    %v7806 = vunpack.c.l.b16 %v7264
    %v7807 = vunpack.c.h.b16 %v7264
    %v7808 = vunpack.c.l.b16 %v7265
    %v7809 = vunpack.c.h.b16 %v7265
    %v7810 = vunpack.c.l.b16 %v7266
    %v7811 = vunpack.c.h.b16 %v7266
    %v7812 = vunpack.c.l.b16 %v7267
    %v7813 = vunpack.c.h.b16 %v7267
    %v7814 = vunpack.c.l.b16 %v7268
    %v7815 = vunpack.c.h.b16 %v7268
    %v7816 = vunpack.c.l.b16 %v7269
    %v7817 = vunpack.c.h.b16 %v7269
    %v7818 = vunpack.c.l.b16 %v7270
    %v7819 = vunpack.c.h.b16 %v7270
    %v7820 = vunpack.c.l.b16 %v7271
    %v7821 = vunpack.c.h.b16 %v7271
    %v7822 = vunpack.c.l.b16 %v7272
    %v7823 = vunpack.c.h.b16 %v7272
    %v7824 = vunpack.c.l.b16 %v7273
    %v7825 = vunpack.c.h.b16 %v7273
    %v7826 = vunpack.c.l.b16 %v7274
    %v7827 = vunpack.c.h.b16 %v7274
    %v7828 = vunpack.c.l.b16 %v7275
    %v7829 = vunpack.c.h.b16 %v7275
    %v7830 = vunpack.c.l.b16 %v7276
    %v7831 = vunpack.c.h.b16 %v7276
    %v7832 = vunpack.c.l.b16 %v7277
    %v7833 = vunpack.c.h.b16 %v7277
    %v7834 = vunpack.c.l.b16 %v7278
    %v7835 = vunpack.c.h.b16 %v7278
    %v7836 = vunpack.c.l.b16 %v7279
    %v7837 = vunpack.c.h.b16 %v7279
    %v7838 = vunpack.c.l.b16 %v7280
    %v7839 = vunpack.c.h.b16 %v7280
    %v7840 = vunpack.c.l.b16 %v7281
    %v7841 = vunpack.c.h.b16 %v7281
    %v7842 = vunpack.c.l.b16 %v7282
    %v7843 = vunpack.c.h.b16 %v7282
    %v7844 = vunpack.c.l.b16 %v7283
    %v7845 = vunpack.c.h.b16 %v7283
    %v7846 = vunpack.c.l.b16 %v7284
    %v7847 = vunpack.c.h.b16 %v7284
    %v7848 = vunpack.c.l.b16 %v7285
    %v7849 = vunpack.c.h.b16 %v7285
    %v7850 = vunpack.c.l.b16 %v7286
    %v7851 = vunpack.c.h.b16 %v7286
    %v7852 = vunpack.c.l.b16 %v7287
    %v7853 = vunpack.c.h.b16 %v7287
    %v7854 = vunpack.c.l.b16 %v7288
    %v7855 = vunpack.c.h.b16 %v7288
    %v7856 = vunpack.c.l.b16 %v7289
    %v7857 = vunpack.c.h.b16 %v7289
    %v7858 = vunpack.c.l.b16 %v7290
    %v7859 = vunpack.c.h.b16 %v7290
    %v7860 = vunpack.c.l.b16 %v7291
    %v7861 = vunpack.c.h.b16 %v7291
    %v7862 = vunpack.c.l.b16 %v7292
    %v7863 = vunpack.c.h.b16 %v7292
    %v7864 = vunpack.c.l.b16 %v7293
    %v7865 = vunpack.c.h.b16 %v7293
    %v7866 = vunpack.c.l.b16 %v7294
    %v7867 = vunpack.c.h.b16 %v7294
    %v7868 = vunpack.c.l.b16 %v7295
    %v7869 = vunpack.c.h.b16 %v7295
    %v7870 = vunpack.c.l.b16 %v7296
    %v7871 = vunpack.c.h.b16 %v7296
    %v7872 = vunpack.c.l.b16 %v7297
    %v7873 = vunpack.c.h.b16 %v7297
    %v7874 = vunpack.c.l.b16 %v7298
    %v7875 = vunpack.c.h.b16 %v7298
    %v7876 = vunpack.c.l.b16 %v7299
    %v7877 = vunpack.c.h.b16 %v7299
    %v7878 = vunpack.c.l.b16 %v7300
    %v7879 = vunpack.c.h.b16 %v7300
    %v7880 = vunpack.c.l.b16 %v7301
    %v7881 = vunpack.c.h.b16 %v7301
    %v7882 = vunpack.c.l.b16 %v7302
    %v7883 = vunpack.c.h.b16 %v7302
    %v7884 = vunpack.c.l.b16 %v7303
    %v7885 = vunpack.c.h.b16 %v7303
    %v7886 = vunpack.c.l.b16 %v7304
    %v7887 = vunpack.c.h.b16 %v7304
    %v7888 = vunpack.c.l.b16 %v7305
    %v7889 = vunpack.c.h.b16 %v7305
    %v7890 = vunpack.c.l.b16 %v7306
    %v7891 = vunpack.c.h.b16 %v7306
    %v7892 = vunpack.c.l.b16 %v7307
    %v7893 = vunpack.c.h.b16 %v7307
    %v7894 = vunpack.c.l.b16 %v7308
    %v7895 = vunpack.c.h.b16 %v7308
    %v7896 = vunpack.c.l.b16 %v7309
    %v7897 = vunpack.c.h.b16 %v7309
    %v7898 = vunpack.c.l.b16 %v7310
    %v7899 = vunpack.c.h.b16 %v7310
    %v7900 = vunpack.c.l.b16 %v7311
    %v7901 = vunpack.c.h.b16 %v7311
    %v7902 = vunpack.c.l.b16 %v7312
    %v7903 = vunpack.c.h.b16 %v7312
    %v7904 = vunpack.c.l.b16 %v7313
    %v7905 = vunpack.c.h.b16 %v7313
    %v7906 = vunpack.c.l.b16 %v7314
    %v7907 = vunpack.c.h.b16 %v7314
    %v7908 = vunpack.c.l.b16 %v7315
    %v7909 = vunpack.c.h.b16 %v7315
    %v7910 = vunpack.c.l.b16 %v7316
    %v7911 = vunpack.c.h.b16 %v7316
    %v7912 = vunpack.c.l.b16 %v7317
    %v7913 = vunpack.c.h.b16 %v7317
    %v7914 = vunpack.c.l.b16 %v7318
    %v7915 = vunpack.c.h.b16 %v7318
    %v7916 = vunpack.c.l.b16 %v7319
    %v7917 = vunpack.c.h.b16 %v7319
    %v7918 = vunpack.c.l.b16 %v7320
    %v7919 = vunpack.c.h.b16 %v7320
    %v7920 = vunpack.c.l.b16 %v7321
    %v7921 = vunpack.c.h.b16 %v7321
    %v7922 = vunpack.c.l.b16 %v7322
    %v7923 = vunpack.c.h.b16 %v7322
    %v7924 = vunpack.c.l.b16 %v7323
    %v7925 = vunpack.c.h.b16 %v7323
    %v7926 = vunpack.c.l.b16 %v7324
    %v7927 = vunpack.c.h.b16 %v7324
    %v7928 = vunpack.c.l.b16 %v7325
    %v7929 = vunpack.c.h.b16 %v7325
    %v7930 = vunpack.c.l.b16 %v7326
    %v7931 = vunpack.c.h.b16 %v7326
    %v7932 = vunpack.c.l.b16 %v7327
    %v7933 = vunpack.c.h.b16 %v7327
    %v7934 = vunpack.c.l.b16 %v7328
    %v7935 = vunpack.c.h.b16 %v7328
    %v7936 = vunpack.c.l.b16 %v7329
    %v7937 = vunpack.c.h.b16 %v7329
    %v7938 = vunpack.c.l.b16 %v7330
    %v7939 = vunpack.c.h.b16 %v7330
    %v7940 = vunpack.c.l.b16 %v7331
    %v7941 = vunpack.c.h.b16 %v7331
    %v7942 = vunpack.c.l.b16 %v7332
    %v7943 = vunpack.c.h.b16 %v7332
    %v7944 = vunpack.c.l.b16 %v7333
    %v7945 = vunpack.c.h.b16 %v7333
    %v7946 = vunpack.c.l.b16 %v7334
    %v7947 = vunpack.c.h.b16 %v7334
    %v7948 = vunpack.c.l.b16 %v7335
    %v7949 = vunpack.c.h.b16 %v7335
    %v7950 = vunpack.c.l.b16 %v7336
    %v7951 = vunpack.c.h.b16 %v7336
    %v7952 = vunpack.c.l.b16 %v7337
    %v7953 = vunpack.c.h.b16 %v7337
    %v7954 = vunpack.c.l.b16 %v7338
    %v7955 = vunpack.c.h.b16 %v7338
    %v7956 = vunpack.c.l.b16 %v7339
    %v7957 = vunpack.c.h.b16 %v7339
    %v7958 = vunpack.c.l.b16 %v7340
    %v7959 = vunpack.c.h.b16 %v7340
    %v7960 = vunpack.c.l.b16 %v7341
    %v7961 = vunpack.c.h.b16 %v7341
    %v7962 = vunpack.c.l.b16 %v7342
    %v7963 = vunpack.c.h.b16 %v7342
    %v7964 = vunpack.c.l.b16 %v7343
    %v7965 = vunpack.c.h.b16 %v7343
    %v7966 = vunpack.c.l.b16 %v7344
    %v7967 = vunpack.c.h.b16 %v7344
    %v7968 = vunpack.c.l.b16 %v7345
    %v7969 = vunpack.c.h.b16 %v7345
    %v7970 = vunpack.c.l.b16 %v7346
    %v7971 = vunpack.c.h.b16 %v7346
    %v7972 = vunpack.c.l.b16 %v7347
    %v7973 = vunpack.c.h.b16 %v7347
    %v7974 = vunpack.c.l.b16 %v7348
    %v7975 = vunpack.c.h.b16 %v7348
    %v7976 = vunpack.c.l.b16 %v7349
    %v7977 = vunpack.c.h.b16 %v7349
    %v7978 = vunpack.c.l.b16 %v7350
    %v7979 = vunpack.c.h.b16 %v7350
    %v7980 = vunpack.c.l.b16 %v7351
    %v7981 = vunpack.c.h.b16 %v7351
    %v7982 = vunpack.c.l.b16 %v7352
    %v7983 = vunpack.c.h.b16 %v7352
    %v7984 = vunpack.c.l.b16 %v7353
    %v7985 = vunpack.c.h.b16 %v7353
    %v7986 = vunpack.c.l.b16 %v7354
    %v7987 = vunpack.c.h.b16 %v7354
    %v7988 = vunpack.c.l.b16 %v7355
    %v7989 = vunpack.c.h.b16 %v7355
    %v7990 = vunpack.c.l.b16 %v7356
    %v7991 = vunpack.c.h.b16 %v7356
    %v7992 = vunpack.c.l.b16 %v7357
    %v7993 = vunpack.c.h.b16 %v7357
    %v7994 = vunpack.c.l.b16 %v7358
    %v7995 = vunpack.c.h.b16 %v7358
    %v7996 = vunpack.c.l.b16 %v7359
    %v7997 = vunpack.c.h.b16 %v7359
    %v7998 = vunpack.c.l.b16 %v7360
    %v7999 = vunpack.c.h.b16 %v7360
    %v8000 = vunpack.c.l.b16 %v7361
    %v8001 = vunpack.c.h.b16 %v7361
    %v8002 = vunpack.c.l.b16 %v7362
    %v8003 = vunpack.c.h.b16 %v7362
    %v8004 = vunpack.c.l.b16 %v7363
    %v8005 = vunpack.c.h.b16 %v7363
    %v8006 = vunpack.c.l.b16 %v7364
    %v8007 = vunpack.c.h.b16 %v7364
    %v8008 = vunpack.c.l.b16 %v7365
    %v8009 = vunpack.c.h.b16 %v7365
    %v8010 = vunpack.c.l.b16 %v7366
    %v8011 = vunpack.c.h.b16 %v7366
    %v8012 = vunpack.c.l.b16 %v7367
    %v8013 = vunpack.c.h.b16 %v7367
    %v8014 = vunpack.c.l.b16 %v7368
    %v8015 = vunpack.c.h.b16 %v7368
    %v8016 = vunpack.c.l.b16 %v7369
    %v8017 = vunpack.c.h.b16 %v7369
    %v8018 = vunpack.c.l.b16 %v7370
    %v8019 = vunpack.c.h.b16 %v7370
    %v8020 = vunpack.c.l.b16 %v7371
    %v8021 = vunpack.c.h.b16 %v7371
    %v8022 = vunpack.c.l.b16 %v7372
    %v8023 = vunpack.c.h.b16 %v7372
    %v8024 = vunpack.c.l.b16 %v7373
    %v8025 = vunpack.c.h.b16 %v7373
    %v8026 = vunpack.c.l.b16 %v7374
    %v8027 = vunpack.c.h.b16 %v7374
    %v8028 = vunpack.c.l.b16 %v7375
    %v8029 = vunpack.c.h.b16 %v7375
    %v8030 = vunpack.c.l.b16 %v7376
    %v8031 = vunpack.c.h.b16 %v7376
    %v8032 = vunpack.c.l.b16 %v7377
    %v8033 = vunpack.c.h.b16 %v7377
    %v8034 = vunpack.c.l.b16 %v7378
    %v8035 = vunpack.c.h.b16 %v7378
    %v8036 = vunpack.c.l.b16 %v7379
    %v8037 = vunpack.c.h.b16 %v7379
    %v8038 = vunpack.c.l.b16 %v7380
    %v8039 = vunpack.c.h.b16 %v7380
    %v8040 = vunpack.c.l.b16 %v7381
    %v8041 = vunpack.c.h.b16 %v7381
    %v8042 = vunpack.c.l.b16 %v7382
    %v8043 = vunpack.c.h.b16 %v7382
    %v8044 = vunpack.c.l.b16 %v7383
    %v8045 = vunpack.c.h.b16 %v7383
    %v8046 = vunpack.c.l.b16 %v7384
    %v8047 = vunpack.c.h.b16 %v7384
    %v8048 = vunpack.c.l.b16 %v7385
    %v8049 = vunpack.c.h.b16 %v7385
    %v8050 = vunpack.c.l.b16 %v7386
    %v8051 = vunpack.c.h.b16 %v7386
    %v8052 = vunpack.c.l.b16 %v7387
    %v8053 = vunpack.c.h.b16 %v7387
    %v8054 = vunpack.c.l.b16 %v7388
    %v8055 = vunpack.c.h.b16 %v7388
    %v8056 = vunpack.c.l.b16 %v7389
    %v8057 = vunpack.c.h.b16 %v7389
    %v8058 = vunpack.c.l.b16 %v7390
    %v8059 = vunpack.c.h.b16 %v7390
    %v8060 = vunpack.c.l.b16 %v7391
    %v8061 = vunpack.c.h.b16 %v7391
    %v8062 = vunpack.c.l.b16 %v7392
    %v8063 = vunpack.c.h.b16 %v7392
    %v8064 = vunpack.c.l.b16 %v7393
    %v8065 = vunpack.c.h.b16 %v7393
    %v8066 = vunpack.c.l.b16 %v7394
    %v8067 = vunpack.c.h.b16 %v7394
    %v8068 = vunpack.c.l.b16 %v7395
    %v8069 = vunpack.c.h.b16 %v7395
    %v8070 = vunpack.c.l.b16 %v7396
    %v8071 = vunpack.c.h.b16 %v7396
    %v8072 = vunpack.c.l.b16 %v7397
    %v8073 = vunpack.c.h.b16 %v7397
    %v8074 = vunpack.c.l.b16 %v7398
    %v8075 = vunpack.c.h.b16 %v7398
    %v8076 = vunpack.c.l.b16 %v7399
    %v8077 = vunpack.c.h.b16 %v7399
    %v8078 = vunpack.c.l.b16 %v7400
    %v8079 = vunpack.c.h.b16 %v7400
    %v8080 = vunpack.c.l.b16 %v7401
    %v8081 = vunpack.c.h.b16 %v7401
    %v8082 = vunpack.c.l.b16 %v7402
    %v8083 = vunpack.c.h.b16 %v7402
    %v8084 = vunpack.c.l.b16 %v7403
    %v8085 = vunpack.c.h.b16 %v7403
    %v8086 = vunpack.c.l.b16 %v7404
    %v8087 = vunpack.c.h.b16 %v7404
    %v8088 = vunpack.c.l.b16 %v7405
    %v8089 = vunpack.c.h.b16 %v7405
    %v8090 = vunpack.c.l.b16 %v7406
    %v8091 = vunpack.c.h.b16 %v7406
    %v8092 = vunpack.c.l.b16 %v7407
    %v8093 = vunpack.c.h.b16 %v7407
    %v8094 = vunpack.c.l.b16 %v7408
    %v8095 = vunpack.c.h.b16 %v7408
    %v8096 = vunpack.c.l.b16 %v7409
    %v8097 = vunpack.c.h.b16 %v7409
    %v8098 = vunpack.c.l.b16 %v7410
    %v8099 = vunpack.c.h.b16 %v7410
    %v8100 = vunpack.c.l.b16 %v7411
    %v8101 = vunpack.c.h.b16 %v7411
    %v8102 = vunpack.c.l.b16 %v7412
    %v8103 = vunpack.c.h.b16 %v7412
    %v8104 = vunpack.c.l.b16 %v7413
    %v8105 = vunpack.c.h.b16 %v7413
    %v8106 = vunpack.c.l.b16 %v7414
    %v8107 = vunpack.c.h.b16 %v7414
    %v8108 = vunpack.c.l.b16 %v7415
    %v8109 = vunpack.c.h.b16 %v7415
    %v8110 = vunpack.c.l.b16 %v7416
    %v8111 = vunpack.c.h.b16 %v7416
    %v8112 = vunpack.c.l.b16 %v7417
    %v8113 = vunpack.c.h.b16 %v7417
    %v8114 = vunpack.c.l.b16 %v7418
    %v8115 = vunpack.c.h.b16 %v7418
    %v8116 = vunpack.c.l.b16 %v7419
    %v8117 = vunpack.c.h.b16 %v7419
    %v8118 = vunpack.c.l.b16 %v7420
    %v8119 = vunpack.c.h.b16 %v7420
    %v8120 = vunpack.c.l.b16 %v7421
    %v8121 = vunpack.c.h.b16 %v7421
    %v8122 = vunpack.c.l.b16 %v7422
    %v8123 = vunpack.c.h.b16 %v7422
    %v8124 = vunpack.c.l.b16 %v7423
    %v8125 = vunpack.c.h.b16 %v7423
    %v8126 = vunpack.c.l.b16 %v7424
    %v8127 = vunpack.c.h.b16 %v7424
    %v8128 = vunpack.c.l.b16 %v7425
    %v8129 = vunpack.c.h.b16 %v7425
    %v8130 = vunpack.c.l.b16 %v7426
    %v8131 = vunpack.c.h.b16 %v7426
    %v8132 = vunpack.c.l.b16 %v7427
    %v8133 = vunpack.c.h.b16 %v7427
    %v8134 = vunpack.c.l.b16 %v7428
    %v8135 = vunpack.c.h.b16 %v7428
    %v8136 = vunpack.c.l.b16 %v7429
    %v8137 = vunpack.c.h.b16 %v7429
    %v8138 = vunpack.c.l.b16 %v7430
    %v8139 = vunpack.c.h.b16 %v7430
    %v8140 = vunpack.c.l.b16 %v7431
    %v8141 = vunpack.c.h.b16 %v7431
    %v8142 = vunpack.c.l.b16 %v7432
    %v8143 = vunpack.c.h.b16 %v7432
    %v8144 = vunpack.c.l.b16 %v7433
    %v8145 = vunpack.c.h.b16 %v7433
    %v8146 = vunpack.c.l.b16 %v7434
    %v8147 = vunpack.c.h.b16 %v7434
    %v8148 = vunpack.c.l.b16 %v7435
    %v8149 = vunpack.c.h.b16 %v7435
    %v8150 = vunpack.c.l.b16 %v7436
    %v8151 = vunpack.c.h.b16 %v7436
    %v8152 = vunpack.c.l.b16 %v7437
    %v8153 = vunpack.c.h.b16 %v7437
    %v8154 = vunpack.c.l.b16 %v7438
    %v8155 = vunpack.c.h.b16 %v7438
    %v8156 = vunpack.c.l.b16 %v7439
    %v8157 = vunpack.c.h.b16 %v7439
    %v8158 = vunpack.c.l.b16 %v7440
    %v8159 = vunpack.c.h.b16 %v7440
    %v8160 = vunpack.c.l.b16 %v7441
    %v8161 = vunpack.c.h.b16 %v7441
    %v8162 = vunpack.c.l.b16 %v7442
    %v8163 = vunpack.c.h.b16 %v7442
    %v8164 = vunpack.c.l.b16 %v7443
    %v8165 = vunpack.c.h.b16 %v7443
    %v8166 = vunpack.c.l.b16 %v7444
    %v8167 = vunpack.c.h.b16 %v7444
    %v8168 = vunpack.c.l.b16 %v7445
    %v8169 = vunpack.c.h.b16 %v7445
    %v8170 = vunpack.c.l.b16 %v7446
    %v8171 = vunpack.c.h.b16 %v7446
    %v8172 = vunpack.c.l.b16 %v7447
    %v8173 = vunpack.c.h.b16 %v7447
    %v8174 = vunpack.c.l.b16 %v7448
    %v8175 = vunpack.c.h.b16 %v7448
    %v8176 = vunpack.c.l.b16 %v7449
    %v8177 = vunpack.c.h.b16 %v7449
    %v8178 = vunpack.c.l.b16 %v7450
    %v8179 = vunpack.c.h.b16 %v7450
    %v8180 = vunpack.c.l.b16 %v7451
    %v8181 = vunpack.c.h.b16 %v7451
    %v8182 = vunpack.c.l.b16 %v7452
    %v8183 = vunpack.c.h.b16 %v7452
    %v8184 = vunpack.c.l.b16 %v7453
    %v8185 = vunpack.c.h.b16 %v7453
    %v8186 = vunpack.c.l.b16 %v7454
    %v8187 = vunpack.c.h.b16 %v7454
    %v8188 = vunpack.c.l.b16 %v7455
    %v8189 = vunpack.c.h.b16 %v7455
    %v8190 = vunpack.c.l.b16 %v7456
    %v8191 = vunpack.c.h.b16 %v7456
    %v8192 = vunpack.c.l.b16 %v7457
    %v8193 = vunpack.c.h.b16 %v7457
    %v8194 = vunpack.c.l.b16 %v7458
    %v8195 = vunpack.c.h.b16 %v7458
    %v8196 = vunpack.c.l.b16 %v7459
    %v8197 = vunpack.c.h.b16 %v7459
    %v8198 = vunpack.c.l.b16 %v7460
    %v8199 = vunpack.c.h.b16 %v7460
    %v8200 = vunpack.c.l.b16 %v7461
    %v8201 = vunpack.c.h.b16 %v7461
    %v8202 = vunpack.c.l.b16 %v7462
    %v8203 = vunpack.c.h.b16 %v7462
    %v8204 = vunpack.c.l.b16 %v7463
    %v8205 = vunpack.c.h.b16 %v7463
    %v8206 = vunpack.c.l.b16 %v7464
    %v8207 = vunpack.c.h.b16 %v7464
    %v8208 = vunpack.c.l.b16 %v7465
    %v8209 = vunpack.c.h.b16 %v7465
    %v8210 = vunpack.c.l.b16 %v7466
    %v8211 = vunpack.c.h.b16 %v7466
    %v8212 = vunpack.c.l.b16 %v7467
    %v8213 = vunpack.c.h.b16 %v7467
    %v8214 = vunpack.c.l.b16 %v7468
    %v8215 = vunpack.c.h.b16 %v7468
    %v8216 = vunpack.c.l.b16 %v7469
    %v8217 = vunpack.c.h.b16 %v7469
    %v8218 = vunpack.c.l.b16 %v7470
    %v8219 = vunpack.c.h.b16 %v7470
    %v8220 = vunpack.c.l.b16 %v7471
    %v8221 = vunpack.c.h.b16 %v7471
    %v8222 = vunpack.c.l.b16 %v7472
    %v8223 = vunpack.c.h.b16 %v7472
    %v8224 = vunpack.c.l.b16 %v7473
    %v8225 = vunpack.c.h.b16 %v7473
    %v8226 = vunpack.c.l.b16 %v7474
    %v8227 = vunpack.c.h.b16 %v7474
    %v8228 = vunpack.c.l.b16 %v7475
    %v8229 = vunpack.c.h.b16 %v7475
    %v8230 = vunpack.c.l.b16 %v7476
    %v8231 = vunpack.c.h.b16 %v7476
    %v8232 = vunpack.c.l.b16 %v7477
    %v8233 = vunpack.c.h.b16 %v7477
    %v8234 = vunpack.c.l.b16 %v7478
    %v8235 = vunpack.c.h.b16 %v7478
    %v8236 = vunpack.c.l.b16 %v7479
    %v8237 = vunpack.c.h.b16 %v7479
    %v8238 = vunpack.c.l.b16 %v7480
    %v8239 = vunpack.c.h.b16 %v7480
    %v8240 = vunpack.c.l.b16 %v7481
    %v8241 = vunpack.c.h.b16 %v7481
    %v8242 = vunpack.c.l.b16 %v7482
    %v8243 = vunpack.c.h.b16 %v7482
    %v8244 = vunpack.c.l.b16 %v7483
    %v8245 = vunpack.c.h.b16 %v7483
    %v8246 = vunpack.c.l.b16 %v7484
    %v8247 = vunpack.c.h.b16 %v7484
    %v8248 = vunpack.c.l.b16 %v7485
    %v8249 = vunpack.c.h.b16 %v7485
    %v8250 = vunpack.c.l.b16 %v7486
    %v8251 = vunpack.c.h.b16 %v7486
    %v8252 = vunpack.c.l.b16 %v7487
    %v8253 = vunpack.c.h.b16 %v7487
    %v8254 = vunpack.c.l.b16 %v7488
    %v8255 = vunpack.c.h.b16 %v7488
    %v8256 = vunpack.c.l.b16 %v7489
    %v8257 = vunpack.c.h.b16 %v7489
    %v8258 = vunpack.c.l.b16 %v7490
    %v8259 = vunpack.c.h.b16 %v7490
    %v8260 = vunpack.c.l.b16 %v7491
    %v8261 = vunpack.c.h.b16 %v7491
    %v8262 = vunpack.c.l.b16 %v7492
    %v8263 = vunpack.c.h.b16 %v7492
    %v8264 = vunpack.c.l.b16 %v7493
    %v8265 = vunpack.c.h.b16 %v7493
    %v8266 = vunpack.c.l.b16 %v7494
    %v8267 = vunpack.c.h.b16 %v7494
    %v8268 = vunpack.c.l.b16 %v7495
    %v8269 = vunpack.c.h.b16 %v7495
    %v8270 = vunpack.c.l.b16 %v7496
    %v8271 = vunpack.c.h.b16 %v7496
    %v8272 = vunpack.c.l.b16 %v7497
    %v8273 = vunpack.c.h.b16 %v7497
    %v8274 = vunpack.c.l.b16 %v7498
    %v8275 = vunpack.c.h.b16 %v7498
    %v8276 = vunpack.c.l.b16 %v7499
    %v8277 = vunpack.c.h.b16 %v7499
    %v8278 = vpack.c.b16 %v7770, %v7766
    %v8279 = vpack.c.b16 %v7771, %v7767
    %v8280 = vpack.c.b16 %v7772, %v7768
    %v8281 = vpack.c.b16 %v7773, %v7769
    %v8282 = vpack.c.b16 %v7778, %v7774
    %v8283 = vpack.c.b16 %v7779, %v7775
    %v8284 = vpack.c.b16 %v7780, %v7776
    %v8285 = vpack.c.b16 %v7781, %v7777
    %v8286 = vpack.c.b16 %v7786, %v7782
    %v8287 = vpack.c.b16 %v7787, %v7783
    %v8288 = vpack.c.b16 %v7788, %v7784
    %v8289 = vpack.c.b16 %v7789, %v7785
    %v8290 = vpack.c.b16 %v7794, %v7790
    %v8291 = vpack.c.b16 %v7795, %v7791
    %v8292 = vpack.c.b16 %v7796, %v7792
    %v8293 = vpack.c.b16 %v7797, %v7793
    %v8294 = vpack.c.b16 %v7802, %v7798
    %v8295 = vpack.c.b16 %v7803, %v7799
    %v8296 = vpack.c.b16 %v7804, %v7800
    %v8297 = vpack.c.b16 %v7805, %v7801
    %v8298 = vpack.c.b16 %v7810, %v7806
    %v8299 = vpack.c.b16 %v7811, %v7807
    %v8300 = vpack.c.b16 %v7812, %v7808
    %v8301 = vpack.c.b16 %v7813, %v7809
    %v8302 = vpack.c.b16 %v7818, %v7814
    %v8303 = vpack.c.b16 %v7819, %v7815
    %v8304 = vpack.c.b16 %v7820, %v7816
    %v8305 = vpack.c.b16 %v7821, %v7817
    %v8306 = vpack.c.b16 %v7826, %v7822
    %v8307 = vpack.c.b16 %v7827, %v7823
    %v8308 = vpack.c.b16 %v7828, %v7824
    %v8309 = vpack.c.b16 %v7829, %v7825
    %v8310 = vpack.c.b16 %v7834, %v7830
    %v8311 = vpack.c.b16 %v7835, %v7831
    %v8312 = vpack.c.b16 %v7836, %v7832
    %v8313 = vpack.c.b16 %v7837, %v7833
    %v8314 = vpack.c.b16 %v7842, %v7838
    %v8315 = vpack.c.b16 %v7843, %v7839
    %v8316 = vpack.c.b16 %v7844, %v7840
    %v8317 = vpack.c.b16 %v7845, %v7841
    %v8318 = vpack.c.b16 %v7850, %v7846
    %v8319 = vpack.c.b16 %v7851, %v7847
    %v8320 = vpack.c.b16 %v7852, %v7848
    %v8321 = vpack.c.b16 %v7853, %v7849
    %v8322 = vpack.c.b16 %v7858, %v7854
    %v8323 = vpack.c.b16 %v7859, %v7855
    %v8324 = vpack.c.b16 %v7860, %v7856
    %v8325 = vpack.c.b16 %v7861, %v7857
    %v8326 = vpack.c.b16 %v7866, %v7862
    %v8327 = vpack.c.b16 %v7867, %v7863
    %v8328 = vpack.c.b16 %v7868, %v7864
    %v8329 = vpack.c.b16 %v7869, %v7865
    %v8330 = vpack.c.b16 %v7874, %v7870
    %v8331 = vpack.c.b16 %v7875, %v7871
    %v8332 = vpack.c.b16 %v7876, %v7872
    %v8333 = vpack.c.b16 %v7877, %v7873
    %v8334 = vpack.c.b16 %v7882, %v7878
    %v8335 = vpack.c.b16 %v7883, %v7879
    %v8336 = vpack.c.b16 %v7884, %v7880
    %v8337 = vpack.c.b16 %v7885, %v7881
    %v8338 = vpack.c.b16 %v7890, %v7886
    %v8339 = vpack.c.b16 %v7891, %v7887
    %v8340 = vpack.c.b16 %v7892, %v7888
    %v8341 = vpack.c.b16 %v7893, %v7889
    %v8342 = vpack.c.b16 %v7898, %v7894
    %v8343 = vpack.c.b16 %v7899, %v7895
    %v8344 = vpack.c.b16 %v7900, %v7896
    %v8345 = vpack.c.b16 %v7901, %v7897
    %v8346 = vpack.c.b16 %v7906, %v7902
    %v8347 = vpack.c.b16 %v7907, %v7903
    %v8348 = vpack.c.b16 %v7908, %v7904
    %v8349 = vpack.c.b16 %v7909, %v7905
    %v8350 = vpack.c.b16 %v7914, %v7910
    %v8351 = vpack.c.b16 %v7915, %v7911
    %v8352 = vpack.c.b16 %v7916, %v7912
    %v8353 = vpack.c.b16 %v7917, %v7913
    %v8354 = vpack.c.b16 %v7922, %v7918
    %v8355 = vpack.c.b16 %v7923, %v7919
    %v8356 = vpack.c.b16 %v7924, %v7920
    %v8357 = vpack.c.b16 %v7925, %v7921
    %v8358 = vpack.c.b16 %v7930, %v7926
    %v8359 = vpack.c.b16 %v7931, %v7927
    %v8360 = vpack.c.b16 %v7932, %v7928
    %v8361 = vpack.c.b16 %v7933, %v7929
    %v8362 = vpack.c.b16 %v7938, %v7934
    %v8363 = vpack.c.b16 %v7939, %v7935
    %v8364 = vpack.c.b16 %v7940, %v7936
    %v8365 = vpack.c.b16 %v7941, %v7937
    %v8366 = vpack.c.b16 %v7946, %v7942
    %v8367 = vpack.c.b16 %v7947, %v7943
    %v8368 = vpack.c.b16 %v7948, %v7944
    %v8369 = vpack.c.b16 %v7949, %v7945
    %v8370 = vpack.c.b16 %v7954, %v7950
    %v8371 = vpack.c.b16 %v7955, %v7951
    %v8372 = vpack.c.b16 %v7956, %v7952
    %v8373 = vpack.c.b16 %v7957, %v7953
    %v8374 = vpack.c.b16 %v7962, %v7958
    %v8375 = vpack.c.b16 %v7963, %v7959
    %v8376 = vpack.c.b16 %v7964, %v7960
    %v8377 = vpack.c.b16 %v7965, %v7961
    %v8378 = vpack.c.b16 %v7970, %v7966
    %v8379 = vpack.c.b16 %v7971, %v7967
    %v8380 = vpack.c.b16 %v7972, %v7968
    %v8381 = vpack.c.b16 %v7973, %v7969
    %v8382 = vpack.c.b16 %v7978, %v7974
    %v8383 = vpack.c.b16 %v7979, %v7975
    %v8384 = vpack.c.b16 %v7980, %v7976
    %v8385 = vpack.c.b16 %v7981, %v7977
    %v8386 = vpack.c.b16 %v7986, %v7982
    %v8387 = vpack.c.b16 %v7987, %v7983
    %v8388 = vpack.c.b16 %v7988, %v7984
    %v8389 = vpack.c.b16 %v7989, %v7985
    %v8390 = vpack.c.b16 %v7994, %v7990
    %v8391 = vpack.c.b16 %v7995, %v7991
    %v8392 = vpack.c.b16 %v7996, %v7992
    %v8393 = vpack.c.b16 %v7997, %v7993
    %v8394 = vpack.c.b16 %v8002, %v7998
    %v8395 = vpack.c.b16 %v8003, %v7999
    %v8396 = vpack.c.b16 %v8004, %v8000
    %v8397 = vpack.c.b16 %v8005, %v8001
    %v8398 = vpack.c.b16 %v8010, %v8006
    %v8399 = vpack.c.b16 %v8011, %v8007
    %v8400 = vpack.c.b16 %v8012, %v8008
    %v8401 = vpack.c.b16 %v8013, %v8009
    %v8402 = vpack.c.b16 %v8018, %v8014
    %v8403 = vpack.c.b16 %v8019, %v8015
    %v8404 = vpack.c.b16 %v8020, %v8016
    %v8405 = vpack.c.b16 %v8021, %v8017
    %v8406 = vpack.c.b16 %v8026, %v8022
    %v8407 = vpack.c.b16 %v8027, %v8023
    %v8408 = vpack.c.b16 %v8028, %v8024
    %v8409 = vpack.c.b16 %v8029, %v8025
    %v8410 = vpack.c.b16 %v8034, %v8030
    %v8411 = vpack.c.b16 %v8035, %v8031
    %v8412 = vpack.c.b16 %v8036, %v8032
    %v8413 = vpack.c.b16 %v8037, %v8033
    %v8414 = vpack.c.b16 %v8042, %v8038
    %v8415 = vpack.c.b16 %v8043, %v8039
    %v8416 = vpack.c.b16 %v8044, %v8040
    %v8417 = vpack.c.b16 %v8045, %v8041
    %v8418 = vpack.c.b16 %v8050, %v8046
    %v8419 = vpack.c.b16 %v8051, %v8047
    %v8420 = vpack.c.b16 %v8052, %v8048
    %v8421 = vpack.c.b16 %v8053, %v8049
    %v8422 = vpack.c.b16 %v8058, %v8054
    %v8423 = vpack.c.b16 %v8059, %v8055
    %v8424 = vpack.c.b16 %v8060, %v8056
    %v8425 = vpack.c.b16 %v8061, %v8057
    %v8426 = vpack.c.b16 %v8066, %v8062
    %v8427 = vpack.c.b16 %v8067, %v8063
    %v8428 = vpack.c.b16 %v8068, %v8064
    %v8429 = vpack.c.b16 %v8069, %v8065
    %v8430 = vpack.c.b16 %v8074, %v8070
    %v8431 = vpack.c.b16 %v8075, %v8071
    %v8432 = vpack.c.b16 %v8076, %v8072
    %v8433 = vpack.c.b16 %v8077, %v8073
    %v8434 = vpack.c.b16 %v8082, %v8078
    %v8435 = vpack.c.b16 %v8083, %v8079
    %v8436 = vpack.c.b16 %v8084, %v8080
    %v8437 = vpack.c.b16 %v8085, %v8081
    %v8438 = vpack.c.b16 %v8090, %v8086
    %v8439 = vpack.c.b16 %v8091, %v8087
    %v8440 = vpack.c.b16 %v8092, %v8088
    %v8441 = vpack.c.b16 %v8093, %v8089
    %v8442 = vpack.c.b16 %v8098, %v8094
    %v8443 = vpack.c.b16 %v8099, %v8095
    %v8444 = vpack.c.b16 %v8100, %v8096
    %v8445 = vpack.c.b16 %v8101, %v8097
    %v8446 = vpack.c.b16 %v8106, %v8102
    %v8447 = vpack.c.b16 %v8107, %v8103
    %v8448 = vpack.c.b16 %v8108, %v8104
    %v8449 = vpack.c.b16 %v8109, %v8105
    %v8450 = vpack.c.b16 %v8114, %v8110
    %v8451 = vpack.c.b16 %v8115, %v8111
    %v8452 = vpack.c.b16 %v8116, %v8112
    %v8453 = vpack.c.b16 %v8117, %v8113
    %v8454 = vpack.c.b16 %v8122, %v8118
    %v8455 = vpack.c.b16 %v8123, %v8119
    %v8456 = vpack.c.b16 %v8124, %v8120
    %v8457 = vpack.c.b16 %v8125, %v8121
    %v8458 = vpack.c.b16 %v8130, %v8126
    %v8459 = vpack.c.b16 %v8131, %v8127
    %v8460 = vpack.c.b16 %v8132, %v8128
    %v8461 = vpack.c.b16 %v8133, %v8129
    %v8462 = vpack.c.b16 %v8138, %v8134
    %v8463 = vpack.c.b16 %v8139, %v8135
    %v8464 = vpack.c.b16 %v8140, %v8136
    %v8465 = vpack.c.b16 %v8141, %v8137
    %v8466 = vpack.c.b16 %v8146, %v8142
    %v8467 = vpack.c.b16 %v8147, %v8143
    %v8468 = vpack.c.b16 %v8148, %v8144
    %v8469 = vpack.c.b16 %v8149, %v8145
    %v8470 = vpack.c.b16 %v8154, %v8150
    %v8471 = vpack.c.b16 %v8155, %v8151
    %v8472 = vpack.c.b16 %v8156, %v8152
    %v8473 = vpack.c.b16 %v8157, %v8153
    %v8474 = vpack.c.b16 %v8162, %v8158
    %v8475 = vpack.c.b16 %v8163, %v8159
    %v8476 = vpack.c.b16 %v8164, %v8160
    %v8477 = vpack.c.b16 %v8165, %v8161
    %v8478 = vpack.c.b16 %v8170, %v8166
    %v8479 = vpack.c.b16 %v8171, %v8167
    %v8480 = vpack.c.b16 %v8172, %v8168
    %v8481 = vpack.c.b16 %v8173, %v8169
    %v8482 = vpack.c.b16 %v8178, %v8174
    %v8483 = vpack.c.b16 %v8179, %v8175
    %v8484 = vpack.c.b16 %v8180, %v8176
    %v8485 = vpack.c.b16 %v8181, %v8177
    %v8486 = vpack.c.b16 %v8186, %v8182
    %v8487 = vpack.c.b16 %v8187, %v8183
    %v8488 = vpack.c.b16 %v8188, %v8184
    %v8489 = vpack.c.b16 %v8189, %v8185
    %v8490 = vpack.c.b16 %v8194, %v8190
    %v8491 = vpack.c.b16 %v8195, %v8191
    %v8492 = vpack.c.b16 %v8196, %v8192
    %v8493 = vpack.c.b16 %v8197, %v8193
    %v8494 = vpack.c.b16 %v8202, %v8198
    %v8495 = vpack.c.b16 %v8203, %v8199
    %v8496 = vpack.c.b16 %v8204, %v8200
    %v8497 = vpack.c.b16 %v8205, %v8201
    %v8498 = vpack.c.b16 %v8210, %v8206
    %v8499 = vpack.c.b16 %v8211, %v8207
    %v8500 = vpack.c.b16 %v8212, %v8208
    %v8501 = vpack.c.b16 %v8213, %v8209
    %v8502 = vpack.c.b16 %v8218, %v8214
    %v8503 = vpack.c.b16 %v8219, %v8215
    %v8504 = vpack.c.b16 %v8220, %v8216
    %v8505 = vpack.c.b16 %v8221, %v8217
    %v8506 = vpack.c.b16 %v8226, %v8222
    %v8507 = vpack.c.b16 %v8227, %v8223
    %v8508 = vpack.c.b16 %v8228, %v8224
    %v8509 = vpack.c.b16 %v8229, %v8225
    %v8510 = vpack.c.b16 %v8234, %v8230
    %v8511 = vpack.c.b16 %v8235, %v8231
    %v8512 = vpack.c.b16 %v8236, %v8232
    %v8513 = vpack.c.b16 %v8237, %v8233
    %v8514 = vpack.c.b16 %v8242, %v8238
    %v8515 = vpack.c.b16 %v8243, %v8239
    %v8516 = vpack.c.b16 %v8244, %v8240
    %v8517 = vpack.c.b16 %v8245, %v8241
    %v8518 = vpack.c.b16 %v8250, %v8246
    %v8519 = vpack.c.b16 %v8251, %v8247
    %v8520 = vpack.c.b16 %v8252, %v8248
    %v8521 = vpack.c.b16 %v8253, %v8249
    %v8522 = vpack.c.b16 %v8258, %v8254
    %v8523 = vpack.c.b16 %v8259, %v8255
    %v8524 = vpack.c.b16 %v8260, %v8256
    %v8525 = vpack.c.b16 %v8261, %v8257
    %v8526 = vpack.c.b16 %v8266, %v8262
    %v8527 = vpack.c.b16 %v8267, %v8263
    %v8528 = vpack.c.b16 %v8268, %v8264
    %v8529 = vpack.c.b16 %v8269, %v8265
    %v8530 = vpack.c.b16 %v8274, %v8270
    %v8531 = vpack.c.b16 %v8275, %v8271
    %v8532 = vpack.c.b16 %v8276, %v8272
    %v8533 = vpack.c.b16 %v8277, %v8273
    %8790 = vmatpush.bf16.msra.mxu0 %v8306
    %8791 = vmatpush.bf16.msra.mxu0 %v8302
    %8792 = vmatpush.bf16.msra.mxu0 %v8298
    %8793 = vmatpush.bf16.msra.mxu0 %v8294
    %8794 = vmatpush.bf16.msra.mxu0 %v8290
    %8795 = vmatpush.bf16.msra.mxu0 %v8286
    %8796 = vmatpush.bf16.msra.mxu0 %v8282
    %8797 = vmatpush.bf16.msra.mxu0 %v8278
    %8798 = vmatmul.bf16.gmra.mxu0 %v7236
    %v8799 = vpop.f32.mrf.mxu0
    %v8800 = vadd.f32 %v7502, %v8799
    %v8801 = vpop.f32.mrf.mxu0
    %8802 = vdwg.mxu0
    %8803 = vmatpush.bf16.msra.mxu0 %v8338
    %8804 = vmatpush.bf16.msra.mxu0 %v8334
    %8805 = vmatpush.bf16.msra.mxu0 %v8330
    %8806 = vmatpush.bf16.msra.mxu0 %v8326
    %8807 = vmatpush.bf16.msra.mxu0 %v8322
    %8808 = vmatpush.bf16.msra.mxu0 %v8318
    %8809 = vmatpush.bf16.msra.mxu0 %v8314
    %8810 = vmatpush.bf16.msra.mxu0 %v8310
    %8811 = vmatmul.bf16.gmra.mxu0 %v7237
    %v8812 = vpop.f32.mrf.mxu0
    %v8813 = vadd.f32 %v8800, %v8812
    %v8814 = vpop.f32.mrf.mxu0
    %8815 = vdwg.mxu0
    %8816 = vmatpush.bf16.msra.mxu0 %v8370
    %8817 = vmatpush.bf16.msra.mxu0 %v8366
    %8818 = vmatpush.bf16.msra.mxu0 %v8362
    %8819 = vmatpush.bf16.msra.mxu0 %v8358
    %8820 = vmatpush.bf16.msra.mxu0 %v8354
    %8821 = vmatpush.bf16.msra.mxu0 %v8350
    %8822 = vmatpush.bf16.msra.mxu0 %v8346
    %8823 = vmatpush.bf16.msra.mxu0 %v8342
    %8824 = vmatmul.bf16.gmra.mxu0 %v7238
    %v8825 = vpop.f32.mrf.mxu0
    %v8826 = vadd.f32 %v8813, %v8825
    %v8827 = vpop.f32.mrf.mxu0
    %8828 = vdwg.mxu0
    %8829 = vmatpush.bf16.msra.mxu0 %v8402
    %8830 = vmatpush.bf16.msra.mxu0 %v8398
    %8831 = vmatpush.bf16.msra.mxu0 %v8394
    %8832 = vmatpush.bf16.msra.mxu0 %v8390
    %8833 = vmatpush.bf16.msra.mxu0 %v8386
    %8834 = vmatpush.bf16.msra.mxu0 %v8382
    %8835 = vmatpush.bf16.msra.mxu0 %v8378
    %8836 = vmatpush.bf16.msra.mxu0 %v8374
    %8837 = vmatmul.bf16.gmra.mxu0 %v7239
    %v8838 = vpop.f32.mrf.mxu0
    %v8839 = vadd.f32 %v8826, %v8838
    %v8840 = vpop.f32.mrf.mxu0
    %8841 = vdwg.mxu0
    %8842 = vmatpush.bf16.msra.mxu0 %v8434
    %8843 = vmatpush.bf16.msra.mxu0 %v8430
    %8844 = vmatpush.bf16.msra.mxu0 %v8426
    %8845 = vmatpush.bf16.msra.mxu0 %v8422
    %8846 = vmatpush.bf16.msra.mxu0 %v8418
    %8847 = vmatpush.bf16.msra.mxu0 %v8414
    %8848 = vmatpush.bf16.msra.mxu0 %v8410
    %8849 = vmatpush.bf16.msra.mxu0 %v8406
    %8850 = vmatmul.bf16.gmra.mxu0 %v7240
    %v8851 = vpop.f32.mrf.mxu0
    %v8852 = vadd.f32 %v8839, %v8851
    %v8853 = vpop.f32.mrf.mxu0
    %8854 = vdwg.mxu0
    %8855 = vmatpush.bf16.msra.mxu0 %v8466
    %8856 = vmatpush.bf16.msra.mxu0 %v8462
    %8857 = vmatpush.bf16.msra.mxu0 %v8458
    %8858 = vmatpush.bf16.msra.mxu0 %v8454
    %8859 = vmatpush.bf16.msra.mxu0 %v8450
    %8860 = vmatpush.bf16.msra.mxu0 %v8446
    %8861 = vmatpush.bf16.msra.mxu0 %v8442
    %8862 = vmatpush.bf16.msra.mxu0 %v8438
    %8863 = vmatmul.bf16.gmra.mxu0 %v7241
    %v8864 = vpop.f32.mrf.mxu0
    %v8865 = vadd.f32 %v8852, %v8864
    %v8866 = vpop.f32.mrf.mxu0
    %8867 = vdwg.mxu0
    %8868 = vmatpush.bf16.msra.mxu0 %v8498
    %8869 = vmatpush.bf16.msra.mxu0 %v8494
    %8870 = vmatpush.bf16.msra.mxu0 %v8490
    %8871 = vmatpush.bf16.msra.mxu0 %v8486
    %8872 = vmatpush.bf16.msra.mxu0 %v8482
    %8873 = vmatpush.bf16.msra.mxu0 %v8478
    %8874 = vmatpush.bf16.msra.mxu0 %v8474
    %8875 = vmatpush.bf16.msra.mxu0 %v8470
    %8876 = vmatmul.bf16.gmra.mxu0 %v7242
    %v8877 = vpop.f32.mrf.mxu0
    %v8878 = vadd.f32 %v8865, %v8877
    %v8879 = vpop.f32.mrf.mxu0
    %8880 = vdwg.mxu0
    %8881 = vmatpush.bf16.msra.mxu0 %v8530
    %8882 = vmatpush.bf16.msra.mxu0 %v8526
    %8883 = vmatpush.bf16.msra.mxu0 %v8522
    %8884 = vmatpush.bf16.msra.mxu0 %v8518
    %8885 = vmatpush.bf16.msra.mxu0 %v8514
    %8886 = vmatpush.bf16.msra.mxu0 %v8510
    %8887 = vmatpush.bf16.msra.mxu0 %v8506
    %8888 = vmatpush.bf16.msra.mxu0 %v8502
    %8889 = vmatmul.bf16.gmra.mxu0 %v7243
    %v8890 = vpop.f32.mrf.mxu0
    %v8891 = vadd.f32 %v8878, %v8890
    %v8892 = vpop.f32.mrf.mxu0
    %8893 = vdwg.mxu0
    %8894 = vmatpush.bf16.msra.mxu0 %v8307
    %8895 = vmatpush.bf16.msra.mxu0 %v8303
    %8896 = vmatpush.bf16.msra.mxu0 %v8299
    %8897 = vmatpush.bf16.msra.mxu0 %v8295
    %8898 = vmatpush.bf16.msra.mxu0 %v8291
    %8899 = vmatpush.bf16.msra.mxu0 %v8287
    %8900 = vmatpush.bf16.msra.mxu0 %v8283
    %8901 = vmatpush.bf16.msra.mxu0 %v8279
    %8902 = vmatmul.bf16.gmra.mxu0 %v7236
    %v8903 = vpop.f32.mrf.mxu0
    %v8904 = vadd.f32 %v7503, %v8903
    %v8905 = vpop.f32.mrf.mxu0
    %8906 = vdwg.mxu0
    %8907 = vmatpush.bf16.msra.mxu0 %v8339
    %8908 = vmatpush.bf16.msra.mxu0 %v8335
    %8909 = vmatpush.bf16.msra.mxu0 %v8331
    %8910 = vmatpush.bf16.msra.mxu0 %v8327
    %8911 = vmatpush.bf16.msra.mxu0 %v8323
    %8912 = vmatpush.bf16.msra.mxu0 %v8319
    %8913 = vmatpush.bf16.msra.mxu0 %v8315
    %8914 = vmatpush.bf16.msra.mxu0 %v8311
    %8915 = vmatmul.bf16.gmra.mxu0 %v7237
    %v8916 = vpop.f32.mrf.mxu0
    %v8917 = vadd.f32 %v8904, %v8916
    %v8918 = vpop.f32.mrf.mxu0
    %8919 = vdwg.mxu0
    %8920 = vmatpush.bf16.msra.mxu0 %v8371
    %8921 = vmatpush.bf16.msra.mxu0 %v8367
    %8922 = vmatpush.bf16.msra.mxu0 %v8363
    %8923 = vmatpush.bf16.msra.mxu0 %v8359
    %8924 = vmatpush.bf16.msra.mxu0 %v8355
    %8925 = vmatpush.bf16.msra.mxu0 %v8351
    %8926 = vmatpush.bf16.msra.mxu0 %v8347
    %8927 = vmatpush.bf16.msra.mxu0 %v8343
    %8928 = vmatmul.bf16.gmra.mxu0 %v7238
    %v8929 = vpop.f32.mrf.mxu0
    %v8930 = vadd.f32 %v8917, %v8929
    %v8931 = vpop.f32.mrf.mxu0
    %8932 = vdwg.mxu0
    %8933 = vmatpush.bf16.msra.mxu0 %v8403
    %8934 = vmatpush.bf16.msra.mxu0 %v8399
    %8935 = vmatpush.bf16.msra.mxu0 %v8395
    %8936 = vmatpush.bf16.msra.mxu0 %v8391
    %8937 = vmatpush.bf16.msra.mxu0 %v8387
    %8938 = vmatpush.bf16.msra.mxu0 %v8383
    %8939 = vmatpush.bf16.msra.mxu0 %v8379
    %8940 = vmatpush.bf16.msra.mxu0 %v8375
    %8941 = vmatmul.bf16.gmra.mxu0 %v7239
    %v8942 = vpop.f32.mrf.mxu0
    %v8943 = vadd.f32 %v8930, %v8942
    %v8944 = vpop.f32.mrf.mxu0
    %8945 = vdwg.mxu0
    %8946 = vmatpush.bf16.msra.mxu0 %v8435
    %8947 = vmatpush.bf16.msra.mxu0 %v8431
    %8948 = vmatpush.bf16.msra.mxu0 %v8427
    %8949 = vmatpush.bf16.msra.mxu0 %v8423
    %8950 = vmatpush.bf16.msra.mxu0 %v8419
    %8951 = vmatpush.bf16.msra.mxu0 %v8415
    %8952 = vmatpush.bf16.msra.mxu0 %v8411
    %8953 = vmatpush.bf16.msra.mxu0 %v8407
    %8954 = vmatmul.bf16.gmra.mxu0 %v7240
    %v8955 = vpop.f32.mrf.mxu0
    %v8956 = vadd.f32 %v8943, %v8955
    %v8957 = vpop.f32.mrf.mxu0
    %8958 = vdwg.mxu0
    %8959 = vmatpush.bf16.msra.mxu0 %v8467
    %8960 = vmatpush.bf16.msra.mxu0 %v8463
    %8961 = vmatpush.bf16.msra.mxu0 %v8459
    %8962 = vmatpush.bf16.msra.mxu0 %v8455
    %8963 = vmatpush.bf16.msra.mxu0 %v8451
    %8964 = vmatpush.bf16.msra.mxu0 %v8447
    %8965 = vmatpush.bf16.msra.mxu0 %v8443
    %8966 = vmatpush.bf16.msra.mxu0 %v8439
    %8967 = vmatmul.bf16.gmra.mxu0 %v7241
    %v8968 = vpop.f32.mrf.mxu0
    %v8969 = vadd.f32 %v8956, %v8968
    %v8970 = vpop.f32.mrf.mxu0
    %8971 = vdwg.mxu0
    %8972 = vmatpush.bf16.msra.mxu0 %v8499
    %8973 = vmatpush.bf16.msra.mxu0 %v8495
    %8974 = vmatpush.bf16.msra.mxu0 %v8491
    %8975 = vmatpush.bf16.msra.mxu0 %v8487
    %8976 = vmatpush.bf16.msra.mxu0 %v8483
    %8977 = vmatpush.bf16.msra.mxu0 %v8479
    %8978 = vmatpush.bf16.msra.mxu0 %v8475
    %8979 = vmatpush.bf16.msra.mxu0 %v8471
    %8980 = vmatmul.bf16.gmra.mxu0 %v7242
    %v8981 = vpop.f32.mrf.mxu0
    %v8982 = vadd.f32 %v8969, %v8981
    %v8983 = vpop.f32.mrf.mxu0
    %8984 = vdwg.mxu0
    %8985 = vmatpush.bf16.msra.mxu0 %v8531
    %8986 = vmatpush.bf16.msra.mxu0 %v8527
    %8987 = vmatpush.bf16.msra.mxu0 %v8523
    %8988 = vmatpush.bf16.msra.mxu0 %v8519
    %8989 = vmatpush.bf16.msra.mxu0 %v8515
    %8990 = vmatpush.bf16.msra.mxu0 %v8511
    %8991 = vmatpush.bf16.msra.mxu0 %v8507
    %8992 = vmatpush.bf16.msra.mxu0 %v8503
    %8993 = vmatmul.bf16.gmra.mxu0 %v7243
    %v8994 = vpop.f32.mrf.mxu0
    %v8995 = vadd.f32 %v8982, %v8994
    %v8996 = vpop.f32.mrf.mxu0
    %8997 = vdwg.mxu0
    %8998 = vmatpush.bf16.msra.mxu0 %v8308
    %8999 = vmatpush.bf16.msra.mxu0 %v8304
    %9000 = vmatpush.bf16.msra.mxu0 %v8300
    %9001 = vmatpush.bf16.msra.mxu0 %v8296
    %9002 = vmatpush.bf16.msra.mxu0 %v8292
    %9003 = vmatpush.bf16.msra.mxu0 %v8288
    %9004 = vmatpush.bf16.msra.mxu0 %v8284
    %9005 = vmatpush.bf16.msra.mxu0 %v8280
    %9006 = vmatmul.bf16.gmra.mxu0 %v7236
    %v9007 = vpop.f32.mrf.mxu0
    %v9008 = vadd.f32 %v7504, %v9007
    %v9009 = vpop.f32.mrf.mxu0
    %9010 = vdwg.mxu0
    %9011 = vmatpush.bf16.msra.mxu0 %v8340
    %9012 = vmatpush.bf16.msra.mxu0 %v8336
    %9013 = vmatpush.bf16.msra.mxu0 %v8332
    %9014 = vmatpush.bf16.msra.mxu0 %v8328
    %9015 = vmatpush.bf16.msra.mxu0 %v8324
    %9016 = vmatpush.bf16.msra.mxu0 %v8320
    %9017 = vmatpush.bf16.msra.mxu0 %v8316
    %9018 = vmatpush.bf16.msra.mxu0 %v8312
    %9019 = vmatmul.bf16.gmra.mxu0 %v7237
    %v9020 = vpop.f32.mrf.mxu0
    %v9021 = vadd.f32 %v9008, %v9020
    %v9022 = vpop.f32.mrf.mxu0
    %9023 = vdwg.mxu0
    %9024 = vmatpush.bf16.msra.mxu0 %v8372
    %9025 = vmatpush.bf16.msra.mxu0 %v8368
    %9026 = vmatpush.bf16.msra.mxu0 %v8364
    %9027 = vmatpush.bf16.msra.mxu0 %v8360
    %9028 = vmatpush.bf16.msra.mxu0 %v8356
    %9029 = vmatpush.bf16.msra.mxu0 %v8352
    %9030 = vmatpush.bf16.msra.mxu0 %v8348
    %9031 = vmatpush.bf16.msra.mxu0 %v8344
    %9032 = vmatmul.bf16.gmra.mxu0 %v7238
    %v9033 = vpop.f32.mrf.mxu0
    %v9034 = vadd.f32 %v9021, %v9033
    %v9035 = vpop.f32.mrf.mxu0
    %9036 = vdwg.mxu0
    %9037 = vmatpush.bf16.msra.mxu0 %v8404
    %9038 = vmatpush.bf16.msra.mxu0 %v8400
    %9039 = vmatpush.bf16.msra.mxu0 %v8396
    %9040 = vmatpush.bf16.msra.mxu0 %v8392
    %9041 = vmatpush.bf16.msra.mxu0 %v8388
    %9042 = vmatpush.bf16.msra.mxu0 %v8384
    %9043 = vmatpush.bf16.msra.mxu0 %v8380
    %9044 = vmatpush.bf16.msra.mxu0 %v8376
    %9045 = vmatmul.bf16.gmra.mxu0 %v7239
    %v9046 = vpop.f32.mrf.mxu0
    %v9047 = vadd.f32 %v9034, %v9046
    %v9048 = vpop.f32.mrf.mxu0
    %9049 = vdwg.mxu0
    %9050 = vmatpush.bf16.msra.mxu0 %v8436
    %9051 = vmatpush.bf16.msra.mxu0 %v8432
    %9052 = vmatpush.bf16.msra.mxu0 %v8428
    %9053 = vmatpush.bf16.msra.mxu0 %v8424
    %9054 = vmatpush.bf16.msra.mxu0 %v8420
    %9055 = vmatpush.bf16.msra.mxu0 %v8416
    %9056 = vmatpush.bf16.msra.mxu0 %v8412
    %9057 = vmatpush.bf16.msra.mxu0 %v8408
    %9058 = vmatmul.bf16.gmra.mxu0 %v7240
    %v9059 = vpop.f32.mrf.mxu0
    %v9060 = vadd.f32 %v9047, %v9059
    %v9061 = vpop.f32.mrf.mxu0
    %9062 = vdwg.mxu0
    %9063 = vmatpush.bf16.msra.mxu0 %v8468
    %9064 = vmatpush.bf16.msra.mxu0 %v8464
    %9065 = vmatpush.bf16.msra.mxu0 %v8460
    %9066 = vmatpush.bf16.msra.mxu0 %v8456
    %9067 = vmatpush.bf16.msra.mxu0 %v8452
    %9068 = vmatpush.bf16.msra.mxu0 %v8448
    %9069 = vmatpush.bf16.msra.mxu0 %v8444
    %9070 = vmatpush.bf16.msra.mxu0 %v8440
    %9071 = vmatmul.bf16.gmra.mxu0 %v7241
    %v9072 = vpop.f32.mrf.mxu0
    %v9073 = vadd.f32 %v9060, %v9072
    %v9074 = vpop.f32.mrf.mxu0
    %9075 = vdwg.mxu0
    %9076 = vmatpush.bf16.msra.mxu0 %v8500
    %9077 = vmatpush.bf16.msra.mxu0 %v8496
    %9078 = vmatpush.bf16.msra.mxu0 %v8492
    %9079 = vmatpush.bf16.msra.mxu0 %v8488
    %9080 = vmatpush.bf16.msra.mxu0 %v8484
    %9081 = vmatpush.bf16.msra.mxu0 %v8480
    %9082 = vmatpush.bf16.msra.mxu0 %v8476
    %9083 = vmatpush.bf16.msra.mxu0 %v8472
    %9084 = vmatmul.bf16.gmra.mxu0 %v7242
    %v9085 = vpop.f32.mrf.mxu0
    %v9086 = vadd.f32 %v9073, %v9085
    %v9087 = vpop.f32.mrf.mxu0
    %9088 = vdwg.mxu0
    %9089 = vmatpush.bf16.msra.mxu0 %v8532
    %9090 = vmatpush.bf16.msra.mxu0 %v8528
    %9091 = vmatpush.bf16.msra.mxu0 %v8524
    %9092 = vmatpush.bf16.msra.mxu0 %v8520
    %9093 = vmatpush.bf16.msra.mxu0 %v8516
    %9094 = vmatpush.bf16.msra.mxu0 %v8512
    %9095 = vmatpush.bf16.msra.mxu0 %v8508
    %9096 = vmatpush.bf16.msra.mxu0 %v8504
    %9097 = vmatmul.bf16.gmra.mxu0 %v7243
    %v9098 = vpop.f32.mrf.mxu0
    %v9099 = vadd.f32 %v9086, %v9098
    %v9100 = vpop.f32.mrf.mxu0
    %9101 = vdwg.mxu0
    %9102 = vmatpush.bf16.msra.mxu0 %v8309
    %9103 = vmatpush.bf16.msra.mxu0 %v8305
    %9104 = vmatpush.bf16.msra.mxu0 %v8301
    %9105 = vmatpush.bf16.msra.mxu0 %v8297
    %9106 = vmatpush.bf16.msra.mxu0 %v8293
    %9107 = vmatpush.bf16.msra.mxu0 %v8289
    %9108 = vmatpush.bf16.msra.mxu0 %v8285
    %9109 = vmatpush.bf16.msra.mxu0 %v8281
    %9110 = vmatmul.bf16.gmra.mxu0 %v7236
    %v9111 = vpop.f32.mrf.mxu0
    %v9112 = vadd.f32 %v7505, %v9111
    %v9113 = vpop.f32.mrf.mxu0
    %9114 = vdwg.mxu0
    %9115 = vmatpush.bf16.msra.mxu0 %v8341
    %9116 = vmatpush.bf16.msra.mxu0 %v8337
    %9117 = vmatpush.bf16.msra.mxu0 %v8333
    %9118 = vmatpush.bf16.msra.mxu0 %v8329
    %9119 = vmatpush.bf16.msra.mxu0 %v8325
    %9120 = vmatpush.bf16.msra.mxu0 %v8321
    %9121 = vmatpush.bf16.msra.mxu0 %v8317
    %9122 = vmatpush.bf16.msra.mxu0 %v8313
    %9123 = vmatmul.bf16.gmra.mxu0 %v7237
    %v9124 = vpop.f32.mrf.mxu0
    %v9125 = vadd.f32 %v9112, %v9124
    %v9126 = vpop.f32.mrf.mxu0
    %9127 = vdwg.mxu0
    %9128 = vmatpush.bf16.msra.mxu0 %v8373
    %9129 = vmatpush.bf16.msra.mxu0 %v8369
    %9130 = vmatpush.bf16.msra.mxu0 %v8365
    %9131 = vmatpush.bf16.msra.mxu0 %v8361
    %9132 = vmatpush.bf16.msra.mxu0 %v8357
    %9133 = vmatpush.bf16.msra.mxu0 %v8353
    %9134 = vmatpush.bf16.msra.mxu0 %v8349
    %9135 = vmatpush.bf16.msra.mxu0 %v8345
    %9136 = vmatmul.bf16.gmra.mxu0 %v7238
    %v9137 = vpop.f32.mrf.mxu0
    %v9138 = vadd.f32 %v9125, %v9137
    %v9139 = vpop.f32.mrf.mxu0
    %9140 = vdwg.mxu0
    %9141 = vmatpush.bf16.msra.mxu0 %v8405
    %9142 = vmatpush.bf16.msra.mxu0 %v8401
    %9143 = vmatpush.bf16.msra.mxu0 %v8397
    %9144 = vmatpush.bf16.msra.mxu0 %v8393
    %9145 = vmatpush.bf16.msra.mxu0 %v8389
    %9146 = vmatpush.bf16.msra.mxu0 %v8385
    %9147 = vmatpush.bf16.msra.mxu0 %v8381
    %9148 = vmatpush.bf16.msra.mxu0 %v8377
    %9149 = vmatmul.bf16.gmra.mxu0 %v7239
    %v9150 = vpop.f32.mrf.mxu0
    %v9151 = vadd.f32 %v9138, %v9150
    %v9152 = vpop.f32.mrf.mxu0
    %9153 = vdwg.mxu0
    %9154 = vmatpush.bf16.msra.mxu0 %v8437
    %9155 = vmatpush.bf16.msra.mxu0 %v8433
    %9156 = vmatpush.bf16.msra.mxu0 %v8429
    %9157 = vmatpush.bf16.msra.mxu0 %v8425
    %9158 = vmatpush.bf16.msra.mxu0 %v8421
    %9159 = vmatpush.bf16.msra.mxu0 %v8417
    %9160 = vmatpush.bf16.msra.mxu0 %v8413
    %9161 = vmatpush.bf16.msra.mxu0 %v8409
    %9162 = vmatmul.bf16.gmra.mxu0 %v7240
    %v9163 = vpop.f32.mrf.mxu0
    %v9164 = vadd.f32 %v9151, %v9163
    %v9165 = vpop.f32.mrf.mxu0
    %9166 = vdwg.mxu0
    %9167 = vmatpush.bf16.msra.mxu0 %v8469
    %9168 = vmatpush.bf16.msra.mxu0 %v8465
    %9169 = vmatpush.bf16.msra.mxu0 %v8461
    %9170 = vmatpush.bf16.msra.mxu0 %v8457
    %9171 = vmatpush.bf16.msra.mxu0 %v8453
    %9172 = vmatpush.bf16.msra.mxu0 %v8449
    %9173 = vmatpush.bf16.msra.mxu0 %v8445
    %9174 = vmatpush.bf16.msra.mxu0 %v8441
    %9175 = vmatmul.bf16.gmra.mxu0 %v7241
    %v9176 = vpop.f32.mrf.mxu0
    %v9177 = vadd.f32 %v9164, %v9176
    %v9178 = vpop.f32.mrf.mxu0
    %9179 = vdwg.mxu0
    %9180 = vmatpush.bf16.msra.mxu0 %v8501
    %9181 = vmatpush.bf16.msra.mxu0 %v8497
    %9182 = vmatpush.bf16.msra.mxu0 %v8493
    %9183 = vmatpush.bf16.msra.mxu0 %v8489
    %9184 = vmatpush.bf16.msra.mxu0 %v8485
    %9185 = vmatpush.bf16.msra.mxu0 %v8481
    %9186 = vmatpush.bf16.msra.mxu0 %v8477
    %9187 = vmatpush.bf16.msra.mxu0 %v8473
    %9188 = vmatmul.bf16.gmra.mxu0 %v7242
    %v9189 = vpop.f32.mrf.mxu0
    %v9190 = vadd.f32 %v9177, %v9189
    %v9191 = vpop.f32.mrf.mxu0
    %9192 = vdwg.mxu0
    %9193 = vmatpush.bf16.msra.mxu0 %v8533
    %9194 = vmatpush.bf16.msra.mxu0 %v8529
    %9195 = vmatpush.bf16.msra.mxu0 %v8525
    %9196 = vmatpush.bf16.msra.mxu0 %v8521
    %9197 = vmatpush.bf16.msra.mxu0 %v8517
    %9198 = vmatpush.bf16.msra.mxu0 %v8513
    %9199 = vmatpush.bf16.msra.mxu0 %v8509
    %9200 = vmatpush.bf16.msra.mxu0 %v8505
    %9201 = vmatmul.bf16.gmra.mxu0 %v7243
    %v9202 = vpop.f32.mrf.mxu0
    %v9203 = vadd.f32 %v9190, %v9202
    %v9204 = vpop.f32.mrf.mxu0
    %9205 = vdwg.mxu0
    %v9206 = vmax.f32 %v8891, 0.0
    %v9207 = vmax.f32 %v8995, 0.0
    %v9208 = vmax.f32 %v9099, 0.0
    %v9209 = vmax.f32 %v9203, 0.0
    %v9210 = vpack.c.bf16 %v9206, %v9206
    %v9211 = vpack.c.bf16 %v9207, %v9207
    %v9212 = vpack.c.bf16 %v9208, %v9208
    %v9213 = vpack.c.bf16 %v9209, %v9209
    %v9214 = vld [vmem:[#allocation7] sm:$0xf]
    %v9215 = vld [vmem:[#allocation7 + $0x4] sm:$0xf]
    %v9216 = vld [vmem:[#allocation7 + $0x8] sm:$0xf]
    %v9217 = vld [vmem:[#allocation7 + $0xc] sm:$0xf]
    %v9218 = vld [vmem:[#allocation7 + $0x10] sm:$0xf]
    %v9219 = vld [vmem:[#allocation7 + $0x14] sm:$0xf]
    %v9220 = vld [vmem:[#allocation7 + $0x18] sm:$0xf]
    %v9221 = vld [vmem:[#allocation7 + $0x1c] sm:$0xf]
    %v9222 = vld [vmem:[#allocation7 + $0x20] sm:$0xf]
    %v9223 = vld [vmem:[#allocation7 + $0x24] sm:$0xf]
    %v9224 = vld [vmem:[#allocation7 + $0x28] sm:$0xf]
    %v9225 = vld [vmem:[#allocation7 + $0x2c] sm:$0xf]
    %v9226 = vld [vmem:[#allocation7 + $0x30] sm:$0xf]
    %v9227 = vld [vmem:[#allocation7 + $0x34] sm:$0xf]
    %v9228 = vld [vmem:[#allocation7 + $0x38] sm:$0xf]
    %v9229 = vld [vmem:[#allocation7 + $0x3c] sm:$0xf]
    %v9230 = vld [vmem:[#allocation7 + $0x40] sm:$0xf]
    %v9231 = vld [vmem:[#allocation7 + $0x44] sm:$0xf]
    %v9232 = vld [vmem:[#allocation7 + $0x48] sm:$0xf]
    %v9233 = vld [vmem:[#allocation7 + $0x4c] sm:$0xf]
    %v9234 = vld [vmem:[#allocation7 + $0x50] sm:$0xf]
    %v9235 = vld [vmem:[#allocation7 + $0x54] sm:$0xf]
    %v9236 = vld [vmem:[#allocation7 + $0x58] sm:$0xf]
    %v9237 = vld [vmem:[#allocation7 + $0x5c] sm:$0xf]
    %v9238 = vld [vmem:[#allocation7 + $0x60] sm:$0xf]
    %v9239 = vld [vmem:[#allocation7 + $0x64] sm:$0xf]
    %v9240 = vld [vmem:[#allocation7 + $0x68] sm:$0xf]
    %v9241 = vld [vmem:[#allocation7 + $0x6c] sm:$0xf]
    %v9242 = vld [vmem:[#allocation7 + $0x70] sm:$0xf]
    %v9243 = vld [vmem:[#allocation7 + $0x74] sm:$0xf]
    %v9244 = vld [vmem:[#allocation7 + $0x78] sm:$0xf]
    %v9245 = vld [vmem:[#allocation7 + $0x7c] sm:$0xf]
    %v9246 = vld [vmem:[#allocation7 + $0x80] sm:$0xf]
    %v9247 = vld [vmem:[#allocation7 + $0x84] sm:$0xf]
    %v9248 = vld [vmem:[#allocation7 + $0x88] sm:$0xf]
    %v9249 = vld [vmem:[#allocation7 + $0x8c] sm:$0xf]
    %v9250 = vld [vmem:[#allocation7 + $0x90] sm:$0xf]
    %v9251 = vld [vmem:[#allocation7 + $0x94] sm:$0xf]
    %v9252 = vld [vmem:[#allocation7 + $0x98] sm:$0xf]
    %v9253 = vld [vmem:[#allocation7 + $0x9c] sm:$0xf]
    %v9254 = vld [vmem:[#allocation7 + $0xa0] sm:$0xf]
    %v9255 = vld [vmem:[#allocation7 + $0xa4] sm:$0xf]
    %v9256 = vld [vmem:[#allocation7 + $0xa8] sm:$0xf]
    %v9257 = vld [vmem:[#allocation7 + $0xac] sm:$0xf]
    %v9258 = vld [vmem:[#allocation7 + $0xb0] sm:$0xf]
    %v9259 = vld [vmem:[#allocation7 + $0xb4] sm:$0xf]
    %v9260 = vld [vmem:[#allocation7 + $0xb8] sm:$0xf]
    %v9261 = vld [vmem:[#allocation7 + $0xbc] sm:$0xf]
    %v9262 = vld [vmem:[#allocation7 + $0xc0] sm:$0xf]
    %v9263 = vld [vmem:[#allocation7 + $0xc4] sm:$0xf]
    %v9264 = vld [vmem:[#allocation7 + $0xc8] sm:$0xf]
    %v9265 = vld [vmem:[#allocation7 + $0xcc] sm:$0xf]
    %v9266 = vld [vmem:[#allocation7 + $0xd0] sm:$0xf]
    %v9267 = vld [vmem:[#allocation7 + $0xd4] sm:$0xf]
    %v9268 = vld [vmem:[#allocation7 + $0xd8] sm:$0xf]
    %v9269 = vld [vmem:[#allocation7 + $0xdc] sm:$0xf]
    %v9270 = vld [vmem:[#allocation7 + $0xe0] sm:$0xf]
    %v9271 = vld [vmem:[#allocation7 + $0xe4] sm:$0xf]
    %v9272 = vld [vmem:[#allocation7 + $0xe8] sm:$0xf]
    %v9273 = vld [vmem:[#allocation7 + $0xec] sm:$0xf]
    %v9274 = vld [vmem:[#allocation7 + $0xf0] sm:$0xf]
    %v9275 = vld [vmem:[#allocation7 + $0xf4] sm:$0xf]
    %v9276 = vld [vmem:[#allocation7 + $0xf8] sm:$0xf]
    %v9277 = vld [vmem:[#allocation7 + $0xfc] sm:$0xf]
    %v9278 = vld [vmem:[%s14] sm:$0x1]
    %v9280 = vperm.slane %v9278, 0
    %v9346 = vunpack.c.l.b16 %v9214
    %v9347 = vunpack.c.l.b16 %v9215
    %v9348 = vunpack.c.l.b16 %v9216
    %v9349 = vunpack.c.l.b16 %v9217
    %v9350 = vunpack.c.l.b16 %v9218
    %v9351 = vunpack.c.l.b16 %v9219
    %v9352 = vunpack.c.l.b16 %v9220
    %v9353 = vunpack.c.l.b16 %v9221
    %v9354 = vunpack.c.l.b16 %v9222
    %v9355 = vunpack.c.l.b16 %v9223
    %v9356 = vunpack.c.l.b16 %v9224
    %v9357 = vunpack.c.l.b16 %v9225
    %v9358 = vunpack.c.l.b16 %v9226
    %v9359 = vunpack.c.l.b16 %v9227
    %v9360 = vunpack.c.l.b16 %v9228
    %v9361 = vunpack.c.l.b16 %v9229
    %v9362 = vunpack.c.l.b16 %v9230
    %v9363 = vunpack.c.l.b16 %v9231
    %v9364 = vunpack.c.l.b16 %v9232
    %v9365 = vunpack.c.l.b16 %v9233
    %v9366 = vunpack.c.l.b16 %v9234
    %v9367 = vunpack.c.l.b16 %v9235
    %v9368 = vunpack.c.l.b16 %v9236
    %v9369 = vunpack.c.l.b16 %v9237
    %v9370 = vunpack.c.l.b16 %v9238
    %v9371 = vunpack.c.l.b16 %v9239
    %v9372 = vunpack.c.l.b16 %v9240
    %v9373 = vunpack.c.l.b16 %v9241
    %v9374 = vunpack.c.l.b16 %v9242
    %v9375 = vunpack.c.l.b16 %v9243
    %v9376 = vunpack.c.l.b16 %v9244
    %v9377 = vunpack.c.l.b16 %v9245
    %v9378 = vunpack.c.l.b16 %v9246
    %v9379 = vunpack.c.l.b16 %v9247
    %v9380 = vunpack.c.l.b16 %v9248
    %v9381 = vunpack.c.l.b16 %v9249
    %v9382 = vunpack.c.l.b16 %v9250
    %v9383 = vunpack.c.l.b16 %v9251
    %v9384 = vunpack.c.l.b16 %v9252
    %v9385 = vunpack.c.l.b16 %v9253
    %v9386 = vunpack.c.l.b16 %v9254
    %v9387 = vunpack.c.l.b16 %v9255
    %v9388 = vunpack.c.l.b16 %v9256
    %v9389 = vunpack.c.l.b16 %v9257
    %v9390 = vunpack.c.l.b16 %v9258
    %v9391 = vunpack.c.l.b16 %v9259
    %v9392 = vunpack.c.l.b16 %v9260
    %v9393 = vunpack.c.l.b16 %v9261
    %v9394 = vunpack.c.l.b16 %v9262
    %v9395 = vunpack.c.l.b16 %v9263
    %v9396 = vunpack.c.l.b16 %v9264
    %v9397 = vunpack.c.l.b16 %v9265
    %v9398 = vunpack.c.l.b16 %v9266
    %v9399 = vunpack.c.l.b16 %v9267
    %v9400 = vunpack.c.l.b16 %v9268
    %v9401 = vunpack.c.l.b16 %v9269
    %v9402 = vunpack.c.l.b16 %v9270
    %v9403 = vunpack.c.l.b16 %v9271
    %v9404 = vunpack.c.l.b16 %v9272
    %v9405 = vunpack.c.l.b16 %v9273
    %v9406 = vunpack.c.l.b16 %v9274
    %v9407 = vunpack.c.l.b16 %v9275
    %v9408 = vunpack.c.l.b16 %v9276
    %v9409 = vunpack.c.l.b16 %v9277
    %v9410 = vpack.c.b16 %v9347, %v9346
    %v9411 = vpack.c.b16 %v9349, %v9348
    %v9412 = vpack.c.b16 %v9351, %v9350
    %v9413 = vpack.c.b16 %v9353, %v9352
    %v9414 = vpack.c.b16 %v9355, %v9354
    %v9415 = vpack.c.b16 %v9357, %v9356
    %v9416 = vpack.c.b16 %v9359, %v9358
    %v9417 = vpack.c.b16 %v9361, %v9360
    %v9418 = vpack.c.b16 %v9363, %v9362
    %v9419 = vpack.c.b16 %v9365, %v9364
    %v9420 = vpack.c.b16 %v9367, %v9366
    %v9421 = vpack.c.b16 %v9369, %v9368
    %v9422 = vpack.c.b16 %v9371, %v9370
    %v9423 = vpack.c.b16 %v9373, %v9372
    %v9424 = vpack.c.b16 %v9375, %v9374
    %v9425 = vpack.c.b16 %v9377, %v9376
    %v9426 = vpack.c.b16 %v9379, %v9378
    %v9427 = vpack.c.b16 %v9381, %v9380
    %v9428 = vpack.c.b16 %v9383, %v9382
    %v9429 = vpack.c.b16 %v9385, %v9384
    %v9430 = vpack.c.b16 %v9387, %v9386
    %v9431 = vpack.c.b16 %v9389, %v9388
    %v9432 = vpack.c.b16 %v9391, %v9390
    %v9433 = vpack.c.b16 %v9393, %v9392
    %v9434 = vpack.c.b16 %v9395, %v9394
    %v9435 = vpack.c.b16 %v9397, %v9396
    %v9436 = vpack.c.b16 %v9399, %v9398
    %v9437 = vpack.c.b16 %v9401, %v9400
    %v9438 = vpack.c.b16 %v9403, %v9402
    %v9439 = vpack.c.b16 %v9405, %v9404
    %v9440 = vpack.c.b16 %v9407, %v9406
    %v9441 = vpack.c.b16 %v9409, %v9408
    %9474 = vmatpush.bf16.msra.mxu0 %v9417
    %9475 = vmatpush.bf16.msra.mxu0 %v9416
    %9476 = vmatpush.bf16.msra.mxu0 %v9415
    %9477 = vmatpush.bf16.msra.mxu0 %v9414
    %9478 = vmatpush.bf16.msra.mxu0 %v9413
    %9479 = vmatpush.bf16.msra.mxu0 %v9412
    %9480 = vmatpush.bf16.msra.mxu0 %v9411
    %9481 = vmatpush.bf16.msra.mxu0 %v9410
    %9482 = vmatmul.bf16.gmra.mxu0 %v9210
    %v9483 = vpop.f32.mrf.mxu0
    %v9484 = vadd.f32 %v9280, %v9483
    %v9485 = vpop.f32.mrf.mxu0
    %9486 = vdwg.mxu0
    %9487 = vmatpush.bf16.msra.mxu0 %v9425
    %9488 = vmatpush.bf16.msra.mxu0 %v9424
    %9489 = vmatpush.bf16.msra.mxu0 %v9423
    %9490 = vmatpush.bf16.msra.mxu0 %v9422
    %9491 = vmatpush.bf16.msra.mxu0 %v9421
    %9492 = vmatpush.bf16.msra.mxu0 %v9420
    %9493 = vmatpush.bf16.msra.mxu0 %v9419
    %9494 = vmatpush.bf16.msra.mxu0 %v9418
    %9495 = vmatmul.bf16.gmra.mxu0 %v9211
    %v9496 = vpop.f32.mrf.mxu0
    %v9497 = vadd.f32 %v9484, %v9496
    %v9498 = vpop.f32.mrf.mxu0
    %9499 = vdwg.mxu0
    %9500 = vmatpush.bf16.msra.mxu0 %v9433
    %9501 = vmatpush.bf16.msra.mxu0 %v9432
    %9502 = vmatpush.bf16.msra.mxu0 %v9431
    %9503 = vmatpush.bf16.msra.mxu0 %v9430
    %9504 = vmatpush.bf16.msra.mxu0 %v9429
    %9505 = vmatpush.bf16.msra.mxu0 %v9428
    %9506 = vmatpush.bf16.msra.mxu0 %v9427
    %9507 = vmatpush.bf16.msra.mxu0 %v9426
    %9508 = vmatmul.bf16.gmra.mxu0 %v9212
    %v9509 = vpop.f32.mrf.mxu0
    %v9510 = vadd.f32 %v9497, %v9509
    %v9511 = vpop.f32.mrf.mxu0
    %9512 = vdwg.mxu0
    %9513 = vmatpush.bf16.msra.mxu0 %v9441
    %9514 = vmatpush.bf16.msra.mxu0 %v9440
    %9515 = vmatpush.bf16.msra.mxu0 %v9439
    %9516 = vmatpush.bf16.msra.mxu0 %v9438
    %9517 = vmatpush.bf16.msra.mxu0 %v9437
    %9518 = vmatpush.bf16.msra.mxu0 %v9436
    %9519 = vmatpush.bf16.msra.mxu0 %v9435
    %9520 = vmatpush.bf16.msra.mxu0 %v9434
    %9521 = vmatmul.bf16.gmra.mxu0 %v9213
    %v9522 = vpop.f32.mrf.mxu0
    %v9523 = vadd.f32 %v9510, %v9522
    %v9524 = vpop.f32.mrf.mxu0
    %9525 = vdwg.mxu0
    %v9526 = vlaneseq
    %v9527 = vand.u32 %v9526, 127
    %vm9528 = vcmp.lt.s32.totalorder %v9527, 65
    %v9529 = vsel %vm9528, %v9523, -1e+30
    %9530 = vmax.xlane.f32.xlu0 %v9529
    %v9531 = vpop.xlane.xlu0 %9530
    %v9532 = vsub.f32 %v9529, %v9531
    %v9533 = vmul.f32 %v9532, 1.442695
    %v9534 = vpow.pop %v9533
    %9535 = vadd.xlane.f32.xlu0 %v9534
    %v9536 = vpop.xlane.xlu0 %9535
    %v9537 = vlog2.pop %v9536
    %v9538 = vmul.f32 %v9537, 0.6931472
    %v9539 = vadd.f32 %v9538, %v9531
    %v9540 = vsub.f32 %v9523, %v9539
    %vm9541 = vcmp.eq.s32.totalorder %v9527, 65
    %v9542 = vtanh.pop %v9523
    %v9543 = vsel %vm9541, %v9542, 0.0
    %v9544 = vsel %vm9528, %v9540, %v9543
    %9545 = vst [vmem:[%s15] sm:$0xff] %v9544
    // Predicated region
    $region74: #{othello_net_forward_impl.1} parent=1 // pred_check
      _
    $region75: #{othello_net_forward_impl.1} parent=1 // pred_check_branch
      %9547 = sbr.rel (0) target = $region77
    $region76: #{othello_net_forward_impl.1} parent=1 // pred_region
      _
    $region77: #{othello_net_forward_impl.1} parent=1 // pred_fallthru
      _
    // Predicated region
    $region78: #{othello_net_forward_impl.1} parent=1 // pred_check
      _
    $region79: #{othello_net_forward_impl.1} parent=1 // pred_check_branch
      %9549 = sbr.rel (0) target = $region81
    $region80: #{othello_net_forward_impl.1} parent=1 // pred_region
      _
    $region81: #{othello_net_forward_impl.1} parent=1 // pred_fallthru
      _
    %9550 = vsyncpa [#allocation4], 1
    %9551 = vsyncpa [#allocation6], 1

</llo_original>
